<compile_context>
chip_gen: v7x
topology: tpu7x:2x2x1
jax: 0.10.0
libtpu: 0.0.40
codegen_flags: <defaults>
</compile_context>

<pallas_src>
import functools
import math

import jax
import jax.numpy as jnp
from jax.experimental import pallas as pl
from jax.experimental.pallas import tpu as pltpu

DIM_HEAD = 64  # cross_dim_head == latent_dim_head == 64 in the PyTorch module


# --------------------------------------------------------------------------
# In-kernel helpers
# --------------------------------------------------------------------------

def _layernorm(x, g, b):
    # PyTorch nn.LayerNorm semantics: biased variance, eps=1e-5.  g, b: (1, d).
    mu = jnp.mean(x, axis=-1, keepdims=True)
    var = jnp.mean((x - mu) ** 2, axis=-1, keepdims=True)
    inv = jax.lax.rsqrt(var + 1e-5)
    return (x - mu) * inv * g + b


def _erf_f32(x):
    # Abramowitz & Stegun 7.1.26 (max abs err 1.5e-7): exact-erf GELU semantics
    # using only exp/mul/add + an EUP reciprocal (no f32 VPU divide).
    a1, a2, a3, a4, a5 = 0.254829592, -0.284496736, 1.421413741, -1.453152027, 1.061405429
    p = 0.3275911
    s = jnp.where(x >= 0.0, 1.0, -1.0)
    ax = jnp.abs(x)
    t = pl.reciprocal(1.0 + p * ax, approx=True)
    poly = ((((a5 * t + a4) * t + a3) * t + a2) * t + a1) * t
    return s * (1.0 - poly * jnp.exp(-ax * ax))


def _gelu_exact(x):
    return 0.5 * x * (1.0 + _erf_f32(x * 0.7071067811865476))


def _attention(xq, ctx, mask_add, wq, wkv, wo, vec, cvec, *, heads, residual):
    """PreNorm(q) [+ PreNorm(ctx)] -> multi-head attention -> out-proj (+ residual).

    xq: (Nq, Dq) f32.  ctx: (Nk, Dc) f32 or None (self-attention uses normed xq).
    mask_add: (1, Nk) additive mask (0 or -finfo.max) or None.
    vec rows: [ln_gamma, ln_beta, out_proj_bias].  cvec rows: [ctx_gamma, ctx_beta].
    """
    qn = _layernorm(xq, vec[0:1], vec[1:2])
    if ctx is None:
        cn = qn                                  # self-attn: context == normed x
    elif cvec is not None:
        cn = _layernorm(ctx, cvec[0:1], cvec[1:2])
    else:
        cn = ctx

    # Projections (bf16 MXU inputs, f32 accumulation).
    q = jnp.dot(qn.astype(jnp.bfloat16), wq, preferred_element_type=jnp.float32)
    kv = jnp.dot(cn.astype(jnp.bfloat16), wkv, preferred_element_type=jnp.float32)

    inner = heads * DIM_HEAD
    # Hoisted out of the head unroll: scale folded into q (exact, power of two),
    # single bf16 cast of q / k / v.
    q_bf = (q * (DIM_HEAD ** -0.5)).astype(jnp.bfloat16)    # (Nq, inner)
    k_bf = kv[:, :inner].astype(jnp.bfloat16)                # (Nk, inner)
    v_bf = kv[:, inner:].astype(jnp.bfloat16)                # (Nk, inner)

    head_outs = []
    for h in range(heads):                                   # static unroll
        lo = h * DIM_HEAD
        hi = lo + DIM_HEAD
        # QK^T without materializing a transpose: contract the last dims.
        sim = jax.lax.dot_general(q_bf[:, lo:hi], k_bf[:, lo:hi],
                                  (((1,), (1,)), ((), ())),
                                  preferred_element_type=jnp.float32)  # (Nq, Nk)
        if mask_add is not None:
            sim = sim + mask_add                             # masked_fill(~mask, -max)
        sim = sim - jnp.max(sim, axis=-1, keepdims=True)
        p = jnp.exp(sim)
        p = p * pl.reciprocal(jnp.sum(p, axis=-1, keepdims=True), approx=True)
        head_outs.append(jnp.dot(p.astype(jnp.bfloat16), v_bf[:, lo:hi],
                                 preferred_element_type=jnp.float32))  # (Nq, 64)

    # Single deep-K output projection: (Nq, inner) @ (inner, Dq).
    o_cat = head_outs[0] if heads == 1 else jnp.concatenate(head_outs, axis=-1)
    out = jnp.dot(o_cat.astype(jnp.bfloat16), wo,
                  preferred_element_type=jnp.float32) + vec[2:3]
    if residual:
        out = out + xq
    return out


def _geglu_ff(x, w1, b1, w2, vec):
    """PreNorm -> Linear(d, 8d) -> GEGLU (exact-erf GELU) -> Linear(4d, d) + residual.

    vec rows: [ln_gamma, ln_beta, b2].  b1: (1, 8d).
    """
    hid = w2.shape[0]
    xn = _layernorm(x, vec[0:1], vec[1:2])
    h = jnp.dot(xn.astype(jnp.bfloat16), w1, preferred_element_type=jnp.float32) + b1
    act = h[:, :hid] * _gelu_exact(h[:, hid:])               # GEGLU
    out = jnp.dot(act.astype(jnp.bfloat16), w2, preferred_element_type=jnp.float32) + vec[2:3]
    return out + x


# --------------------------------------------------------------------------
# The single fused PerceiverIO kernel (grid over batch)
# --------------------------------------------------------------------------

def _infer_func_kernel(x_ref, mask_ref, lat_ref, fq_ref,
                       ca_wq, ca_wkv, ca_wo, ca_vec, ca_cvec,
                       cf_w1, cf_b1, cf_w2, cf_vec,
                       la_wq, la_wkv, la_wo, la_vec,
                       lf_w1, lf_b1, lf_w2, lf_vec,
                       da_wq, da_wkv, da_wo, da_vec, da_cvec,
                       o_ref, *, depth, cross_heads, latent_heads, dec_heads):
    neg = -jnp.finfo(jnp.float32).max
    x = x_ref[0]                                            # (n, dim) f32
    mask_add = jnp.where(mask_ref[0] > 0.5, 0.0, neg)       # (1, n) additive mask

    lat = lat_ref[...]                                      # (num_latents, latent_dim)

    # ---- encoder cross-attention + GEGLU FF (residuals fused, mask applied) ----
    lat = _attention(lat, x, mask_add,
                     ca_wq[...], ca_wkv[...], ca_wo[...], ca_vec[...], ca_cvec[...],
                     heads=cross_heads, residual=True)
    lat = _geglu_ff(lat, cf_w1[...], cf_b1[...], cf_w2[...], cf_vec[...])

    # ---- latent self-attention stack (static unroll; lat never leaves VMEM) ----
    for l in range(depth):
        lat = _attention(lat, None, None,
                         la_wq[l], la_wkv[l], la_wo[l], la_vec[l], None,
                         heads=latent_heads, residual=True)
        lat = _geglu_ff(lat, lf_w1[l], lf_b1[l], lf_w2[l], lf_vec[l])

    # ---- decoder cross-attention (no mask, no residual, no decoder FF) ----
    dec = _attention(fq_ref[...], lat, None,
                     da_wq[...], da_wkv[...], da_wo[...], da_vec[...], da_cvec[...],
                     heads=dec_heads, residual=False)
    o_ref[0] = dec


def _resident_spec(a):
    # Full-array block whose index never changes -> stays VMEM-resident across
    # the batch grid (no re-DMA per grid step).
    zeros = (0,) * a.ndim
    return pl.BlockSpec(a.shape, lambda i, _z=zeros: _z)


def fused_perceiver_io(x, mask_f, params):
    """One pallas_call for the whole PerceiverIO trunk.  x: (b, n, dim) f32,
    mask_f: (b, 1, n) f32 {0,1}.  Returns decoder output (b, nf, qdim) f32."""
    b, n, dim = x.shape
    lat = params["latents"]
    fq = params["func_queries"]
    nf, qdim = fq.shape
    ca, cf, la, lf, da = (params["ca"], params["cf"], params["la"],
                          params["lf"], params["da"])
    depth = la["wq"].shape[0]
    cross_heads = ca["wq"].shape[1] // DIM_HEAD
    latent_heads = la["wq"].shape[2] // DIM_HEAD
    dec_heads = da["wq"].shape[1] // DIM_HEAD

    resident = [lat, fq,
                ca["wq"], ca["wkv"], ca["wo"], ca["vec"], ca["cvec"],
                cf["w1"], cf["b1"], cf["w2"], cf["vec"],
                la["wq"], la["wkv"], la["wo"], la["vec"],
                lf["w1"], lf["b1"], lf["w2"], lf["vec"],
                da["wq"], da["wkv"], da["wo"], da["vec"], da["cvec"]]

    in_specs = ([pl.BlockSpec((1, n, dim), lambda i: (i, 0, 0)),
                 pl.BlockSpec((1, 1, n), lambda i: (i, 0, 0))]
                + [_resident_spec(a) for a in resident])

    kernel = functools.partial(
        _infer_func_kernel, depth=depth, cross_heads=cross_heads,
        latent_heads=latent_heads, dec_heads=dec_heads)

    return pl.pallas_call(
        kernel,
        out_shape=jax.ShapeDtypeStruct((b, nf, qdim), jnp.float32),
        grid=(b,),
        in_specs=in_specs,
        out_specs=pl.BlockSpec((1, nf, qdim), lambda i: (i, 0, 0)),
        compiler_params=pltpu.CompilerParams(
            dimension_semantics=("parallel",),      # keep both v7x TCs busy
            vmem_limit_bytes=32 * 1024 * 1024),
    )(x, mask_f, *resident)


# --------------------------------------------------------------------------
# Full forward pass (PerceiverIO semantics, perceiver-pytorch reference)
# --------------------------------------------------------------------------

def infer_func_forward(params, inputs, mask, io_type, train_example_index, pos_x, pos_y):
    # ---- embeddings (glue: gathers stay in plain JAX) ----
    x = params["token_emb"][inputs]
    x = x + params["io_type_emb"][io_type]
    x = x + params["train_example_index_emb"][train_example_index]
    x = x + params["pos_x_emb"][pos_x]
    x = x + params["pos_y_emb"][pos_y]

    b = x.shape[0]
    dim = x.shape[-1]
    x = x.reshape(b, -1, dim)                       # (b, n, dim)
    n = x.shape[1]
    mask_f = mask.reshape(b, 1, n).astype(jnp.float32)

    dec = fused_perceiver_io(x, mask_f, params)     # (b, nf, qdim)

    # ---- final logits: tiny (b, nf*qdim) @ (nf*qdim, nf); keep in plain JAX ----
    flat = dec.reshape(b, -1)
    return flat @ params["to_logits_w"] + params["to_logits_b"]


# --------------------------------------------------------------------------
# Deterministic parameter initialization (shapes match the PyTorch module;
# small vectors are pre-packed for the fused kernel, layer weights stacked
# over depth so the latent stack is a single set of resident inputs).
# --------------------------------------------------------------------------

def _lin_w(key, fan_in, fan_out, dtype=jnp.bfloat16):
    bound = 1.0 / math.sqrt(fan_in)
    w = jax.random.uniform(key, (fan_in, fan_out), jnp.float32, -bound, bound)
    return w.astype(dtype)


def _attn_params(key, query_dim, context_dim, heads, *, norm_context):
    inner = heads * DIM_HEAD
    k1, k2, k3 = jax.random.split(key, 3)
    p = {
        "wq": _lin_w(k1, query_dim, inner),           # bias=False
        "wkv": _lin_w(k2, context_dim, 2 * inner),    # bias=False
        "wo": _lin_w(k3, inner, query_dim),
        # vec rows: [LayerNorm gamma, LayerNorm beta, out-proj bias]
        "vec": jnp.concatenate([jnp.ones((1, query_dim), jnp.float32),
                                jnp.zeros((2, query_dim), jnp.float32)], axis=0),
    }
    if norm_context:
        p["cvec"] = jnp.concatenate([jnp.ones((1, context_dim), jnp.float32),
                                     jnp.zeros((1, context_dim), jnp.float32)], axis=0)
    return p


def _ff_params(key, d, mult=4):
    hid = d * mult
    k1, k2 = jax.random.split(key)
    return {
        "w1": _lin_w(k1, d, 2 * hid),
        "b1": jnp.zeros((1, 2 * hid), jnp.float32),
        "w2": _lin_w(k2, hid, d),
        # vec rows: [LayerNorm gamma, LayerNorm beta, second-linear bias]
        "vec": jnp.concatenate([jnp.ones((1, d), jnp.float32),
                                jnp.zeros((2, d), jnp.float32)], axis=0),
    }


def init_params(key, *, num_functions, dim, depth, num_latents, latent_dim,
                max_train_examples):
    assert depth >= 1
    num_tokens, max_width, max_height, num_io_types = 10, 32, 32, 2
    queries_dim, cross_heads, latent_heads = 64, 1, 8

    ks = iter(jax.random.split(key, 16 + 2 * depth))
    params = {
        "token_emb": jax.random.normal(next(ks), (num_tokens, dim), jnp.float32) * 0.02,
        "io_type_emb": jax.random.normal(next(ks), (num_io_types, dim), jnp.float32) * 0.02,
        "train_example_index_emb": jax.random.normal(
            next(ks), (max_train_examples, dim), jnp.float32) * 0.02,
        "pos_x_emb": jax.random.normal(next(ks), (max_width, dim), jnp.float32) * 0.02,
        "pos_y_emb": jax.random.normal(next(ks), (max_height, dim), jnp.float32) * 0.02,
        "latents": jax.random.normal(next(ks), (num_latents, latent_dim), jnp.float32),
        "func_queries": jax.random.normal(next(ks), (num_functions, queries_dim), jnp.float32),
        "ca": _attn_params(next(ks), latent_dim, dim, cross_heads, norm_context=True),
        "cf": _ff_params(next(ks), latent_dim),
        "da": _attn_params(next(ks), queries_dim, latent_dim, cross_heads, norm_context=True),
        "to_logits_w": _lin_w(next(ks), num_functions * queries_dim, num_functions,
                              dtype=jnp.float32),
        "to_logits_b": jnp.zeros((num_functions,), jnp.float32),
    }
    layer_attn = [_attn_params(next(ks), latent_dim, latent_dim, latent_heads,
                               norm_context=False) for _ in range(depth)]
    layer_ff = [_ff_params(next(ks), latent_dim) for _ in range(depth)]
    params["la"] = {k: jnp.stack([p[k] for p in layer_attn])
                    for k in ("wq", "wkv", "wo", "vec")}
    params["lf"] = {k: jnp.stack([p[k] for p in layer_ff])
                    for k in ("w1", "b1", "w2", "vec")}
    return params


# --------------------------------------------------------------------------
# Example run
# --------------------------------------------------------------------------

if __name__ == "__main__":
    # Small config consistent with the module's constructor knobs.
    NUM_FUNCTIONS = 8
    DIM = 128
    DEPTH = 1
    NUM_LATENTS = 16
    LATENT_DIM = 128
    MAX_TRAIN_EXAMPLES = 4

    params = init_params(
        jax.random.PRNGKey(42),
        num_functions=NUM_FUNCTIONS, dim=DIM, depth=DEPTH,
        num_latents=NUM_LATENTS, latent_dim=LATENT_DIM,
        max_train_examples=MAX_TRAIN_EXAMPLES,
    )

    key = jax.random.PRNGKey(0)
    B, E, H, W = 2, 2, 4, 4   # batch, train-examples, grid height, grid width
    k1, k2, k3, k4, k5, k6 = jax.random.split(key, 6)
    inputs = jax.random.randint(k1, (B, E, H, W), 0, 10, dtype=jnp.int32)
    io_type = jax.random.randint(k2, (B, E, H, W), 0, 2, dtype=jnp.int32)
    train_example_index = jax.random.randint(
        k3, (B, E, H, W), 0, MAX_TRAIN_EXAMPLES, dtype=jnp.int32)
    pos_x = jax.random.randint(k4, (B, E, H, W), 0, W, dtype=jnp.int32)
    pos_y = jax.random.randint(k5, (B, E, H, W), 0, H, dtype=jnp.int32)
    mask = jax.random.bernoulli(k6, 0.85, (B, E, H, W))
    mask = mask.at[:, 0, 0, 0].set(True)   # ensure at least one valid token per batch

    fwd = jax.jit(infer_func_forward)
    logits = fwd(params, inputs, mask, io_type, train_example_index, pos_x, pos_y)
    logits = jax.block_until_ready(logits)

    assert logits.shape == (B, NUM_FUNCTIONS), logits.shape
    assert logits.dtype == jnp.float32
    assert bool(jnp.all(jnp.isfinite(logits)))
    print("KERNEL_OK")
</pallas_src>

<mosaic_0001>
module attributes {stable_mosaic.version = 11 : i64} {
  func.func @_infer_func_kernel(%arg0: i32, %arg1: memref<1x32x128xf32, #tpu.memory_space<vmem>>, %arg2: memref<1x1x32xf32, #tpu.memory_space<vmem>>, %arg3: memref<16x128xf32, #tpu.memory_space<vmem>>, %arg4: memref<8x64xf32, #tpu.memory_space<vmem>>, %arg5: memref<128x64xbf16, #tpu.memory_space<vmem>>, %arg6: memref<128x128xbf16, #tpu.memory_space<vmem>>, %arg7: memref<64x128xbf16, #tpu.memory_space<vmem>>, %arg8: memref<3x128xf32, #tpu.memory_space<vmem>>, %arg9: memref<2x128xf32, #tpu.memory_space<vmem>>, %arg10: memref<128x1024xbf16, #tpu.memory_space<vmem>>, %arg11: memref<1x1024xf32, #tpu.memory_space<vmem>>, %arg12: memref<512x128xbf16, #tpu.memory_space<vmem>>, %arg13: memref<3x128xf32, #tpu.memory_space<vmem>>, %arg14: memref<1x128x512xbf16, #tpu.memory_space<vmem>>, %arg15: memref<1x128x1024xbf16, #tpu.memory_space<vmem>>, %arg16: memref<1x512x128xbf16, #tpu.memory_space<vmem>>, %arg17: memref<1x3x128xf32, #tpu.memory_space<vmem>>, %arg18: memref<1x128x1024xbf16, #tpu.memory_space<vmem>>, %arg19: memref<1x1x1024xf32, #tpu.memory_space<vmem>>, %arg20: memref<1x512x128xbf16, #tpu.memory_space<vmem>>, %arg21: memref<1x3x128xf32, #tpu.memory_space<vmem>>, %arg22: memref<64x64xbf16, #tpu.memory_space<vmem>>, %arg23: memref<128x128xbf16, #tpu.memory_space<vmem>>, %arg24: memref<64x64xbf16, #tpu.memory_space<vmem>>, %arg25: memref<3x64xf32, #tpu.memory_space<vmem>>, %arg26: memref<2x128xf32, #tpu.memory_space<vmem>>, %arg27: memref<1x8x64xf32, #tpu.memory_space<vmem>>) attributes {dimension_semantics = [#tpu.dimension_semantics<parallel>], iteration_bounds = array<i64: 2>, scalar_prefetch = 0 : i64, scratch_operands = 0 : i64, tpu.core_type = #tpu.core_type<tc>, window_params = [{transform_indices = @transform_0, window_bounds = array<i64: 1, 32, 128>}, {transform_indices = @transform_1, window_bounds = array<i64: 1, 1, 32>}, {pipeline_mode = #tpu.pipeline_mode<synchronous>, transform_indices = @transform_2, window_bounds = array<i64: 16, 128>}, {pipeline_mode = #tpu.pipeline_mode<synchronous>, transform_indices = @transform_3, window_bounds = array<i64: 8, 64>}, {pipeline_mode = #tpu.pipeline_mode<synchronous>, transform_indices = @transform_4, window_bounds = array<i64: 128, 64>}, {pipeline_mode = #tpu.pipeline_mode<synchronous>, transform_indices = @transform_5, window_bounds = array<i64: 128, 128>}, {pipeline_mode = #tpu.pipeline_mode<synchronous>, transform_indices = @transform_6, window_bounds = array<i64: 64, 128>}, {pipeline_mode = #tpu.pipeline_mode<synchronous>, transform_indices = @transform_7, window_bounds = array<i64: 3, 128>}, {pipeline_mode = #tpu.pipeline_mode<synchronous>, transform_indices = @transform_8, window_bounds = array<i64: 2, 128>}, {pipeline_mode = #tpu.pipeline_mode<synchronous>, transform_indices = @transform_9, window_bounds = array<i64: 128, 1024>}, {pipeline_mode = #tpu.pipeline_mode<synchronous>, transform_indices = @transform_10, window_bounds = array<i64: 1, 1024>}, {pipeline_mode = #tpu.pipeline_mode<synchronous>, transform_indices = @transform_11, window_bounds = array<i64: 512, 128>}, {pipeline_mode = #tpu.pipeline_mode<synchronous>, transform_indices = @transform_12, window_bounds = array<i64: 3, 128>}, {pipeline_mode = #tpu.pipeline_mode<synchronous>, transform_indices = @transform_13, window_bounds = array<i64: 1, 128, 512>}, {pipeline_mode = #tpu.pipeline_mode<synchronous>, transform_indices = @transform_14, window_bounds = array<i64: 1, 128, 1024>}, {pipeline_mode = #tpu.pipeline_mode<synchronous>, transform_indices = @transform_15, window_bounds = array<i64: 1, 512, 128>}, {pipeline_mode = #tpu.pipeline_mode<synchronous>, transform_indices = @transform_16, window_bounds = array<i64: 1, 3, 128>}, {pipeline_mode = #tpu.pipeline_mode<synchronous>, transform_indices = @transform_17, window_bounds = array<i64: 1, 128, 1024>}, {pipeline_mode = #tpu.pipeline_mode<synchronous>, transform_indices = @transform_18, window_bounds = array<i64: 1, 1, 1024>}, {pipeline_mode = #tpu.pipeline_mode<synchronous>, transform_indices = @transform_19, window_bounds = array<i64: 1, 512, 128>}, {pipeline_mode = #tpu.pipeline_mode<synchronous>, transform_indices = @transform_20, window_bounds = array<i64: 1, 3, 128>}, {pipeline_mode = #tpu.pipeline_mode<synchronous>, transform_indices = @transform_21, window_bounds = array<i64: 64, 64>}, {pipeline_mode = #tpu.pipeline_mode<synchronous>, transform_indices = @transform_22, window_bounds = array<i64: 128, 128>}, {pipeline_mode = #tpu.pipeline_mode<synchronous>, transform_indices = @transform_23, window_bounds = array<i64: 64, 64>}, {pipeline_mode = #tpu.pipeline_mode<synchronous>, transform_indices = @transform_24, window_bounds = array<i64: 3, 64>}, {pipeline_mode = #tpu.pipeline_mode<synchronous>, transform_indices = @transform_25, window_bounds = array<i64: 2, 128>}, {transform_indices = @transform_26, window_bounds = array<i64: 1, 8, 64>}]} {
    %c0 = arith.constant 0 : index
    %c0_0 = arith.constant 0 : index
    %c0_1 = arith.constant 0 : index
    %0 = vector.load %arg1[%c0, %c0_0, %c0_1] : memref<1x32x128xf32, #tpu.memory_space<vmem>>, vector<1x32x128xf32>
    %1 = vector.shape_cast %0 : vector<1x32x128xf32> to vector<32x128xf32>
    %c0_2 = arith.constant 0 : index
    %c0_3 = arith.constant 0 : index
    %c0_4 = arith.constant 0 : index
    %2 = vector.load %arg2[%c0_2, %c0_3, %c0_4] : memref<1x1x32xf32, #tpu.memory_space<vmem>>, vector<1x1x32xf32>
    %3 = vector.shape_cast %2 : vector<1x1x32xf32> to vector<1x32xf32>
    %cst = arith.constant 5.000000e-01 : f32
    %4 = vector.broadcast %cst : f32 to vector<1x32xf32>
    %5 = arith.cmpf ogt, %3, %4 : vector<1x32xf32>
    %cst_5 = arith.constant 0.000000e+00 : f32
    %cst_6 = arith.constant -3.40282347E+38 : f32
    %6 = vector.broadcast %cst_5 : f32 to vector<1x32xf32>
    %7 = vector.broadcast %cst_6 : f32 to vector<1x32xf32>
    %8 = arith.select %5, %6, %7 : vector<1x32xi1>, vector<1x32xf32>
    %c0_7 = arith.constant 0 : index
    %c0_8 = arith.constant 0 : index
    %9 = vector.load %arg3[%c0_7, %c0_8] : memref<16x128xf32, #tpu.memory_space<vmem>>, vector<16x128xf32>
    %c0_9 = arith.constant 0 : index
    %c0_10 = arith.constant 0 : index
    %10 = vector.load %arg5[%c0_9, %c0_10] : memref<128x64xbf16, #tpu.memory_space<vmem>>, vector<128x64xbf16>
    %c0_11 = arith.constant 0 : index
    %c0_12 = arith.constant 0 : index
    %11 = vector.load %arg6[%c0_11, %c0_12] : memref<128x128xbf16, #tpu.memory_space<vmem>>, vector<128x128xbf16>
    %c0_13 = arith.constant 0 : index
    %c0_14 = arith.constant 0 : index
    %12 = vector.load %arg7[%c0_13, %c0_14] : memref<64x128xbf16, #tpu.memory_space<vmem>>, vector<64x128xbf16>
    %c0_15 = arith.constant 0 : index
    %c0_16 = arith.constant 0 : index
    %13 = vector.load %arg8[%c0_15, %c0_16] : memref<3x128xf32, #tpu.memory_space<vmem>>, vector<3x128xf32>
    %c0_17 = arith.constant 0 : index
    %c0_18 = arith.constant 0 : index
    %14 = vector.load %arg9[%c0_17, %c0_18] : memref<2x128xf32, #tpu.memory_space<vmem>>, vector<2x128xf32>
    %15 = vector.extract_strided_slice %13 {offsets = [0, 0], sizes = [1, 128], strides = [1, 1]} : vector<3x128xf32> to vector<1x128xf32>
    %16 = vector.extract_strided_slice %13 {offsets = [1, 0], sizes = [1, 128], strides = [1, 1]} : vector<3x128xf32> to vector<1x128xf32>
    %cst_19 = arith.constant dense<0.000000e+00> : vector<16xf32>
    %17 = vector.multi_reduction <add>, %9, %cst_19 [1] : vector<16x128xf32> to vector<16xf32>
    %18 = vector.shape_cast %17 : vector<16xf32> to vector<16x1xf32>
    %cst_20 = arith.constant 1.280000e+02 : f32
    %19 = vector.broadcast %cst_20 : f32 to vector<16x1xf32>
    %20 = arith.divf %18, %19 : vector<16x1xf32>
    %21 = vector.broadcast %20 : vector<16x1xf32> to vector<16x128xf32>
    %22 = arith.subf %9, %21 : vector<16x128xf32>
    %23 = arith.mulf %22, %22 : vector<16x128xf32>
    %cst_21 = arith.constant dense<0.000000e+00> : vector<16xf32>
    %24 = vector.multi_reduction <add>, %23, %cst_21 [1] : vector<16x128xf32> to vector<16xf32>
    %25 = vector.shape_cast %24 : vector<16xf32> to vector<16x1xf32>
    %cst_22 = arith.constant 1.280000e+02 : f32
    %26 = vector.broadcast %cst_22 : f32 to vector<16x1xf32>
    %27 = arith.divf %25, %26 : vector<16x1xf32>
    %cst_23 = arith.constant 9.99999974E-6 : f32
    %28 = vector.broadcast %cst_23 : f32 to vector<16x1xf32>
    %29 = arith.addf %27, %28 : vector<16x1xf32>
    %30 = math.rsqrt %29 : vector<16x1xf32>
    %31 = vector.broadcast %20 : vector<16x1xf32> to vector<16x128xf32>
    %32 = arith.subf %9, %31 : vector<16x128xf32>
    %33 = vector.broadcast %30 : vector<16x1xf32> to vector<16x128xf32>
    %34 = arith.mulf %32, %33 : vector<16x128xf32>
    %35 = vector.broadcast %15 : vector<1x128xf32> to vector<16x128xf32>
    %36 = arith.mulf %34, %35 : vector<16x128xf32>
    %37 = vector.broadcast %16 : vector<1x128xf32> to vector<16x128xf32>
    %38 = arith.addf %36, %37 : vector<16x128xf32>
    %39 = vector.extract_strided_slice %14 {offsets = [0, 0], sizes = [1, 128], strides = [1, 1]} : vector<2x128xf32> to vector<1x128xf32>
    %40 = vector.extract_strided_slice %14 {offsets = [1, 0], sizes = [1, 128], strides = [1, 1]} : vector<2x128xf32> to vector<1x128xf32>
    %cst_24 = arith.constant dense<0.000000e+00> : vector<32xf32>
    %41 = vector.multi_reduction <add>, %1, %cst_24 [1] : vector<32x128xf32> to vector<32xf32>
    %42 = vector.shape_cast %41 : vector<32xf32> to vector<32x1xf32>
    %cst_25 = arith.constant 1.280000e+02 : f32
    %43 = vector.broadcast %cst_25 : f32 to vector<32x1xf32>
    %44 = arith.divf %42, %43 : vector<32x1xf32>
    %45 = vector.broadcast %44 : vector<32x1xf32> to vector<32x128xf32>
    %46 = arith.subf %1, %45 : vector<32x128xf32>
    %47 = arith.mulf %46, %46 : vector<32x128xf32>
    %cst_26 = arith.constant dense<0.000000e+00> : vector<32xf32>
    %48 = vector.multi_reduction <add>, %47, %cst_26 [1] : vector<32x128xf32> to vector<32xf32>
    %49 = vector.shape_cast %48 : vector<32xf32> to vector<32x1xf32>
    %cst_27 = arith.constant 1.280000e+02 : f32
    %50 = vector.broadcast %cst_27 : f32 to vector<32x1xf32>
    %51 = arith.divf %49, %50 : vector<32x1xf32>
    %cst_28 = arith.constant 9.99999974E-6 : f32
    %52 = vector.broadcast %cst_28 : f32 to vector<32x1xf32>
    %53 = arith.addf %51, %52 : vector<32x1xf32>
    %54 = math.rsqrt %53 : vector<32x1xf32>
    %55 = vector.broadcast %44 : vector<32x1xf32> to vector<32x128xf32>
    %56 = arith.subf %1, %55 : vector<32x128xf32>
    %57 = vector.broadcast %54 : vector<32x1xf32> to vector<32x128xf32>
    %58 = arith.mulf %56, %57 : vector<32x128xf32>
    %59 = vector.broadcast %39 : vector<1x128xf32> to vector<32x128xf32>
    %60 = arith.mulf %58, %59 : vector<32x128xf32>
    %61 = vector.broadcast %40 : vector<1x128xf32> to vector<32x128xf32>
    %62 = arith.addf %60, %61 : vector<32x128xf32>
    %63 = arith.truncf %38 : vector<16x128xf32> to vector<16x128xbf16>
    %cst_29 = arith.constant dense<0.000000e+00> : vector<16x64xf32>
    %64 = tpu.matmul %63, %10, %cst_29 {dimension_numbers = #tpu.dot_dimension_numbers<[1], [0], [0], [1], [0, 0, 1, 1], [], []>} : vector<16x128xbf16>, vector<128x64xbf16>, vector<16x64xf32> -> vector<16x64xf32>
    %65 = arith.truncf %62 : vector<32x128xf32> to vector<32x128xbf16>
    %cst_30 = arith.constant dense<0.000000e+00> : vector<32x128xf32>
    %66 = tpu.matmul %65, %11, %cst_30 {dimension_numbers = #tpu.dot_dimension_numbers<[1], [0], [0], [1], [0, 0, 1, 1], [], []>} : vector<32x128xbf16>, vector<128x128xbf16>, vector<32x128xf32> -> vector<32x128xf32>
    %cst_31 = arith.constant 1.250000e-01 : f32
    %67 = vector.broadcast %cst_31 : f32 to vector<16x64xf32>
    %68 = arith.mulf %64, %67 : vector<16x64xf32>
    %69 = arith.truncf %68 : vector<16x64xf32> to vector<16x64xbf16>
    %70 = vector.extract_strided_slice %66 {offsets = [0, 0], sizes = [32, 64], strides = [1, 1]} : vector<32x128xf32> to vector<32x64xf32>
    %71 = arith.truncf %70 : vector<32x64xf32> to vector<32x64xbf16>
    %72 = vector.extract_strided_slice %66 {offsets = [0, 64], sizes = [32, 64], strides = [1, 1]} : vector<32x128xf32> to vector<32x64xf32>
    %73 = arith.truncf %72 : vector<32x64xf32> to vector<32x64xbf16>
    %cst_32 = arith.constant dense<0.000000e+00> : vector<16x32xf32>
    %74 = tpu.matmul %69, %71, %cst_32 {dimension_numbers = #tpu.dot_dimension_numbers<[1], [1], [0], [0], [0, 0, 1, 0], [], []>} : vector<16x64xbf16>, vector<32x64xbf16>, vector<16x32xf32> -> vector<16x32xf32>
    %75 = vector.broadcast %8 : vector<1x32xf32> to vector<16x32xf32>
    %76 = arith.addf %74, %75 : vector<16x32xf32>
    %cst_33 = arith.constant dense<0xFF800000> : vector<16xf32>
    %77 = vector.multi_reduction <maximumf>, %76, %cst_33 [1] : vector<16x32xf32> to vector<16xf32>
    %78 = vector.shape_cast %77 : vector<16xf32> to vector<16x1xf32>
    %79 = vector.broadcast %78 : vector<16x1xf32> to vector<16x32xf32>
    %80 = arith.subf %76, %79 : vector<16x32xf32>
    %81 = math.exp %80 : vector<16x32xf32>
    %cst_34 = arith.constant dense<0.000000e+00> : vector<16xf32>
    %82 = vector.multi_reduction <add>, %81, %cst_34 [1] : vector<16x32xf32> to vector<16xf32>
    %83 = vector.shape_cast %82 : vector<16xf32> to vector<16x1xf32>
    %84 = tpu.reciprocal %83 {approx = true} : vector<16x1xf32> -> vector<16x1xf32>
    %85 = vector.broadcast %84 : vector<16x1xf32> to vector<16x32xf32>
    %86 = arith.mulf %81, %85 : vector<16x32xf32>
    %87 = arith.truncf %86 : vector<16x32xf32> to vector<16x32xbf16>
    %cst_35 = arith.constant dense<0.000000e+00> : vector<16x64xf32>
    %88 = tpu.matmul %87, %73, %cst_35 {dimension_numbers = #tpu.dot_dimension_numbers<[1], [0], [0], [1], [0, 0, 1, 1], [], []>} : vector<16x32xbf16>, vector<32x64xbf16>, vector<16x64xf32> -> vector<16x64xf32>
    %89 = arith.truncf %88 : vector<16x64xf32> to vector<16x64xbf16>
    %cst_36 = arith.constant dense<0.000000e+00> : vector<16x128xf32>
    %90 = tpu.matmul %89, %12, %cst_36 {dimension_numbers = #tpu.dot_dimension_numbers<[1], [0], [0], [1], [0, 0, 1, 1], [], []>} : vector<16x64xbf16>, vector<64x128xbf16>, vector<16x128xf32> -> vector<16x128xf32>
    %91 = vector.extract_strided_slice %13 {offsets = [2, 0], sizes = [1, 128], strides = [1, 1]} : vector<3x128xf32> to vector<1x128xf32>
    %92 = vector.broadcast %91 : vector<1x128xf32> to vector<16x128xf32>
    %93 = arith.addf %90, %92 : vector<16x128xf32>
    %94 = arith.addf %93, %9 : vector<16x128xf32>
    %c0_37 = arith.constant 0 : index
    %c0_38 = arith.constant 0 : index
    %95 = vector.load %arg10[%c0_37, %c0_38] : memref<128x1024xbf16, #tpu.memory_space<vmem>>, vector<128x1024xbf16>
    %c0_39 = arith.constant 0 : index
    %c0_40 = arith.constant 0 : index
    %96 = vector.load %arg11[%c0_39, %c0_40] : memref<1x1024xf32, #tpu.memory_space<vmem>>, vector<1x1024xf32>
    %c0_41 = arith.constant 0 : index
    %c0_42 = arith.constant 0 : index
    %97 = vector.load %arg12[%c0_41, %c0_42] : memref<512x128xbf16, #tpu.memory_space<vmem>>, vector<512x128xbf16>
    %c0_43 = arith.constant 0 : index
    %c0_44 = arith.constant 0 : index
    %98 = vector.load %arg13[%c0_43, %c0_44] : memref<3x128xf32, #tpu.memory_space<vmem>>, vector<3x128xf32>
    %99 = vector.extract_strided_slice %98 {offsets = [0, 0], sizes = [1, 128], strides = [1, 1]} : vector<3x128xf32> to vector<1x128xf32>
    %100 = vector.extract_strided_slice %98 {offsets = [1, 0], sizes = [1, 128], strides = [1, 1]} : vector<3x128xf32> to vector<1x128xf32>
    %cst_45 = arith.constant dense<0.000000e+00> : vector<16xf32>
    %101 = vector.multi_reduction <add>, %94, %cst_45 [1] : vector<16x128xf32> to vector<16xf32>
    %102 = vector.shape_cast %101 : vector<16xf32> to vector<16x1xf32>
    %cst_46 = arith.constant 1.280000e+02 : f32
    %103 = vector.broadcast %cst_46 : f32 to vector<16x1xf32>
    %104 = arith.divf %102, %103 : vector<16x1xf32>
    %105 = vector.broadcast %104 : vector<16x1xf32> to vector<16x128xf32>
    %106 = arith.subf %94, %105 : vector<16x128xf32>
    %107 = arith.mulf %106, %106 : vector<16x128xf32>
    %cst_47 = arith.constant dense<0.000000e+00> : vector<16xf32>
    %108 = vector.multi_reduction <add>, %107, %cst_47 [1] : vector<16x128xf32> to vector<16xf32>
    %109 = vector.shape_cast %108 : vector<16xf32> to vector<16x1xf32>
    %cst_48 = arith.constant 1.280000e+02 : f32
    %110 = vector.broadcast %cst_48 : f32 to vector<16x1xf32>
    %111 = arith.divf %109, %110 : vector<16x1xf32>
    %cst_49 = arith.constant 9.99999974E-6 : f32
    %112 = vector.broadcast %cst_49 : f32 to vector<16x1xf32>
    %113 = arith.addf %111, %112 : vector<16x1xf32>
    %114 = math.rsqrt %113 : vector<16x1xf32>
    %115 = vector.broadcast %104 : vector<16x1xf32> to vector<16x128xf32>
    %116 = arith.subf %94, %115 : vector<16x128xf32>
    %117 = vector.broadcast %114 : vector<16x1xf32> to vector<16x128xf32>
    %118 = arith.mulf %116, %117 : vector<16x128xf32>
    %119 = vector.broadcast %99 : vector<1x128xf32> to vector<16x128xf32>
    %120 = arith.mulf %118, %119 : vector<16x128xf32>
    %121 = vector.broadcast %100 : vector<1x128xf32> to vector<16x128xf32>
    %122 = arith.addf %120, %121 : vector<16x128xf32>
    %123 = arith.truncf %122 : vector<16x128xf32> to vector<16x128xbf16>
    %cst_50 = arith.constant dense<0.000000e+00> : vector<16x1024xf32>
    %124 = tpu.matmul %123, %95, %cst_50 {dimension_numbers = #tpu.dot_dimension_numbers<[1], [0], [0], [1], [0, 0, 1, 1], [], []>} : vector<16x128xbf16>, vector<128x1024xbf16>, vector<16x1024xf32> -> vector<16x1024xf32>
    %125 = vector.broadcast %96 : vector<1x1024xf32> to vector<16x1024xf32>
    %126 = arith.addf %124, %125 : vector<16x1024xf32>
    %127 = vector.extract_strided_slice %126 {offsets = [0, 0], sizes = [16, 512], strides = [1, 1]} : vector<16x1024xf32> to vector<16x512xf32>
    %128 = vector.extract_strided_slice %126 {offsets = [0, 512], sizes = [16, 512], strides = [1, 1]} : vector<16x1024xf32> to vector<16x512xf32>
    %cst_51 = arith.constant 5.000000e-01 : f32
    %129 = vector.broadcast %cst_51 : f32 to vector<16x512xf32>
    %130 = arith.mulf %129, %128 : vector<16x512xf32>
    %cst_52 = arith.constant 0.707106769 : f32
    %131 = vector.broadcast %cst_52 : f32 to vector<16x512xf32>
    %132 = arith.mulf %128, %131 : vector<16x512xf32>
    %cst_53 = arith.constant 0.000000e+00 : f32
    %133 = vector.broadcast %cst_53 : f32 to vector<16x512xf32>
    %134 = arith.cmpf oge, %132, %133 : vector<16x512xf32>
    %cst_54 = arith.constant 1.000000e+00 : f32
    %cst_55 = arith.constant -1.000000e+00 : f32
    %135 = vector.broadcast %cst_54 : f32 to vector<16x512xf32>
    %136 = vector.broadcast %cst_55 : f32 to vector<16x512xf32>
    %137 = arith.select %134, %135, %136 : vector<16x512xi1>, vector<16x512xf32>
    %138 = math.absf %132 : vector<16x512xf32>
    %cst_56 = arith.constant 0.327591091 : f32
    %139 = vector.broadcast %cst_56 : f32 to vector<16x512xf32>
    %140 = arith.mulf %139, %138 : vector<16x512xf32>
    %cst_57 = arith.constant 1.000000e+00 : f32
    %141 = vector.broadcast %cst_57 : f32 to vector<16x512xf32>
    %142 = arith.addf %141, %140 : vector<16x512xf32>
    %143 = tpu.reciprocal %142 {approx = true} : vector<16x512xf32> -> vector<16x512xf32>
    %cst_58 = arith.constant 1.06140542 : f32
    %144 = vector.broadcast %cst_58 : f32 to vector<16x512xf32>
    %145 = arith.mulf %144, %143 : vector<16x512xf32>
    %cst_59 = arith.constant -1.45315206 : f32
    %146 = vector.broadcast %cst_59 : f32 to vector<16x512xf32>
    %147 = arith.addf %145, %146 : vector<16x512xf32>
    %148 = arith.mulf %147, %143 : vector<16x512xf32>
    %cst_60 = arith.constant 1.42141378 : f32
    %149 = vector.broadcast %cst_60 : f32 to vector<16x512xf32>
    %150 = arith.addf %148, %149 : vector<16x512xf32>
    %151 = arith.mulf %150, %143 : vector<16x512xf32>
    %cst_61 = arith.constant -0.284496725 : f32
    %152 = vector.broadcast %cst_61 : f32 to vector<16x512xf32>
    %153 = arith.addf %151, %152 : vector<16x512xf32>
    %154 = arith.mulf %153, %143 : vector<16x512xf32>
    %cst_62 = arith.constant 0.254829586 : f32
    %155 = vector.broadcast %cst_62 : f32 to vector<16x512xf32>
    %156 = arith.addf %154, %155 : vector<16x512xf32>
    %157 = arith.mulf %156, %143 : vector<16x512xf32>
    %cst_63 = arith.constant 0.000000e+00 : f32
    %158 = vector.broadcast %cst_63 : f32 to vector<16x512xf32>
    %159 = arith.subf %158, %138 : vector<16x512xf32>
    %160 = arith.mulf %159, %138 : vector<16x512xf32>
    %161 = math.exp %160 : vector<16x512xf32>
    %162 = arith.mulf %157, %161 : vector<16x512xf32>
    %cst_64 = arith.constant 1.000000e+00 : f32
    %163 = vector.broadcast %cst_64 : f32 to vector<16x512xf32>
    %164 = arith.subf %163, %162 : vector<16x512xf32>
    %165 = arith.mulf %137, %164 : vector<16x512xf32>
    %cst_65 = arith.constant 1.000000e+00 : f32
    %166 = vector.broadcast %cst_65 : f32 to vector<16x512xf32>
    %167 = arith.addf %166, %165 : vector<16x512xf32>
    %168 = arith.mulf %130, %167 : vector<16x512xf32>
    %169 = arith.mulf %127, %168 : vector<16x512xf32>
    %170 = arith.truncf %169 : vector<16x512xf32> to vector<16x512xbf16>
    %cst_66 = arith.constant dense<0.000000e+00> : vector<16x128xf32>
    %171 = tpu.matmul %170, %97, %cst_66 {dimension_numbers = #tpu.dot_dimension_numbers<[1], [0], [0], [1], [0, 0, 1, 1], [], []>} : vector<16x512xbf16>, vector<512x128xbf16>, vector<16x128xf32> -> vector<16x128xf32>
    %172 = vector.extract_strided_slice %98 {offsets = [2, 0], sizes = [1, 128], strides = [1, 1]} : vector<3x128xf32> to vector<1x128xf32>
    %173 = vector.broadcast %172 : vector<1x128xf32> to vector<16x128xf32>
    %174 = arith.addf %171, %173 : vector<16x128xf32>
    %175 = arith.addf %174, %94 : vector<16x128xf32>
    %c0_67 = arith.constant 0 : index
    %c0_68 = arith.constant 0 : index
    %c0_69 = arith.constant 0 : index
    %176 = vector.load %arg14[%c0_67, %c0_68, %c0_69] : memref<1x128x512xbf16, #tpu.memory_space<vmem>>, vector<1x128x512xbf16>
    %177 = vector.shape_cast %176 : vector<1x128x512xbf16> to vector<128x512xbf16>
    %c0_70 = arith.constant 0 : index
    %c0_71 = arith.constant 0 : index
    %c0_72 = arith.constant 0 : index
    %178 = vector.load %arg15[%c0_70, %c0_71, %c0_72] : memref<1x128x1024xbf16, #tpu.memory_space<vmem>>, vector<1x128x1024xbf16>
    %179 = vector.shape_cast %178 : vector<1x128x1024xbf16> to vector<128x1024xbf16>
    %c0_73 = arith.constant 0 : index
    %c0_74 = arith.constant 0 : index
    %c0_75 = arith.constant 0 : index
    %180 = vector.load %arg16[%c0_73, %c0_74, %c0_75] : memref<1x512x128xbf16, #tpu.memory_space<vmem>>, vector<1x512x128xbf16>
    %181 = vector.shape_cast %180 : vector<1x512x128xbf16> to vector<512x128xbf16>
    %c0_76 = arith.constant 0 : index
    %c0_77 = arith.constant 0 : index
    %c0_78 = arith.constant 0 : index
    %182 = vector.load %arg17[%c0_76, %c0_77, %c0_78] : memref<1x3x128xf32, #tpu.memory_space<vmem>>, vector<1x3x128xf32>
    %183 = vector.shape_cast %182 : vector<1x3x128xf32> to vector<3x128xf32>
    %184 = vector.extract_strided_slice %183 {offsets = [0, 0], sizes = [1, 128], strides = [1, 1]} : vector<3x128xf32> to vector<1x128xf32>
    %185 = vector.extract_strided_slice %183 {offsets = [1, 0], sizes = [1, 128], strides = [1, 1]} : vector<3x128xf32> to vector<1x128xf32>
    %cst_79 = arith.constant dense<0.000000e+00> : vector<16xf32>
    %186 = vector.multi_reduction <add>, %175, %cst_79 [1] : vector<16x128xf32> to vector<16xf32>
    %187 = vector.shape_cast %186 : vector<16xf32> to vector<16x1xf32>
    %cst_80 = arith.constant 1.280000e+02 : f32
    %188 = vector.broadcast %cst_80 : f32 to vector<16x1xf32>
    %189 = arith.divf %187, %188 : vector<16x1xf32>
    %190 = vector.broadcast %189 : vector<16x1xf32> to vector<16x128xf32>
    %191 = arith.subf %175, %190 : vector<16x128xf32>
    %192 = arith.mulf %191, %191 : vector<16x128xf32>
    %cst_81 = arith.constant dense<0.000000e+00> : vector<16xf32>
    %193 = vector.multi_reduction <add>, %192, %cst_81 [1] : vector<16x128xf32> to vector<16xf32>
    %194 = vector.shape_cast %193 : vector<16xf32> to vector<16x1xf32>
    %cst_82 = arith.constant 1.280000e+02 : f32
    %195 = vector.broadcast %cst_82 : f32 to vector<16x1xf32>
    %196 = arith.divf %194, %195 : vector<16x1xf32>
    %cst_83 = arith.constant 9.99999974E-6 : f32
    %197 = vector.broadcast %cst_83 : f32 to vector<16x1xf32>
    %198 = arith.addf %196, %197 : vector<16x1xf32>
    %199 = math.rsqrt %198 : vector<16x1xf32>
    %200 = vector.broadcast %189 : vector<16x1xf32> to vector<16x128xf32>
    %201 = arith.subf %175, %200 : vector<16x128xf32>
    %202 = vector.broadcast %199 : vector<16x1xf32> to vector<16x128xf32>
    %203 = arith.mulf %201, %202 : vector<16x128xf32>
    %204 = vector.broadcast %184 : vector<1x128xf32> to vector<16x128xf32>
    %205 = arith.mulf %203, %204 : vector<16x128xf32>
    %206 = vector.broadcast %185 : vector<1x128xf32> to vector<16x128xf32>
    %207 = arith.addf %205, %206 : vector<16x128xf32>
    %208 = arith.truncf %207 : vector<16x128xf32> to vector<16x128xbf16>
    %cst_84 = arith.constant dense<0.000000e+00> : vector<16x512xf32>
    %209 = tpu.matmul %208, %177, %cst_84 {dimension_numbers = #tpu.dot_dimension_numbers<[1], [0], [0], [1], [0, 0, 1, 1], [], []>} : vector<16x128xbf16>, vector<128x512xbf16>, vector<16x512xf32> -> vector<16x512xf32>
    %210 = arith.truncf %207 : vector<16x128xf32> to vector<16x128xbf16>
    %cst_85 = arith.constant dense<0.000000e+00> : vector<16x1024xf32>
    %211 = tpu.matmul %210, %179, %cst_85 {dimension_numbers = #tpu.dot_dimension_numbers<[1], [0], [0], [1], [0, 0, 1, 1], [], []>} : vector<16x128xbf16>, vector<128x1024xbf16>, vector<16x1024xf32> -> vector<16x1024xf32>
    %cst_86 = arith.constant 1.250000e-01 : f32
    %212 = vector.broadcast %cst_86 : f32 to vector<16x512xf32>
    %213 = arith.mulf %209, %212 : vector<16x512xf32>
    %214 = arith.truncf %213 : vector<16x512xf32> to vector<16x512xbf16>
    %215 = vector.extract_strided_slice %211 {offsets = [0, 0], sizes = [16, 512], strides = [1, 1]} : vector<16x1024xf32> to vector<16x512xf32>
    %216 = arith.truncf %215 : vector<16x512xf32> to vector<16x512xbf16>
    %217 = vector.extract_strided_slice %211 {offsets = [0, 512], sizes = [16, 512], strides = [1, 1]} : vector<16x1024xf32> to vector<16x512xf32>
    %218 = arith.truncf %217 : vector<16x512xf32> to vector<16x512xbf16>
    %219 = vector.extract_strided_slice %214 {offsets = [0, 0], sizes = [16, 64], strides = [1, 1]} : vector<16x512xbf16> to vector<16x64xbf16>
    %220 = vector.extract_strided_slice %216 {offsets = [0, 0], sizes = [16, 64], strides = [1, 1]} : vector<16x512xbf16> to vector<16x64xbf16>
    %cst_87 = arith.constant dense<0.000000e+00> : vector<16x16xf32>
    %221 = tpu.matmul %219, %220, %cst_87 {dimension_numbers = #tpu.dot_dimension_numbers<[1], [1], [0], [0], [0, 0, 1, 0], [], []>} : vector<16x64xbf16>, vector<16x64xbf16>, vector<16x16xf32> -> vector<16x16xf32>
    %cst_88 = arith.constant dense<0xFF800000> : vector<16xf32>
    %222 = vector.multi_reduction <maximumf>, %221, %cst_88 [1] : vector<16x16xf32> to vector<16xf32>
    %223 = vector.shape_cast %222 : vector<16xf32> to vector<16x1xf32>
    %224 = vector.broadcast %223 : vector<16x1xf32> to vector<16x16xf32>
    %225 = arith.subf %221, %224 : vector<16x16xf32>
    %226 = math.exp %225 : vector<16x16xf32>
    %cst_89 = arith.constant dense<0.000000e+00> : vector<16xf32>
    %227 = vector.multi_reduction <add>, %226, %cst_89 [1] : vector<16x16xf32> to vector<16xf32>
    %228 = vector.shape_cast %227 : vector<16xf32> to vector<16x1xf32>
    %229 = tpu.reciprocal %228 {approx = true} : vector<16x1xf32> -> vector<16x1xf32>
    %230 = vector.broadcast %229 : vector<16x1xf32> to vector<16x16xf32>
    %231 = arith.mulf %226, %230 : vector<16x16xf32>
    %232 = arith.truncf %231 : vector<16x16xf32> to vector<16x16xbf16>
    %233 = vector.extract_strided_slice %218 {offsets = [0, 0], sizes = [16, 64], strides = [1, 1]} : vector<16x512xbf16> to vector<16x64xbf16>
    %cst_90 = arith.constant dense<0.000000e+00> : vector<16x64xf32>
    %234 = tpu.matmul %232, %233, %cst_90 {dimension_numbers = #tpu.dot_dimension_numbers<[1], [0], [0], [1], [0, 0, 1, 1], [], []>} : vector<16x16xbf16>, vector<16x64xbf16>, vector<16x64xf32> -> vector<16x64xf32>
    %235 = vector.extract_strided_slice %214 {offsets = [0, 64], sizes = [16, 64], strides = [1, 1]} : vector<16x512xbf16> to vector<16x64xbf16>
    %236 = vector.extract_strided_slice %216 {offsets = [0, 64], sizes = [16, 64], strides = [1, 1]} : vector<16x512xbf16> to vector<16x64xbf16>
    %cst_91 = arith.constant dense<0.000000e+00> : vector<16x16xf32>
    %237 = tpu.matmul %235, %236, %cst_91 {dimension_numbers = #tpu.dot_dimension_numbers<[1], [1], [0], [0], [0, 0, 1, 0], [], []>} : vector<16x64xbf16>, vector<16x64xbf16>, vector<16x16xf32> -> vector<16x16xf32>
    %cst_92 = arith.constant dense<0xFF800000> : vector<16xf32>
    %238 = vector.multi_reduction <maximumf>, %237, %cst_92 [1] : vector<16x16xf32> to vector<16xf32>
    %239 = vector.shape_cast %238 : vector<16xf32> to vector<16x1xf32>
    %240 = vector.broadcast %239 : vector<16x1xf32> to vector<16x16xf32>
    %241 = arith.subf %237, %240 : vector<16x16xf32>
    %242 = math.exp %241 : vector<16x16xf32>
    %cst_93 = arith.constant dense<0.000000e+00> : vector<16xf32>
    %243 = vector.multi_reduction <add>, %242, %cst_93 [1] : vector<16x16xf32> to vector<16xf32>
    %244 = vector.shape_cast %243 : vector<16xf32> to vector<16x1xf32>
    %245 = tpu.reciprocal %244 {approx = true} : vector<16x1xf32> -> vector<16x1xf32>
    %246 = vector.broadcast %245 : vector<16x1xf32> to vector<16x16xf32>
    %247 = arith.mulf %242, %246 : vector<16x16xf32>
    %248 = arith.truncf %247 : vector<16x16xf32> to vector<16x16xbf16>
    %249 = vector.extract_strided_slice %218 {offsets = [0, 64], sizes = [16, 64], strides = [1, 1]} : vector<16x512xbf16> to vector<16x64xbf16>
    %cst_94 = arith.constant dense<0.000000e+00> : vector<16x64xf32>
    %250 = tpu.matmul %248, %249, %cst_94 {dimension_numbers = #tpu.dot_dimension_numbers<[1], [0], [0], [1], [0, 0, 1, 1], [], []>} : vector<16x16xbf16>, vector<16x64xbf16>, vector<16x64xf32> -> vector<16x64xf32>
    %251 = vector.extract_strided_slice %214 {offsets = [0, 128], sizes = [16, 64], strides = [1, 1]} : vector<16x512xbf16> to vector<16x64xbf16>
    %252 = vector.extract_strided_slice %216 {offsets = [0, 128], sizes = [16, 64], strides = [1, 1]} : vector<16x512xbf16> to vector<16x64xbf16>
    %cst_95 = arith.constant dense<0.000000e+00> : vector<16x16xf32>
    %253 = tpu.matmul %251, %252, %cst_95 {dimension_numbers = #tpu.dot_dimension_numbers<[1], [1], [0], [0], [0, 0, 1, 0], [], []>} : vector<16x64xbf16>, vector<16x64xbf16>, vector<16x16xf32> -> vector<16x16xf32>
    %cst_96 = arith.constant dense<0xFF800000> : vector<16xf32>
    %254 = vector.multi_reduction <maximumf>, %253, %cst_96 [1] : vector<16x16xf32> to vector<16xf32>
    %255 = vector.shape_cast %254 : vector<16xf32> to vector<16x1xf32>
    %256 = vector.broadcast %255 : vector<16x1xf32> to vector<16x16xf32>
    %257 = arith.subf %253, %256 : vector<16x16xf32>
    %258 = math.exp %257 : vector<16x16xf32>
    %cst_97 = arith.constant dense<0.000000e+00> : vector<16xf32>
    %259 = vector.multi_reduction <add>, %258, %cst_97 [1] : vector<16x16xf32> to vector<16xf32>
    %260 = vector.shape_cast %259 : vector<16xf32> to vector<16x1xf32>
    %261 = tpu.reciprocal %260 {approx = true} : vector<16x1xf32> -> vector<16x1xf32>
    %262 = vector.broadcast %261 : vector<16x1xf32> to vector<16x16xf32>
    %263 = arith.mulf %258, %262 : vector<16x16xf32>
    %264 = arith.truncf %263 : vector<16x16xf32> to vector<16x16xbf16>
    %265 = vector.extract_strided_slice %218 {offsets = [0, 128], sizes = [16, 64], strides = [1, 1]} : vector<16x512xbf16> to vector<16x64xbf16>
    %cst_98 = arith.constant dense<0.000000e+00> : vector<16x64xf32>
    %266 = tpu.matmul %264, %265, %cst_98 {dimension_numbers = #tpu.dot_dimension_numbers<[1], [0], [0], [1], [0, 0, 1, 1], [], []>} : vector<16x16xbf16>, vector<16x64xbf16>, vector<16x64xf32> -> vector<16x64xf32>
    %267 = vector.extract_strided_slice %214 {offsets = [0, 192], sizes = [16, 64], strides = [1, 1]} : vector<16x512xbf16> to vector<16x64xbf16>
    %268 = vector.extract_strided_slice %216 {offsets = [0, 192], sizes = [16, 64], strides = [1, 1]} : vector<16x512xbf16> to vector<16x64xbf16>
    %cst_99 = arith.constant dense<0.000000e+00> : vector<16x16xf32>
    %269 = tpu.matmul %267, %268, %cst_99 {dimension_numbers = #tpu.dot_dimension_numbers<[1], [1], [0], [0], [0, 0, 1, 0], [], []>} : vector<16x64xbf16>, vector<16x64xbf16>, vector<16x16xf32> -> vector<16x16xf32>
    %cst_100 = arith.constant dense<0xFF800000> : vector<16xf32>
    %270 = vector.multi_reduction <maximumf>, %269, %cst_100 [1] : vector<16x16xf32> to vector<16xf32>
    %271 = vector.shape_cast %270 : vector<16xf32> to vector<16x1xf32>
    %272 = vector.broadcast %271 : vector<16x1xf32> to vector<16x16xf32>
    %273 = arith.subf %269, %272 : vector<16x16xf32>
    %274 = math.exp %273 : vector<16x16xf32>
    %cst_101 = arith.constant dense<0.000000e+00> : vector<16xf32>
    %275 = vector.multi_reduction <add>, %274, %cst_101 [1] : vector<16x16xf32> to vector<16xf32>
    %276 = vector.shape_cast %275 : vector<16xf32> to vector<16x1xf32>
    %277 = tpu.reciprocal %276 {approx = true} : vector<16x1xf32> -> vector<16x1xf32>
    %278 = vector.broadcast %277 : vector<16x1xf32> to vector<16x16xf32>
    %279 = arith.mulf %274, %278 : vector<16x16xf32>
    %280 = arith.truncf %279 : vector<16x16xf32> to vector<16x16xbf16>
    %281 = vector.extract_strided_slice %218 {offsets = [0, 192], sizes = [16, 64], strides = [1, 1]} : vector<16x512xbf16> to vector<16x64xbf16>
    %cst_102 = arith.constant dense<0.000000e+00> : vector<16x64xf32>
    %282 = tpu.matmul %280, %281, %cst_102 {dimension_numbers = #tpu.dot_dimension_numbers<[1], [0], [0], [1], [0, 0, 1, 1], [], []>} : vector<16x16xbf16>, vector<16x64xbf16>, vector<16x64xf32> -> vector<16x64xf32>
    %283 = vector.extract_strided_slice %214 {offsets = [0, 256], sizes = [16, 64], strides = [1, 1]} : vector<16x512xbf16> to vector<16x64xbf16>
    %284 = vector.extract_strided_slice %216 {offsets = [0, 256], sizes = [16, 64], strides = [1, 1]} : vector<16x512xbf16> to vector<16x64xbf16>
    %cst_103 = arith.constant dense<0.000000e+00> : vector<16x16xf32>
    %285 = tpu.matmul %283, %284, %cst_103 {dimension_numbers = #tpu.dot_dimension_numbers<[1], [1], [0], [0], [0, 0, 1, 0], [], []>} : vector<16x64xbf16>, vector<16x64xbf16>, vector<16x16xf32> -> vector<16x16xf32>
    %cst_104 = arith.constant dense<0xFF800000> : vector<16xf32>
    %286 = vector.multi_reduction <maximumf>, %285, %cst_104 [1] : vector<16x16xf32> to vector<16xf32>
    %287 = vector.shape_cast %286 : vector<16xf32> to vector<16x1xf32>
    %288 = vector.broadcast %287 : vector<16x1xf32> to vector<16x16xf32>
    %289 = arith.subf %285, %288 : vector<16x16xf32>
    %290 = math.exp %289 : vector<16x16xf32>
    %cst_105 = arith.constant dense<0.000000e+00> : vector<16xf32>
    %291 = vector.multi_reduction <add>, %290, %cst_105 [1] : vector<16x16xf32> to vector<16xf32>
    %292 = vector.shape_cast %291 : vector<16xf32> to vector<16x1xf32>
    %293 = tpu.reciprocal %292 {approx = true} : vector<16x1xf32> -> vector<16x1xf32>
    %294 = vector.broadcast %293 : vector<16x1xf32> to vector<16x16xf32>
    %295 = arith.mulf %290, %294 : vector<16x16xf32>
    %296 = arith.truncf %295 : vector<16x16xf32> to vector<16x16xbf16>
    %297 = vector.extract_strided_slice %218 {offsets = [0, 256], sizes = [16, 64], strides = [1, 1]} : vector<16x512xbf16> to vector<16x64xbf16>
    %cst_106 = arith.constant dense<0.000000e+00> : vector<16x64xf32>
    %298 = tpu.matmul %296, %297, %cst_106 {dimension_numbers = #tpu.dot_dimension_numbers<[1], [0], [0], [1], [0, 0, 1, 1], [], []>} : vector<16x16xbf16>, vector<16x64xbf16>, vector<16x64xf32> -> vector<16x64xf32>
    %299 = vector.extract_strided_slice %214 {offsets = [0, 320], sizes = [16, 64], strides = [1, 1]} : vector<16x512xbf16> to vector<16x64xbf16>
    %300 = vector.extract_strided_slice %216 {offsets = [0, 320], sizes = [16, 64], strides = [1, 1]} : vector<16x512xbf16> to vector<16x64xbf16>
    %cst_107 = arith.constant dense<0.000000e+00> : vector<16x16xf32>
    %301 = tpu.matmul %299, %300, %cst_107 {dimension_numbers = #tpu.dot_dimension_numbers<[1], [1], [0], [0], [0, 0, 1, 0], [], []>} : vector<16x64xbf16>, vector<16x64xbf16>, vector<16x16xf32> -> vector<16x16xf32>
    %cst_108 = arith.constant dense<0xFF800000> : vector<16xf32>
    %302 = vector.multi_reduction <maximumf>, %301, %cst_108 [1] : vector<16x16xf32> to vector<16xf32>
    %303 = vector.shape_cast %302 : vector<16xf32> to vector<16x1xf32>
    %304 = vector.broadcast %303 : vector<16x1xf32> to vector<16x16xf32>
    %305 = arith.subf %301, %304 : vector<16x16xf32>
    %306 = math.exp %305 : vector<16x16xf32>
    %cst_109 = arith.constant dense<0.000000e+00> : vector<16xf32>
    %307 = vector.multi_reduction <add>, %306, %cst_109 [1] : vector<16x16xf32> to vector<16xf32>
    %308 = vector.shape_cast %307 : vector<16xf32> to vector<16x1xf32>
    %309 = tpu.reciprocal %308 {approx = true} : vector<16x1xf32> -> vector<16x1xf32>
    %310 = vector.broadcast %309 : vector<16x1xf32> to vector<16x16xf32>
    %311 = arith.mulf %306, %310 : vector<16x16xf32>
    %312 = arith.truncf %311 : vector<16x16xf32> to vector<16x16xbf16>
    %313 = vector.extract_strided_slice %218 {offsets = [0, 320], sizes = [16, 64], strides = [1, 1]} : vector<16x512xbf16> to vector<16x64xbf16>
    %cst_110 = arith.constant dense<0.000000e+00> : vector<16x64xf32>
    %314 = tpu.matmul %312, %313, %cst_110 {dimension_numbers = #tpu.dot_dimension_numbers<[1], [0], [0], [1], [0, 0, 1, 1], [], []>} : vector<16x16xbf16>, vector<16x64xbf16>, vector<16x64xf32> -> vector<16x64xf32>
    %315 = vector.extract_strided_slice %214 {offsets = [0, 384], sizes = [16, 64], strides = [1, 1]} : vector<16x512xbf16> to vector<16x64xbf16>
    %316 = vector.extract_strided_slice %216 {offsets = [0, 384], sizes = [16, 64], strides = [1, 1]} : vector<16x512xbf16> to vector<16x64xbf16>
    %cst_111 = arith.constant dense<0.000000e+00> : vector<16x16xf32>
    %317 = tpu.matmul %315, %316, %cst_111 {dimension_numbers = #tpu.dot_dimension_numbers<[1], [1], [0], [0], [0, 0, 1, 0], [], []>} : vector<16x64xbf16>, vector<16x64xbf16>, vector<16x16xf32> -> vector<16x16xf32>
    %cst_112 = arith.constant dense<0xFF800000> : vector<16xf32>
    %318 = vector.multi_reduction <maximumf>, %317, %cst_112 [1] : vector<16x16xf32> to vector<16xf32>
    %319 = vector.shape_cast %318 : vector<16xf32> to vector<16x1xf32>
    %320 = vector.broadcast %319 : vector<16x1xf32> to vector<16x16xf32>
    %321 = arith.subf %317, %320 : vector<16x16xf32>
    %322 = math.exp %321 : vector<16x16xf32>
    %cst_113 = arith.constant dense<0.000000e+00> : vector<16xf32>
    %323 = vector.multi_reduction <add>, %322, %cst_113 [1] : vector<16x16xf32> to vector<16xf32>
    %324 = vector.shape_cast %323 : vector<16xf32> to vector<16x1xf32>
    %325 = tpu.reciprocal %324 {approx = true} : vector<16x1xf32> -> vector<16x1xf32>
    %326 = vector.broadcast %325 : vector<16x1xf32> to vector<16x16xf32>
    %327 = arith.mulf %322, %326 : vector<16x16xf32>
    %328 = arith.truncf %327 : vector<16x16xf32> to vector<16x16xbf16>
    %329 = vector.extract_strided_slice %218 {offsets = [0, 384], sizes = [16, 64], strides = [1, 1]} : vector<16x512xbf16> to vector<16x64xbf16>
    %cst_114 = arith.constant dense<0.000000e+00> : vector<16x64xf32>
    %330 = tpu.matmul %328, %329, %cst_114 {dimension_numbers = #tpu.dot_dimension_numbers<[1], [0], [0], [1], [0, 0, 1, 1], [], []>} : vector<16x16xbf16>, vector<16x64xbf16>, vector<16x64xf32> -> vector<16x64xf32>
    %331 = vector.extract_strided_slice %214 {offsets = [0, 448], sizes = [16, 64], strides = [1, 1]} : vector<16x512xbf16> to vector<16x64xbf16>
    %332 = vector.extract_strided_slice %216 {offsets = [0, 448], sizes = [16, 64], strides = [1, 1]} : vector<16x512xbf16> to vector<16x64xbf16>
    %cst_115 = arith.constant dense<0.000000e+00> : vector<16x16xf32>
    %333 = tpu.matmul %331, %332, %cst_115 {dimension_numbers = #tpu.dot_dimension_numbers<[1], [1], [0], [0], [0, 0, 1, 0], [], []>} : vector<16x64xbf16>, vector<16x64xbf16>, vector<16x16xf32> -> vector<16x16xf32>
    %cst_116 = arith.constant dense<0xFF800000> : vector<16xf32>
    %334 = vector.multi_reduction <maximumf>, %333, %cst_116 [1] : vector<16x16xf32> to vector<16xf32>
    %335 = vector.shape_cast %334 : vector<16xf32> to vector<16x1xf32>
    %336 = vector.broadcast %335 : vector<16x1xf32> to vector<16x16xf32>
    %337 = arith.subf %333, %336 : vector<16x16xf32>
    %338 = math.exp %337 : vector<16x16xf32>
    %cst_117 = arith.constant dense<0.000000e+00> : vector<16xf32>
    %339 = vector.multi_reduction <add>, %338, %cst_117 [1] : vector<16x16xf32> to vector<16xf32>
    %340 = vector.shape_cast %339 : vector<16xf32> to vector<16x1xf32>
    %341 = tpu.reciprocal %340 {approx = true} : vector<16x1xf32> -> vector<16x1xf32>
    %342 = vector.broadcast %341 : vector<16x1xf32> to vector<16x16xf32>
    %343 = arith.mulf %338, %342 : vector<16x16xf32>
    %344 = arith.truncf %343 : vector<16x16xf32> to vector<16x16xbf16>
    %345 = vector.extract_strided_slice %218 {offsets = [0, 448], sizes = [16, 64], strides = [1, 1]} : vector<16x512xbf16> to vector<16x64xbf16>
    %cst_118 = arith.constant dense<0.000000e+00> : vector<16x64xf32>
    %346 = tpu.matmul %344, %345, %cst_118 {dimension_numbers = #tpu.dot_dimension_numbers<[1], [0], [0], [1], [0, 0, 1, 1], [], []>} : vector<16x16xbf16>, vector<16x64xbf16>, vector<16x64xf32> -> vector<16x64xf32>
    %347 = tpu.concatenate %234, %250, %266, %282, %298, %314, %330, %346 in 1 : vector<16x64xf32>, vector<16x64xf32>, vector<16x64xf32>, vector<16x64xf32>, vector<16x64xf32>, vector<16x64xf32>, vector<16x64xf32>, vector<16x64xf32> -> vector<16x512xf32>
    %348 = arith.truncf %347 : vector<16x512xf32> to vector<16x512xbf16>
    %cst_119 = arith.constant dense<0.000000e+00> : vector<16x128xf32>
    %349 = tpu.matmul %348, %181, %cst_119 {dimension_numbers = #tpu.dot_dimension_numbers<[1], [0], [0], [1], [0, 0, 1, 1], [], []>} : vector<16x512xbf16>, vector<512x128xbf16>, vector<16x128xf32> -> vector<16x128xf32>
    %350 = vector.extract_strided_slice %183 {offsets = [2, 0], sizes = [1, 128], strides = [1, 1]} : vector<3x128xf32> to vector<1x128xf32>
    %351 = vector.broadcast %350 : vector<1x128xf32> to vector<16x128xf32>
    %352 = arith.addf %349, %351 : vector<16x128xf32>
    %353 = arith.addf %352, %175 : vector<16x128xf32>
    %c0_120 = arith.constant 0 : index
    %c0_121 = arith.constant 0 : index
    %c0_122 = arith.constant 0 : index
    %354 = vector.load %arg18[%c0_120, %c0_121, %c0_122] : memref<1x128x1024xbf16, #tpu.memory_space<vmem>>, vector<1x128x1024xbf16>
    %355 = vector.shape_cast %354 : vector<1x128x1024xbf16> to vector<128x1024xbf16>
    %c0_123 = arith.constant 0 : index
    %c0_124 = arith.constant 0 : index
    %c0_125 = arith.constant 0 : index
    %356 = vector.load %arg19[%c0_123, %c0_124, %c0_125] : memref<1x1x1024xf32, #tpu.memory_space<vmem>>, vector<1x1x1024xf32>
    %357 = vector.shape_cast %356 : vector<1x1x1024xf32> to vector<1x1024xf32>
    %c0_126 = arith.constant 0 : index
    %c0_127 = arith.constant 0 : index
    %c0_128 = arith.constant 0 : index
    %358 = vector.load %arg20[%c0_126, %c0_127, %c0_128] : memref<1x512x128xbf16, #tpu.memory_space<vmem>>, vector<1x512x128xbf16>
    %359 = vector.shape_cast %358 : vector<1x512x128xbf16> to vector<512x128xbf16>
    %c0_129 = arith.constant 0 : index
    %c0_130 = arith.constant 0 : index
    %c0_131 = arith.constant 0 : index
    %360 = vector.load %arg21[%c0_129, %c0_130, %c0_131] : memref<1x3x128xf32, #tpu.memory_space<vmem>>, vector<1x3x128xf32>
    %361 = vector.shape_cast %360 : vector<1x3x128xf32> to vector<3x128xf32>
    %362 = vector.extract_strided_slice %361 {offsets = [0, 0], sizes = [1, 128], strides = [1, 1]} : vector<3x128xf32> to vector<1x128xf32>
    %363 = vector.extract_strided_slice %361 {offsets = [1, 0], sizes = [1, 128], strides = [1, 1]} : vector<3x128xf32> to vector<1x128xf32>
    %cst_132 = arith.constant dense<0.000000e+00> : vector<16xf32>
    %364 = vector.multi_reduction <add>, %353, %cst_132 [1] : vector<16x128xf32> to vector<16xf32>
    %365 = vector.shape_cast %364 : vector<16xf32> to vector<16x1xf32>
    %cst_133 = arith.constant 1.280000e+02 : f32
    %366 = vector.broadcast %cst_133 : f32 to vector<16x1xf32>
    %367 = arith.divf %365, %366 : vector<16x1xf32>
    %368 = vector.broadcast %367 : vector<16x1xf32> to vector<16x128xf32>
    %369 = arith.subf %353, %368 : vector<16x128xf32>
    %370 = arith.mulf %369, %369 : vector<16x128xf32>
    %cst_134 = arith.constant dense<0.000000e+00> : vector<16xf32>
    %371 = vector.multi_reduction <add>, %370, %cst_134 [1] : vector<16x128xf32> to vector<16xf32>
    %372 = vector.shape_cast %371 : vector<16xf32> to vector<16x1xf32>
    %cst_135 = arith.constant 1.280000e+02 : f32
    %373 = vector.broadcast %cst_135 : f32 to vector<16x1xf32>
    %374 = arith.divf %372, %373 : vector<16x1xf32>
    %cst_136 = arith.constant 9.99999974E-6 : f32
    %375 = vector.broadcast %cst_136 : f32 to vector<16x1xf32>
    %376 = arith.addf %374, %375 : vector<16x1xf32>
    %377 = math.rsqrt %376 : vector<16x1xf32>
    %378 = vector.broadcast %367 : vector<16x1xf32> to vector<16x128xf32>
    %379 = arith.subf %353, %378 : vector<16x128xf32>
    %380 = vector.broadcast %377 : vector<16x1xf32> to vector<16x128xf32>
    %381 = arith.mulf %379, %380 : vector<16x128xf32>
    %382 = vector.broadcast %362 : vector<1x128xf32> to vector<16x128xf32>
    %383 = arith.mulf %381, %382 : vector<16x128xf32>
    %384 = vector.broadcast %363 : vector<1x128xf32> to vector<16x128xf32>
    %385 = arith.addf %383, %384 : vector<16x128xf32>
    %386 = arith.truncf %385 : vector<16x128xf32> to vector<16x128xbf16>
    %cst_137 = arith.constant dense<0.000000e+00> : vector<16x1024xf32>
    %387 = tpu.matmul %386, %355, %cst_137 {dimension_numbers = #tpu.dot_dimension_numbers<[1], [0], [0], [1], [0, 0, 1, 1], [], []>} : vector<16x128xbf16>, vector<128x1024xbf16>, vector<16x1024xf32> -> vector<16x1024xf32>
    %388 = vector.broadcast %357 : vector<1x1024xf32> to vector<16x1024xf32>
    %389 = arith.addf %387, %388 : vector<16x1024xf32>
    %390 = vector.extract_strided_slice %389 {offsets = [0, 0], sizes = [16, 512], strides = [1, 1]} : vector<16x1024xf32> to vector<16x512xf32>
    %391 = vector.extract_strided_slice %389 {offsets = [0, 512], sizes = [16, 512], strides = [1, 1]} : vector<16x1024xf32> to vector<16x512xf32>
    %cst_138 = arith.constant 5.000000e-01 : f32
    %392 = vector.broadcast %cst_138 : f32 to vector<16x512xf32>
    %393 = arith.mulf %392, %391 : vector<16x512xf32>
    %cst_139 = arith.constant 0.707106769 : f32
    %394 = vector.broadcast %cst_139 : f32 to vector<16x512xf32>
    %395 = arith.mulf %391, %394 : vector<16x512xf32>
    %cst_140 = arith.constant 0.000000e+00 : f32
    %396 = vector.broadcast %cst_140 : f32 to vector<16x512xf32>
    %397 = arith.cmpf oge, %395, %396 : vector<16x512xf32>
    %cst_141 = arith.constant 1.000000e+00 : f32
    %cst_142 = arith.constant -1.000000e+00 : f32
    %398 = vector.broadcast %cst_141 : f32 to vector<16x512xf32>
    %399 = vector.broadcast %cst_142 : f32 to vector<16x512xf32>
    %400 = arith.select %397, %398, %399 : vector<16x512xi1>, vector<16x512xf32>
    %401 = math.absf %395 : vector<16x512xf32>
    %cst_143 = arith.constant 0.327591091 : f32
    %402 = vector.broadcast %cst_143 : f32 to vector<16x512xf32>
    %403 = arith.mulf %402, %401 : vector<16x512xf32>
    %cst_144 = arith.constant 1.000000e+00 : f32
    %404 = vector.broadcast %cst_144 : f32 to vector<16x512xf32>
    %405 = arith.addf %404, %403 : vector<16x512xf32>
    %406 = tpu.reciprocal %405 {approx = true} : vector<16x512xf32> -> vector<16x512xf32>
    %cst_145 = arith.constant 1.06140542 : f32
    %407 = vector.broadcast %cst_145 : f32 to vector<16x512xf32>
    %408 = arith.mulf %407, %406 : vector<16x512xf32>
    %cst_146 = arith.constant -1.45315206 : f32
    %409 = vector.broadcast %cst_146 : f32 to vector<16x512xf32>
    %410 = arith.addf %408, %409 : vector<16x512xf32>
    %411 = arith.mulf %410, %406 : vector<16x512xf32>
    %cst_147 = arith.constant 1.42141378 : f32
    %412 = vector.broadcast %cst_147 : f32 to vector<16x512xf32>
    %413 = arith.addf %411, %412 : vector<16x512xf32>
    %414 = arith.mulf %413, %406 : vector<16x512xf32>
    %cst_148 = arith.constant -0.284496725 : f32
    %415 = vector.broadcast %cst_148 : f32 to vector<16x512xf32>
    %416 = arith.addf %414, %415 : vector<16x512xf32>
    %417 = arith.mulf %416, %406 : vector<16x512xf32>
    %cst_149 = arith.constant 0.254829586 : f32
    %418 = vector.broadcast %cst_149 : f32 to vector<16x512xf32>
    %419 = arith.addf %417, %418 : vector<16x512xf32>
    %420 = arith.mulf %419, %406 : vector<16x512xf32>
    %cst_150 = arith.constant 0.000000e+00 : f32
    %421 = vector.broadcast %cst_150 : f32 to vector<16x512xf32>
    %422 = arith.subf %421, %401 : vector<16x512xf32>
    %423 = arith.mulf %422, %401 : vector<16x512xf32>
    %424 = math.exp %423 : vector<16x512xf32>
    %425 = arith.mulf %420, %424 : vector<16x512xf32>
    %cst_151 = arith.constant 1.000000e+00 : f32
    %426 = vector.broadcast %cst_151 : f32 to vector<16x512xf32>
    %427 = arith.subf %426, %425 : vector<16x512xf32>
    %428 = arith.mulf %400, %427 : vector<16x512xf32>
    %cst_152 = arith.constant 1.000000e+00 : f32
    %429 = vector.broadcast %cst_152 : f32 to vector<16x512xf32>
    %430 = arith.addf %429, %428 : vector<16x512xf32>
    %431 = arith.mulf %393, %430 : vector<16x512xf32>
    %432 = arith.mulf %390, %431 : vector<16x512xf32>
    %433 = arith.truncf %432 : vector<16x512xf32> to vector<16x512xbf16>
    %cst_153 = arith.constant dense<0.000000e+00> : vector<16x128xf32>
    %434 = tpu.matmul %433, %359, %cst_153 {dimension_numbers = #tpu.dot_dimension_numbers<[1], [0], [0], [1], [0, 0, 1, 1], [], []>} : vector<16x512xbf16>, vector<512x128xbf16>, vector<16x128xf32> -> vector<16x128xf32>
    %435 = vector.extract_strided_slice %361 {offsets = [2, 0], sizes = [1, 128], strides = [1, 1]} : vector<3x128xf32> to vector<1x128xf32>
    %436 = vector.broadcast %435 : vector<1x128xf32> to vector<16x128xf32>
    %437 = arith.addf %434, %436 : vector<16x128xf32>
    %438 = arith.addf %437, %353 : vector<16x128xf32>
    %c0_154 = arith.constant 0 : index
    %c0_155 = arith.constant 0 : index
    %439 = vector.load %arg4[%c0_154, %c0_155] : memref<8x64xf32, #tpu.memory_space<vmem>>, vector<8x64xf32>
    %c0_156 = arith.constant 0 : index
    %c0_157 = arith.constant 0 : index
    %440 = vector.load %arg22[%c0_156, %c0_157] : memref<64x64xbf16, #tpu.memory_space<vmem>>, vector<64x64xbf16>
    %c0_158 = arith.constant 0 : index
    %c0_159 = arith.constant 0 : index
    %441 = vector.load %arg23[%c0_158, %c0_159] : memref<128x128xbf16, #tpu.memory_space<vmem>>, vector<128x128xbf16>
    %c0_160 = arith.constant 0 : index
    %c0_161 = arith.constant 0 : index
    %442 = vector.load %arg24[%c0_160, %c0_161] : memref<64x64xbf16, #tpu.memory_space<vmem>>, vector<64x64xbf16>
    %c0_162 = arith.constant 0 : index
    %c0_163 = arith.constant 0 : index
    %443 = vector.load %arg25[%c0_162, %c0_163] : memref<3x64xf32, #tpu.memory_space<vmem>>, vector<3x64xf32>
    %c0_164 = arith.constant 0 : index
    %c0_165 = arith.constant 0 : index
    %444 = vector.load %arg26[%c0_164, %c0_165] : memref<2x128xf32, #tpu.memory_space<vmem>>, vector<2x128xf32>
    %445 = vector.extract_strided_slice %443 {offsets = [0, 0], sizes = [1, 64], strides = [1, 1]} : vector<3x64xf32> to vector<1x64xf32>
    %446 = vector.extract_strided_slice %443 {offsets = [1, 0], sizes = [1, 64], strides = [1, 1]} : vector<3x64xf32> to vector<1x64xf32>
    %cst_166 = arith.constant dense<0.000000e+00> : vector<8xf32>
    %447 = vector.multi_reduction <add>, %439, %cst_166 [1] : vector<8x64xf32> to vector<8xf32>
    %448 = vector.shape_cast %447 : vector<8xf32> to vector<8x1xf32>
    %cst_167 = arith.constant 6.400000e+01 : f32
    %449 = vector.broadcast %cst_167 : f32 to vector<8x1xf32>
    %450 = arith.divf %448, %449 : vector<8x1xf32>
    %451 = vector.broadcast %450 : vector<8x1xf32> to vector<8x64xf32>
    %452 = arith.subf %439, %451 : vector<8x64xf32>
    %453 = arith.mulf %452, %452 : vector<8x64xf32>
    %cst_168 = arith.constant dense<0.000000e+00> : vector<8xf32>
    %454 = vector.multi_reduction <add>, %453, %cst_168 [1] : vector<8x64xf32> to vector<8xf32>
    %455 = vector.shape_cast %454 : vector<8xf32> to vector<8x1xf32>
    %cst_169 = arith.constant 6.400000e+01 : f32
    %456 = vector.broadcast %cst_169 : f32 to vector<8x1xf32>
    %457 = arith.divf %455, %456 : vector<8x1xf32>
    %cst_170 = arith.constant 9.99999974E-6 : f32
    %458 = vector.broadcast %cst_170 : f32 to vector<8x1xf32>
    %459 = arith.addf %457, %458 : vector<8x1xf32>
    %460 = math.rsqrt %459 : vector<8x1xf32>
    %461 = vector.broadcast %450 : vector<8x1xf32> to vector<8x64xf32>
    %462 = arith.subf %439, %461 : vector<8x64xf32>
    %463 = vector.broadcast %460 : vector<8x1xf32> to vector<8x64xf32>
    %464 = arith.mulf %462, %463 : vector<8x64xf32>
    %465 = vector.broadcast %445 : vector<1x64xf32> to vector<8x64xf32>
    %466 = arith.mulf %464, %465 : vector<8x64xf32>
    %467 = vector.broadcast %446 : vector<1x64xf32> to vector<8x64xf32>
    %468 = arith.addf %466, %467 : vector<8x64xf32>
    %469 = vector.extract_strided_slice %444 {offsets = [0, 0], sizes = [1, 128], strides = [1, 1]} : vector<2x128xf32> to vector<1x128xf32>
    %470 = vector.extract_strided_slice %444 {offsets = [1, 0], sizes = [1, 128], strides = [1, 1]} : vector<2x128xf32> to vector<1x128xf32>
    %cst_171 = arith.constant dense<0.000000e+00> : vector<16xf32>
    %471 = vector.multi_reduction <add>, %438, %cst_171 [1] : vector<16x128xf32> to vector<16xf32>
    %472 = vector.shape_cast %471 : vector<16xf32> to vector<16x1xf32>
    %cst_172 = arith.constant 1.280000e+02 : f32
    %473 = vector.broadcast %cst_172 : f32 to vector<16x1xf32>
    %474 = arith.divf %472, %473 : vector<16x1xf32>
    %475 = vector.broadcast %474 : vector<16x1xf32> to vector<16x128xf32>
    %476 = arith.subf %438, %475 : vector<16x128xf32>
    %477 = arith.mulf %476, %476 : vector<16x128xf32>
    %cst_173 = arith.constant dense<0.000000e+00> : vector<16xf32>
    %478 = vector.multi_reduction <add>, %477, %cst_173 [1] : vector<16x128xf32> to vector<16xf32>
    %479 = vector.shape_cast %478 : vector<16xf32> to vector<16x1xf32>
    %cst_174 = arith.constant 1.280000e+02 : f32
    %480 = vector.broadcast %cst_174 : f32 to vector<16x1xf32>
    %481 = arith.divf %479, %480 : vector<16x1xf32>
    %cst_175 = arith.constant 9.99999974E-6 : f32
    %482 = vector.broadcast %cst_175 : f32 to vector<16x1xf32>
    %483 = arith.addf %481, %482 : vector<16x1xf32>
    %484 = math.rsqrt %483 : vector<16x1xf32>
    %485 = vector.broadcast %474 : vector<16x1xf32> to vector<16x128xf32>
    %486 = arith.subf %438, %485 : vector<16x128xf32>
    %487 = vector.broadcast %484 : vector<16x1xf32> to vector<16x128xf32>
    %488 = arith.mulf %486, %487 : vector<16x128xf32>
    %489 = vector.broadcast %469 : vector<1x128xf32> to vector<16x128xf32>
    %490 = arith.mulf %488, %489 : vector<16x128xf32>
    %491 = vector.broadcast %470 : vector<1x128xf32> to vector<16x128xf32>
    %492 = arith.addf %490, %491 : vector<16x128xf32>
    %493 = arith.truncf %468 : vector<8x64xf32> to vector<8x64xbf16>
    %cst_176 = arith.constant dense<0.000000e+00> : vector<8x64xf32>
    %494 = tpu.matmul %493, %440, %cst_176 {dimension_numbers = #tpu.dot_dimension_numbers<[1], [0], [0], [1], [0, 0, 1, 1], [], []>} : vector<8x64xbf16>, vector<64x64xbf16>, vector<8x64xf32> -> vector<8x64xf32>
    %495 = arith.truncf %492 : vector<16x128xf32> to vector<16x128xbf16>
    %cst_177 = arith.constant dense<0.000000e+00> : vector<16x128xf32>
    %496 = tpu.matmul %495, %441, %cst_177 {dimension_numbers = #tpu.dot_dimension_numbers<[1], [0], [0], [1], [0, 0, 1, 1], [], []>} : vector<16x128xbf16>, vector<128x128xbf16>, vector<16x128xf32> -> vector<16x128xf32>
    %cst_178 = arith.constant 1.250000e-01 : f32
    %497 = vector.broadcast %cst_178 : f32 to vector<8x64xf32>
    %498 = arith.mulf %494, %497 : vector<8x64xf32>
    %499 = arith.truncf %498 : vector<8x64xf32> to vector<8x64xbf16>
    %500 = vector.extract_strided_slice %496 {offsets = [0, 0], sizes = [16, 64], strides = [1, 1]} : vector<16x128xf32> to vector<16x64xf32>
    %501 = arith.truncf %500 : vector<16x64xf32> to vector<16x64xbf16>
    %502 = vector.extract_strided_slice %496 {offsets = [0, 64], sizes = [16, 64], strides = [1, 1]} : vector<16x128xf32> to vector<16x64xf32>
    %503 = arith.truncf %502 : vector<16x64xf32> to vector<16x64xbf16>
    %cst_179 = arith.constant dense<0.000000e+00> : vector<8x16xf32>
    %504 = tpu.matmul %499, %501, %cst_179 {dimension_numbers = #tpu.dot_dimension_numbers<[1], [1], [0], [0], [0, 0, 1, 0], [], []>} : vector<8x64xbf16>, vector<16x64xbf16>, vector<8x16xf32> -> vector<8x16xf32>
    %cst_180 = arith.constant dense<0xFF800000> : vector<8xf32>
    %505 = vector.multi_reduction <maximumf>, %504, %cst_180 [1] : vector<8x16xf32> to vector<8xf32>
    %506 = vector.shape_cast %505 : vector<8xf32> to vector<8x1xf32>
    %507 = vector.broadcast %506 : vector<8x1xf32> to vector<8x16xf32>
    %508 = arith.subf %504, %507 : vector<8x16xf32>
    %509 = math.exp %508 : vector<8x16xf32>
    %cst_181 = arith.constant dense<0.000000e+00> : vector<8xf32>
    %510 = vector.multi_reduction <add>, %509, %cst_181 [1] : vector<8x16xf32> to vector<8xf32>
    %511 = vector.shape_cast %510 : vector<8xf32> to vector<8x1xf32>
    %512 = tpu.reciprocal %511 {approx = true} : vector<8x1xf32> -> vector<8x1xf32>
    %513 = vector.broadcast %512 : vector<8x1xf32> to vector<8x16xf32>
    %514 = arith.mulf %509, %513 : vector<8x16xf32>
    %515 = arith.truncf %514 : vector<8x16xf32> to vector<8x16xbf16>
    %cst_182 = arith.constant dense<0.000000e+00> : vector<8x64xf32>
    %516 = tpu.matmul %515, %503, %cst_182 {dimension_numbers = #tpu.dot_dimension_numbers<[1], [0], [0], [1], [0, 0, 1, 1], [], []>} : vector<8x16xbf16>, vector<16x64xbf16>, vector<8x64xf32> -> vector<8x64xf32>
    %517 = arith.truncf %516 : vector<8x64xf32> to vector<8x64xbf16>
    %cst_183 = arith.constant dense<0.000000e+00> : vector<8x64xf32>
    %518 = tpu.matmul %517, %442, %cst_183 {dimension_numbers = #tpu.dot_dimension_numbers<[1], [0], [0], [1], [0, 0, 1, 1], [], []>} : vector<8x64xbf16>, vector<64x64xbf16>, vector<8x64xf32> -> vector<8x64xf32>
    %519 = vector.extract_strided_slice %443 {offsets = [2, 0], sizes = [1, 64], strides = [1, 1]} : vector<3x64xf32> to vector<1x64xf32>
    %520 = vector.broadcast %519 : vector<1x64xf32> to vector<8x64xf32>
    %521 = arith.addf %518, %520 : vector<8x64xf32>
    %c0_184 = arith.constant 0 : index
    %c0_185 = arith.constant 0 : index
    %c0_186 = arith.constant 0 : index
    %522 = vector.load %arg27[%c0_184, %c0_185, %c0_186] : memref<1x8x64xf32, #tpu.memory_space<vmem>>, vector<1x8x64xf32>
    %523 = vector.shape_cast %522 : vector<1x8x64xf32> to vector<8x64xf32>
    %524 = vector.shape_cast %521 : vector<8x64xf32> to vector<1x8x64xf32>
    tpu.vector_store %arg27[%c0_184, %c0_185, %c0_186], %524 {strides = array<i32>} : memref<1x8x64xf32, #tpu.memory_space<vmem>>, vector<1x8x64xf32>,
    return
  }
  func.func @transform_0(%arg0: i32) -> (i32, i32, i32) {
    %c0_i32 = arith.constant 0 : i32
    %c0_i32_0 = arith.constant 0 : i32
    %c0_i32_1 = arith.constant 0 : i32
    return %arg0, %c0_i32, %c0_i32_0 : i32, i32, i32
  }
  func.func @transform_1(%arg0: i32) -> (i32, i32, i32) {
    %c0_i32 = arith.constant 0 : i32
    %c0_i32_0 = arith.constant 0 : i32
    %c0_i32_1 = arith.constant 0 : i32
    return %arg0, %c0_i32, %c0_i32_0 : i32, i32, i32
  }
  func.func @transform_2(%arg0: i32) -> (i32, i32) {
    %c0_i32 = arith.constant 0 : i32
    %c0_i32_0 = arith.constant 0 : i32
    %c0_i32_1 = arith.constant 0 : i32
    return %c0_i32, %c0_i32_0 : i32, i32
  }
  func.func @transform_3(%arg0: i32) -> (i32, i32) {
    %c0_i32 = arith.constant 0 : i32
    %c0_i32_0 = arith.constant 0 : i32
    %c0_i32_1 = arith.constant 0 : i32
    return %c0_i32, %c0_i32_0 : i32, i32
  }
  func.func @transform_4(%arg0: i32) -> (i32, i32) {
    %c0_i32 = arith.constant 0 : i32
    %c0_i32_0 = arith.constant 0 : i32
    %c0_i32_1 = arith.constant 0 : i32
    return %c0_i32, %c0_i32_0 : i32, i32
  }
  func.func @transform_5(%arg0: i32) -> (i32, i32) {
    %c0_i32 = arith.constant 0 : i32
    %c0_i32_0 = arith.constant 0 : i32
    %c0_i32_1 = arith.constant 0 : i32
    return %c0_i32, %c0_i32_0 : i32, i32
  }
  func.func @transform_6(%arg0: i32) -> (i32, i32) {
    %c0_i32 = arith.constant 0 : i32
    %c0_i32_0 = arith.constant 0 : i32
    %c0_i32_1 = arith.constant 0 : i32
    return %c0_i32, %c0_i32_0 : i32, i32
  }
  func.func @transform_7(%arg0: i32) -> (i32, i32) {
    %c0_i32 = arith.constant 0 : i32
    %c0_i32_0 = arith.constant 0 : i32
    %c0_i32_1 = arith.constant 0 : i32
    return %c0_i32, %c0_i32_0 : i32, i32
  }
  func.func @transform_8(%arg0: i32) -> (i32, i32) {
    %c0_i32 = arith.constant 0 : i32
    %c0_i32_0 = arith.constant 0 : i32
    %c0_i32_1 = arith.constant 0 : i32
    return %c0_i32, %c0_i32_0 : i32, i32
  }
  func.func @transform_9(%arg0: i32) -> (i32, i32) {
    %c0_i32 = arith.constant 0 : i32
    %c0_i32_0 = arith.constant 0 : i32
    %c0_i32_1 = arith.constant 0 : i32
    return %c0_i32, %c0_i32_0 : i32, i32
  }
  func.func @transform_10(%arg0: i32) -> (i32, i32) {
    %c0_i32 = arith.constant 0 : i32
    %c0_i32_0 = arith.constant 0 : i32
    %c0_i32_1 = arith.constant 0 : i32
    return %c0_i32, %c0_i32_0 : i32, i32
  }
  func.func @transform_11(%arg0: i32) -> (i32, i32) {
    %c0_i32 = arith.constant 0 : i32
    %c0_i32_0 = arith.constant 0 : i32
    %c0_i32_1 = arith.constant 0 : i32
    return %c0_i32, %c0_i32_0 : i32, i32
  }
  func.func @transform_12(%arg0: i32) -> (i32, i32) {
    %c0_i32 = arith.constant 0 : i32
    %c0_i32_0 = arith.constant 0 : i32
    %c0_i32_1 = arith.constant 0 : i32
    return %c0_i32, %c0_i32_0 : i32, i32
  }
  func.func @transform_13(%arg0: i32) -> (i32, i32, i32) {
    %c0_i32 = arith.constant 0 : i32
    %c0_i32_0 = arith.constant 0 : i32
    %c0_i32_1 = arith.constant 0 : i32
    %c0_i32_2 = arith.constant 0 : i32
    return %c0_i32, %c0_i32_0, %c0_i32_1 : i32, i32, i32
  }
  func.func @transform_14(%arg0: i32) -> (i32, i32, i32) {
    %c0_i32 = arith.constant 0 : i32
    %c0_i32_0 = arith.constant 0 : i32
    %c0_i32_1 = arith.constant 0 : i32
    %c0_i32_2 = arith.constant 0 : i32
    return %c0_i32, %c0_i32_0, %c0_i32_1 : i32, i32, i32
  }
  func.func @transform_15(%arg0: i32) -> (i32, i32, i32) {
    %c0_i32 = arith.constant 0 : i32
    %c0_i32_0 = arith.constant 0 : i32
    %c0_i32_1 = arith.constant 0 : i32
    %c0_i32_2 = arith.constant 0 : i32
    return %c0_i32, %c0_i32_0, %c0_i32_1 : i32, i32, i32
  }
  func.func @transform_16(%arg0: i32) -> (i32, i32, i32) {
    %c0_i32 = arith.constant 0 : i32
    %c0_i32_0 = arith.constant 0 : i32
    %c0_i32_1 = arith.constant 0 : i32
    %c0_i32_2 = arith.constant 0 : i32
    return %c0_i32, %c0_i32_0, %c0_i32_1 : i32, i32, i32
  }
  func.func @transform_17(%arg0: i32) -> (i32, i32, i32) {
    %c0_i32 = arith.constant 0 : i32
    %c0_i32_0 = arith.constant 0 : i32
    %c0_i32_1 = arith.constant 0 : i32
    %c0_i32_2 = arith.constant 0 : i32
    return %c0_i32, %c0_i32_0, %c0_i32_1 : i32, i32, i32
  }
  func.func @transform_18(%arg0: i32) -> (i32, i32, i32) {
    %c0_i32 = arith.constant 0 : i32
    %c0_i32_0 = arith.constant 0 : i32
    %c0_i32_1 = arith.constant 0 : i32
    %c0_i32_2 = arith.constant 0 : i32
    return %c0_i32, %c0_i32_0, %c0_i32_1 : i32, i32, i32
  }
  func.func @transform_19(%arg0: i32) -> (i32, i32, i32) {
    %c0_i32 = arith.constant 0 : i32
    %c0_i32_0 = arith.constant 0 : i32
    %c0_i32_1 = arith.constant 0 : i32
    %c0_i32_2 = arith.constant 0 : i32
    return %c0_i32, %c0_i32_0, %c0_i32_1 : i32, i32, i32
  }
  func.func @transform_20(%arg0: i32) -> (i32, i32, i32) {
    %c0_i32 = arith.constant 0 : i32
    %c0_i32_0 = arith.constant 0 : i32
    %c0_i32_1 = arith.constant 0 : i32
    %c0_i32_2 = arith.constant 0 : i32
    return %c0_i32, %c0_i32_0, %c0_i32_1 : i32, i32, i32
  }
  func.func @transform_21(%arg0: i32) -> (i32, i32) {
    %c0_i32 = arith.constant 0 : i32
    %c0_i32_0 = arith.constant 0 : i32
    %c0_i32_1 = arith.constant 0 : i32
    return %c0_i32, %c0_i32_0 : i32, i32
  }
  func.func @transform_22(%arg0: i32) -> (i32, i32) {
    %c0_i32 = arith.constant 0 : i32
    %c0_i32_0 = arith.constant 0 : i32
    %c0_i32_1 = arith.constant 0 : i32
    return %c0_i32, %c0_i32_0 : i32, i32
  }
  func.func @transform_23(%arg0: i32) -> (i32, i32) {
    %c0_i32 = arith.constant 0 : i32
    %c0_i32_0 = arith.constant 0 : i32
    %c0_i32_1 = arith.constant 0 : i32
    return %c0_i32, %c0_i32_0 : i32, i32
  }
  func.func @transform_24(%arg0: i32) -> (i32, i32) {
    %c0_i32 = arith.constant 0 : i32
    %c0_i32_0 = arith.constant 0 : i32
    %c0_i32_1 = arith.constant 0 : i32
    return %c0_i32, %c0_i32_0 : i32, i32
  }
  func.func @transform_25(%arg0: i32) -> (i32, i32) {
    %c0_i32 = arith.constant 0 : i32
    %c0_i32_0 = arith.constant 0 : i32
    %c0_i32_1 = arith.constant 0 : i32
    return %c0_i32, %c0_i32_0 : i32, i32
  }
  func.func @transform_26(%arg0: i32) -> (i32, i32, i32) {
    %c0_i32 = arith.constant 0 : i32
    %c0_i32_0 = arith.constant 0 : i32
    %c0_i32_1 = arith.constant 0 : i32
    return %arg0, %c0_i32, %c0_i32_0 : i32, i32, i32
  }
}

</mosaic_0001>

<llo_original>
// kernel: infer_func_forward.1
$region0: #{infer_func_forward.1}
  #allocation0 [shape = 'u32[]', space=smem, size = 0x4, offset = 0x4, fixed_abs, tag = 'smem constant byte address 0x4 - core index']
  #allocation1 [shape = 'u32[144,128]{1,0:T(1,128)}', space=vmem, size = 0x12000, scoped, tag = 'internal scratch']
  %s0 = inlined_call_operand.vmem [shape: f32[2,32,128], index: 0, kind: input, shape index: {}]
  %s1 = inlined_call_operand.vmem [shape: f32[2,1,32], index: 1, kind: input, shape index: {}]
  %s2 = inlined_call_operand.vmem [shape: f32[16,128], index: 2, kind: input, shape index: {}]
  %s3 = inlined_call_operand.vmem [shape: f32[8,64], index: 3, kind: input, shape index: {}]
  %s4 = inlined_call_operand.vmem [shape: bf16[128,64], index: 4, kind: input, shape index: {}]
  %s5 = inlined_call_operand.vmem [shape: bf16[128,128], index: 5, kind: input, shape index: {}]
  %s6 = inlined_call_operand.vmem [shape: bf16[64,128], index: 6, kind: input, shape index: {}]
  %s7 = inlined_call_operand.vmem [shape: f32[3,128], index: 7, kind: input, shape index: {}]
  %s8 = inlined_call_operand.vmem [shape: f32[2,128], index: 8, kind: input, shape index: {}]
  %s9 = inlined_call_operand.vmem [shape: bf16[128,1024], index: 9, kind: input, shape index: {}]
  %s10 = inlined_call_operand.vmem [shape: f32[1,1024], index: 10, kind: input, shape index: {}]
  %s11 = inlined_call_operand.vmem [shape: bf16[512,128], index: 11, kind: input, shape index: {}]
  %s12 = inlined_call_operand.vmem [shape: f32[3,128], index: 12, kind: input, shape index: {}]
  %s13 = inlined_call_operand.vmem [shape: bf16[1,128,512], index: 13, kind: input, shape index: {}]
  %s14 = inlined_call_operand.vmem [shape: bf16[1,128,1024], index: 14, kind: input, shape index: {}]
  %s15 = inlined_call_operand.vmem [shape: bf16[1,512,128], index: 15, kind: input, shape index: {}]
  %s16 = inlined_call_operand.vmem [shape: f32[1,3,128], index: 16, kind: input, shape index: {}]
  %s17 = inlined_call_operand.vmem [shape: bf16[1,128,1024], index: 17, kind: input, shape index: {}]
  %s18 = inlined_call_operand.vmem [shape: f32[1,1,1024], index: 18, kind: input, shape index: {}]
  %s19 = inlined_call_operand.vmem [shape: bf16[1,512,128], index: 19, kind: input, shape index: {}]
  %s20 = inlined_call_operand.vmem [shape: f32[1,3,128], index: 20, kind: input, shape index: {}]
  %s21 = inlined_call_operand.vmem [shape: bf16[64,64], index: 21, kind: input, shape index: {}]
  %s22 = inlined_call_operand.vmem [shape: bf16[128,128], index: 22, kind: input, shape index: {}]
  %s23 = inlined_call_operand.vmem [shape: bf16[64,64], index: 23, kind: input, shape index: {}]
  %s24 = inlined_call_operand.vmem [shape: f32[3,64], index: 24, kind: input, shape index: {}]
  %s25 = inlined_call_operand.vmem [shape: f32[2,128], index: 25, kind: input, shape index: {}]
  %s26 = inlined_call_operand.vmem [shape: f32[2,8,64], index: 26, kind: output, shape index: {}]
  %s27 = sld [smem:[#allocation0]]
  $region137: #{infer_func_forward.1} parent=0
    _
  %s29 = ssub.s32 1, %s27
  %s30 = scalar_select 0, %s29, %s27
  loop: start=0, step=1, limit=4
  $region2: #{infer_func_forward.1} parent=0 // loop_pre_header
    _
  $region3: #{infer_func_forward.1} parent=0 // loop_header
    %s32 = sphi 0, %s36
    %p33 = scmp.ge.s32.totalorder %s32, 4
    %s42 = sphi 0, %s44
    %s45 = sphi 0, %s42
    %s46 = sphi 0, %s45
    %s62 = sphi 0, %s46
    %s68 = sphi 0, %s70
    %s71 = sphi 0, %s68
    %s72 = sphi 0, %s71
    %s88 = sphi 0, %s72
    %s92 = sphi 0, %s92
    %s94 = sphi 0, %s92
    %s95 = sphi 0, %s94
    %s109 = sphi 0, %s95
    %s113 = sphi 0, %s113
    %s115 = sphi 0, %s113
    %s116 = sphi 0, %s115
    %s130 = sphi 0, %s116
    %s134 = sphi 0, %s134
    %s136 = sphi 0, %s134
    %s137 = sphi 0, %s136
    %s151 = sphi 0, %s137
    %s155 = sphi 0, %s155
    %s157 = sphi 0, %s155
    %s158 = sphi 0, %s157
    %s172 = sphi 0, %s158
    %s176 = sphi 0, %s176
    %s178 = sphi 0, %s176
    %s179 = sphi 0, %s178
    %s193 = sphi 0, %s179
    %s197 = sphi 0, %s197
    %s199 = sphi 0, %s197
    %s200 = sphi 0, %s199
    %s214 = sphi 0, %s200
    %s218 = sphi 0, %s218
    %s220 = sphi 0, %s218
    %s221 = sphi 0, %s220
    %s235 = sphi 0, %s221
    %s239 = sphi 0, %s239
    %s241 = sphi 0, %s239
    %s242 = sphi 0, %s241
    %s256 = sphi 0, %s242
    %s260 = sphi 0, %s260
    %s262 = sphi 0, %s260
    %s263 = sphi 0, %s262
    %s277 = sphi 0, %s263
    %s281 = sphi 0, %s281
    %s283 = sphi 0, %s281
    %s284 = sphi 0, %s283
    %s298 = sphi 0, %s284
    %s302 = sphi 0, %s302
    %s304 = sphi 0, %s302
    %s305 = sphi 0, %s304
    %s319 = sphi 0, %s305
    %s323 = sphi 0, %s323
    %s325 = sphi 0, %s323
    %s326 = sphi 0, %s325
    %s340 = sphi 0, %s326
    %s344 = sphi 0, %s344
    %s346 = sphi 0, %s344
    %s347 = sphi 0, %s346
    %s361 = sphi 0, %s347
    %s365 = sphi 0, %s365
    %s367 = sphi 0, %s365
    %s368 = sphi 0, %s367
    %s382 = sphi 0, %s368
    %s386 = sphi 0, %s386
    %s388 = sphi 0, %s386
    %s389 = sphi 0, %s388
    %s403 = sphi 0, %s389
    %s407 = sphi 0, %s407
    %s409 = sphi 0, %s407
    %s410 = sphi 0, %s409
    %s424 = sphi 0, %s410
    %s428 = sphi 0, %s428
    %s430 = sphi 0, %s428
    %s431 = sphi 0, %s430
    %s445 = sphi 0, %s431
    %s449 = sphi 0, %s449
    %s451 = sphi 0, %s449
    %s452 = sphi 0, %s451
    %s466 = sphi 0, %s452
    %s470 = sphi 0, %s470
    %s472 = sphi 0, %s470
    %s473 = sphi 0, %s472
    %s487 = sphi 0, %s473
    %s491 = sphi 0, %s491
    %s493 = sphi 0, %s491
    %s494 = sphi 0, %s493
    %s508 = sphi 0, %s494
    %s512 = sphi 0, %s512
    %s514 = sphi 0, %s512
    %s515 = sphi 0, %s514
    %s529 = sphi 0, %s515
    %s533 = sphi 0, %s533
    %s535 = sphi 0, %s533
    %s536 = sphi 0, %s535
    %s550 = sphi 0, %s536
    %s554 = sphi 0, %s554
    %s556 = sphi 0, %s554
    %s557 = sphi 0, %s556
    %s571 = sphi 0, %s557
    %s575 = sphi 0, %s575
    %s577 = sphi 0, %s575
    %s578 = sphi 0, %s577
    %s592 = sphi 0, %s578
    %s598 = sphi 0, %s600
    %s601 = sphi 0, %s598
    %s602 = sphi 0, %s601
    %s618 = sphi 0, %s602
  $region4: #{infer_func_forward.1} parent=0 // loop_header_branch
    %35 = sbr.rel (%p33) target = $region8
  $region5: #{infer_func_forward.1} parent=0 // loop_body
    %s37 = ssub.s32 %s32, 1
    %s38 = ssub.s32 %s32, 2
    %s39 = sadd.s32 %s32, 1
    %s40 = ssub.s32 %s32, %s39
    %p41 = scmp.eq.s32.totalorder %s40, 0
    %s43 = sadd.s32 %s42, 1
    %s44 = scalar_select %p41, %s42, %s43
    %p47 = pneg %p41
    %p48 = scmp.eq.s32.totalorder %s32, 1
    %p49 = por %p47, %p48
    %p50 = scmp.ne.s32.totalorder %s42, %s45
    %p51 = scmp.eq.s32.totalorder %s32, 0
    %p52 = por %p50, %p51
    %p53 = scmp.ne.s32.totalorder %s42, %s45
    %p54 = scmp.eq.s32.totalorder %s37, 1
    %p55 = por %p53, %p54
    %p56 = scmp.ne.s32.totalorder %s45, %s46
    %p57 = scmp.eq.s32.totalorder %s37, 0
    %p58 = por %p56, %p57
    %p59 = scmp.ne.s32.totalorder %s45, %s46
    %p60 = scmp.eq.s32.totalorder %s38, 1
    %p61 = por %p59, %p60
    %p63 = scmp.ne.s32.totalorder %s46, %s62
    %p64 = scmp.eq.s32.totalorder %s38, 0
    %p65 = por %p63, %p64
    %s66 = ssub.s32 %s32, %s39
    %p67 = scmp.eq.s32.totalorder %s66, 0
    %s69 = sadd.s32 %s68, 1
    %s70 = scalar_select %p67, %s68, %s69
    %p73 = pneg %p67
    %p74 = scmp.eq.s32.totalorder %s32, 1
    %p75 = por %p73, %p74
    %p76 = scmp.ne.s32.totalorder %s68, %s71
    %p77 = scmp.eq.s32.totalorder %s32, 0
    %p78 = por %p76, %p77
    %p79 = scmp.ne.s32.totalorder %s68, %s71
    %p80 = scmp.eq.s32.totalorder %s37, 1
    %p81 = por %p79, %p80
    %p82 = scmp.ne.s32.totalorder %s71, %s72
    %p83 = scmp.eq.s32.totalorder %s37, 0
    %p84 = por %p82, %p83
    %p85 = scmp.ne.s32.totalorder %s71, %s72
    %p86 = scmp.eq.s32.totalorder %s38, 1
    %p87 = por %p85, %p86
    %p89 = scmp.ne.s32.totalorder %s72, %s88
    %p90 = scmp.eq.s32.totalorder %s38, 0
    %p91 = por %p89, %p90
    %s93 = sadd.s32 %s92, 1
    %p96 = scmp.eq.s32.totalorder %s32, 1
    %p97 = scmp.ne.s32.totalorder %s92, %s94
    %p98 = scmp.eq.s32.totalorder %s32, 0
    %p99 = por %p97, %p98
    %p100 = scmp.ne.s32.totalorder %s92, %s94
    %p101 = scmp.eq.s32.totalorder %s37, 1
    %p102 = por %p100, %p101
    %p103 = scmp.ne.s32.totalorder %s94, %s95
    %p104 = scmp.eq.s32.totalorder %s37, 0
    %p105 = por %p103, %p104
    %p106 = scmp.ne.s32.totalorder %s94, %s95
    %p107 = scmp.eq.s32.totalorder %s38, 1
    %p108 = por %p106, %p107
    %p110 = scmp.ne.s32.totalorder %s95, %s109
    %p111 = scmp.eq.s32.totalorder %s38, 0
    %p112 = por %p110, %p111
    %s114 = sadd.s32 %s113, 1
    %p117 = scmp.eq.s32.totalorder %s32, 1
    %p118 = scmp.ne.s32.totalorder %s113, %s115
    %p119 = scmp.eq.s32.totalorder %s32, 0
    %p120 = por %p118, %p119
    %p121 = scmp.ne.s32.totalorder %s113, %s115
    %p122 = scmp.eq.s32.totalorder %s37, 1
    %p123 = por %p121, %p122
    %p124 = scmp.ne.s32.totalorder %s115, %s116
    %p125 = scmp.eq.s32.totalorder %s37, 0
    %p126 = por %p124, %p125
    %p127 = scmp.ne.s32.totalorder %s115, %s116
    %p128 = scmp.eq.s32.totalorder %s38, 1
    %p129 = por %p127, %p128
    %p131 = scmp.ne.s32.totalorder %s116, %s130
    %p132 = scmp.eq.s32.totalorder %s38, 0
    %p133 = por %p131, %p132
    %s135 = sadd.s32 %s134, 1
    %p138 = scmp.eq.s32.totalorder %s32, 1
    %p139 = scmp.ne.s32.totalorder %s134, %s136
    %p140 = scmp.eq.s32.totalorder %s32, 0
    %p141 = por %p139, %p140
    %p142 = scmp.ne.s32.totalorder %s134, %s136
    %p143 = scmp.eq.s32.totalorder %s37, 1
    %p144 = por %p142, %p143
    %p145 = scmp.ne.s32.totalorder %s136, %s137
    %p146 = scmp.eq.s32.totalorder %s37, 0
    %p147 = por %p145, %p146
    %p148 = scmp.ne.s32.totalorder %s136, %s137
    %p149 = scmp.eq.s32.totalorder %s38, 1
    %p150 = por %p148, %p149
    %p152 = scmp.ne.s32.totalorder %s137, %s151
    %p153 = scmp.eq.s32.totalorder %s38, 0
    %p154 = por %p152, %p153
    %s156 = sadd.s32 %s155, 1
    %p159 = scmp.eq.s32.totalorder %s32, 1
    %p160 = scmp.ne.s32.totalorder %s155, %s157
    %p161 = scmp.eq.s32.totalorder %s32, 0
    %p162 = por %p160, %p161
    %p163 = scmp.ne.s32.totalorder %s155, %s157
    %p164 = scmp.eq.s32.totalorder %s37, 1
    %p165 = por %p163, %p164
    %p166 = scmp.ne.s32.totalorder %s157, %s158
    %p167 = scmp.eq.s32.totalorder %s37, 0
    %p168 = por %p166, %p167
    %p169 = scmp.ne.s32.totalorder %s157, %s158
    %p170 = scmp.eq.s32.totalorder %s38, 1
    %p171 = por %p169, %p170
    %p173 = scmp.ne.s32.totalorder %s158, %s172
    %p174 = scmp.eq.s32.totalorder %s38, 0
    %p175 = por %p173, %p174
    %s177 = sadd.s32 %s176, 1
    %p180 = scmp.eq.s32.totalorder %s32, 1
    %p181 = scmp.ne.s32.totalorder %s176, %s178
    %p182 = scmp.eq.s32.totalorder %s32, 0
    %p183 = por %p181, %p182
    %p184 = scmp.ne.s32.totalorder %s176, %s178
    %p185 = scmp.eq.s32.totalorder %s37, 1
    %p186 = por %p184, %p185
    %p187 = scmp.ne.s32.totalorder %s178, %s179
    %p188 = scmp.eq.s32.totalorder %s37, 0
    %p189 = por %p187, %p188
    %p190 = scmp.ne.s32.totalorder %s178, %s179
    %p191 = scmp.eq.s32.totalorder %s38, 1
    %p192 = por %p190, %p191
    %p194 = scmp.ne.s32.totalorder %s179, %s193
    %p195 = scmp.eq.s32.totalorder %s38, 0
    %p196 = por %p194, %p195
    %s198 = sadd.s32 %s197, 1
    %p201 = scmp.eq.s32.totalorder %s32, 1
    %p202 = scmp.ne.s32.totalorder %s197, %s199
    %p203 = scmp.eq.s32.totalorder %s32, 0
    %p204 = por %p202, %p203
    %p205 = scmp.ne.s32.totalorder %s197, %s199
    %p206 = scmp.eq.s32.totalorder %s37, 1
    %p207 = por %p205, %p206
    %p208 = scmp.ne.s32.totalorder %s199, %s200
    %p209 = scmp.eq.s32.totalorder %s37, 0
    %p210 = por %p208, %p209
    %p211 = scmp.ne.s32.totalorder %s199, %s200
    %p212 = scmp.eq.s32.totalorder %s38, 1
    %p213 = por %p211, %p212
    %p215 = scmp.ne.s32.totalorder %s200, %s214
    %p216 = scmp.eq.s32.totalorder %s38, 0
    %p217 = por %p215, %p216
    %s219 = sadd.s32 %s218, 1
    %p222 = scmp.eq.s32.totalorder %s32, 1
    %p223 = scmp.ne.s32.totalorder %s218, %s220
    %p224 = scmp.eq.s32.totalorder %s32, 0
    %p225 = por %p223, %p224
    %p226 = scmp.ne.s32.totalorder %s218, %s220
    %p227 = scmp.eq.s32.totalorder %s37, 1
    %p228 = por %p226, %p227
    %p229 = scmp.ne.s32.totalorder %s220, %s221
    %p230 = scmp.eq.s32.totalorder %s37, 0
    %p231 = por %p229, %p230
    %p232 = scmp.ne.s32.totalorder %s220, %s221
    %p233 = scmp.eq.s32.totalorder %s38, 1
    %p234 = por %p232, %p233
    %p236 = scmp.ne.s32.totalorder %s221, %s235
    %p237 = scmp.eq.s32.totalorder %s38, 0
    %p238 = por %p236, %p237
    %s240 = sadd.s32 %s239, 1
    %p243 = scmp.eq.s32.totalorder %s32, 1
    %p244 = scmp.ne.s32.totalorder %s239, %s241
    %p245 = scmp.eq.s32.totalorder %s32, 0
    %p246 = por %p244, %p245
    %p247 = scmp.ne.s32.totalorder %s239, %s241
    %p248 = scmp.eq.s32.totalorder %s37, 1
    %p249 = por %p247, %p248
    %p250 = scmp.ne.s32.totalorder %s241, %s242
    %p251 = scmp.eq.s32.totalorder %s37, 0
    %p252 = por %p250, %p251
    %p253 = scmp.ne.s32.totalorder %s241, %s242
    %p254 = scmp.eq.s32.totalorder %s38, 1
    %p255 = por %p253, %p254
    %p257 = scmp.ne.s32.totalorder %s242, %s256
    %p258 = scmp.eq.s32.totalorder %s38, 0
    %p259 = por %p257, %p258
    %s261 = sadd.s32 %s260, 1
    %p264 = scmp.eq.s32.totalorder %s32, 1
    %p265 = scmp.ne.s32.totalorder %s260, %s262
    %p266 = scmp.eq.s32.totalorder %s32, 0
    %p267 = por %p265, %p266
    %p268 = scmp.ne.s32.totalorder %s260, %s262
    %p269 = scmp.eq.s32.totalorder %s37, 1
    %p270 = por %p268, %p269
    %p271 = scmp.ne.s32.totalorder %s262, %s263
    %p272 = scmp.eq.s32.totalorder %s37, 0
    %p273 = por %p271, %p272
    %p274 = scmp.ne.s32.totalorder %s262, %s263
    %p275 = scmp.eq.s32.totalorder %s38, 1
    %p276 = por %p274, %p275
    %p278 = scmp.ne.s32.totalorder %s263, %s277
    %p279 = scmp.eq.s32.totalorder %s38, 0
    %p280 = por %p278, %p279
    %s282 = sadd.s32 %s281, 1
    %p285 = scmp.eq.s32.totalorder %s32, 1
    %p286 = scmp.ne.s32.totalorder %s281, %s283
    %p287 = scmp.eq.s32.totalorder %s32, 0
    %p288 = por %p286, %p287
    %p289 = scmp.ne.s32.totalorder %s281, %s283
    %p290 = scmp.eq.s32.totalorder %s37, 1
    %p291 = por %p289, %p290
    %p292 = scmp.ne.s32.totalorder %s283, %s284
    %p293 = scmp.eq.s32.totalorder %s37, 0
    %p294 = por %p292, %p293
    %p295 = scmp.ne.s32.totalorder %s283, %s284
    %p296 = scmp.eq.s32.totalorder %s38, 1
    %p297 = por %p295, %p296
    %p299 = scmp.ne.s32.totalorder %s284, %s298
    %p300 = scmp.eq.s32.totalorder %s38, 0
    %p301 = por %p299, %p300
    %s303 = sadd.s32 %s302, 1
    %p306 = scmp.eq.s32.totalorder %s32, 1
    %p307 = scmp.ne.s32.totalorder %s302, %s304
    %p308 = scmp.eq.s32.totalorder %s32, 0
    %p309 = por %p307, %p308
    %p310 = scmp.ne.s32.totalorder %s302, %s304
    %p311 = scmp.eq.s32.totalorder %s37, 1
    %p312 = por %p310, %p311
    %p313 = scmp.ne.s32.totalorder %s304, %s305
    %p314 = scmp.eq.s32.totalorder %s37, 0
    %p315 = por %p313, %p314
    %p316 = scmp.ne.s32.totalorder %s304, %s305
    %p317 = scmp.eq.s32.totalorder %s38, 1
    %p318 = por %p316, %p317
    %p320 = scmp.ne.s32.totalorder %s305, %s319
    %p321 = scmp.eq.s32.totalorder %s38, 0
    %p322 = por %p320, %p321
    %s324 = sadd.s32 %s323, 1
    %p327 = scmp.eq.s32.totalorder %s32, 1
    %p328 = scmp.ne.s32.totalorder %s323, %s325
    %p329 = scmp.eq.s32.totalorder %s32, 0
    %p330 = por %p328, %p329
    %p331 = scmp.ne.s32.totalorder %s323, %s325
    %p332 = scmp.eq.s32.totalorder %s37, 1
    %p333 = por %p331, %p332
    %p334 = scmp.ne.s32.totalorder %s325, %s326
    %p335 = scmp.eq.s32.totalorder %s37, 0
    %p336 = por %p334, %p335
    %p337 = scmp.ne.s32.totalorder %s325, %s326
    %p338 = scmp.eq.s32.totalorder %s38, 1
    %p339 = por %p337, %p338
    %p341 = scmp.ne.s32.totalorder %s326, %s340
    %p342 = scmp.eq.s32.totalorder %s38, 0
    %p343 = por %p341, %p342
    %s345 = sadd.s32 %s344, 1
    %p348 = scmp.eq.s32.totalorder %s32, 1
    %p349 = scmp.ne.s32.totalorder %s344, %s346
    %p350 = scmp.eq.s32.totalorder %s32, 0
    %p351 = por %p349, %p350
    %p352 = scmp.ne.s32.totalorder %s344, %s346
    %p353 = scmp.eq.s32.totalorder %s37, 1
    %p354 = por %p352, %p353
    %p355 = scmp.ne.s32.totalorder %s346, %s347
    %p356 = scmp.eq.s32.totalorder %s37, 0
    %p357 = por %p355, %p356
    %p358 = scmp.ne.s32.totalorder %s346, %s347
    %p359 = scmp.eq.s32.totalorder %s38, 1
    %p360 = por %p358, %p359
    %p362 = scmp.ne.s32.totalorder %s347, %s361
    %p363 = scmp.eq.s32.totalorder %s38, 0
    %p364 = por %p362, %p363
    %s366 = sadd.s32 %s365, 1
    %p369 = scmp.eq.s32.totalorder %s32, 1
    %p370 = scmp.ne.s32.totalorder %s365, %s367
    %p371 = scmp.eq.s32.totalorder %s32, 0
    %p372 = por %p370, %p371
    %p373 = scmp.ne.s32.totalorder %s365, %s367
    %p374 = scmp.eq.s32.totalorder %s37, 1
    %p375 = por %p373, %p374
    %p376 = scmp.ne.s32.totalorder %s367, %s368
    %p377 = scmp.eq.s32.totalorder %s37, 0
    %p378 = por %p376, %p377
    %p379 = scmp.ne.s32.totalorder %s367, %s368
    %p380 = scmp.eq.s32.totalorder %s38, 1
    %p381 = por %p379, %p380
    %p383 = scmp.ne.s32.totalorder %s368, %s382
    %p384 = scmp.eq.s32.totalorder %s38, 0
    %p385 = por %p383, %p384
    %s387 = sadd.s32 %s386, 1
    %p390 = scmp.eq.s32.totalorder %s32, 1
    %p391 = scmp.ne.s32.totalorder %s386, %s388
    %p392 = scmp.eq.s32.totalorder %s32, 0
    %p393 = por %p391, %p392
    %p394 = scmp.ne.s32.totalorder %s386, %s388
    %p395 = scmp.eq.s32.totalorder %s37, 1
    %p396 = por %p394, %p395
    %p397 = scmp.ne.s32.totalorder %s388, %s389
    %p398 = scmp.eq.s32.totalorder %s37, 0
    %p399 = por %p397, %p398
    %p400 = scmp.ne.s32.totalorder %s388, %s389
    %p401 = scmp.eq.s32.totalorder %s38, 1
    %p402 = por %p400, %p401
    %p404 = scmp.ne.s32.totalorder %s389, %s403
    %p405 = scmp.eq.s32.totalorder %s38, 0
    %p406 = por %p404, %p405
    %s408 = sadd.s32 %s407, 1
    %p411 = scmp.eq.s32.totalorder %s32, 1
    %p412 = scmp.ne.s32.totalorder %s407, %s409
    %p413 = scmp.eq.s32.totalorder %s32, 0
    %p414 = por %p412, %p413
    %p415 = scmp.ne.s32.totalorder %s407, %s409
    %p416 = scmp.eq.s32.totalorder %s37, 1
    %p417 = por %p415, %p416
    %p418 = scmp.ne.s32.totalorder %s409, %s410
    %p419 = scmp.eq.s32.totalorder %s37, 0
    %p420 = por %p418, %p419
    %p421 = scmp.ne.s32.totalorder %s409, %s410
    %p422 = scmp.eq.s32.totalorder %s38, 1
    %p423 = por %p421, %p422
    %p425 = scmp.ne.s32.totalorder %s410, %s424
    %p426 = scmp.eq.s32.totalorder %s38, 0
    %p427 = por %p425, %p426
    %s429 = sadd.s32 %s428, 1
    %p432 = scmp.eq.s32.totalorder %s32, 1
    %p433 = scmp.ne.s32.totalorder %s428, %s430
    %p434 = scmp.eq.s32.totalorder %s32, 0
    %p435 = por %p433, %p434
    %p436 = scmp.ne.s32.totalorder %s428, %s430
    %p437 = scmp.eq.s32.totalorder %s37, 1
    %p438 = por %p436, %p437
    %p439 = scmp.ne.s32.totalorder %s430, %s431
    %p440 = scmp.eq.s32.totalorder %s37, 0
    %p441 = por %p439, %p440
    %p442 = scmp.ne.s32.totalorder %s430, %s431
    %p443 = scmp.eq.s32.totalorder %s38, 1
    %p444 = por %p442, %p443
    %p446 = scmp.ne.s32.totalorder %s431, %s445
    %p447 = scmp.eq.s32.totalorder %s38, 0
    %p448 = por %p446, %p447
    %s450 = sadd.s32 %s449, 1
    %p453 = scmp.eq.s32.totalorder %s32, 1
    %p454 = scmp.ne.s32.totalorder %s449, %s451
    %p455 = scmp.eq.s32.totalorder %s32, 0
    %p456 = por %p454, %p455
    %p457 = scmp.ne.s32.totalorder %s449, %s451
    %p458 = scmp.eq.s32.totalorder %s37, 1
    %p459 = por %p457, %p458
    %p460 = scmp.ne.s32.totalorder %s451, %s452
    %p461 = scmp.eq.s32.totalorder %s37, 0
    %p462 = por %p460, %p461
    %p463 = scmp.ne.s32.totalorder %s451, %s452
    %p464 = scmp.eq.s32.totalorder %s38, 1
    %p465 = por %p463, %p464
    %p467 = scmp.ne.s32.totalorder %s452, %s466
    %p468 = scmp.eq.s32.totalorder %s38, 0
    %p469 = por %p467, %p468
    %s471 = sadd.s32 %s470, 1
    %p474 = scmp.eq.s32.totalorder %s32, 1
    %p475 = scmp.ne.s32.totalorder %s470, %s472
    %p476 = scmp.eq.s32.totalorder %s32, 0
    %p477 = por %p475, %p476
    %p478 = scmp.ne.s32.totalorder %s470, %s472
    %p479 = scmp.eq.s32.totalorder %s37, 1
    %p480 = por %p478, %p479
    %p481 = scmp.ne.s32.totalorder %s472, %s473
    %p482 = scmp.eq.s32.totalorder %s37, 0
    %p483 = por %p481, %p482
    %p484 = scmp.ne.s32.totalorder %s472, %s473
    %p485 = scmp.eq.s32.totalorder %s38, 1
    %p486 = por %p484, %p485
    %p488 = scmp.ne.s32.totalorder %s473, %s487
    %p489 = scmp.eq.s32.totalorder %s38, 0
    %p490 = por %p488, %p489
    %s492 = sadd.s32 %s491, 1
    %p495 = scmp.eq.s32.totalorder %s32, 1
    %p496 = scmp.ne.s32.totalorder %s491, %s493
    %p497 = scmp.eq.s32.totalorder %s32, 0
    %p498 = por %p496, %p497
    %p499 = scmp.ne.s32.totalorder %s491, %s493
    %p500 = scmp.eq.s32.totalorder %s37, 1
    %p501 = por %p499, %p500
    %p502 = scmp.ne.s32.totalorder %s493, %s494
    %p503 = scmp.eq.s32.totalorder %s37, 0
    %p504 = por %p502, %p503
    %p505 = scmp.ne.s32.totalorder %s493, %s494
    %p506 = scmp.eq.s32.totalorder %s38, 1
    %p507 = por %p505, %p506
    %p509 = scmp.ne.s32.totalorder %s494, %s508
    %p510 = scmp.eq.s32.totalorder %s38, 0
    %p511 = por %p509, %p510
    %s513 = sadd.s32 %s512, 1
    %p516 = scmp.eq.s32.totalorder %s32, 1
    %p517 = scmp.ne.s32.totalorder %s512, %s514
    %p518 = scmp.eq.s32.totalorder %s32, 0
    %p519 = por %p517, %p518
    %p520 = scmp.ne.s32.totalorder %s512, %s514
    %p521 = scmp.eq.s32.totalorder %s37, 1
    %p522 = por %p520, %p521
    %p523 = scmp.ne.s32.totalorder %s514, %s515
    %p524 = scmp.eq.s32.totalorder %s37, 0
    %p525 = por %p523, %p524
    %p526 = scmp.ne.s32.totalorder %s514, %s515
    %p527 = scmp.eq.s32.totalorder %s38, 1
    %p528 = por %p526, %p527
    %p530 = scmp.ne.s32.totalorder %s515, %s529
    %p531 = scmp.eq.s32.totalorder %s38, 0
    %p532 = por %p530, %p531
    %s534 = sadd.s32 %s533, 1
    %p537 = scmp.eq.s32.totalorder %s32, 1
    %p538 = scmp.ne.s32.totalorder %s533, %s535
    %p539 = scmp.eq.s32.totalorder %s32, 0
    %p540 = por %p538, %p539
    %p541 = scmp.ne.s32.totalorder %s533, %s535
    %p542 = scmp.eq.s32.totalorder %s37, 1
    %p543 = por %p541, %p542
    %p544 = scmp.ne.s32.totalorder %s535, %s536
    %p545 = scmp.eq.s32.totalorder %s37, 0
    %p546 = por %p544, %p545
    %p547 = scmp.ne.s32.totalorder %s535, %s536
    %p548 = scmp.eq.s32.totalorder %s38, 1
    %p549 = por %p547, %p548
    %p551 = scmp.ne.s32.totalorder %s536, %s550
    %p552 = scmp.eq.s32.totalorder %s38, 0
    %p553 = por %p551, %p552
    %s555 = sadd.s32 %s554, 1
    %p558 = scmp.eq.s32.totalorder %s32, 1
    %p559 = scmp.ne.s32.totalorder %s554, %s556
    %p560 = scmp.eq.s32.totalorder %s32, 0
    %p561 = por %p559, %p560
    %p562 = scmp.ne.s32.totalorder %s554, %s556
    %p563 = scmp.eq.s32.totalorder %s37, 1
    %p564 = por %p562, %p563
    %p565 = scmp.ne.s32.totalorder %s556, %s557
    %p566 = scmp.eq.s32.totalorder %s37, 0
    %p567 = por %p565, %p566
    %p568 = scmp.ne.s32.totalorder %s556, %s557
    %p569 = scmp.eq.s32.totalorder %s38, 1
    %p570 = por %p568, %p569
    %p572 = scmp.ne.s32.totalorder %s557, %s571
    %p573 = scmp.eq.s32.totalorder %s38, 0
    %p574 = por %p572, %p573
    %s576 = sadd.s32 %s575, 1
    %p579 = scmp.eq.s32.totalorder %s32, 1
    %p580 = scmp.ne.s32.totalorder %s575, %s577
    %p581 = scmp.eq.s32.totalorder %s32, 0
    %p582 = por %p580, %p581
    %p583 = scmp.ne.s32.totalorder %s575, %s577
    %p584 = scmp.eq.s32.totalorder %s37, 1
    %p585 = por %p583, %p584
    %p586 = scmp.ne.s32.totalorder %s577, %s578
    %p587 = scmp.eq.s32.totalorder %s37, 0
    %p588 = por %p586, %p587
    %p589 = scmp.ne.s32.totalorder %s577, %s578
    %p590 = scmp.eq.s32.totalorder %s38, 1
    %p591 = por %p589, %p590
    %p593 = scmp.ne.s32.totalorder %s578, %s592
    %p594 = scmp.eq.s32.totalorder %s38, 0
    %p595 = por %p593, %p594
    %s596 = ssub.s32 %s32, %s39
    %p597 = scmp.eq.s32.totalorder %s596, 0
    %s599 = sadd.s32 %s598, 1
    %s600 = scalar_select %p597, %s598, %s599
    %p603 = pneg %p597
    %p604 = scmp.eq.s32.totalorder %s32, 1
    %p605 = por %p603, %p604
    %p606 = scmp.ne.s32.totalorder %s598, %s601
    %p607 = scmp.eq.s32.totalorder %s32, 0
    %p608 = por %p606, %p607
    %p609 = scmp.ne.s32.totalorder %s598, %s601
    %p610 = scmp.eq.s32.totalorder %s37, 1
    %p611 = por %p609, %p610
    %p612 = scmp.ne.s32.totalorder %s601, %s602
    %p613 = scmp.eq.s32.totalorder %s37, 0
    %p614 = por %p612, %p613
    %p615 = scmp.ne.s32.totalorder %s601, %s602
    %p616 = scmp.eq.s32.totalorder %s38, 1
    %p617 = por %p615, %p616
    %p619 = scmp.ne.s32.totalorder %s602, %s618
    %p620 = scmp.eq.s32.totalorder %s38, 0
    %p621 = por %p619, %p620
    %p622 = scmp.le.s32.totalorder 1, %s32
    %p623 = scmp.lt.s32.totalorder %s32, 3
    %p624 = pnand %p622, %p623
    %p625 = pneg %p624
    // Predicated region
    $region9: #{infer_func_forward.1} parent=5 // pred_check
      _
    $region10: #{infer_func_forward.1} parent=5 // pred_check_branch
      %627 = sbr.rel (%p624) target = $region12
    $region11: #{infer_func_forward.1} parent=5 // pred_region
      %s628 = ssub.s32 %s32, 1
      // Predicated region
      $region13: #{infer_func_forward.1} parent=11 // pred_check
        %p629 = pneg %p105
      $region14: #{infer_func_forward.1} parent=11 // pred_check_branch
        %631 = sbr.rel (%p629) target = $region16
      $region15: #{infer_func_forward.1} parent=11 // pred_region
        _
      $region16: #{infer_func_forward.1} parent=11 // pred_fallthru
        _
      // Predicated region
      $region17: #{infer_func_forward.1} parent=11 // pred_check
        %p632 = pneg %p126
      $region18: #{infer_func_forward.1} parent=11 // pred_check_branch
        %634 = sbr.rel (%p632) target = $region20
      $region19: #{infer_func_forward.1} parent=11 // pred_region
        _
      $region20: #{infer_func_forward.1} parent=11 // pred_fallthru
        _
      // Predicated region
      $region21: #{infer_func_forward.1} parent=11 // pred_check
        %p635 = pneg %p147
      $region22: #{infer_func_forward.1} parent=11 // pred_check_branch
        %637 = sbr.rel (%p635) target = $region24
      $region23: #{infer_func_forward.1} parent=11 // pred_region
        _
      $region24: #{infer_func_forward.1} parent=11 // pred_fallthru
        _
      // Predicated region
      $region25: #{infer_func_forward.1} parent=11 // pred_check
        %p638 = pneg %p168
      $region26: #{infer_func_forward.1} parent=11 // pred_check_branch
        %640 = sbr.rel (%p638) target = $region28
      $region27: #{infer_func_forward.1} parent=11 // pred_region
        _
      $region28: #{infer_func_forward.1} parent=11 // pred_fallthru
        _
      // Predicated region
      $region29: #{infer_func_forward.1} parent=11 // pred_check
        %p641 = pneg %p189
      $region30: #{infer_func_forward.1} parent=11 // pred_check_branch
        %643 = sbr.rel (%p641) target = $region32
      $region31: #{infer_func_forward.1} parent=11 // pred_region
        _
      $region32: #{infer_func_forward.1} parent=11 // pred_fallthru
        _
      // Predicated region
      $region33: #{infer_func_forward.1} parent=11 // pred_check
        %p644 = pneg %p210
      $region34: #{infer_func_forward.1} parent=11 // pred_check_branch
        %646 = sbr.rel (%p644) target = $region36
      $region35: #{infer_func_forward.1} parent=11 // pred_region
        _
      $region36: #{infer_func_forward.1} parent=11 // pred_fallthru
        _
      // Predicated region
      $region37: #{infer_func_forward.1} parent=11 // pred_check
        %p647 = pneg %p231
      $region38: #{infer_func_forward.1} parent=11 // pred_check_branch
        %649 = sbr.rel (%p647) target = $region40
      $region39: #{infer_func_forward.1} parent=11 // pred_region
        _
      $region40: #{infer_func_forward.1} parent=11 // pred_fallthru
        _
      // Predicated region
      $region41: #{infer_func_forward.1} parent=11 // pred_check
        %p650 = pneg %p252
      $region42: #{infer_func_forward.1} parent=11 // pred_check_branch
        %652 = sbr.rel (%p650) target = $region44
      $region43: #{infer_func_forward.1} parent=11 // pred_region
        _
      $region44: #{infer_func_forward.1} parent=11 // pred_fallthru
        _
      // Predicated region
      $region45: #{infer_func_forward.1} parent=11 // pred_check
        %p653 = pneg %p273
      $region46: #{infer_func_forward.1} parent=11 // pred_check_branch
        %655 = sbr.rel (%p653) target = $region48
      $region47: #{infer_func_forward.1} parent=11 // pred_region
        _
      $region48: #{infer_func_forward.1} parent=11 // pred_fallthru
        _
      // Predicated region
      $region49: #{infer_func_forward.1} parent=11 // pred_check
        %p656 = pneg %p294
      $region50: #{infer_func_forward.1} parent=11 // pred_check_branch
        %658 = sbr.rel (%p656) target = $region52
      $region51: #{infer_func_forward.1} parent=11 // pred_region
        _
      $region52: #{infer_func_forward.1} parent=11 // pred_fallthru
        _
      // Predicated region
      $region53: #{infer_func_forward.1} parent=11 // pred_check
        %p659 = pneg %p315
      $region54: #{infer_func_forward.1} parent=11 // pred_check_branch
        %661 = sbr.rel (%p659) target = $region56
      $region55: #{infer_func_forward.1} parent=11 // pred_region
        _
      $region56: #{infer_func_forward.1} parent=11 // pred_fallthru
        _
      // Predicated region
      $region57: #{infer_func_forward.1} parent=11 // pred_check
        %p662 = pneg %p336
      $region58: #{infer_func_forward.1} parent=11 // pred_check_branch
        %664 = sbr.rel (%p662) target = $region60
      $region59: #{infer_func_forward.1} parent=11 // pred_region
        _
      $region60: #{infer_func_forward.1} parent=11 // pred_fallthru
        _
      // Predicated region
      $region61: #{infer_func_forward.1} parent=11 // pred_check
        %p665 = pneg %p357
      $region62: #{infer_func_forward.1} parent=11 // pred_check_branch
        %667 = sbr.rel (%p665) target = $region64
      $region63: #{infer_func_forward.1} parent=11 // pred_region
        _
      $region64: #{infer_func_forward.1} parent=11 // pred_fallthru
        _
      // Predicated region
      $region65: #{infer_func_forward.1} parent=11 // pred_check
        %p668 = pneg %p378
      $region66: #{infer_func_forward.1} parent=11 // pred_check_branch
        %670 = sbr.rel (%p668) target = $region68
      $region67: #{infer_func_forward.1} parent=11 // pred_region
        _
      $region68: #{infer_func_forward.1} parent=11 // pred_fallthru
        _
      // Predicated region
      $region69: #{infer_func_forward.1} parent=11 // pred_check
        %p671 = pneg %p399
      $region70: #{infer_func_forward.1} parent=11 // pred_check_branch
        %673 = sbr.rel (%p671) target = $region72
      $region71: #{infer_func_forward.1} parent=11 // pred_region
        _
      $region72: #{infer_func_forward.1} parent=11 // pred_fallthru
        _
      // Predicated region
      $region73: #{infer_func_forward.1} parent=11 // pred_check
        %p674 = pneg %p420
      $region74: #{infer_func_forward.1} parent=11 // pred_check_branch
        %676 = sbr.rel (%p674) target = $region76
      $region75: #{infer_func_forward.1} parent=11 // pred_region
        _
      $region76: #{infer_func_forward.1} parent=11 // pred_fallthru
        _
      // Predicated region
      $region77: #{infer_func_forward.1} parent=11 // pred_check
        %p677 = pneg %p441
      $region78: #{infer_func_forward.1} parent=11 // pred_check_branch
        %679 = sbr.rel (%p677) target = $region80
      $region79: #{infer_func_forward.1} parent=11 // pred_region
        _
      $region80: #{infer_func_forward.1} parent=11 // pred_fallthru
        _
      // Predicated region
      $region81: #{infer_func_forward.1} parent=11 // pred_check
        %p680 = pneg %p462
      $region82: #{infer_func_forward.1} parent=11 // pred_check_branch
        %682 = sbr.rel (%p680) target = $region84
      $region83: #{infer_func_forward.1} parent=11 // pred_region
        _
      $region84: #{infer_func_forward.1} parent=11 // pred_fallthru
        _
      // Predicated region
      $region85: #{infer_func_forward.1} parent=11 // pred_check
        %p683 = pneg %p483
      $region86: #{infer_func_forward.1} parent=11 // pred_check_branch
        %685 = sbr.rel (%p683) target = $region88
      $region87: #{infer_func_forward.1} parent=11 // pred_region
        _
      $region88: #{infer_func_forward.1} parent=11 // pred_fallthru
        _
      // Predicated region
      $region89: #{infer_func_forward.1} parent=11 // pred_check
        %p686 = pneg %p504
      $region90: #{infer_func_forward.1} parent=11 // pred_check_branch
        %688 = sbr.rel (%p686) target = $region92
      $region91: #{infer_func_forward.1} parent=11 // pred_region
        _
      $region92: #{infer_func_forward.1} parent=11 // pred_fallthru
        _
      // Predicated region
      $region93: #{infer_func_forward.1} parent=11 // pred_check
        %p689 = pneg %p525
      $region94: #{infer_func_forward.1} parent=11 // pred_check_branch
        %691 = sbr.rel (%p689) target = $region96
      $region95: #{infer_func_forward.1} parent=11 // pred_region
        _
      $region96: #{infer_func_forward.1} parent=11 // pred_fallthru
        _
      // Predicated region
      $region97: #{infer_func_forward.1} parent=11 // pred_check
        %p692 = pneg %p546
      $region98: #{infer_func_forward.1} parent=11 // pred_check_branch
        %694 = sbr.rel (%p692) target = $region100
      $region99: #{infer_func_forward.1} parent=11 // pred_region
        _
      $region100: #{infer_func_forward.1} parent=11 // pred_fallthru
        _
      // Predicated region
      $region101: #{infer_func_forward.1} parent=11 // pred_check
        %p695 = pneg %p567
      $region102: #{infer_func_forward.1} parent=11 // pred_check_branch
        %697 = sbr.rel (%p695) target = $region104
      $region103: #{infer_func_forward.1} parent=11 // pred_region
        _
      $region104: #{infer_func_forward.1} parent=11 // pred_fallthru
        _
      // Predicated region
      $region105: #{infer_func_forward.1} parent=11 // pred_check
        %p698 = pneg %p588
      $region106: #{infer_func_forward.1} parent=11 // pred_check_branch
        %700 = sbr.rel (%p698) target = $region108
      $region107: #{infer_func_forward.1} parent=11 // pred_region
        _
      $region108: #{infer_func_forward.1} parent=11 // pred_fallthru
        _
    $region12: #{infer_func_forward.1} parent=5 // pred_fallthru
      _
    %p701 = scmp.lt.s32.totalorder %s32, 2
    // Predicated region
    $region109: #{infer_func_forward.1} parent=5 // pred_check
      %p702 = pneg %p701
    $region110: #{infer_func_forward.1} parent=5 // pred_check_branch
      %704 = sbr.rel (%p702) target = $region112
    $region111: #{infer_func_forward.1} parent=5 // pred_region
      // Predicated region
      $region113: #{infer_func_forward.1} parent=111 // pred_check
        %p705 = pneg %p52
      $region114: #{infer_func_forward.1} parent=111 // pred_check_branch
        %707 = sbr.rel (%p705) target = $region116
      $region115: #{infer_func_forward.1} parent=111 // pred_region
        %p708 = scmp.lt.s32.totalorder %s32, 1
        %s709 = scalar_select %p708, %s32, 1
        %s710 = smul.addr %s709, 4
        %s711 = smul.addr %s710, 8
        %s712 = scalar_lea.vmem %s0, %s711
      $region116: #{infer_func_forward.1} parent=111 // pred_fallthru
        _
      // Predicated region
      $region117: #{infer_func_forward.1} parent=111 // pred_check
        %p713 = pneg %p78
      $region118: #{infer_func_forward.1} parent=111 // pred_check_branch
        %715 = sbr.rel (%p713) target = $region120
      $region119: #{infer_func_forward.1} parent=111 // pred_region
        %p716 = scmp.lt.s32.totalorder %s32, 1
        %s717 = scalar_select %p716, %s32, 1
        %s718 = scalar_lea.vmem %s1, %s717
      $region120: #{infer_func_forward.1} parent=111 // pred_fallthru
        _
    $region112: #{infer_func_forward.1} parent=5 // pred_fallthru
      _
    %p719 = scmp.le.s32.totalorder 1, %s32
    %p720 = scmp.lt.s32.totalorder %s32, 3
    %p721 = pnand %p719, %p720
    %p722 = pneg %p721
    // Predicated region
    $region121: #{infer_func_forward.1} parent=5 // pred_check
      _
    $region122: #{infer_func_forward.1} parent=5 // pred_check_branch
      %724 = sbr.rel (%p721) target = $region124
    $region123: #{infer_func_forward.1} parent=5 // pred_region
      %s725 = ssub.s32 %s32, 1
      %p726 = scmp.lt.s32.totalorder %s37, 1
      %s727 = scalar_select %p726, %s37, 1
      %s728 = smul.addr %s727, 4
      %s729 = smul.addr %s728, 8
      %s730 = scalar_lea.vmem %s0, %s729
      %p731 = pneg %p58
      %p732 = pneg %p55
      %p733 = scmp.lt.s32.totalorder %s37, 1
      %s734 = scalar_select %p733, %s37, 1
      %s735 = scalar_lea.vmem %s1, %s734
      %p736 = pneg %p84
      %p737 = pneg %p81
      %p738 = pneg %p105
      %p739 = pneg %p102
      %p740 = pneg %p126
      %p741 = pneg %p123
      %p742 = pneg %p147
      %p743 = pneg %p144
      %p744 = pneg %p168
      %p745 = pneg %p165
      %p746 = pneg %p189
      %p747 = pneg %p186
      %p748 = pneg %p210
      %p749 = pneg %p207
      %p750 = pneg %p231
      %p751 = pneg %p228
      %p752 = pneg %p252
      %p753 = pneg %p249
      %p754 = pneg %p273
      %p755 = pneg %p270
      %p756 = pneg %p294
      %p757 = pneg %p291
      %p758 = pneg %p315
      %p759 = pneg %p312
      %p760 = pneg %p336
      %p761 = pneg %p333
      %p762 = pneg %p357
      %p763 = pneg %p354
      %p764 = pneg %p378
      %p765 = pneg %p375
      %p766 = pneg %p399
      %p767 = pneg %p396
      %p768 = pneg %p420
      %p769 = pneg %p417
      %p770 = pneg %p441
      %p771 = pneg %p438
      %p772 = pneg %p462
      %p773 = pneg %p459
      %p774 = pneg %p483
      %p775 = pneg %p480
      %p776 = pneg %p504
      %p777 = pneg %p501
      %p778 = pneg %p525
      %p779 = pneg %p522
      %p780 = pneg %p546
      %p781 = pneg %p543
      %p782 = pneg %p567
      %p783 = pneg %p564
      %p784 = pneg %p588
      %p785 = pneg %p585
      %p786 = pneg %p614
      %p787 = pneg %p611
      %p788 = scmp.lt.s32.totalorder %s37, 1
      %s789 = scalar_select %p788, %s37, 1
      %s790 = smul.addr %s789, 8
      %s791 = scalar_lea.vmem %s26, %s790
      %p792 = scmp.lt.s32.totalorder %s37, 1
      %s793 = scalar_select %p792, %s37, 1
      %s794 = smul.addr %s793, 4
      %s795 = smul.addr %s794, 8
      %s796 = scalar_lea.vmem %s0, %s795
      %p797 = scmp.lt.s32.totalorder %s37, 1
      %s798 = scalar_select %p797, %s37, 1
      %s799 = scalar_lea.vmem %s1, %s798
      %p800 = scmp.lt.s32.totalorder %s37, 1
      %s801 = scalar_select %p800, %s37, 1
      %s802 = smul.addr %s801, 8
      %s803 = scalar_lea.vmem %s26, %s802
      %v805 = vld [vmem:[%s796] sm:$0xff]
      %v806 = vld [vmem:[%s796 + $0x8] sm:$0xff]
      %v807 = vld [vmem:[%s796 + $0x10] sm:$0xff]
      %v808 = vld [vmem:[%s796 + $0x18] sm:$0xff]
      %v809 = vld [vmem:[%s799] sm:$0x1]
      %vm810 = vcmp.gt.f32.partialorder %v809, 0.5
      %v811 = vsel %vm810, 0.0, -3.4028235e+38
      %v812 = vld [vmem:[%s2] sm:$0xff]
      %v813 = vld [vmem:[%s2 + $0x8] sm:$0xff]
      %v814 = vld [vmem:[%s4] sm:$0xf]
      %v815 = vld [vmem:[%s4 + $0x4] sm:$0xf]
      %v816 = vld [vmem:[%s4 + $0x8] sm:$0xf]
      %v817 = vld [vmem:[%s4 + $0xc] sm:$0xf]
      %v818 = vld [vmem:[%s4 + $0x10] sm:$0xf]
      %v819 = vld [vmem:[%s4 + $0x14] sm:$0xf]
      %v820 = vld [vmem:[%s4 + $0x18] sm:$0xf]
      %v821 = vld [vmem:[%s4 + $0x1c] sm:$0xf]
      %v822 = vld [vmem:[%s4 + $0x20] sm:$0xf]
      %v823 = vld [vmem:[%s4 + $0x24] sm:$0xf]
      %v824 = vld [vmem:[%s4 + $0x28] sm:$0xf]
      %v825 = vld [vmem:[%s4 + $0x2c] sm:$0xf]
      %v826 = vld [vmem:[%s4 + $0x30] sm:$0xf]
      %v827 = vld [vmem:[%s4 + $0x34] sm:$0xf]
      %v828 = vld [vmem:[%s4 + $0x38] sm:$0xf]
      %v829 = vld [vmem:[%s4 + $0x3c] sm:$0xf]
      %v830 = vld [vmem:[%s5] sm:$0xf]
      %v831 = vld [vmem:[%s5 + $0x4] sm:$0xf]
      %v832 = vld [vmem:[%s5 + $0x8] sm:$0xf]
      %v833 = vld [vmem:[%s5 + $0xc] sm:$0xf]
      %v834 = vld [vmem:[%s5 + $0x10] sm:$0xf]
      %v835 = vld [vmem:[%s5 + $0x14] sm:$0xf]
      %v836 = vld [vmem:[%s5 + $0x18] sm:$0xf]
      %v837 = vld [vmem:[%s5 + $0x1c] sm:$0xf]
      %v838 = vld [vmem:[%s5 + $0x20] sm:$0xf]
      %v839 = vld [vmem:[%s5 + $0x24] sm:$0xf]
      %v840 = vld [vmem:[%s5 + $0x28] sm:$0xf]
      %v841 = vld [vmem:[%s5 + $0x2c] sm:$0xf]
      %v842 = vld [vmem:[%s5 + $0x30] sm:$0xf]
      %v843 = vld [vmem:[%s5 + $0x34] sm:$0xf]
      %v844 = vld [vmem:[%s5 + $0x38] sm:$0xf]
      %v845 = vld [vmem:[%s5 + $0x3c] sm:$0xf]
      %v846 = vld [vmem:[%s6] sm:$0xf]
      %v847 = vld [vmem:[%s6 + $0x4] sm:$0xf]
      %v848 = vld [vmem:[%s6 + $0x8] sm:$0xf]
      %v849 = vld [vmem:[%s6 + $0xc] sm:$0xf]
      %v850 = vld [vmem:[%s6 + $0x10] sm:$0xf]
      %v851 = vld [vmem:[%s6 + $0x14] sm:$0xf]
      %v852 = vld [vmem:[%s6 + $0x18] sm:$0xf]
      %v853 = vld [vmem:[%s6 + $0x1c] sm:$0xf]
      %v854 = vld [vmem:[%s7] sm:$0x7]
      %v855 = vld [vmem:[%s8] sm:$0x3]
      %856 = vadd.xlane.f32.xlu0 %v812
      %v857 = vpop.xlane.xlu0 %856
      %858 = vadd.xlane.f32.xlu0 %v813
      %v859 = vpop.xlane.xlu0 %858
      %v860 = vrcp.pop 128.0
      %v861 = vmul.f32 %v857, %v860
      %v862 = vmul.f32 %v859, %v860
      %v863 = vsub.f32 %v812, %v861
      %v864 = vsub.f32 %v813, %v862
      %v865 = vmul.f32 %v863, %v863
      %v866 = vmul.f32 %v864, %v864
      %867 = vadd.xlane.f32.xlu0 %v865
      %v868 = vpop.xlane.xlu0 %867
      %869 = vadd.xlane.f32.xlu0 %v866
      %v870 = vpop.xlane.xlu0 %869
      %v871 = vmul.f32 %v868, %v860
      %v872 = vmul.f32 %v870, %v860
      %v873 = vadd.f32 %v871, 1e-05
      %v874 = vadd.f32 %v872, 1e-05
      %v875 = vrsqrt.pop %v873
      %v876 = vrsqrt.pop %v874
      %v877 = vmul.f32 %v863, %v875
      %v878 = vmul.f32 %v864, %v876
      %v879 = vlaneseq
      %v880 = vshrl.u32 %v879, 7
      %v881 = vsub.s32 0, %v880
      %v882 = vrot.slane %v854, %v881
      %v883 = vmul.f32 %v877, %v882
      %v884 = vmul.f32 %v878, %v882
      %v885 = vlaneseq
      %v886 = vshrl.u32 %v885, 7
      %v887 = vsub.s32 1, %v886
      %v888 = vrot.slane %v854, %v887
      %v889 = vadd.f32 %v883, %v888
      %v890 = vadd.f32 %v884, %v888
      %891 = vadd.xlane.f32.xlu0 %v805
      %v892 = vpop.xlane.xlu0 %891
      %893 = vadd.xlane.f32.xlu0 %v806
      %v894 = vpop.xlane.xlu0 %893
      %895 = vadd.xlane.f32.xlu0 %v807
      %v896 = vpop.xlane.xlu0 %895
      %897 = vadd.xlane.f32.xlu0 %v808
      %v898 = vpop.xlane.xlu0 %897
      %v899 = vmul.f32 %v892, %v860
      %v900 = vmul.f32 %v894, %v860
      %v901 = vmul.f32 %v896, %v860
      %v902 = vmul.f32 %v898, %v860
      %v903 = vsub.f32 %v805, %v899
      %v904 = vsub.f32 %v806, %v900
      %v905 = vsub.f32 %v807, %v901
      %v906 = vsub.f32 %v808, %v902
      %v907 = vmul.f32 %v903, %v903
      %v908 = vmul.f32 %v904, %v904
      %v909 = vmul.f32 %v905, %v905
      %v910 = vmul.f32 %v906, %v906
      %911 = vadd.xlane.f32.xlu0 %v907
      %v912 = vpop.xlane.xlu0 %911
      %913 = vadd.xlane.f32.xlu0 %v908
      %v914 = vpop.xlane.xlu0 %913
      %915 = vadd.xlane.f32.xlu0 %v909
      %v916 = vpop.xlane.xlu0 %915
      %917 = vadd.xlane.f32.xlu0 %v910
      %v918 = vpop.xlane.xlu0 %917
      %v919 = vmul.f32 %v912, %v860
      %v920 = vmul.f32 %v914, %v860
      %v921 = vmul.f32 %v916, %v860
      %v922 = vmul.f32 %v918, %v860
      %v923 = vadd.f32 %v919, 1e-05
      %v924 = vadd.f32 %v920, 1e-05
      %v925 = vadd.f32 %v921, 1e-05
      %v926 = vadd.f32 %v922, 1e-05
      %v927 = vrsqrt.pop %v923
      %v928 = vrsqrt.pop %v924
      %v929 = vrsqrt.pop %v925
      %v930 = vrsqrt.pop %v926
      %v931 = vmul.f32 %v903, %v927
      %v932 = vmul.f32 %v904, %v928
      %v933 = vmul.f32 %v905, %v929
      %v934 = vmul.f32 %v906, %v930
      %v935 = vlaneseq
      %v936 = vshrl.u32 %v935, 7
      %v937 = vsub.s32 0, %v936
      %v938 = vrot.slane %v855, %v937
      %v939 = vmul.f32 %v931, %v938
      %v940 = vmul.f32 %v932, %v938
      %v941 = vmul.f32 %v933, %v938
      %v942 = vmul.f32 %v934, %v938
      %v943 = vlaneseq
      %v944 = vshrl.u32 %v943, 7
      %v945 = vsub.s32 1, %v944
      %v946 = vrot.slane %v855, %v945
      %v947 = vadd.f32 %v939, %v946
      %v948 = vadd.f32 %v940, %v946
      %v949 = vadd.f32 %v941, %v946
      %v950 = vadd.f32 %v942, %v946
      %v951 = vpack.c.bf16 %v890, %v889
      %v968 = vunpack.c.l.b16 %v814
      %v969 = vunpack.c.l.b16 %v815
      %v970 = vunpack.c.l.b16 %v816
      %v971 = vunpack.c.l.b16 %v817
      %v972 = vunpack.c.l.b16 %v818
      %v973 = vunpack.c.l.b16 %v819
      %v974 = vunpack.c.l.b16 %v820
      %v975 = vunpack.c.l.b16 %v821
      %v976 = vunpack.c.l.b16 %v822
      %v977 = vunpack.c.l.b16 %v823
      %v978 = vunpack.c.l.b16 %v824
      %v979 = vunpack.c.l.b16 %v825
      %v980 = vunpack.c.l.b16 %v826
      %v981 = vunpack.c.l.b16 %v827
      %v982 = vunpack.c.l.b16 %v828
      %v983 = vunpack.c.l.b16 %v829
      %v984 = vpack.c.b16 %v969, %v968
      %v985 = vpack.c.b16 %v971, %v970
      %v986 = vpack.c.b16 %v973, %v972
      %v987 = vpack.c.b16 %v975, %v974
      %v988 = vpack.c.b16 %v977, %v976
      %v989 = vpack.c.b16 %v979, %v978
      %v990 = vpack.c.b16 %v981, %v980
      %v991 = vpack.c.b16 %v983, %v982
      %1000 = vmatprep.subr.bf16.mxu0 0
      %1001 = vmatpush1.bf16.msra.mxu0 %v984
      %1002 = vmatprep.subr.bf16.mxu0 0
      %1003 = vmatpush1.bf16.msra.mxu0 %v985
      %1004 = vmatprep.subr.bf16.mxu0 0
      %1005 = vmatpush1.bf16.msra.mxu0 %v986
      %1006 = vmatprep.subr.bf16.mxu0 0
      %1007 = vmatpush1.bf16.msra.mxu0 %v987
      %1008 = vmatprep.subr.bf16.mxu0 0
      %1009 = vmatpush1.bf16.msra.mxu0 %v988
      %1010 = vmatprep.subr.bf16.mxu0 0
      %1011 = vmatpush1.bf16.msra.mxu0 %v989
      %1012 = vmatprep.subr.bf16.mxu0 0
      %1013 = vmatpush1.bf16.msra.mxu0 %v990
      %1014 = vmatprep.subr.bf16.mxu0 0
      %1015 = vmatpush1.bf16.msra.mxu0 %v991
      %1016 = vmatprep.subr.bf16.mxu0 0
      %1017 = vmatpush1.bf16.msra.mxu0 0
      %1018 = vmatprep.subr.bf16.mxu0 0
      %1019 = vmatpush1.bf16.msra.mxu0 0
      %1020 = vmatprep.subr.bf16.mxu0 0
      %1021 = vmatpush1.bf16.msra.mxu0 0
      %1022 = vmatprep.subr.bf16.mxu0 0
      %1023 = vmatpush1.bf16.msra.mxu0 0
      %1024 = vmatprep.subr.bf16.mxu0 0
      %1025 = vmatpush1.bf16.msra.mxu0 0
      %1026 = vmatprep.subr.bf16.mxu0 0
      %1027 = vmatpush1.bf16.msra.mxu0 0
      %1028 = vmatprep.subr.bf16.mxu0 0
      %1029 = vmatpush1.bf16.msra.mxu0 0
      %1030 = vmatprep.subr.bf16.mxu0 0
      %1031 = vmatpush1.bf16.msra.mxu0 0
      %1032 = vmatprep.mubr.bf16.mxu0 0
      %1033 = vmatmul.mubr.bf16.gmra.mrb[0].mxu0 %v951
      %v1034 = vpop.f32.mrb[0].mxu0
      %v1035 = vadd.f32 0.0, %v1034
      %v1036 = vpop.f32.mrb[0].mxu0
      %v1037 = vpop.f32.mrb[0].mxu0
      %v1038 = vadd.f32 0.0, %v1037
      %v1039 = vpop.f32.mrb[0].mxu0
      %1040 = vdwg.mxu0
      %v1041 = vpack.c.bf16 %v948, %v947
      %v1042 = vpack.c.bf16 %v950, %v949
      %v1059 = vunpack.c.l.b16 %v830
      %v1060 = vunpack.c.l.b16 %v831
      %v1061 = vunpack.c.l.b16 %v832
      %v1062 = vunpack.c.l.b16 %v833
      %v1063 = vunpack.c.l.b16 %v834
      %v1064 = vunpack.c.l.b16 %v835
      %v1065 = vunpack.c.l.b16 %v836
      %v1066 = vunpack.c.l.b16 %v837
      %v1067 = vunpack.c.l.b16 %v838
      %v1068 = vunpack.c.l.b16 %v839
      %v1069 = vunpack.c.l.b16 %v840
      %v1070 = vunpack.c.l.b16 %v841
      %v1071 = vunpack.c.l.b16 %v842
      %v1072 = vunpack.c.l.b16 %v843
      %v1073 = vunpack.c.l.b16 %v844
      %v1074 = vunpack.c.l.b16 %v845
      %v1075 = vpack.c.b16 %v1060, %v1059
      %v1076 = vpack.c.b16 %v1062, %v1061
      %v1077 = vpack.c.b16 %v1064, %v1063
      %v1078 = vpack.c.b16 %v1066, %v1065
      %v1079 = vpack.c.b16 %v1068, %v1067
      %v1080 = vpack.c.b16 %v1070, %v1069
      %v1081 = vpack.c.b16 %v1072, %v1071
      %v1082 = vpack.c.b16 %v1074, %v1073
      %1091 = vmatprep.subr.bf16.mxu0 0
      %1092 = vmatpush1.bf16.msra.mxu0 %v1075
      %1093 = vmatprep.subr.bf16.mxu0 0
      %1094 = vmatpush1.bf16.msra.mxu0 %v1076
      %1095 = vmatprep.subr.bf16.mxu0 0
      %1096 = vmatpush1.bf16.msra.mxu0 %v1077
      %1097 = vmatprep.subr.bf16.mxu0 0
      %1098 = vmatpush1.bf16.msra.mxu0 %v1078
      %1099 = vmatprep.subr.bf16.mxu0 0
      %1100 = vmatpush1.bf16.msra.mxu0 %v1079
      %1101 = vmatprep.subr.bf16.mxu0 0
      %1102 = vmatpush1.bf16.msra.mxu0 %v1080
      %1103 = vmatprep.subr.bf16.mxu0 0
      %1104 = vmatpush1.bf16.msra.mxu0 %v1081
      %1105 = vmatprep.subr.bf16.mxu0 0
      %1106 = vmatpush1.bf16.msra.mxu0 %v1082
      %1107 = vmatprep.subr.bf16.mxu0 0
      %1108 = vmatpush1.bf16.msra.mxu0 0
      %1109 = vmatprep.subr.bf16.mxu0 0
      %1110 = vmatpush1.bf16.msra.mxu0 0
      %1111 = vmatprep.subr.bf16.mxu0 0
      %1112 = vmatpush1.bf16.msra.mxu0 0
      %1113 = vmatprep.subr.bf16.mxu0 0
      %1114 = vmatpush1.bf16.msra.mxu0 0
      %1115 = vmatprep.subr.bf16.mxu0 0
      %1116 = vmatpush1.bf16.msra.mxu0 0
      %1117 = vmatprep.subr.bf16.mxu0 0
      %1118 = vmatpush1.bf16.msra.mxu0 0
      %1119 = vmatprep.subr.bf16.mxu0 0
      %1120 = vmatpush1.bf16.msra.mxu0 0
      %1121 = vmatprep.subr.bf16.mxu0 0
      %1122 = vmatpush1.bf16.msra.mxu0 0
      %1123 = vmatprep.mubr.bf16.mxu0 0
      %1124 = vmatmul.mubr.bf16.gmra.mrb[0].mxu0 %v1041
      %v1125 = vpop.f32.mrb[0].mxu0
      %v1126 = vadd.f32 0.0, %v1125
      %v1127 = vpop.f32.mrb[0].mxu0
      %v1128 = vpop.f32.mrb[0].mxu0
      %v1129 = vadd.f32 0.0, %v1128
      %v1130 = vpop.f32.mrb[0].mxu0
      %1131 = vmatprep.mubr.bf16.mxu0 0
      %1132 = vmatmul.mubr.bf16.gmra.mrb[0].mxu0 %v1042
      %v1133 = vpop.f32.mrb[0].mxu0
      %v1134 = vadd.f32 0.0, %v1133
      %v1135 = vpop.f32.mrb[0].mxu0
      %v1136 = vpop.f32.mrb[0].mxu0
      %v1137 = vadd.f32 0.0, %v1136
      %v1138 = vpop.f32.mrb[0].mxu0
      %1139 = vdwg.mxu0
      %v1140 = vmul.f32 %v1035, 0.125
      %v1141 = vmul.f32 %v1038, 0.125
      %v1142 = vpack.c.bf16 %v1141, %v1140
      %v1143 = vpack.c.bf16 %v1129, %v1126
      %v1144 = vpack.c.bf16 %v1137, %v1134
      %v1146 = vlaneseq
      %v1147 = vshrl.u32 %v1146, 7
      %v1148 = vsub.s32 0, %v1147
      %v1149 = vrot.slane %v811, %v1148
      %vm1151 = vcmask 523264
      %v1153 = vsel %vm1151, %v1142, 0
      %v1156 = vsel %vm1151, %v1143, 0
      %v1159 = vsel %vm1151, %v1144, 0
      %1161 = vmatprep.subr.bf16.mxu0 0
      %1162 = vmatpush1.bf16.xpose.msra.mxu0 %v1156
      %1163 = vmatprep.subr.bf16.mxu0 0
      %1164 = vmatpush1.bf16.xpose.msra.mxu0 %v1159
      %1165 = vmatprep.subr.bf16.mxu0 0
      %1166 = vmatpush1.bf16.xpose.msra.mxu0 0
      %1167 = vmatprep.subr.bf16.mxu0 0
      %1168 = vmatpush1.bf16.xpose.msra.mxu0 0
      %1169 = vmatprep.subr.bf16.mxu0 0
      %1170 = vmatpush1.bf16.xpose.msra.mxu0 0
      %1171 = vmatprep.subr.bf16.mxu0 0
      %1172 = vmatpush1.bf16.xpose.msra.mxu0 0
      %1173 = vmatprep.subr.bf16.mxu0 0
      %1174 = vmatpush1.bf16.xpose.msra.mxu0 0
      %1175 = vmatprep.subr.bf16.mxu0 0
      %1176 = vmatpush1.bf16.xpose.msra.mxu0 0
      %1177 = vmatprep.subr.bf16.mxu0 0
      %1178 = vmatpush1.bf16.xpose.msra.mxu0 0
      %1179 = vmatprep.subr.bf16.mxu0 0
      %1180 = vmatpush1.bf16.xpose.msra.mxu0 0
      %1181 = vmatprep.subr.bf16.mxu0 0
      %1182 = vmatpush1.bf16.xpose.msra.mxu0 0
      %1183 = vmatprep.subr.bf16.mxu0 0
      %1184 = vmatpush1.bf16.xpose.msra.mxu0 0
      %1185 = vmatprep.subr.bf16.mxu0 0
      %1186 = vmatpush1.bf16.xpose.msra.mxu0 0
      %1187 = vmatprep.subr.bf16.mxu0 0
      %1188 = vmatpush1.bf16.xpose.msra.mxu0 0
      %1189 = vmatprep.subr.bf16.mxu0 0
      %1190 = vmatpush1.bf16.xpose.msra.mxu0 0
      %1191 = vmatprep.subr.bf16.mxu0 0
      %1192 = vmatpush1.bf16.xpose.msra.mxu0 0
      %1193 = vmatprep.mubr.bf16.mxu0 0
      %1194 = vmatmul.mubr.bf16.gmra.mrb[0].mxu0 %v1153
      %v1195 = vpop.f32.mrb[0].mxu0
      %v1196 = vadd.f32 %v1149, %v1195
      %v1197 = vpop.f32.mrb[0].mxu0
      %v1198 = vpop.f32.mrb[0].mxu0
      %v1199 = vadd.f32 %v1149, %v1198
      %v1200 = vpop.f32.mrb[0].mxu0
      %1201 = vdwg.mxu0
      %vm1202 = vcmask 261120
      %v1203 = vsel %vm1202, %v1196, -inf
      %1204 = vmax.xlane.f32.xlu0 %v1203
      %v1205 = vpop.xlane.xlu0 %1204
      %v1206 = vsel %vm1202, %v1199, -inf
      %1207 = vmax.xlane.f32.xlu0 %v1206
      %v1208 = vpop.xlane.xlu0 %1207
      %v1209 = vsub.f32 %v1196, %v1205
      %v1210 = vsub.f32 %v1199, %v1208
      %v1211 = vmul.f32 %v1209, 1.442695
      %v1212 = vpow.pop %v1211
      %v1213 = vmul.f32 %v1210, 1.442695
      %v1214 = vpow.pop %v1213
      %v1215 = vsel %vm1202, %v1212, 0.0
      %1216 = vadd.xlane.f32.xlu0 %v1215
      %v1217 = vpop.xlane.xlu0 %1216
      %v1218 = vsel %vm1202, %v1214, 0.0
      %1219 = vadd.xlane.f32.xlu0 %v1218
      %v1220 = vpop.xlane.xlu0 %1219
      %v1221 = vrcp.pop %v1217
      %v1222 = vrcp.pop %v1220
      %v1223 = vmul.f32 %v1212, %v1221
      %v1224 = vmul.f32 %v1214, %v1222
      %v1225 = vpack.c.bf16 %v1224, %v1223
      %1228 = vrot.lane.b32.xlu0 %v1143, 64
      %v1229 = vpop.permute.xlu0 %1228
      %1230 = vrot.lane.b32.xlu0 %v1144, 64
      %v1231 = vpop.permute.xlu0 %1230
      %v1235 = vsel %vm1202, %v1225, 0
      %1237 = vmatprep.subr.bf16.mxu0 0
      %1238 = vmatpush1.bf16.msra.mxu0 %v1229
      %1239 = vmatprep.subr.bf16.mxu0 0
      %1240 = vmatpush1.bf16.msra.mxu0 %v1231
      %1241 = vmatprep.subr.bf16.mxu0 0
      %1242 = vmatpush1.bf16.msra.mxu0 0
      %1243 = vmatprep.subr.bf16.mxu0 0
      %1244 = vmatpush1.bf16.msra.mxu0 0
      %1245 = vmatprep.subr.bf16.mxu0 0
      %1246 = vmatpush1.bf16.msra.mxu0 0
      %1247 = vmatprep.subr.bf16.mxu0 0
      %1248 = vmatpush1.bf16.msra.mxu0 0
      %1249 = vmatprep.subr.bf16.mxu0 0
      %1250 = vmatpush1.bf16.msra.mxu0 0
      %1251 = vmatprep.subr.bf16.mxu0 0
      %1252 = vmatpush1.bf16.msra.mxu0 0
      %1253 = vmatprep.subr.bf16.mxu0 0
      %1254 = vmatpush1.bf16.msra.mxu0 0
      %1255 = vmatprep.subr.bf16.mxu0 0
      %1256 = vmatpush1.bf16.msra.mxu0 0
      %1257 = vmatprep.subr.bf16.mxu0 0
      %1258 = vmatpush1.bf16.msra.mxu0 0
      %1259 = vmatprep.subr.bf16.mxu0 0
      %1260 = vmatpush1.bf16.msra.mxu0 0
      %1261 = vmatprep.subr.bf16.mxu0 0
      %1262 = vmatpush1.bf16.msra.mxu0 0
      %1263 = vmatprep.subr.bf16.mxu0 0
      %1264 = vmatpush1.bf16.msra.mxu0 0
      %1265 = vmatprep.subr.bf16.mxu0 0
      %1266 = vmatpush1.bf16.msra.mxu0 0
      %1267 = vmatprep.subr.bf16.mxu0 0
      %1268 = vmatpush1.bf16.msra.mxu0 0
      %1269 = vmatprep.mubr.bf16.mxu0 0
      %1270 = vmatmul.mubr.bf16.gmra.mrb[0].mxu0 %v1235
      %v1271 = vpop.f32.mrb[0].mxu0
      %v1272 = vadd.f32 0.0, %v1271
      %v1273 = vpop.f32.mrb[0].mxu0
      %v1274 = vpop.f32.mrb[0].mxu0
      %v1275 = vadd.f32 0.0, %v1274
      %v1276 = vpop.f32.mrb[0].mxu0
      %1277 = vdwg.mxu0
      %v1278 = vpack.c.bf16 %v1275, %v1272
      %v1279 = vlaneseq
      %v1280 = vshrl.u32 %v1279, 7
      %v1281 = vsub.s32 2, %v1280
      %v1282 = vrot.slane %v854, %v1281
      %v1291 = vunpack.c.l.b16 %v846
      %v1292 = vunpack.c.l.b16 %v847
      %v1293 = vunpack.c.l.b16 %v848
      %v1294 = vunpack.c.l.b16 %v849
      %v1295 = vunpack.c.l.b16 %v850
      %v1296 = vunpack.c.l.b16 %v851
      %v1297 = vunpack.c.l.b16 %v852
      %v1298 = vunpack.c.l.b16 %v853
      %v1299 = vpack.c.b16 %v1292, %v1291
      %v1300 = vpack.c.b16 %v1294, %v1293
      %v1301 = vpack.c.b16 %v1296, %v1295
      %v1302 = vpack.c.b16 %v1298, %v1297
      %v1308 = vsel %vm1151, %v1278, 0
      %1310 = vmatprep.subr.bf16.mxu0 0
      %1311 = vmatpush1.bf16.msra.mxu0 %v1299
      %1312 = vmatprep.subr.bf16.mxu0 0
      %1313 = vmatpush1.bf16.msra.mxu0 %v1300
      %1314 = vmatprep.subr.bf16.mxu0 0
      %1315 = vmatpush1.bf16.msra.mxu0 %v1301
      %1316 = vmatprep.subr.bf16.mxu0 0
      %1317 = vmatpush1.bf16.msra.mxu0 %v1302
      %1318 = vmatprep.subr.bf16.mxu0 0
      %1319 = vmatpush1.bf16.msra.mxu0 0
      %1320 = vmatprep.subr.bf16.mxu0 0
      %1321 = vmatpush1.bf16.msra.mxu0 0
      %1322 = vmatprep.subr.bf16.mxu0 0
      %1323 = vmatpush1.bf16.msra.mxu0 0
      %1324 = vmatprep.subr.bf16.mxu0 0
      %1325 = vmatpush1.bf16.msra.mxu0 0
      %1326 = vmatprep.subr.bf16.mxu0 0
      %1327 = vmatpush1.bf16.msra.mxu0 0
      %1328 = vmatprep.subr.bf16.mxu0 0
      %1329 = vmatpush1.bf16.msra.mxu0 0
      %1330 = vmatprep.subr.bf16.mxu0 0
      %1331 = vmatpush1.bf16.msra.mxu0 0
      %1332 = vmatprep.subr.bf16.mxu0 0
      %1333 = vmatpush1.bf16.msra.mxu0 0
      %1334 = vmatprep.subr.bf16.mxu0 0
      %1335 = vmatpush1.bf16.msra.mxu0 0
      %1336 = vmatprep.subr.bf16.mxu0 0
      %1337 = vmatpush1.bf16.msra.mxu0 0
      %1338 = vmatprep.subr.bf16.mxu0 0
      %1339 = vmatpush1.bf16.msra.mxu0 0
      %1340 = vmatprep.subr.bf16.mxu0 0
      %1341 = vmatpush1.bf16.msra.mxu0 0
      %1342 = vmatprep.mubr.bf16.mxu0 0
      %1343 = vmatmul.mubr.bf16.gmra.mrb[0].mxu0 %v1308
      %v1344 = vpop.f32.mrb[0].mxu0
      %v1345 = vadd.f32 %v1282, %v1344
      %v1346 = vpop.f32.mrb[0].mxu0
      %v1347 = vpop.f32.mrb[0].mxu0
      %v1348 = vadd.f32 %v1282, %v1347
      %v1349 = vpop.f32.mrb[0].mxu0
      %1350 = vdwg.mxu0
      %v1351 = vadd.f32 %v1345, %v812
      %v1352 = vadd.f32 %v1348, %v813
      %v1353 = vld [vmem:[%s9] sm:$0xff]
      %v1354 = vld [vmem:[%s9 + $0x8] sm:$0xff]
      %v1355 = vld [vmem:[%s9 + $0x10] sm:$0xff]
      %v1356 = vld [vmem:[%s9 + $0x18] sm:$0xff]
      %v1357 = vld [vmem:[%s9 + $0x20] sm:$0xff]
      %v1358 = vld [vmem:[%s9 + $0x28] sm:$0xff]
      %v1359 = vld [vmem:[%s9 + $0x30] sm:$0xff]
      %v1360 = vld [vmem:[%s9 + $0x38] sm:$0xff]
      %v1361 = vld [vmem:[%s9 + $0x40] sm:$0xff]
      %v1362 = vld [vmem:[%s9 + $0x48] sm:$0xff]
      %v1363 = vld [vmem:[%s9 + $0x50] sm:$0xff]
      %v1364 = vld [vmem:[%s9 + $0x58] sm:$0xff]
      %v1365 = vld [vmem:[%s9 + $0x60] sm:$0xff]
      %v1366 = vld [vmem:[%s9 + $0x68] sm:$0xff]
      %v1367 = vld [vmem:[%s9 + $0x70] sm:$0xff]
      %v1368 = vld [vmem:[%s9 + $0x78] sm:$0xff]
      %v1369 = vld [vmem:[%s9 + $0x80] sm:$0xff]
      %v1370 = vld [vmem:[%s9 + $0x88] sm:$0xff]
      %v1371 = vld [vmem:[%s9 + $0x90] sm:$0xff]
      %v1372 = vld [vmem:[%s9 + $0x98] sm:$0xff]
      %v1373 = vld [vmem:[%s9 + $0xa0] sm:$0xff]
      %v1374 = vld [vmem:[%s9 + $0xa8] sm:$0xff]
      %v1375 = vld [vmem:[%s9 + $0xb0] sm:$0xff]
      %v1376 = vld [vmem:[%s9 + $0xb8] sm:$0xff]
      %v1377 = vld [vmem:[%s9 + $0xc0] sm:$0xff]
      %v1378 = vld [vmem:[%s9 + $0xc8] sm:$0xff]
      %v1379 = vld [vmem:[%s9 + $0xd0] sm:$0xff]
      %v1380 = vld [vmem:[%s9 + $0xd8] sm:$0xff]
      %v1381 = vld [vmem:[%s9 + $0xe0] sm:$0xff]
      %v1382 = vld [vmem:[%s9 + $0xe8] sm:$0xff]
      %v1383 = vld [vmem:[%s9 + $0xf0] sm:$0xff]
      %v1384 = vld [vmem:[%s9 + $0xf8] sm:$0xff]
      %v1385 = vld [vmem:[%s9 + $0x100] sm:$0xff]
      %v1386 = vld [vmem:[%s9 + $0x108] sm:$0xff]
      %v1387 = vld [vmem:[%s9 + $0x110] sm:$0xff]
      %v1388 = vld [vmem:[%s9 + $0x118] sm:$0xff]
      %v1389 = vld [vmem:[%s9 + $0x120] sm:$0xff]
      %v1390 = vld [vmem:[%s9 + $0x128] sm:$0xff]
      %v1391 = vld [vmem:[%s9 + $0x130] sm:$0xff]
      %v1392 = vld [vmem:[%s9 + $0x138] sm:$0xff]
      %v1393 = vld [vmem:[%s9 + $0x140] sm:$0xff]
      %v1394 = vld [vmem:[%s9 + $0x148] sm:$0xff]
      %v1395 = vld [vmem:[%s9 + $0x150] sm:$0xff]
      %v1396 = vld [vmem:[%s9 + $0x158] sm:$0xff]
      %v1397 = vld [vmem:[%s9 + $0x160] sm:$0xff]
      %v1398 = vld [vmem:[%s9 + $0x168] sm:$0xff]
      %v1399 = vld [vmem:[%s9 + $0x170] sm:$0xff]
      %v1400 = vld [vmem:[%s9 + $0x178] sm:$0xff]
      %v1401 = vld [vmem:[%s9 + $0x180] sm:$0xff]
      %v1402 = vld [vmem:[%s9 + $0x188] sm:$0xff]
      %v1403 = vld [vmem:[%s9 + $0x190] sm:$0xff]
      %v1404 = vld [vmem:[%s9 + $0x198] sm:$0xff]
      %v1405 = vld [vmem:[%s9 + $0x1a0] sm:$0xff]
      %v1406 = vld [vmem:[%s9 + $0x1a8] sm:$0xff]
      %v1407 = vld [vmem:[%s9 + $0x1b0] sm:$0xff]
      %v1408 = vld [vmem:[%s9 + $0x1b8] sm:$0xff]
      %v1409 = vld [vmem:[%s9 + $0x1c0] sm:$0xff]
      %v1410 = vld [vmem:[%s9 + $0x1c8] sm:$0xff]
      %v1411 = vld [vmem:[%s9 + $0x1d0] sm:$0xff]
      %v1412 = vld [vmem:[%s9 + $0x1d8] sm:$0xff]
      %v1413 = vld [vmem:[%s9 + $0x1e0] sm:$0xff]
      %v1414 = vld [vmem:[%s9 + $0x1e8] sm:$0xff]
      %v1415 = vld [vmem:[%s9 + $0x1f0] sm:$0xff]
      %v1416 = vld [vmem:[%s9 + $0x1f8] sm:$0xff]
      %v1417 = vld [vmem:[%s10] sm:$0xff]
      %v1418 = vld [vmem:[%s11] sm:$0xf]
      %v1419 = vld [vmem:[%s11 + $0x4] sm:$0xf]
      %v1420 = vld [vmem:[%s11 + $0x8] sm:$0xf]
      %v1421 = vld [vmem:[%s11 + $0xc] sm:$0xf]
      %v1422 = vld [vmem:[%s11 + $0x10] sm:$0xf]
      %v1423 = vld [vmem:[%s11 + $0x14] sm:$0xf]
      %v1424 = vld [vmem:[%s11 + $0x18] sm:$0xf]
      %v1425 = vld [vmem:[%s11 + $0x1c] sm:$0xf]
      %v1426 = vld [vmem:[%s11 + $0x20] sm:$0xf]
      %v1427 = vld [vmem:[%s11 + $0x24] sm:$0xf]
      %v1428 = vld [vmem:[%s11 + $0x28] sm:$0xf]
      %v1429 = vld [vmem:[%s11 + $0x2c] sm:$0xf]
      %v1430 = vld [vmem:[%s11 + $0x30] sm:$0xf]
      %v1431 = vld [vmem:[%s11 + $0x34] sm:$0xf]
      %v1432 = vld [vmem:[%s11 + $0x38] sm:$0xf]
      %v1433 = vld [vmem:[%s11 + $0x3c] sm:$0xf]
      %v1434 = vld [vmem:[%s11 + $0x40] sm:$0xf]
      %v1435 = vld [vmem:[%s11 + $0x44] sm:$0xf]
      %v1436 = vld [vmem:[%s11 + $0x48] sm:$0xf]
      %v1437 = vld [vmem:[%s11 + $0x4c] sm:$0xf]
      %v1438 = vld [vmem:[%s11 + $0x50] sm:$0xf]
      %v1439 = vld [vmem:[%s11 + $0x54] sm:$0xf]
      %v1440 = vld [vmem:[%s11 + $0x58] sm:$0xf]
      %v1441 = vld [vmem:[%s11 + $0x5c] sm:$0xf]
      %v1442 = vld [vmem:[%s11 + $0x60] sm:$0xf]
      %v1443 = vld [vmem:[%s11 + $0x64] sm:$0xf]
      %v1444 = vld [vmem:[%s11 + $0x68] sm:$0xf]
      %v1445 = vld [vmem:[%s11 + $0x6c] sm:$0xf]
      %v1446 = vld [vmem:[%s11 + $0x70] sm:$0xf]
      %v1447 = vld [vmem:[%s11 + $0x74] sm:$0xf]
      %v1448 = vld [vmem:[%s11 + $0x78] sm:$0xf]
      %v1449 = vld [vmem:[%s11 + $0x7c] sm:$0xf]
      %v1450 = vld [vmem:[%s11 + $0x80] sm:$0xf]
      %v1451 = vld [vmem:[%s11 + $0x84] sm:$0xf]
      %v1452 = vld [vmem:[%s11 + $0x88] sm:$0xf]
      %v1453 = vld [vmem:[%s11 + $0x8c] sm:$0xf]
      %v1454 = vld [vmem:[%s11 + $0x90] sm:$0xf]
      %v1455 = vld [vmem:[%s11 + $0x94] sm:$0xf]
      %v1456 = vld [vmem:[%s11 + $0x98] sm:$0xf]
      %v1457 = vld [vmem:[%s11 + $0x9c] sm:$0xf]
      %v1458 = vld [vmem:[%s11 + $0xa0] sm:$0xf]
      %v1459 = vld [vmem:[%s11 + $0xa4] sm:$0xf]
      %v1460 = vld [vmem:[%s11 + $0xa8] sm:$0xf]
      %v1461 = vld [vmem:[%s11 + $0xac] sm:$0xf]
      %v1462 = vld [vmem:[%s11 + $0xb0] sm:$0xf]
      %v1463 = vld [vmem:[%s11 + $0xb4] sm:$0xf]
      %v1464 = vld [vmem:[%s11 + $0xb8] sm:$0xf]
      %v1465 = vld [vmem:[%s11 + $0xbc] sm:$0xf]
      %v1466 = vld [vmem:[%s11 + $0xc0] sm:$0xf]
      %v1467 = vld [vmem:[%s11 + $0xc4] sm:$0xf]
      %v1468 = vld [vmem:[%s11 + $0xc8] sm:$0xf]
      %v1469 = vld [vmem:[%s11 + $0xcc] sm:$0xf]
      %v1470 = vld [vmem:[%s11 + $0xd0] sm:$0xf]
      %v1471 = vld [vmem:[%s11 + $0xd4] sm:$0xf]
      %v1472 = vld [vmem:[%s11 + $0xd8] sm:$0xf]
      %v1473 = vld [vmem:[%s11 + $0xdc] sm:$0xf]
      %v1474 = vld [vmem:[%s11 + $0xe0] sm:$0xf]
      %v1475 = vld [vmem:[%s11 + $0xe4] sm:$0xf]
      %v1476 = vld [vmem:[%s11 + $0xe8] sm:$0xf]
      %v1477 = vld [vmem:[%s11 + $0xec] sm:$0xf]
      %v1478 = vld [vmem:[%s11 + $0xf0] sm:$0xf]
      %v1479 = vld [vmem:[%s11 + $0xf4] sm:$0xf]
      %v1480 = vld [vmem:[%s11 + $0xf8] sm:$0xf]
      %v1481 = vld [vmem:[%s11 + $0xfc] sm:$0xf]
      %v1482 = vld [vmem:[%s12] sm:$0x7]
      %1483 = vadd.xlane.f32.xlu0 %v1351
      %v1484 = vpop.xlane.xlu0 %1483
      %1485 = vadd.xlane.f32.xlu0 %v1352
      %v1486 = vpop.xlane.xlu0 %1485
      %v1487 = vmul.f32 %v1484, %v860
      %v1488 = vmul.f32 %v1486, %v860
      %v1489 = vsub.f32 %v1351, %v1487
      %v1490 = vsub.f32 %v1352, %v1488
      %v1491 = vmul.f32 %v1489, %v1489
      %v1492 = vmul.f32 %v1490, %v1490
      %1493 = vadd.xlane.f32.xlu0 %v1491
      %v1494 = vpop.xlane.xlu0 %1493
      %1495 = vadd.xlane.f32.xlu0 %v1492
      %v1496 = vpop.xlane.xlu0 %1495
      %v1497 = vmul.f32 %v1494, %v860
      %v1498 = vmul.f32 %v1496, %v860
      %v1499 = vadd.f32 %v1497, 1e-05
      %v1500 = vadd.f32 %v1498, 1e-05
      %v1501 = vrsqrt.pop %v1499
      %v1502 = vrsqrt.pop %v1500
      %v1503 = vmul.f32 %v1489, %v1501
      %v1504 = vmul.f32 %v1490, %v1502
      %v1505 = vlaneseq
      %v1506 = vshrl.u32 %v1505, 7
      %v1507 = vsub.s32 0, %v1506
      %v1508 = vrot.slane %v1482, %v1507
      %v1509 = vmul.f32 %v1503, %v1508
      %v1510 = vmul.f32 %v1504, %v1508
      %v1511 = vlaneseq
      %v1512 = vshrl.u32 %v1511, 7
      %v1513 = vsub.s32 1, %v1512
      %v1514 = vrot.slane %v1482, %v1513
      %v1515 = vadd.f32 %v1509, %v1514
      %v1516 = vadd.f32 %v1510, %v1514
      %v1517 = vpack.c.bf16 %v1516, %v1515
      %v1519 = vlaneseq
      %v1520 = vshrl.u32 %v1519, 7
      %v1521 = vsub.s32 0, %v1520
      %v1522 = vrot.slane %v1417, %v1521
      %v1523 = vlaneseq
      %v1524 = vshrl.u32 %v1523, 7
      %v1525 = vsub.s32 1, %v1524
      %v1526 = vrot.slane %v1417, %v1525
      %v1527 = vlaneseq
      %v1528 = vshrl.u32 %v1527, 7
      %v1529 = vsub.s32 2, %v1528
      %v1530 = vrot.slane %v1417, %v1529
      %v1531 = vlaneseq
      %v1532 = vshrl.u32 %v1531, 7
      %v1533 = vsub.s32 3, %v1532
      %v1534 = vrot.slane %v1417, %v1533
      %v1535 = vlaneseq
      %v1536 = vshrl.u32 %v1535, 7
      %v1537 = vsub.s32 4, %v1536
      %v1538 = vrot.slane %v1417, %v1537
      %v1539 = vlaneseq
      %v1540 = vshrl.u32 %v1539, 7
      %v1541 = vsub.s32 5, %v1540
      %v1542 = vrot.slane %v1417, %v1541
      %v1543 = vlaneseq
      %v1544 = vshrl.u32 %v1543, 7
      %v1545 = vsub.s32 6, %v1544
      %v1546 = vrot.slane %v1417, %v1545
      %v1547 = vlaneseq
      %v1548 = vshrl.u32 %v1547, 7
      %v1549 = vsub.s32 7, %v1548
      %v1550 = vrot.slane %v1417, %v1549
      %v1623 = vunpack.c.l.b16 %v1353
      %v1624 = vunpack.c.h.b16 %v1353
      %v1625 = vunpack.c.l.b16 %v1354
      %v1626 = vunpack.c.h.b16 %v1354
      %v1627 = vunpack.c.l.b16 %v1355
      %v1628 = vunpack.c.h.b16 %v1355
      %v1629 = vunpack.c.l.b16 %v1356
      %v1630 = vunpack.c.h.b16 %v1356
      %v1631 = vunpack.c.l.b16 %v1357
      %v1632 = vunpack.c.h.b16 %v1357
      %v1633 = vunpack.c.l.b16 %v1358
      %v1634 = vunpack.c.h.b16 %v1358
      %v1635 = vunpack.c.l.b16 %v1359
      %v1636 = vunpack.c.h.b16 %v1359
      %v1637 = vunpack.c.l.b16 %v1360
      %v1638 = vunpack.c.h.b16 %v1360
      %v1639 = vunpack.c.l.b16 %v1361
      %v1640 = vunpack.c.h.b16 %v1361
      %v1641 = vunpack.c.l.b16 %v1362
      %v1642 = vunpack.c.h.b16 %v1362
      %v1643 = vunpack.c.l.b16 %v1363
      %v1644 = vunpack.c.h.b16 %v1363
      %v1645 = vunpack.c.l.b16 %v1364
      %v1646 = vunpack.c.h.b16 %v1364
      %v1647 = vunpack.c.l.b16 %v1365
      %v1648 = vunpack.c.h.b16 %v1365
      %v1649 = vunpack.c.l.b16 %v1366
      %v1650 = vunpack.c.h.b16 %v1366
      %v1651 = vunpack.c.l.b16 %v1367
      %v1652 = vunpack.c.h.b16 %v1367
      %v1653 = vunpack.c.l.b16 %v1368
      %v1654 = vunpack.c.h.b16 %v1368
      %v1655 = vunpack.c.l.b16 %v1369
      %v1656 = vunpack.c.h.b16 %v1369
      %v1657 = vunpack.c.l.b16 %v1370
      %v1658 = vunpack.c.h.b16 %v1370
      %v1659 = vunpack.c.l.b16 %v1371
      %v1660 = vunpack.c.h.b16 %v1371
      %v1661 = vunpack.c.l.b16 %v1372
      %v1662 = vunpack.c.h.b16 %v1372
      %v1663 = vunpack.c.l.b16 %v1373
      %v1664 = vunpack.c.h.b16 %v1373
      %v1665 = vunpack.c.l.b16 %v1374
      %v1666 = vunpack.c.h.b16 %v1374
      %v1667 = vunpack.c.l.b16 %v1375
      %v1668 = vunpack.c.h.b16 %v1375
      %v1669 = vunpack.c.l.b16 %v1376
      %v1670 = vunpack.c.h.b16 %v1376
      %v1671 = vunpack.c.l.b16 %v1377
      %v1672 = vunpack.c.h.b16 %v1377
      %v1673 = vunpack.c.l.b16 %v1378
      %v1674 = vunpack.c.h.b16 %v1378
      %v1675 = vunpack.c.l.b16 %v1379
      %v1676 = vunpack.c.h.b16 %v1379
      %v1677 = vunpack.c.l.b16 %v1380
      %v1678 = vunpack.c.h.b16 %v1380
      %v1679 = vunpack.c.l.b16 %v1381
      %v1680 = vunpack.c.h.b16 %v1381
      %v1681 = vunpack.c.l.b16 %v1382
      %v1682 = vunpack.c.h.b16 %v1382
      %v1683 = vunpack.c.l.b16 %v1383
      %v1684 = vunpack.c.h.b16 %v1383
      %v1685 = vunpack.c.l.b16 %v1384
      %v1686 = vunpack.c.h.b16 %v1384
      %v1687 = vunpack.c.l.b16 %v1385
      %v1688 = vunpack.c.h.b16 %v1385
      %v1689 = vunpack.c.l.b16 %v1386
      %v1690 = vunpack.c.h.b16 %v1386
      %v1691 = vunpack.c.l.b16 %v1387
      %v1692 = vunpack.c.h.b16 %v1387
      %v1693 = vunpack.c.l.b16 %v1388
      %v1694 = vunpack.c.h.b16 %v1388
      %v1695 = vunpack.c.l.b16 %v1389
      %v1696 = vunpack.c.h.b16 %v1389
      %v1697 = vunpack.c.l.b16 %v1390
      %v1698 = vunpack.c.h.b16 %v1390
      %v1699 = vunpack.c.l.b16 %v1391
      %v1700 = vunpack.c.h.b16 %v1391
      %v1701 = vunpack.c.l.b16 %v1392
      %v1702 = vunpack.c.h.b16 %v1392
      %v1703 = vunpack.c.l.b16 %v1393
      %v1704 = vunpack.c.h.b16 %v1393
      %v1705 = vunpack.c.l.b16 %v1394
      %v1706 = vunpack.c.h.b16 %v1394
      %v1707 = vunpack.c.l.b16 %v1395
      %v1708 = vunpack.c.h.b16 %v1395
      %v1709 = vunpack.c.l.b16 %v1396
      %v1710 = vunpack.c.h.b16 %v1396
      %v1711 = vunpack.c.l.b16 %v1397
      %v1712 = vunpack.c.h.b16 %v1397
      %v1713 = vunpack.c.l.b16 %v1398
      %v1714 = vunpack.c.h.b16 %v1398
      %v1715 = vunpack.c.l.b16 %v1399
      %v1716 = vunpack.c.h.b16 %v1399
      %v1717 = vunpack.c.l.b16 %v1400
      %v1718 = vunpack.c.h.b16 %v1400
      %v1719 = vunpack.c.l.b16 %v1401
      %v1720 = vunpack.c.h.b16 %v1401
      %v1721 = vunpack.c.l.b16 %v1402
      %v1722 = vunpack.c.h.b16 %v1402
      %v1723 = vunpack.c.l.b16 %v1403
      %v1724 = vunpack.c.h.b16 %v1403
      %v1725 = vunpack.c.l.b16 %v1404
      %v1726 = vunpack.c.h.b16 %v1404
      %v1727 = vunpack.c.l.b16 %v1405
      %v1728 = vunpack.c.h.b16 %v1405
      %v1729 = vunpack.c.l.b16 %v1406
      %v1730 = vunpack.c.h.b16 %v1406
      %v1731 = vunpack.c.l.b16 %v1407
      %v1732 = vunpack.c.h.b16 %v1407
      %v1733 = vunpack.c.l.b16 %v1408
      %v1734 = vunpack.c.h.b16 %v1408
      %v1735 = vunpack.c.l.b16 %v1409
      %v1736 = vunpack.c.h.b16 %v1409
      %v1737 = vunpack.c.l.b16 %v1410
      %v1738 = vunpack.c.h.b16 %v1410
      %v1739 = vunpack.c.l.b16 %v1411
      %v1740 = vunpack.c.h.b16 %v1411
      %v1741 = vunpack.c.l.b16 %v1412
      %v1742 = vunpack.c.h.b16 %v1412
      %v1743 = vunpack.c.l.b16 %v1413
      %v1744 = vunpack.c.h.b16 %v1413
      %v1745 = vunpack.c.l.b16 %v1414
      %v1746 = vunpack.c.h.b16 %v1414
      %v1747 = vunpack.c.l.b16 %v1415
      %v1748 = vunpack.c.h.b16 %v1415
      %v1749 = vunpack.c.l.b16 %v1416
      %v1750 = vunpack.c.h.b16 %v1416
      %v1751 = vpack.c.b16 %v1631, %v1623
      %v1752 = vpack.c.b16 %v1632, %v1624
      %v1753 = vpack.c.b16 %v1633, %v1625
      %v1754 = vpack.c.b16 %v1634, %v1626
      %v1755 = vpack.c.b16 %v1635, %v1627
      %v1756 = vpack.c.b16 %v1636, %v1628
      %v1757 = vpack.c.b16 %v1637, %v1629
      %v1758 = vpack.c.b16 %v1638, %v1630
      %v1759 = vpack.c.b16 %v1647, %v1639
      %v1760 = vpack.c.b16 %v1648, %v1640
      %v1761 = vpack.c.b16 %v1649, %v1641
      %v1762 = vpack.c.b16 %v1650, %v1642
      %v1763 = vpack.c.b16 %v1651, %v1643
      %v1764 = vpack.c.b16 %v1652, %v1644
      %v1765 = vpack.c.b16 %v1653, %v1645
      %v1766 = vpack.c.b16 %v1654, %v1646
      %v1767 = vpack.c.b16 %v1663, %v1655
      %v1768 = vpack.c.b16 %v1664, %v1656
      %v1769 = vpack.c.b16 %v1665, %v1657
      %v1770 = vpack.c.b16 %v1666, %v1658
      %v1771 = vpack.c.b16 %v1667, %v1659
      %v1772 = vpack.c.b16 %v1668, %v1660
      %v1773 = vpack.c.b16 %v1669, %v1661
      %v1774 = vpack.c.b16 %v1670, %v1662
      %v1775 = vpack.c.b16 %v1679, %v1671
      %v1776 = vpack.c.b16 %v1680, %v1672
      %v1777 = vpack.c.b16 %v1681, %v1673
      %v1778 = vpack.c.b16 %v1682, %v1674
      %v1779 = vpack.c.b16 %v1683, %v1675
      %v1780 = vpack.c.b16 %v1684, %v1676
      %v1781 = vpack.c.b16 %v1685, %v1677
      %v1782 = vpack.c.b16 %v1686, %v1678
      %v1783 = vpack.c.b16 %v1695, %v1687
      %v1784 = vpack.c.b16 %v1696, %v1688
      %v1785 = vpack.c.b16 %v1697, %v1689
      %v1786 = vpack.c.b16 %v1698, %v1690
      %v1787 = vpack.c.b16 %v1699, %v1691
      %v1788 = vpack.c.b16 %v1700, %v1692
      %v1789 = vpack.c.b16 %v1701, %v1693
      %v1790 = vpack.c.b16 %v1702, %v1694
      %v1791 = vpack.c.b16 %v1711, %v1703
      %v1792 = vpack.c.b16 %v1712, %v1704
      %v1793 = vpack.c.b16 %v1713, %v1705
      %v1794 = vpack.c.b16 %v1714, %v1706
      %v1795 = vpack.c.b16 %v1715, %v1707
      %v1796 = vpack.c.b16 %v1716, %v1708
      %v1797 = vpack.c.b16 %v1717, %v1709
      %v1798 = vpack.c.b16 %v1718, %v1710
      %v1799 = vpack.c.b16 %v1727, %v1719
      %v1800 = vpack.c.b16 %v1728, %v1720
      %v1801 = vpack.c.b16 %v1729, %v1721
      %v1802 = vpack.c.b16 %v1730, %v1722
      %v1803 = vpack.c.b16 %v1731, %v1723
      %v1804 = vpack.c.b16 %v1732, %v1724
      %v1805 = vpack.c.b16 %v1733, %v1725
      %v1806 = vpack.c.b16 %v1734, %v1726
      %v1807 = vpack.c.b16 %v1743, %v1735
      %v1808 = vpack.c.b16 %v1744, %v1736
      %v1809 = vpack.c.b16 %v1745, %v1737
      %v1810 = vpack.c.b16 %v1746, %v1738
      %v1811 = vpack.c.b16 %v1747, %v1739
      %v1812 = vpack.c.b16 %v1748, %v1740
      %v1813 = vpack.c.b16 %v1749, %v1741
      %v1814 = vpack.c.b16 %v1750, %v1742
      %1879 = vmatprep.subr.bf16.mxu0 %v1752
      %1880 = vmatpush1.bf16.msra.mxu0 %v1751
      %1881 = vmatprep.subr.bf16.mxu0 %v1760
      %1882 = vmatpush1.bf16.msra.mxu0 %v1759
      %1883 = vmatprep.subr.bf16.mxu0 %v1768
      %1884 = vmatpush1.bf16.msra.mxu0 %v1767
      %1885 = vmatprep.subr.bf16.mxu0 %v1776
      %1886 = vmatpush1.bf16.msra.mxu0 %v1775
      %1887 = vmatprep.subr.bf16.mxu0 %v1784
      %1888 = vmatpush1.bf16.msra.mxu0 %v1783
      %1889 = vmatprep.subr.bf16.mxu0 %v1792
      %1890 = vmatpush1.bf16.msra.mxu0 %v1791
      %1891 = vmatprep.subr.bf16.mxu0 %v1800
      %1892 = vmatpush1.bf16.msra.mxu0 %v1799
      %1893 = vmatprep.subr.bf16.mxu0 %v1808
      %1894 = vmatpush1.bf16.msra.mxu0 %v1807
      %1895 = vmatprep.subr.bf16.mxu0 0
      %1896 = vmatpush1.bf16.msra.mxu0 0
      %1897 = vmatprep.subr.bf16.mxu0 0
      %1898 = vmatpush1.bf16.msra.mxu0 0
      %1899 = vmatprep.subr.bf16.mxu0 0
      %1900 = vmatpush1.bf16.msra.mxu0 0
      %1901 = vmatprep.subr.bf16.mxu0 0
      %1902 = vmatpush1.bf16.msra.mxu0 0
      %1903 = vmatprep.subr.bf16.mxu0 0
      %1904 = vmatpush1.bf16.msra.mxu0 0
      %1905 = vmatprep.subr.bf16.mxu0 0
      %1906 = vmatpush1.bf16.msra.mxu0 0
      %1907 = vmatprep.subr.bf16.mxu0 0
      %1908 = vmatpush1.bf16.msra.mxu0 0
      %1909 = vmatprep.subr.bf16.mxu0 0
      %1910 = vmatpush1.bf16.msra.mxu0 0
      %1911 = vmatprep.mubr.bf16.mxu0 0
      %1912 = vmatmul.mubr.bf16.gmra.mrb[0].mxu0 %v1517
      %v1913 = vpop.f32.mrb[0].mxu0
      %v1914 = vadd.f32 %v1522, %v1913
      %v1915 = vpop.f32.mrb[0].mxu0
      %v1916 = vadd.f32 %v1526, %v1915
      %v1917 = vpop.f32.mrb[0].mxu0
      %v1918 = vadd.f32 %v1522, %v1917
      %v1919 = vpop.f32.mrb[0].mxu0
      %v1920 = vadd.f32 %v1526, %v1919
      %1921 = vdwg.mxu0
      %1922 = vmatprep.subr.bf16.mxu0 %v1754
      %1923 = vmatpush1.bf16.msra.mxu0 %v1753
      %1924 = vmatprep.subr.bf16.mxu0 %v1762
      %1925 = vmatpush1.bf16.msra.mxu0 %v1761
      %1926 = vmatprep.subr.bf16.mxu0 %v1770
      %1927 = vmatpush1.bf16.msra.mxu0 %v1769
      %1928 = vmatprep.subr.bf16.mxu0 %v1778
      %1929 = vmatpush1.bf16.msra.mxu0 %v1777
      %1930 = vmatprep.subr.bf16.mxu0 %v1786
      %1931 = vmatpush1.bf16.msra.mxu0 %v1785
      %1932 = vmatprep.subr.bf16.mxu0 %v1794
      %1933 = vmatpush1.bf16.msra.mxu0 %v1793
      %1934 = vmatprep.subr.bf16.mxu0 %v1802
      %1935 = vmatpush1.bf16.msra.mxu0 %v1801
      %1936 = vmatprep.subr.bf16.mxu0 %v1810
      %1937 = vmatpush1.bf16.msra.mxu0 %v1809
      %1938 = vmatprep.subr.bf16.mxu0 0
      %1939 = vmatpush1.bf16.msra.mxu0 0
      %1940 = vmatprep.subr.bf16.mxu0 0
      %1941 = vmatpush1.bf16.msra.mxu0 0
      %1942 = vmatprep.subr.bf16.mxu0 0
      %1943 = vmatpush1.bf16.msra.mxu0 0
      %1944 = vmatprep.subr.bf16.mxu0 0
      %1945 = vmatpush1.bf16.msra.mxu0 0
      %1946 = vmatprep.subr.bf16.mxu0 0
      %1947 = vmatpush1.bf16.msra.mxu0 0
      %1948 = vmatprep.subr.bf16.mxu0 0
      %1949 = vmatpush1.bf16.msra.mxu0 0
      %1950 = vmatprep.subr.bf16.mxu0 0
      %1951 = vmatpush1.bf16.msra.mxu0 0
      %1952 = vmatprep.subr.bf16.mxu0 0
      %1953 = vmatpush1.bf16.msra.mxu0 0
      %1954 = vmatprep.mubr.bf16.mxu0 0
      %1955 = vmatmul.mubr.bf16.gmra.mrb[0].mxu0 %v1517
      %v1956 = vpop.f32.mrb[0].mxu0
      %v1957 = vadd.f32 %v1530, %v1956
      %v1958 = vpop.f32.mrb[0].mxu0
      %v1959 = vadd.f32 %v1534, %v1958
      %v1960 = vpop.f32.mrb[0].mxu0
      %v1961 = vadd.f32 %v1530, %v1960
      %v1962 = vpop.f32.mrb[0].mxu0
      %v1963 = vadd.f32 %v1534, %v1962
      %1964 = vdwg.mxu0
      %1965 = vmatprep.subr.bf16.mxu0 %v1756
      %1966 = vmatpush1.bf16.msra.mxu0 %v1755
      %1967 = vmatprep.subr.bf16.mxu0 %v1764
      %1968 = vmatpush1.bf16.msra.mxu0 %v1763
      %1969 = vmatprep.subr.bf16.mxu0 %v1772
      %1970 = vmatpush1.bf16.msra.mxu0 %v1771
      %1971 = vmatprep.subr.bf16.mxu0 %v1780
      %1972 = vmatpush1.bf16.msra.mxu0 %v1779
      %1973 = vmatprep.subr.bf16.mxu0 %v1788
      %1974 = vmatpush1.bf16.msra.mxu0 %v1787
      %1975 = vmatprep.subr.bf16.mxu0 %v1796
      %1976 = vmatpush1.bf16.msra.mxu0 %v1795
      %1977 = vmatprep.subr.bf16.mxu0 %v1804
      %1978 = vmatpush1.bf16.msra.mxu0 %v1803
      %1979 = vmatprep.subr.bf16.mxu0 %v1812
      %1980 = vmatpush1.bf16.msra.mxu0 %v1811
      %1981 = vmatprep.subr.bf16.mxu0 0
      %1982 = vmatpush1.bf16.msra.mxu0 0
      %1983 = vmatprep.subr.bf16.mxu0 0
      %1984 = vmatpush1.bf16.msra.mxu0 0
      %1985 = vmatprep.subr.bf16.mxu0 0
      %1986 = vmatpush1.bf16.msra.mxu0 0
      %1987 = vmatprep.subr.bf16.mxu0 0
      %1988 = vmatpush1.bf16.msra.mxu0 0
      %1989 = vmatprep.subr.bf16.mxu0 0
      %1990 = vmatpush1.bf16.msra.mxu0 0
      %1991 = vmatprep.subr.bf16.mxu0 0
      %1992 = vmatpush1.bf16.msra.mxu0 0
      %1993 = vmatprep.subr.bf16.mxu0 0
      %1994 = vmatpush1.bf16.msra.mxu0 0
      %1995 = vmatprep.subr.bf16.mxu0 0
      %1996 = vmatpush1.bf16.msra.mxu0 0
      %1997 = vmatprep.mubr.bf16.mxu0 0
      %1998 = vmatmul.mubr.bf16.gmra.mrb[0].mxu0 %v1517
      %v1999 = vpop.f32.mrb[0].mxu0
      %v2000 = vadd.f32 %v1538, %v1999
      %v2001 = vpop.f32.mrb[0].mxu0
      %v2002 = vadd.f32 %v1542, %v2001
      %v2003 = vpop.f32.mrb[0].mxu0
      %v2004 = vadd.f32 %v1538, %v2003
      %v2005 = vpop.f32.mrb[0].mxu0
      %v2006 = vadd.f32 %v1542, %v2005
      %2007 = vdwg.mxu0
      %2008 = vmatprep.subr.bf16.mxu0 %v1758
      %2009 = vmatpush1.bf16.msra.mxu0 %v1757
      %2010 = vmatprep.subr.bf16.mxu0 %v1766
      %2011 = vmatpush1.bf16.msra.mxu0 %v1765
      %2012 = vmatprep.subr.bf16.mxu0 %v1774
      %2013 = vmatpush1.bf16.msra.mxu0 %v1773
      %2014 = vmatprep.subr.bf16.mxu0 %v1782
      %2015 = vmatpush1.bf16.msra.mxu0 %v1781
      %2016 = vmatprep.subr.bf16.mxu0 %v1790
      %2017 = vmatpush1.bf16.msra.mxu0 %v1789
      %2018 = vmatprep.subr.bf16.mxu0 %v1798
      %2019 = vmatpush1.bf16.msra.mxu0 %v1797
      %2020 = vmatprep.subr.bf16.mxu0 %v1806
      %2021 = vmatpush1.bf16.msra.mxu0 %v1805
      %2022 = vmatprep.subr.bf16.mxu0 %v1814
      %2023 = vmatpush1.bf16.msra.mxu0 %v1813
      %2024 = vmatprep.subr.bf16.mxu0 0
      %2025 = vmatpush1.bf16.msra.mxu0 0
      %2026 = vmatprep.subr.bf16.mxu0 0
      %2027 = vmatpush1.bf16.msra.mxu0 0
      %2028 = vmatprep.subr.bf16.mxu0 0
      %2029 = vmatpush1.bf16.msra.mxu0 0
      %2030 = vmatprep.subr.bf16.mxu0 0
      %2031 = vmatpush1.bf16.msra.mxu0 0
      %2032 = vmatprep.subr.bf16.mxu0 0
      %2033 = vmatpush1.bf16.msra.mxu0 0
      %2034 = vmatprep.subr.bf16.mxu0 0
      %2035 = vmatpush1.bf16.msra.mxu0 0
      %2036 = vmatprep.subr.bf16.mxu0 0
      %2037 = vmatpush1.bf16.msra.mxu0 0
      %2038 = vmatprep.subr.bf16.mxu0 0
      %2039 = vmatpush1.bf16.msra.mxu0 0
      %2040 = vmatprep.mubr.bf16.mxu0 0
      %2041 = vmatmul.mubr.bf16.gmra.mrb[0].mxu0 %v1517
      %v2042 = vpop.f32.mrb[0].mxu0
      %v2043 = vadd.f32 %v1546, %v2042
      %v2044 = vpop.f32.mrb[0].mxu0
      %v2045 = vadd.f32 %v1550, %v2044
      %v2046 = vpop.f32.mrb[0].mxu0
      %v2047 = vadd.f32 %v1546, %v2046
      %v2048 = vpop.f32.mrb[0].mxu0
      %v2049 = vadd.f32 %v1550, %v2048
      %2050 = vdwg.mxu0
      %v2051 = vmul.f32 %v2000, 0.5
      %v2052 = vmul.f32 %v2002, 0.5
      %v2053 = vmul.f32 %v2043, 0.5
      %v2054 = vmul.f32 %v2045, 0.5
      %v2055 = vmul.f32 %v2004, 0.5
      %v2056 = vmul.f32 %v2006, 0.5
      %v2057 = vmul.f32 %v2047, 0.5
      %v2058 = vmul.f32 %v2049, 0.5
      %v2059 = vmul.f32 %v2000, 0.70710677
      %v2060 = vmul.f32 %v2002, 0.70710677
      %v2061 = vmul.f32 %v2043, 0.70710677
      %v2062 = vmul.f32 %v2045, 0.70710677
      %v2063 = vmul.f32 %v2004, 0.70710677
      %v2064 = vmul.f32 %v2006, 0.70710677
      %v2065 = vmul.f32 %v2047, 0.70710677
      %v2066 = vmul.f32 %v2049, 0.70710677
      %vm2067 = vcmp.ge.f32.partialorder %v2059, 0.0
      %vm2068 = vcmp.ge.f32.partialorder %v2060, 0.0
      %vm2069 = vcmp.ge.f32.partialorder %v2061, 0.0
      %vm2070 = vcmp.ge.f32.partialorder %v2062, 0.0
      %vm2071 = vcmp.ge.f32.partialorder %v2063, 0.0
      %vm2072 = vcmp.ge.f32.partialorder %v2064, 0.0
      %vm2073 = vcmp.ge.f32.partialorder %v2065, 0.0
      %vm2074 = vcmp.ge.f32.partialorder %v2066, 0.0
      %v2075 = vsel %vm2067, 1.0, -1.0
      %v2076 = vsel %vm2068, 1.0, -1.0
      %v2077 = vsel %vm2069, 1.0, -1.0
      %v2078 = vsel %vm2070, 1.0, -1.0
      %v2079 = vsel %vm2071, 1.0, -1.0
      %v2080 = vsel %vm2072, 1.0, -1.0
      %v2081 = vsel %vm2073, 1.0, -1.0
      %v2082 = vsel %vm2074, 1.0, -1.0
      %v2083 = vand.u32 2147483647, %v2059
      %v2084 = vand.u32 2147483647, %v2060
      %v2085 = vand.u32 2147483647, %v2061
      %v2086 = vand.u32 2147483647, %v2062
      %v2087 = vand.u32 2147483647, %v2063
      %v2088 = vand.u32 2147483647, %v2064
      %v2089 = vand.u32 2147483647, %v2065
      %v2090 = vand.u32 2147483647, %v2066
      %v2091 = vmul.f32 %v2083, 0.3275911
      %v2092 = vmul.f32 %v2084, 0.3275911
      %v2093 = vmul.f32 %v2085, 0.3275911
      %v2094 = vmul.f32 %v2086, 0.3275911
      %v2095 = vmul.f32 %v2087, 0.3275911
      %v2096 = vmul.f32 %v2088, 0.3275911
      %v2097 = vmul.f32 %v2089, 0.3275911
      %v2098 = vmul.f32 %v2090, 0.3275911
      %v2099 = vadd.f32 %v2091, 1.0
      %v2100 = vadd.f32 %v2092, 1.0
      %v2101 = vadd.f32 %v2093, 1.0
      %v2102 = vadd.f32 %v2094, 1.0
      %v2103 = vadd.f32 %v2095, 1.0
      %v2104 = vadd.f32 %v2096, 1.0
      %v2105 = vadd.f32 %v2097, 1.0
      %v2106 = vadd.f32 %v2098, 1.0
      %v2107 = vrcp.pop %v2099
      %v2108 = vrcp.pop %v2100
      %v2109 = vrcp.pop %v2101
      %v2110 = vrcp.pop %v2102
      %v2111 = vrcp.pop %v2103
      %v2112 = vrcp.pop %v2104
      %v2113 = vrcp.pop %v2105
      %v2114 = vrcp.pop %v2106
      %v2115 = vmul.f32 %v2107, 1.0614054
      %v2116 = vmul.f32 %v2108, 1.0614054
      %v2117 = vmul.f32 %v2109, 1.0614054
      %v2118 = vmul.f32 %v2110, 1.0614054
      %v2119 = vmul.f32 %v2111, 1.0614054
      %v2120 = vmul.f32 %v2112, 1.0614054
      %v2121 = vmul.f32 %v2113, 1.0614054
      %v2122 = vmul.f32 %v2114, 1.0614054
      %v2123 = vadd.f32 %v2115, -1.4531521
      %v2124 = vadd.f32 %v2116, -1.4531521
      %v2125 = vadd.f32 %v2117, -1.4531521
      %v2126 = vadd.f32 %v2118, -1.4531521
      %v2127 = vadd.f32 %v2119, -1.4531521
      %v2128 = vadd.f32 %v2120, -1.4531521
      %v2129 = vadd.f32 %v2121, -1.4531521
      %v2130 = vadd.f32 %v2122, -1.4531521
      %v2131 = vmul.f32 %v2123, %v2107
      %v2132 = vmul.f32 %v2124, %v2108
      %v2133 = vmul.f32 %v2125, %v2109
      %v2134 = vmul.f32 %v2126, %v2110
      %v2135 = vmul.f32 %v2127, %v2111
      %v2136 = vmul.f32 %v2128, %v2112
      %v2137 = vmul.f32 %v2129, %v2113
      %v2138 = vmul.f32 %v2130, %v2114
      %v2139 = vadd.f32 %v2131, 1.4214138
      %v2140 = vadd.f32 %v2132, 1.4214138
      %v2141 = vadd.f32 %v2133, 1.4214138
      %v2142 = vadd.f32 %v2134, 1.4214138
      %v2143 = vadd.f32 %v2135, 1.4214138
      %v2144 = vadd.f32 %v2136, 1.4214138
      %v2145 = vadd.f32 %v2137, 1.4214138
      %v2146 = vadd.f32 %v2138, 1.4214138
      %v2147 = vmul.f32 %v2139, %v2107
      %v2148 = vmul.f32 %v2140, %v2108
      %v2149 = vmul.f32 %v2141, %v2109
      %v2150 = vmul.f32 %v2142, %v2110
      %v2151 = vmul.f32 %v2143, %v2111
      %v2152 = vmul.f32 %v2144, %v2112
      %v2153 = vmul.f32 %v2145, %v2113
      %v2154 = vmul.f32 %v2146, %v2114
      %v2155 = vadd.f32 %v2147, -0.28449672
      %v2156 = vadd.f32 %v2148, -0.28449672
      %v2157 = vadd.f32 %v2149, -0.28449672
      %v2158 = vadd.f32 %v2150, -0.28449672
      %v2159 = vadd.f32 %v2151, -0.28449672
      %v2160 = vadd.f32 %v2152, -0.28449672
      %v2161 = vadd.f32 %v2153, -0.28449672
      %v2162 = vadd.f32 %v2154, -0.28449672
      %v2163 = vmul.f32 %v2155, %v2107
      %v2164 = vmul.f32 %v2156, %v2108
      %v2165 = vmul.f32 %v2157, %v2109
      %v2166 = vmul.f32 %v2158, %v2110
      %v2167 = vmul.f32 %v2159, %v2111
      %v2168 = vmul.f32 %v2160, %v2112
      %v2169 = vmul.f32 %v2161, %v2113
      %v2170 = vmul.f32 %v2162, %v2114
      %v2171 = vadd.f32 %v2163, 0.2548296
      %v2172 = vadd.f32 %v2164, 0.2548296
      %v2173 = vadd.f32 %v2165, 0.2548296
      %v2174 = vadd.f32 %v2166, 0.2548296
      %v2175 = vadd.f32 %v2167, 0.2548296
      %v2176 = vadd.f32 %v2168, 0.2548296
      %v2177 = vadd.f32 %v2169, 0.2548296
      %v2178 = vadd.f32 %v2170, 0.2548296
      %v2179 = vmul.f32 %v2171, %v2107
      %v2180 = vmul.f32 %v2172, %v2108
      %v2181 = vmul.f32 %v2173, %v2109
      %v2182 = vmul.f32 %v2174, %v2110
      %v2183 = vmul.f32 %v2175, %v2111
      %v2184 = vmul.f32 %v2176, %v2112
      %v2185 = vmul.f32 %v2177, %v2113
      %v2186 = vmul.f32 %v2178, %v2114
      %v2187 = vsub.f32 0.0, %v2083
      %v2188 = vsub.f32 0.0, %v2084
      %v2189 = vsub.f32 0.0, %v2085
      %v2190 = vsub.f32 0.0, %v2086
      %v2191 = vsub.f32 0.0, %v2087
      %v2192 = vsub.f32 0.0, %v2088
      %v2193 = vsub.f32 0.0, %v2089
      %v2194 = vsub.f32 0.0, %v2090
      %v2195 = vmul.f32 %v2187, %v2083
      %v2196 = vmul.f32 %v2188, %v2084
      %v2197 = vmul.f32 %v2189, %v2085
      %v2198 = vmul.f32 %v2190, %v2086
      %v2199 = vmul.f32 %v2191, %v2087
      %v2200 = vmul.f32 %v2192, %v2088
      %v2201 = vmul.f32 %v2193, %v2089
      %v2202 = vmul.f32 %v2194, %v2090
      %v2203 = vmul.f32 %v2195, 1.442695
      %v2204 = vpow.pop %v2203
      %v2205 = vmul.f32 %v2196, 1.442695
      %v2206 = vpow.pop %v2205
      %v2207 = vmul.f32 %v2197, 1.442695
      %v2208 = vpow.pop %v2207
      %v2209 = vmul.f32 %v2198, 1.442695
      %v2210 = vpow.pop %v2209
      %v2211 = vmul.f32 %v2199, 1.442695
      %v2212 = vpow.pop %v2211
      %v2213 = vmul.f32 %v2200, 1.442695
      %v2214 = vpow.pop %v2213
      %v2215 = vmul.f32 %v2201, 1.442695
      %v2216 = vpow.pop %v2215
      %v2217 = vmul.f32 %v2202, 1.442695
      %v2218 = vpow.pop %v2217
      %v2219 = vmul.f32 %v2179, %v2204
      %v2220 = vmul.f32 %v2180, %v2206
      %v2221 = vmul.f32 %v2181, %v2208
      %v2222 = vmul.f32 %v2182, %v2210
      %v2223 = vmul.f32 %v2183, %v2212
      %v2224 = vmul.f32 %v2184, %v2214
      %v2225 = vmul.f32 %v2185, %v2216
      %v2226 = vmul.f32 %v2186, %v2218
      %v2227 = vsub.f32 1.0, %v2219
      %v2228 = vsub.f32 1.0, %v2220
      %v2229 = vsub.f32 1.0, %v2221
      %v2230 = vsub.f32 1.0, %v2222
      %v2231 = vsub.f32 1.0, %v2223
      %v2232 = vsub.f32 1.0, %v2224
      %v2233 = vsub.f32 1.0, %v2225
      %v2234 = vsub.f32 1.0, %v2226
      %v2235 = vmul.f32 %v2075, %v2227
      %v2236 = vmul.f32 %v2076, %v2228
      %v2237 = vmul.f32 %v2077, %v2229
      %v2238 = vmul.f32 %v2078, %v2230
      %v2239 = vmul.f32 %v2079, %v2231
      %v2240 = vmul.f32 %v2080, %v2232
      %v2241 = vmul.f32 %v2081, %v2233
      %v2242 = vmul.f32 %v2082, %v2234
      %v2243 = vadd.f32 %v2235, 1.0
      %v2244 = vadd.f32 %v2236, 1.0
      %v2245 = vadd.f32 %v2237, 1.0
      %v2246 = vadd.f32 %v2238, 1.0
      %v2247 = vadd.f32 %v2239, 1.0
      %v2248 = vadd.f32 %v2240, 1.0
      %v2249 = vadd.f32 %v2241, 1.0
      %v2250 = vadd.f32 %v2242, 1.0
      %v2251 = vmul.f32 %v2051, %v2243
      %v2252 = vmul.f32 %v2052, %v2244
      %v2253 = vmul.f32 %v2053, %v2245
      %v2254 = vmul.f32 %v2054, %v2246
      %v2255 = vmul.f32 %v2055, %v2247
      %v2256 = vmul.f32 %v2056, %v2248
      %v2257 = vmul.f32 %v2057, %v2249
      %v2258 = vmul.f32 %v2058, %v2250
      %v2259 = vmul.f32 %v1914, %v2251
      %v2260 = vmul.f32 %v1916, %v2252
      %v2261 = vmul.f32 %v1957, %v2253
      %v2262 = vmul.f32 %v1959, %v2254
      %v2263 = vmul.f32 %v1918, %v2255
      %v2264 = vmul.f32 %v1920, %v2256
      %v2265 = vmul.f32 %v1961, %v2257
      %v2266 = vmul.f32 %v1963, %v2258
      %v2267 = vpack.c.bf16 %v2263, %v2259
      %v2268 = vpack.c.bf16 %v2264, %v2260
      %v2269 = vpack.c.bf16 %v2265, %v2261
      %v2270 = vpack.c.bf16 %v2266, %v2262
      %v2271 = vlaneseq
      %v2272 = vshrl.u32 %v2271, 7
      %v2273 = vsub.s32 2, %v2272
      %v2274 = vrot.slane %v1482, %v2273
      %v2339 = vunpack.c.l.b16 %v1418
      %v2340 = vunpack.c.l.b16 %v1419
      %v2341 = vunpack.c.l.b16 %v1420
      %v2342 = vunpack.c.l.b16 %v1421
      %v2343 = vunpack.c.l.b16 %v1422
      %v2344 = vunpack.c.l.b16 %v1423
      %v2345 = vunpack.c.l.b16 %v1424
      %v2346 = vunpack.c.l.b16 %v1425
      %v2347 = vunpack.c.l.b16 %v1426
      %v2348 = vunpack.c.l.b16 %v1427
      %v2349 = vunpack.c.l.b16 %v1428
      %v2350 = vunpack.c.l.b16 %v1429
      %v2351 = vunpack.c.l.b16 %v1430
      %v2352 = vunpack.c.l.b16 %v1431
      %v2353 = vunpack.c.l.b16 %v1432
      %v2354 = vunpack.c.l.b16 %v1433
      %v2355 = vunpack.c.l.b16 %v1434
      %v2356 = vunpack.c.l.b16 %v1435
      %v2357 = vunpack.c.l.b16 %v1436
      %v2358 = vunpack.c.l.b16 %v1437
      %v2359 = vunpack.c.l.b16 %v1438
      %v2360 = vunpack.c.l.b16 %v1439
      %v2361 = vunpack.c.l.b16 %v1440
      %v2362 = vunpack.c.l.b16 %v1441
      %v2363 = vunpack.c.l.b16 %v1442
      %v2364 = vunpack.c.l.b16 %v1443
      %v2365 = vunpack.c.l.b16 %v1444
      %v2366 = vunpack.c.l.b16 %v1445
      %v2367 = vunpack.c.l.b16 %v1446
      %v2368 = vunpack.c.l.b16 %v1447
      %v2369 = vunpack.c.l.b16 %v1448
      %v2370 = vunpack.c.l.b16 %v1449
      %v2371 = vunpack.c.l.b16 %v1450
      %v2372 = vunpack.c.l.b16 %v1451
      %v2373 = vunpack.c.l.b16 %v1452
      %v2374 = vunpack.c.l.b16 %v1453
      %v2375 = vunpack.c.l.b16 %v1454
      %v2376 = vunpack.c.l.b16 %v1455
      %v2377 = vunpack.c.l.b16 %v1456
      %v2378 = vunpack.c.l.b16 %v1457
      %v2379 = vunpack.c.l.b16 %v1458
      %v2380 = vunpack.c.l.b16 %v1459
      %v2381 = vunpack.c.l.b16 %v1460
      %v2382 = vunpack.c.l.b16 %v1461
      %v2383 = vunpack.c.l.b16 %v1462
      %v2384 = vunpack.c.l.b16 %v1463
      %v2385 = vunpack.c.l.b16 %v1464
      %v2386 = vunpack.c.l.b16 %v1465
      %v2387 = vunpack.c.l.b16 %v1466
      %v2388 = vunpack.c.l.b16 %v1467
      %v2389 = vunpack.c.l.b16 %v1468
      %v2390 = vunpack.c.l.b16 %v1469
      %v2391 = vunpack.c.l.b16 %v1470
      %v2392 = vunpack.c.l.b16 %v1471
      %v2393 = vunpack.c.l.b16 %v1472
      %v2394 = vunpack.c.l.b16 %v1473
      %v2395 = vunpack.c.l.b16 %v1474
      %v2396 = vunpack.c.l.b16 %v1475
      %v2397 = vunpack.c.l.b16 %v1476
      %v2398 = vunpack.c.l.b16 %v1477
      %v2399 = vunpack.c.l.b16 %v1478
      %v2400 = vunpack.c.l.b16 %v1479
      %v2401 = vunpack.c.l.b16 %v1480
      %v2402 = vunpack.c.l.b16 %v1481
      %v2403 = vpack.c.b16 %v2340, %v2339
      %v2404 = vpack.c.b16 %v2342, %v2341
      %v2405 = vpack.c.b16 %v2344, %v2343
      %v2406 = vpack.c.b16 %v2346, %v2345
      %v2407 = vpack.c.b16 %v2348, %v2347
      %v2408 = vpack.c.b16 %v2350, %v2349
      %v2409 = vpack.c.b16 %v2352, %v2351
      %v2410 = vpack.c.b16 %v2354, %v2353
      %v2411 = vpack.c.b16 %v2356, %v2355
      %v2412 = vpack.c.b16 %v2358, %v2357
      %v2413 = vpack.c.b16 %v2360, %v2359
      %v2414 = vpack.c.b16 %v2362, %v2361
      %v2415 = vpack.c.b16 %v2364, %v2363
      %v2416 = vpack.c.b16 %v2366, %v2365
      %v2417 = vpack.c.b16 %v2368, %v2367
      %v2418 = vpack.c.b16 %v2370, %v2369
      %v2419 = vpack.c.b16 %v2372, %v2371
      %v2420 = vpack.c.b16 %v2374, %v2373
      %v2421 = vpack.c.b16 %v2376, %v2375
      %v2422 = vpack.c.b16 %v2378, %v2377
      %v2423 = vpack.c.b16 %v2380, %v2379
      %v2424 = vpack.c.b16 %v2382, %v2381
      %v2425 = vpack.c.b16 %v2384, %v2383
      %v2426 = vpack.c.b16 %v2386, %v2385
      %v2427 = vpack.c.b16 %v2388, %v2387
      %v2428 = vpack.c.b16 %v2390, %v2389
      %v2429 = vpack.c.b16 %v2392, %v2391
      %v2430 = vpack.c.b16 %v2394, %v2393
      %v2431 = vpack.c.b16 %v2396, %v2395
      %v2432 = vpack.c.b16 %v2398, %v2397
      %v2433 = vpack.c.b16 %v2400, %v2399
      %v2434 = vpack.c.b16 %v2402, %v2401
      %2467 = vmatprep.subr.bf16.mxu0 0
      %2468 = vmatpush1.bf16.msra.mxu0 %v2403
      %2469 = vmatprep.subr.bf16.mxu0 0
      %2470 = vmatpush1.bf16.msra.mxu0 %v2404
      %2471 = vmatprep.subr.bf16.mxu0 0
      %2472 = vmatpush1.bf16.msra.mxu0 %v2405
      %2473 = vmatprep.subr.bf16.mxu0 0
      %2474 = vmatpush1.bf16.msra.mxu0 %v2406
      %2475 = vmatprep.subr.bf16.mxu0 0
      %2476 = vmatpush1.bf16.msra.mxu0 %v2407
      %2477 = vmatprep.subr.bf16.mxu0 0
      %2478 = vmatpush1.bf16.msra.mxu0 %v2408
      %2479 = vmatprep.subr.bf16.mxu0 0
      %2480 = vmatpush1.bf16.msra.mxu0 %v2409
      %2481 = vmatprep.subr.bf16.mxu0 0
      %2482 = vmatpush1.bf16.msra.mxu0 %v2410
      %2483 = vmatprep.subr.bf16.mxu0 0
      %2484 = vmatpush1.bf16.msra.mxu0 %v2411
      %2485 = vmatprep.subr.bf16.mxu0 0
      %2486 = vmatpush1.bf16.msra.mxu0 %v2412
      %2487 = vmatprep.subr.bf16.mxu0 0
      %2488 = vmatpush1.bf16.msra.mxu0 %v2413
      %2489 = vmatprep.subr.bf16.mxu0 0
      %2490 = vmatpush1.bf16.msra.mxu0 %v2414
      %2491 = vmatprep.subr.bf16.mxu0 0
      %2492 = vmatpush1.bf16.msra.mxu0 %v2415
      %2493 = vmatprep.subr.bf16.mxu0 0
      %2494 = vmatpush1.bf16.msra.mxu0 %v2416
      %2495 = vmatprep.subr.bf16.mxu0 0
      %2496 = vmatpush1.bf16.msra.mxu0 %v2417
      %2497 = vmatprep.subr.bf16.mxu0 0
      %2498 = vmatpush1.bf16.msra.mxu0 %v2418
      %2499 = vmatprep.mubr.bf16.mxu0 %v2268
      %2500 = vmatmul.mubr.bf16.gmra.mrb[0].mxu0 %v2267
      %v2501 = vpop.f32.mrb[0].mxu0
      %v2502 = vadd.f32 %v2274, %v2501
      %v2503 = vpop.f32.mrb[0].mxu0
      %v2504 = vpop.f32.mrb[0].mxu0
      %v2505 = vadd.f32 %v2274, %v2504
      %v2506 = vpop.f32.mrb[0].mxu0
      %2507 = vdwg.mxu0
      %2508 = vmatprep.subr.bf16.mxu0 0
      %2509 = vmatpush1.bf16.msra.mxu0 %v2419
      %2510 = vmatprep.subr.bf16.mxu0 0
      %2511 = vmatpush1.bf16.msra.mxu0 %v2420
      %2512 = vmatprep.subr.bf16.mxu0 0
      %2513 = vmatpush1.bf16.msra.mxu0 %v2421
      %2514 = vmatprep.subr.bf16.mxu0 0
      %2515 = vmatpush1.bf16.msra.mxu0 %v2422
      %2516 = vmatprep.subr.bf16.mxu0 0
      %2517 = vmatpush1.bf16.msra.mxu0 %v2423
      %2518 = vmatprep.subr.bf16.mxu0 0
      %2519 = vmatpush1.bf16.msra.mxu0 %v2424
      %2520 = vmatprep.subr.bf16.mxu0 0
      %2521 = vmatpush1.bf16.msra.mxu0 %v2425
      %2522 = vmatprep.subr.bf16.mxu0 0
      %2523 = vmatpush1.bf16.msra.mxu0 %v2426
      %2524 = vmatprep.subr.bf16.mxu0 0
      %2525 = vmatpush1.bf16.msra.mxu0 %v2427
      %2526 = vmatprep.subr.bf16.mxu0 0
      %2527 = vmatpush1.bf16.msra.mxu0 %v2428
      %2528 = vmatprep.subr.bf16.mxu0 0
      %2529 = vmatpush1.bf16.msra.mxu0 %v2429
      %2530 = vmatprep.subr.bf16.mxu0 0
      %2531 = vmatpush1.bf16.msra.mxu0 %v2430
      %2532 = vmatprep.subr.bf16.mxu0 0
      %2533 = vmatpush1.bf16.msra.mxu0 %v2431
      %2534 = vmatprep.subr.bf16.mxu0 0
      %2535 = vmatpush1.bf16.msra.mxu0 %v2432
      %2536 = vmatprep.subr.bf16.mxu0 0
      %2537 = vmatpush1.bf16.msra.mxu0 %v2433
      %2538 = vmatprep.subr.bf16.mxu0 0
      %2539 = vmatpush1.bf16.msra.mxu0 %v2434
      %2540 = vmatprep.mubr.bf16.mxu0 %v2270
      %2541 = vmatmul.mubr.bf16.gmra.mrb[0].mxu0 %v2269
      %v2542 = vpop.f32.mrb[0].mxu0
      %v2543 = vadd.f32 %v2502, %v2542
      %v2544 = vpop.f32.mrb[0].mxu0
      %v2545 = vpop.f32.mrb[0].mxu0
      %v2546 = vadd.f32 %v2505, %v2545
      %v2547 = vpop.f32.mrb[0].mxu0
      %2548 = vdwg.mxu0
      %v2549 = vadd.f32 %v2543, %v1351
      %v2550 = vadd.f32 %v2546, %v1352
      %v2551 = vld [vmem:[%s13] sm:$0xff]
      %v2552 = vld [vmem:[%s13 + $0x8] sm:$0xff]
      %v2553 = vld [vmem:[%s13 + $0x10] sm:$0xff]
      %v2554 = vld [vmem:[%s13 + $0x18] sm:$0xff]
      %v2555 = vld [vmem:[%s13 + $0x20] sm:$0xff]
      %v2556 = vld [vmem:[%s13 + $0x28] sm:$0xff]
      %v2557 = vld [vmem:[%s13 + $0x30] sm:$0xff]
      %v2558 = vld [vmem:[%s13 + $0x38] sm:$0xff]
      %v2559 = vld [vmem:[%s13 + $0x40] sm:$0xff]
      %v2560 = vld [vmem:[%s13 + $0x48] sm:$0xff]
      %v2561 = vld [vmem:[%s13 + $0x50] sm:$0xff]
      %v2562 = vld [vmem:[%s13 + $0x58] sm:$0xff]
      %v2563 = vld [vmem:[%s13 + $0x60] sm:$0xff]
      %v2564 = vld [vmem:[%s13 + $0x68] sm:$0xff]
      %v2565 = vld [vmem:[%s13 + $0x70] sm:$0xff]
      %v2566 = vld [vmem:[%s13 + $0x78] sm:$0xff]
      %v2567 = vld [vmem:[%s13 + $0x80] sm:$0xff]
      %v2568 = vld [vmem:[%s13 + $0x88] sm:$0xff]
      %v2569 = vld [vmem:[%s13 + $0x90] sm:$0xff]
      %v2570 = vld [vmem:[%s13 + $0x98] sm:$0xff]
      %v2571 = vld [vmem:[%s13 + $0xa0] sm:$0xff]
      %v2572 = vld [vmem:[%s13 + $0xa8] sm:$0xff]
      %v2573 = vld [vmem:[%s13 + $0xb0] sm:$0xff]
      %v2574 = vld [vmem:[%s13 + $0xb8] sm:$0xff]
      %v2575 = vld [vmem:[%s13 + $0xc0] sm:$0xff]
      %v2576 = vld [vmem:[%s13 + $0xc8] sm:$0xff]
      %v2577 = vld [vmem:[%s13 + $0xd0] sm:$0xff]
      %v2578 = vld [vmem:[%s13 + $0xd8] sm:$0xff]
      %v2579 = vld [vmem:[%s13 + $0xe0] sm:$0xff]
      %v2580 = vld [vmem:[%s13 + $0xe8] sm:$0xff]
      %v2581 = vld [vmem:[%s13 + $0xf0] sm:$0xff]
      %v2582 = vld [vmem:[%s13 + $0xf8] sm:$0xff]
      %v2583 = vld [vmem:[%s14] sm:$0xff]
      %v2584 = vld [vmem:[%s14 + $0x8] sm:$0xff]
      %v2585 = vld [vmem:[%s14 + $0x10] sm:$0xff]
      %v2586 = vld [vmem:[%s14 + $0x18] sm:$0xff]
      %v2587 = vld [vmem:[%s14 + $0x20] sm:$0xff]
      %v2588 = vld [vmem:[%s14 + $0x28] sm:$0xff]
      %v2589 = vld [vmem:[%s14 + $0x30] sm:$0xff]
      %v2590 = vld [vmem:[%s14 + $0x38] sm:$0xff]
      %v2591 = vld [vmem:[%s14 + $0x40] sm:$0xff]
      %v2592 = vld [vmem:[%s14 + $0x48] sm:$0xff]
      %v2593 = vld [vmem:[%s14 + $0x50] sm:$0xff]
      %v2594 = vld [vmem:[%s14 + $0x58] sm:$0xff]
      %v2595 = vld [vmem:[%s14 + $0x60] sm:$0xff]
      %v2596 = vld [vmem:[%s14 + $0x68] sm:$0xff]
      %v2597 = vld [vmem:[%s14 + $0x70] sm:$0xff]
      %v2598 = vld [vmem:[%s14 + $0x78] sm:$0xff]
      %v2599 = vld [vmem:[%s14 + $0x80] sm:$0xff]
      %v2600 = vld [vmem:[%s14 + $0x88] sm:$0xff]
      %v2601 = vld [vmem:[%s14 + $0x90] sm:$0xff]
      %v2602 = vld [vmem:[%s14 + $0x98] sm:$0xff]
      %v2603 = vld [vmem:[%s14 + $0xa0] sm:$0xff]
      %v2604 = vld [vmem:[%s14 + $0xa8] sm:$0xff]
      %v2605 = vld [vmem:[%s14 + $0xb0] sm:$0xff]
      %v2606 = vld [vmem:[%s14 + $0xb8] sm:$0xff]
      %v2607 = vld [vmem:[%s14 + $0xc0] sm:$0xff]
      %v2608 = vld [vmem:[%s14 + $0xc8] sm:$0xff]
      %v2609 = vld [vmem:[%s14 + $0xd0] sm:$0xff]
      %v2610 = vld [vmem:[%s14 + $0xd8] sm:$0xff]
      %v2611 = vld [vmem:[%s14 + $0xe0] sm:$0xff]
      %v2612 = vld [vmem:[%s14 + $0xe8] sm:$0xff]
      %v2613 = vld [vmem:[%s14 + $0xf0] sm:$0xff]
      %v2614 = vld [vmem:[%s14 + $0xf8] sm:$0xff]
      %v2615 = vld [vmem:[%s14 + $0x100] sm:$0xff]
      %v2616 = vld [vmem:[%s14 + $0x108] sm:$0xff]
      %v2617 = vld [vmem:[%s14 + $0x110] sm:$0xff]
      %v2618 = vld [vmem:[%s14 + $0x118] sm:$0xff]
      %v2619 = vld [vmem:[%s14 + $0x120] sm:$0xff]
      %v2620 = vld [vmem:[%s14 + $0x128] sm:$0xff]
      %v2621 = vld [vmem:[%s14 + $0x130] sm:$0xff]
      %v2622 = vld [vmem:[%s14 + $0x138] sm:$0xff]
      %v2623 = vld [vmem:[%s14 + $0x140] sm:$0xff]
      %v2624 = vld [vmem:[%s14 + $0x148] sm:$0xff]
      %v2625 = vld [vmem:[%s14 + $0x150] sm:$0xff]
      %v2626 = vld [vmem:[%s14 + $0x158] sm:$0xff]
      %v2627 = vld [vmem:[%s14 + $0x160] sm:$0xff]
      %v2628 = vld [vmem:[%s14 + $0x168] sm:$0xff]
      %v2629 = vld [vmem:[%s14 + $0x170] sm:$0xff]
      %v2630 = vld [vmem:[%s14 + $0x178] sm:$0xff]
      %v2631 = vld [vmem:[%s14 + $0x180] sm:$0xff]
      %v2632 = vld [vmem:[%s14 + $0x188] sm:$0xff]
      %v2633 = vld [vmem:[%s14 + $0x190] sm:$0xff]
      %v2634 = vld [vmem:[%s14 + $0x198] sm:$0xff]
      %v2635 = vld [vmem:[%s14 + $0x1a0] sm:$0xff]
      %v2636 = vld [vmem:[%s14 + $0x1a8] sm:$0xff]
      %v2637 = vld [vmem:[%s14 + $0x1b0] sm:$0xff]
      %v2638 = vld [vmem:[%s14 + $0x1b8] sm:$0xff]
      %v2639 = vld [vmem:[%s14 + $0x1c0] sm:$0xff]
      %v2640 = vld [vmem:[%s14 + $0x1c8] sm:$0xff]
      %v2641 = vld [vmem:[%s14 + $0x1d0] sm:$0xff]
      %v2642 = vld [vmem:[%s14 + $0x1d8] sm:$0xff]
      %v2643 = vld [vmem:[%s14 + $0x1e0] sm:$0xff]
      %v2644 = vld [vmem:[%s14 + $0x1e8] sm:$0xff]
      %v2645 = vld [vmem:[%s14 + $0x1f0] sm:$0xff]
      %v2646 = vld [vmem:[%s14 + $0x1f8] sm:$0xff]
      %v2647 = vld [vmem:[%s15] sm:$0xf]
      %v2648 = vld [vmem:[%s15 + $0x4] sm:$0xf]
      %v2649 = vld [vmem:[%s15 + $0x8] sm:$0xf]
      %v2650 = vld [vmem:[%s15 + $0xc] sm:$0xf]
      %v2651 = vld [vmem:[%s15 + $0x10] sm:$0xf]
      %v2652 = vld [vmem:[%s15 + $0x14] sm:$0xf]
      %v2653 = vld [vmem:[%s15 + $0x18] sm:$0xf]
      %v2654 = vld [vmem:[%s15 + $0x1c] sm:$0xf]
      %v2655 = vld [vmem:[%s15 + $0x20] sm:$0xf]
      %v2656 = vld [vmem:[%s15 + $0x24] sm:$0xf]
      %v2657 = vld [vmem:[%s15 + $0x28] sm:$0xf]
      %v2658 = vld [vmem:[%s15 + $0x2c] sm:$0xf]
      %v2659 = vld [vmem:[%s15 + $0x30] sm:$0xf]
      %v2660 = vld [vmem:[%s15 + $0x34] sm:$0xf]
      %v2661 = vld [vmem:[%s15 + $0x38] sm:$0xf]
      %v2662 = vld [vmem:[%s15 + $0x3c] sm:$0xf]
      %v2663 = vld [vmem:[%s15 + $0x40] sm:$0xf]
      %v2664 = vld [vmem:[%s15 + $0x44] sm:$0xf]
      %v2665 = vld [vmem:[%s15 + $0x48] sm:$0xf]
      %v2666 = vld [vmem:[%s15 + $0x4c] sm:$0xf]
      %v2667 = vld [vmem:[%s15 + $0x50] sm:$0xf]
      %v2668 = vld [vmem:[%s15 + $0x54] sm:$0xf]
      %v2669 = vld [vmem:[%s15 + $0x58] sm:$0xf]
      %v2670 = vld [vmem:[%s15 + $0x5c] sm:$0xf]
      %v2671 = vld [vmem:[%s15 + $0x60] sm:$0xf]
      %v2672 = vld [vmem:[%s15 + $0x64] sm:$0xf]
      %v2673 = vld [vmem:[%s15 + $0x68] sm:$0xf]
      %v2674 = vld [vmem:[%s15 + $0x6c] sm:$0xf]
      %v2675 = vld [vmem:[%s15 + $0x70] sm:$0xf]
      %v2676 = vld [vmem:[%s15 + $0x74] sm:$0xf]
      %v2677 = vld [vmem:[%s15 + $0x78] sm:$0xf]
      %v2678 = vld [vmem:[%s15 + $0x7c] sm:$0xf]
      %v2679 = vld [vmem:[%s15 + $0x80] sm:$0xf]
      %v2680 = vld [vmem:[%s15 + $0x84] sm:$0xf]
      %v2681 = vld [vmem:[%s15 + $0x88] sm:$0xf]
      %v2682 = vld [vmem:[%s15 + $0x8c] sm:$0xf]
      %v2683 = vld [vmem:[%s15 + $0x90] sm:$0xf]
      %v2684 = vld [vmem:[%s15 + $0x94] sm:$0xf]
      %v2685 = vld [vmem:[%s15 + $0x98] sm:$0xf]
      %v2686 = vld [vmem:[%s15 + $0x9c] sm:$0xf]
      %v2687 = vld [vmem:[%s15 + $0xa0] sm:$0xf]
      %v2688 = vld [vmem:[%s15 + $0xa4] sm:$0xf]
      %v2689 = vld [vmem:[%s15 + $0xa8] sm:$0xf]
      %v2690 = vld [vmem:[%s15 + $0xac] sm:$0xf]
      %v2691 = vld [vmem:[%s15 + $0xb0] sm:$0xf]
      %v2692 = vld [vmem:[%s15 + $0xb4] sm:$0xf]
      %v2693 = vld [vmem:[%s15 + $0xb8] sm:$0xf]
      %v2694 = vld [vmem:[%s15 + $0xbc] sm:$0xf]
      %v2695 = vld [vmem:[%s15 + $0xc0] sm:$0xf]
      %v2696 = vld [vmem:[%s15 + $0xc4] sm:$0xf]
      %v2697 = vld [vmem:[%s15 + $0xc8] sm:$0xf]
      %v2698 = vld [vmem:[%s15 + $0xcc] sm:$0xf]
      %v2699 = vld [vmem:[%s15 + $0xd0] sm:$0xf]
      %v2700 = vld [vmem:[%s15 + $0xd4] sm:$0xf]
      %v2701 = vld [vmem:[%s15 + $0xd8] sm:$0xf]
      %v2702 = vld [vmem:[%s15 + $0xdc] sm:$0xf]
      %v2703 = vld [vmem:[%s15 + $0xe0] sm:$0xf]
      %v2704 = vld [vmem:[%s15 + $0xe4] sm:$0xf]
      %v2705 = vld [vmem:[%s15 + $0xe8] sm:$0xf]
      %v2706 = vld [vmem:[%s15 + $0xec] sm:$0xf]
      %v2707 = vld [vmem:[%s15 + $0xf0] sm:$0xf]
      %v2708 = vld [vmem:[%s15 + $0xf4] sm:$0xf]
      %v2709 = vld [vmem:[%s15 + $0xf8] sm:$0xf]
      %v2710 = vld [vmem:[%s15 + $0xfc] sm:$0xf]
      %v2711 = vld [vmem:[%s16] sm:$0x7]
      %2712 = vadd.xlane.f32.xlu0 %v2549
      %v2713 = vpop.xlane.xlu0 %2712
      %2714 = vadd.xlane.f32.xlu0 %v2550
      %v2715 = vpop.xlane.xlu0 %2714
      %v2716 = vmul.f32 %v2713, %v860
      %v2717 = vmul.f32 %v2715, %v860
      %v2718 = vsub.f32 %v2549, %v2716
      %v2719 = vsub.f32 %v2550, %v2717
      %v2720 = vmul.f32 %v2718, %v2718
      %v2721 = vmul.f32 %v2719, %v2719
      %2722 = vadd.xlane.f32.xlu0 %v2720
      %v2723 = vpop.xlane.xlu0 %2722
      %2724 = vadd.xlane.f32.xlu0 %v2721
      %v2725 = vpop.xlane.xlu0 %2724
      %v2726 = vmul.f32 %v2723, %v860
      %v2727 = vmul.f32 %v2725, %v860
      %v2728 = vadd.f32 %v2726, 1e-05
      %v2729 = vadd.f32 %v2727, 1e-05
      %v2730 = vrsqrt.pop %v2728
      %v2731 = vrsqrt.pop %v2729
      %v2732 = vmul.f32 %v2718, %v2730
      %v2733 = vmul.f32 %v2719, %v2731
      %v2734 = vlaneseq
      %v2735 = vshrl.u32 %v2734, 7
      %v2736 = vsub.s32 0, %v2735
      %v2737 = vrot.slane %v2711, %v2736
      %v2738 = vmul.f32 %v2732, %v2737
      %v2739 = vmul.f32 %v2733, %v2737
      %v2740 = vlaneseq
      %v2741 = vshrl.u32 %v2740, 7
      %v2742 = vsub.s32 1, %v2741
      %v2743 = vrot.slane %v2711, %v2742
      %v2744 = vadd.f32 %v2738, %v2743
      %v2745 = vadd.f32 %v2739, %v2743
      %v2746 = vpack.c.bf16 %v2745, %v2744
      %v2779 = vunpack.c.l.b16 %v2551
      %v2780 = vunpack.c.h.b16 %v2551
      %v2781 = vunpack.c.l.b16 %v2552
      %v2782 = vunpack.c.h.b16 %v2552
      %v2783 = vunpack.c.l.b16 %v2553
      %v2784 = vunpack.c.h.b16 %v2553
      %v2785 = vunpack.c.l.b16 %v2554
      %v2786 = vunpack.c.h.b16 %v2554
      %v2787 = vunpack.c.l.b16 %v2555
      %v2788 = vunpack.c.h.b16 %v2555
      %v2789 = vunpack.c.l.b16 %v2556
      %v2790 = vunpack.c.h.b16 %v2556
      %v2791 = vunpack.c.l.b16 %v2557
      %v2792 = vunpack.c.h.b16 %v2557
      %v2793 = vunpack.c.l.b16 %v2558
      %v2794 = vunpack.c.h.b16 %v2558
      %v2795 = vunpack.c.l.b16 %v2559
      %v2796 = vunpack.c.h.b16 %v2559
      %v2797 = vunpack.c.l.b16 %v2560
      %v2798 = vunpack.c.h.b16 %v2560
      %v2799 = vunpack.c.l.b16 %v2561
      %v2800 = vunpack.c.h.b16 %v2561
      %v2801 = vunpack.c.l.b16 %v2562
      %v2802 = vunpack.c.h.b16 %v2562
      %v2803 = vunpack.c.l.b16 %v2563
      %v2804 = vunpack.c.h.b16 %v2563
      %v2805 = vunpack.c.l.b16 %v2564
      %v2806 = vunpack.c.h.b16 %v2564
      %v2807 = vunpack.c.l.b16 %v2565
      %v2808 = vunpack.c.h.b16 %v2565
      %v2809 = vunpack.c.l.b16 %v2566
      %v2810 = vunpack.c.h.b16 %v2566
      %v2811 = vunpack.c.l.b16 %v2567
      %v2812 = vunpack.c.h.b16 %v2567
      %v2813 = vunpack.c.l.b16 %v2568
      %v2814 = vunpack.c.h.b16 %v2568
      %v2815 = vunpack.c.l.b16 %v2569
      %v2816 = vunpack.c.h.b16 %v2569
      %v2817 = vunpack.c.l.b16 %v2570
      %v2818 = vunpack.c.h.b16 %v2570
      %v2819 = vunpack.c.l.b16 %v2571
      %v2820 = vunpack.c.h.b16 %v2571
      %v2821 = vunpack.c.l.b16 %v2572
      %v2822 = vunpack.c.h.b16 %v2572
      %v2823 = vunpack.c.l.b16 %v2573
      %v2824 = vunpack.c.h.b16 %v2573
      %v2825 = vunpack.c.l.b16 %v2574
      %v2826 = vunpack.c.h.b16 %v2574
      %v2827 = vunpack.c.l.b16 %v2575
      %v2828 = vunpack.c.h.b16 %v2575
      %v2829 = vunpack.c.l.b16 %v2576
      %v2830 = vunpack.c.h.b16 %v2576
      %v2831 = vunpack.c.l.b16 %v2577
      %v2832 = vunpack.c.h.b16 %v2577
      %v2833 = vunpack.c.l.b16 %v2578
      %v2834 = vunpack.c.h.b16 %v2578
      %v2835 = vunpack.c.l.b16 %v2579
      %v2836 = vunpack.c.h.b16 %v2579
      %v2837 = vunpack.c.l.b16 %v2580
      %v2838 = vunpack.c.h.b16 %v2580
      %v2839 = vunpack.c.l.b16 %v2581
      %v2840 = vunpack.c.h.b16 %v2581
      %v2841 = vunpack.c.l.b16 %v2582
      %v2842 = vunpack.c.h.b16 %v2582
      %v2843 = vpack.c.b16 %v2783, %v2779
      %v2844 = vpack.c.b16 %v2784, %v2780
      %v2845 = vpack.c.b16 %v2785, %v2781
      %v2846 = vpack.c.b16 %v2786, %v2782
      %v2847 = vpack.c.b16 %v2791, %v2787
      %v2848 = vpack.c.b16 %v2792, %v2788
      %v2849 = vpack.c.b16 %v2793, %v2789
      %v2850 = vpack.c.b16 %v2794, %v2790
      %v2851 = vpack.c.b16 %v2799, %v2795
      %v2852 = vpack.c.b16 %v2800, %v2796
      %v2853 = vpack.c.b16 %v2801, %v2797
      %v2854 = vpack.c.b16 %v2802, %v2798
      %v2855 = vpack.c.b16 %v2807, %v2803
      %v2856 = vpack.c.b16 %v2808, %v2804
      %v2857 = vpack.c.b16 %v2809, %v2805
      %v2858 = vpack.c.b16 %v2810, %v2806
      %v2859 = vpack.c.b16 %v2815, %v2811
      %v2860 = vpack.c.b16 %v2816, %v2812
      %v2861 = vpack.c.b16 %v2817, %v2813
      %v2862 = vpack.c.b16 %v2818, %v2814
      %v2863 = vpack.c.b16 %v2823, %v2819
      %v2864 = vpack.c.b16 %v2824, %v2820
      %v2865 = vpack.c.b16 %v2825, %v2821
      %v2866 = vpack.c.b16 %v2826, %v2822
      %v2867 = vpack.c.b16 %v2831, %v2827
      %v2868 = vpack.c.b16 %v2832, %v2828
      %v2869 = vpack.c.b16 %v2833, %v2829
      %v2870 = vpack.c.b16 %v2834, %v2830
      %v2871 = vpack.c.b16 %v2839, %v2835
      %v2872 = vpack.c.b16 %v2840, %v2836
      %v2873 = vpack.c.b16 %v2841, %v2837
      %v2874 = vpack.c.b16 %v2842, %v2838
      %2907 = vmatprep.subr.bf16.mxu0 %v2844
      %2908 = vmatpush1.bf16.msra.mxu0 %v2843
      %2909 = vmatprep.subr.bf16.mxu0 %v2848
      %2910 = vmatpush1.bf16.msra.mxu0 %v2847
      %2911 = vmatprep.subr.bf16.mxu0 %v2852
      %2912 = vmatpush1.bf16.msra.mxu0 %v2851
      %2913 = vmatprep.subr.bf16.mxu0 %v2856
      %2914 = vmatpush1.bf16.msra.mxu0 %v2855
      %2915 = vmatprep.subr.bf16.mxu0 %v2860
      %2916 = vmatpush1.bf16.msra.mxu0 %v2859
      %2917 = vmatprep.subr.bf16.mxu0 %v2864
      %2918 = vmatpush1.bf16.msra.mxu0 %v2863
      %2919 = vmatprep.subr.bf16.mxu0 %v2868
      %2920 = vmatpush1.bf16.msra.mxu0 %v2867
      %2921 = vmatprep.subr.bf16.mxu0 %v2872
      %2922 = vmatpush1.bf16.msra.mxu0 %v2871
      %2923 = vmatprep.subr.bf16.mxu0 0
      %2924 = vmatpush1.bf16.msra.mxu0 0
      %2925 = vmatprep.subr.bf16.mxu0 0
      %2926 = vmatpush1.bf16.msra.mxu0 0
      %2927 = vmatprep.subr.bf16.mxu0 0
      %2928 = vmatpush1.bf16.msra.mxu0 0
      %2929 = vmatprep.subr.bf16.mxu0 0
      %2930 = vmatpush1.bf16.msra.mxu0 0
      %2931 = vmatprep.subr.bf16.mxu0 0
      %2932 = vmatpush1.bf16.msra.mxu0 0
      %2933 = vmatprep.subr.bf16.mxu0 0
      %2934 = vmatpush1.bf16.msra.mxu0 0
      %2935 = vmatprep.subr.bf16.mxu0 0
      %2936 = vmatpush1.bf16.msra.mxu0 0
      %2937 = vmatprep.subr.bf16.mxu0 0
      %2938 = vmatpush1.bf16.msra.mxu0 0
      %2939 = vmatprep.mubr.bf16.mxu0 0
      %2940 = vmatmul.mubr.bf16.gmra.mrb[0].mxu0 %v2746
      %v2941 = vpop.f32.mrb[0].mxu0
      %v2942 = vadd.f32 0.0, %v2941
      %v2943 = vpop.f32.mrb[0].mxu0
      %v2944 = vadd.f32 0.0, %v2943
      %v2945 = vpop.f32.mrb[0].mxu0
      %v2946 = vadd.f32 0.0, %v2945
      %v2947 = vpop.f32.mrb[0].mxu0
      %v2948 = vadd.f32 0.0, %v2947
      %2949 = vdwg.mxu0
      %2950 = vmatprep.subr.bf16.mxu0 %v2846
      %2951 = vmatpush1.bf16.msra.mxu0 %v2845
      %2952 = vmatprep.subr.bf16.mxu0 %v2850
      %2953 = vmatpush1.bf16.msra.mxu0 %v2849
      %2954 = vmatprep.subr.bf16.mxu0 %v2854
      %2955 = vmatpush1.bf16.msra.mxu0 %v2853
      %2956 = vmatprep.subr.bf16.mxu0 %v2858
      %2957 = vmatpush1.bf16.msra.mxu0 %v2857
      %2958 = vmatprep.subr.bf16.mxu0 %v2862
      %2959 = vmatpush1.bf16.msra.mxu0 %v2861
      %2960 = vmatprep.subr.bf16.mxu0 %v2866
      %2961 = vmatpush1.bf16.msra.mxu0 %v2865
      %2962 = vmatprep.subr.bf16.mxu0 %v2870
      %2963 = vmatpush1.bf16.msra.mxu0 %v2869
      %2964 = vmatprep.subr.bf16.mxu0 %v2874
      %2965 = vmatpush1.bf16.msra.mxu0 %v2873
      %2966 = vmatprep.subr.bf16.mxu0 0
      %2967 = vmatpush1.bf16.msra.mxu0 0
      %2968 = vmatprep.subr.bf16.mxu0 0
      %2969 = vmatpush1.bf16.msra.mxu0 0
      %2970 = vmatprep.subr.bf16.mxu0 0
      %2971 = vmatpush1.bf16.msra.mxu0 0
      %2972 = vmatprep.subr.bf16.mxu0 0
      %2973 = vmatpush1.bf16.msra.mxu0 0
      %2974 = vmatprep.subr.bf16.mxu0 0
      %2975 = vmatpush1.bf16.msra.mxu0 0
      %2976 = vmatprep.subr.bf16.mxu0 0
      %2977 = vmatpush1.bf16.msra.mxu0 0
      %2978 = vmatprep.subr.bf16.mxu0 0
      %2979 = vmatpush1.bf16.msra.mxu0 0
      %2980 = vmatprep.subr.bf16.mxu0 0
      %2981 = vmatpush1.bf16.msra.mxu0 0
      %2982 = vmatprep.mubr.bf16.mxu0 0
      %2983 = vmatmul.mubr.bf16.gmra.mrb[0].mxu0 %v2746
      %v2984 = vpop.f32.mrb[0].mxu0
      %v2985 = vadd.f32 0.0, %v2984
      %v2986 = vpop.f32.mrb[0].mxu0
      %v2987 = vadd.f32 0.0, %v2986
      %v2988 = vpop.f32.mrb[0].mxu0
      %v2989 = vadd.f32 0.0, %v2988
      %v2990 = vpop.f32.mrb[0].mxu0
      %v2991 = vadd.f32 0.0, %v2990
      %2992 = vdwg.mxu0
      %v3057 = vunpack.c.l.b16 %v2583
      %v3058 = vunpack.c.h.b16 %v2583
      %v3059 = vunpack.c.l.b16 %v2584
      %v3060 = vunpack.c.h.b16 %v2584
      %v3061 = vunpack.c.l.b16 %v2585
      %v3062 = vunpack.c.h.b16 %v2585
      %v3063 = vunpack.c.l.b16 %v2586
      %v3064 = vunpack.c.h.b16 %v2586
      %v3065 = vunpack.c.l.b16 %v2587
      %v3066 = vunpack.c.h.b16 %v2587
      %v3067 = vunpack.c.l.b16 %v2588
      %v3068 = vunpack.c.h.b16 %v2588
      %v3069 = vunpack.c.l.b16 %v2589
      %v3070 = vunpack.c.h.b16 %v2589
      %v3071 = vunpack.c.l.b16 %v2590
      %v3072 = vunpack.c.h.b16 %v2590
      %v3073 = vunpack.c.l.b16 %v2591
      %v3074 = vunpack.c.h.b16 %v2591
      %v3075 = vunpack.c.l.b16 %v2592
      %v3076 = vunpack.c.h.b16 %v2592
      %v3077 = vunpack.c.l.b16 %v2593
      %v3078 = vunpack.c.h.b16 %v2593
      %v3079 = vunpack.c.l.b16 %v2594
      %v3080 = vunpack.c.h.b16 %v2594
      %v3081 = vunpack.c.l.b16 %v2595
      %v3082 = vunpack.c.h.b16 %v2595
      %v3083 = vunpack.c.l.b16 %v2596
      %v3084 = vunpack.c.h.b16 %v2596
      %v3085 = vunpack.c.l.b16 %v2597
      %v3086 = vunpack.c.h.b16 %v2597
      %v3087 = vunpack.c.l.b16 %v2598
      %v3088 = vunpack.c.h.b16 %v2598
      %v3089 = vunpack.c.l.b16 %v2599
      %v3090 = vunpack.c.h.b16 %v2599
      %v3091 = vunpack.c.l.b16 %v2600
      %v3092 = vunpack.c.h.b16 %v2600
      %v3093 = vunpack.c.l.b16 %v2601
      %v3094 = vunpack.c.h.b16 %v2601
      %v3095 = vunpack.c.l.b16 %v2602
      %v3096 = vunpack.c.h.b16 %v2602
      %v3097 = vunpack.c.l.b16 %v2603
      %v3098 = vunpack.c.h.b16 %v2603
      %v3099 = vunpack.c.l.b16 %v2604
      %v3100 = vunpack.c.h.b16 %v2604
      %v3101 = vunpack.c.l.b16 %v2605
      %v3102 = vunpack.c.h.b16 %v2605
      %v3103 = vunpack.c.l.b16 %v2606
      %v3104 = vunpack.c.h.b16 %v2606
      %v3105 = vunpack.c.l.b16 %v2607
      %v3106 = vunpack.c.h.b16 %v2607
      %v3107 = vunpack.c.l.b16 %v2608
      %v3108 = vunpack.c.h.b16 %v2608
      %v3109 = vunpack.c.l.b16 %v2609
      %v3110 = vunpack.c.h.b16 %v2609
      %v3111 = vunpack.c.l.b16 %v2610
      %v3112 = vunpack.c.h.b16 %v2610
      %v3113 = vunpack.c.l.b16 %v2611
      %v3114 = vunpack.c.h.b16 %v2611
      %v3115 = vunpack.c.l.b16 %v2612
      %v3116 = vunpack.c.h.b16 %v2612
      %v3117 = vunpack.c.l.b16 %v2613
      %v3118 = vunpack.c.h.b16 %v2613
      %v3119 = vunpack.c.l.b16 %v2614
      %v3120 = vunpack.c.h.b16 %v2614
      %v3121 = vunpack.c.l.b16 %v2615
      %v3122 = vunpack.c.h.b16 %v2615
      %v3123 = vunpack.c.l.b16 %v2616
      %v3124 = vunpack.c.h.b16 %v2616
      %v3125 = vunpack.c.l.b16 %v2617
      %v3126 = vunpack.c.h.b16 %v2617
      %v3127 = vunpack.c.l.b16 %v2618
      %v3128 = vunpack.c.h.b16 %v2618
      %v3129 = vunpack.c.l.b16 %v2619
      %v3130 = vunpack.c.h.b16 %v2619
      %v3131 = vunpack.c.l.b16 %v2620
      %v3132 = vunpack.c.h.b16 %v2620
      %v3133 = vunpack.c.l.b16 %v2621
      %v3134 = vunpack.c.h.b16 %v2621
      %v3135 = vunpack.c.l.b16 %v2622
      %v3136 = vunpack.c.h.b16 %v2622
      %v3137 = vunpack.c.l.b16 %v2623
      %v3138 = vunpack.c.h.b16 %v2623
      %v3139 = vunpack.c.l.b16 %v2624
      %v3140 = vunpack.c.h.b16 %v2624
      %v3141 = vunpack.c.l.b16 %v2625
      %v3142 = vunpack.c.h.b16 %v2625
      %v3143 = vunpack.c.l.b16 %v2626
      %v3144 = vunpack.c.h.b16 %v2626
      %v3145 = vunpack.c.l.b16 %v2627
      %v3146 = vunpack.c.h.b16 %v2627
      %v3147 = vunpack.c.l.b16 %v2628
      %v3148 = vunpack.c.h.b16 %v2628
      %v3149 = vunpack.c.l.b16 %v2629
      %v3150 = vunpack.c.h.b16 %v2629
      %v3151 = vunpack.c.l.b16 %v2630
      %v3152 = vunpack.c.h.b16 %v2630
      %v3153 = vunpack.c.l.b16 %v2631
      %v3154 = vunpack.c.h.b16 %v2631
      %v3155 = vunpack.c.l.b16 %v2632
      %v3156 = vunpack.c.h.b16 %v2632
      %v3157 = vunpack.c.l.b16 %v2633
      %v3158 = vunpack.c.h.b16 %v2633
      %v3159 = vunpack.c.l.b16 %v2634
      %v3160 = vunpack.c.h.b16 %v2634
      %v3161 = vunpack.c.l.b16 %v2635
      %v3162 = vunpack.c.h.b16 %v2635
      %v3163 = vunpack.c.l.b16 %v2636
      %v3164 = vunpack.c.h.b16 %v2636
      %v3165 = vunpack.c.l.b16 %v2637
      %v3166 = vunpack.c.h.b16 %v2637
      %v3167 = vunpack.c.l.b16 %v2638
      %v3168 = vunpack.c.h.b16 %v2638
      %v3169 = vunpack.c.l.b16 %v2639
      %v3170 = vunpack.c.h.b16 %v2639
      %v3171 = vunpack.c.l.b16 %v2640
      %v3172 = vunpack.c.h.b16 %v2640
      %v3173 = vunpack.c.l.b16 %v2641
      %v3174 = vunpack.c.h.b16 %v2641
      %v3175 = vunpack.c.l.b16 %v2642
      %v3176 = vunpack.c.h.b16 %v2642
      %v3177 = vunpack.c.l.b16 %v2643
      %v3178 = vunpack.c.h.b16 %v2643
      %v3179 = vunpack.c.l.b16 %v2644
      %v3180 = vunpack.c.h.b16 %v2644
      %v3181 = vunpack.c.l.b16 %v2645
      %v3182 = vunpack.c.h.b16 %v2645
      %v3183 = vunpack.c.l.b16 %v2646
      %v3184 = vunpack.c.h.b16 %v2646
      %v3185 = vpack.c.b16 %v3065, %v3057
      %v3186 = vpack.c.b16 %v3066, %v3058
      %v3187 = vpack.c.b16 %v3067, %v3059
      %v3188 = vpack.c.b16 %v3068, %v3060
      %v3189 = vpack.c.b16 %v3069, %v3061
      %v3190 = vpack.c.b16 %v3070, %v3062
      %v3191 = vpack.c.b16 %v3071, %v3063
      %v3192 = vpack.c.b16 %v3072, %v3064
      %v3193 = vpack.c.b16 %v3081, %v3073
      %v3194 = vpack.c.b16 %v3082, %v3074
      %v3195 = vpack.c.b16 %v3083, %v3075
      %v3196 = vpack.c.b16 %v3084, %v3076
      %v3197 = vpack.c.b16 %v3085, %v3077
      %v3198 = vpack.c.b16 %v3086, %v3078
      %v3199 = vpack.c.b16 %v3087, %v3079
      %v3200 = vpack.c.b16 %v3088, %v3080
      %v3201 = vpack.c.b16 %v3097, %v3089
      %v3202 = vpack.c.b16 %v3098, %v3090
      %v3203 = vpack.c.b16 %v3099, %v3091
      %v3204 = vpack.c.b16 %v3100, %v3092
      %v3205 = vpack.c.b16 %v3101, %v3093
      %v3206 = vpack.c.b16 %v3102, %v3094
      %v3207 = vpack.c.b16 %v3103, %v3095
      %v3208 = vpack.c.b16 %v3104, %v3096
      %v3209 = vpack.c.b16 %v3113, %v3105
      %v3210 = vpack.c.b16 %v3114, %v3106
      %v3211 = vpack.c.b16 %v3115, %v3107
      %v3212 = vpack.c.b16 %v3116, %v3108
      %v3213 = vpack.c.b16 %v3117, %v3109
      %v3214 = vpack.c.b16 %v3118, %v3110
      %v3215 = vpack.c.b16 %v3119, %v3111
      %v3216 = vpack.c.b16 %v3120, %v3112
      %v3217 = vpack.c.b16 %v3129, %v3121
      %v3218 = vpack.c.b16 %v3130, %v3122
      %v3219 = vpack.c.b16 %v3131, %v3123
      %v3220 = vpack.c.b16 %v3132, %v3124
      %v3221 = vpack.c.b16 %v3133, %v3125
      %v3222 = vpack.c.b16 %v3134, %v3126
      %v3223 = vpack.c.b16 %v3135, %v3127
      %v3224 = vpack.c.b16 %v3136, %v3128
      %v3225 = vpack.c.b16 %v3145, %v3137
      %v3226 = vpack.c.b16 %v3146, %v3138
      %v3227 = vpack.c.b16 %v3147, %v3139
      %v3228 = vpack.c.b16 %v3148, %v3140
      %v3229 = vpack.c.b16 %v3149, %v3141
      %v3230 = vpack.c.b16 %v3150, %v3142
      %v3231 = vpack.c.b16 %v3151, %v3143
      %v3232 = vpack.c.b16 %v3152, %v3144
      %v3233 = vpack.c.b16 %v3161, %v3153
      %v3234 = vpack.c.b16 %v3162, %v3154
      %v3235 = vpack.c.b16 %v3163, %v3155
      %v3236 = vpack.c.b16 %v3164, %v3156
      %v3237 = vpack.c.b16 %v3165, %v3157
      %v3238 = vpack.c.b16 %v3166, %v3158
      %v3239 = vpack.c.b16 %v3167, %v3159
      %v3240 = vpack.c.b16 %v3168, %v3160
      %v3241 = vpack.c.b16 %v3177, %v3169
      %v3242 = vpack.c.b16 %v3178, %v3170
      %v3243 = vpack.c.b16 %v3179, %v3171
      %v3244 = vpack.c.b16 %v3180, %v3172
      %v3245 = vpack.c.b16 %v3181, %v3173
      %v3246 = vpack.c.b16 %v3182, %v3174
      %v3247 = vpack.c.b16 %v3183, %v3175
      %v3248 = vpack.c.b16 %v3184, %v3176
      %3313 = vmatprep.subr.bf16.mxu0 %v3186
      %3314 = vmatpush1.bf16.msra.mxu0 %v3185
      %3315 = vmatprep.subr.bf16.mxu0 %v3194
      %3316 = vmatpush1.bf16.msra.mxu0 %v3193
      %3317 = vmatprep.subr.bf16.mxu0 %v3202
      %3318 = vmatpush1.bf16.msra.mxu0 %v3201
      %3319 = vmatprep.subr.bf16.mxu0 %v3210
      %3320 = vmatpush1.bf16.msra.mxu0 %v3209
      %3321 = vmatprep.subr.bf16.mxu0 %v3218
      %3322 = vmatpush1.bf16.msra.mxu0 %v3217
      %3323 = vmatprep.subr.bf16.mxu0 %v3226
      %3324 = vmatpush1.bf16.msra.mxu0 %v3225
      %3325 = vmatprep.subr.bf16.mxu0 %v3234
      %3326 = vmatpush1.bf16.msra.mxu0 %v3233
      %3327 = vmatprep.subr.bf16.mxu0 %v3242
      %3328 = vmatpush1.bf16.msra.mxu0 %v3241
      %3329 = vmatprep.subr.bf16.mxu0 0
      %3330 = vmatpush1.bf16.msra.mxu0 0
      %3331 = vmatprep.subr.bf16.mxu0 0
      %3332 = vmatpush1.bf16.msra.mxu0 0
      %3333 = vmatprep.subr.bf16.mxu0 0
      %3334 = vmatpush1.bf16.msra.mxu0 0
      %3335 = vmatprep.subr.bf16.mxu0 0
      %3336 = vmatpush1.bf16.msra.mxu0 0
      %3337 = vmatprep.subr.bf16.mxu0 0
      %3338 = vmatpush1.bf16.msra.mxu0 0
      %3339 = vmatprep.subr.bf16.mxu0 0
      %3340 = vmatpush1.bf16.msra.mxu0 0
      %3341 = vmatprep.subr.bf16.mxu0 0
      %3342 = vmatpush1.bf16.msra.mxu0 0
      %3343 = vmatprep.subr.bf16.mxu0 0
      %3344 = vmatpush1.bf16.msra.mxu0 0
      %3345 = vmatprep.mubr.bf16.mxu0 0
      %3346 = vmatmul.mubr.bf16.gmra.mrb[0].mxu0 %v2746
      %v3347 = vpop.f32.mrb[0].mxu0
      %v3348 = vadd.f32 0.0, %v3347
      %v3349 = vpop.f32.mrb[0].mxu0
      %v3350 = vadd.f32 0.0, %v3349
      %v3351 = vpop.f32.mrb[0].mxu0
      %v3352 = vadd.f32 0.0, %v3351
      %v3353 = vpop.f32.mrb[0].mxu0
      %v3354 = vadd.f32 0.0, %v3353
      %3355 = vdwg.mxu0
      %3356 = vmatprep.subr.bf16.mxu0 %v3188
      %3357 = vmatpush1.bf16.msra.mxu0 %v3187
      %3358 = vmatprep.subr.bf16.mxu0 %v3196
      %3359 = vmatpush1.bf16.msra.mxu0 %v3195
      %3360 = vmatprep.subr.bf16.mxu0 %v3204
      %3361 = vmatpush1.bf16.msra.mxu0 %v3203
      %3362 = vmatprep.subr.bf16.mxu0 %v3212
      %3363 = vmatpush1.bf16.msra.mxu0 %v3211
      %3364 = vmatprep.subr.bf16.mxu0 %v3220
      %3365 = vmatpush1.bf16.msra.mxu0 %v3219
      %3366 = vmatprep.subr.bf16.mxu0 %v3228
      %3367 = vmatpush1.bf16.msra.mxu0 %v3227
      %3368 = vmatprep.subr.bf16.mxu0 %v3236
      %3369 = vmatpush1.bf16.msra.mxu0 %v3235
      %3370 = vmatprep.subr.bf16.mxu0 %v3244
      %3371 = vmatpush1.bf16.msra.mxu0 %v3243
      %3372 = vmatprep.subr.bf16.mxu0 0
      %3373 = vmatpush1.bf16.msra.mxu0 0
      %3374 = vmatprep.subr.bf16.mxu0 0
      %3375 = vmatpush1.bf16.msra.mxu0 0
      %3376 = vmatprep.subr.bf16.mxu0 0
      %3377 = vmatpush1.bf16.msra.mxu0 0
      %3378 = vmatprep.subr.bf16.mxu0 0
      %3379 = vmatpush1.bf16.msra.mxu0 0
      %3380 = vmatprep.subr.bf16.mxu0 0
      %3381 = vmatpush1.bf16.msra.mxu0 0
      %3382 = vmatprep.subr.bf16.mxu0 0
      %3383 = vmatpush1.bf16.msra.mxu0 0
      %3384 = vmatprep.subr.bf16.mxu0 0
      %3385 = vmatpush1.bf16.msra.mxu0 0
      %3386 = vmatprep.subr.bf16.mxu0 0
      %3387 = vmatpush1.bf16.msra.mxu0 0
      %3388 = vmatprep.mubr.bf16.mxu0 0
      %3389 = vmatmul.mubr.bf16.gmra.mrb[0].mxu0 %v2746
      %v3390 = vpop.f32.mrb[0].mxu0
      %v3391 = vadd.f32 0.0, %v3390
      %v3392 = vpop.f32.mrb[0].mxu0
      %v3393 = vadd.f32 0.0, %v3392
      %v3394 = vpop.f32.mrb[0].mxu0
      %v3395 = vadd.f32 0.0, %v3394
      %v3396 = vpop.f32.mrb[0].mxu0
      %v3397 = vadd.f32 0.0, %v3396
      %3398 = vdwg.mxu0
      %3399 = vmatprep.subr.bf16.mxu0 %v3190
      %3400 = vmatpush1.bf16.msra.mxu0 %v3189
      %3401 = vmatprep.subr.bf16.mxu0 %v3198
      %3402 = vmatpush1.bf16.msra.mxu0 %v3197
      %3403 = vmatprep.subr.bf16.mxu0 %v3206
      %3404 = vmatpush1.bf16.msra.mxu0 %v3205
      %3405 = vmatprep.subr.bf16.mxu0 %v3214
      %3406 = vmatpush1.bf16.msra.mxu0 %v3213
      %3407 = vmatprep.subr.bf16.mxu0 %v3222
      %3408 = vmatpush1.bf16.msra.mxu0 %v3221
      %3409 = vmatprep.subr.bf16.mxu0 %v3230
      %3410 = vmatpush1.bf16.msra.mxu0 %v3229
      %3411 = vmatprep.subr.bf16.mxu0 %v3238
      %3412 = vmatpush1.bf16.msra.mxu0 %v3237
      %3413 = vmatprep.subr.bf16.mxu0 %v3246
      %3414 = vmatpush1.bf16.msra.mxu0 %v3245
      %3415 = vmatprep.subr.bf16.mxu0 0
      %3416 = vmatpush1.bf16.msra.mxu0 0
      %3417 = vmatprep.subr.bf16.mxu0 0
      %3418 = vmatpush1.bf16.msra.mxu0 0
      %3419 = vmatprep.subr.bf16.mxu0 0
      %3420 = vmatpush1.bf16.msra.mxu0 0
      %3421 = vmatprep.subr.bf16.mxu0 0
      %3422 = vmatpush1.bf16.msra.mxu0 0
      %3423 = vmatprep.subr.bf16.mxu0 0
      %3424 = vmatpush1.bf16.msra.mxu0 0
      %3425 = vmatprep.subr.bf16.mxu0 0
      %3426 = vmatpush1.bf16.msra.mxu0 0
      %3427 = vmatprep.subr.bf16.mxu0 0
      %3428 = vmatpush1.bf16.msra.mxu0 0
      %3429 = vmatprep.subr.bf16.mxu0 0
      %3430 = vmatpush1.bf16.msra.mxu0 0
      %3431 = vmatprep.mubr.bf16.mxu0 0
      %3432 = vmatmul.mubr.bf16.gmra.mrb[0].mxu0 %v2746
      %v3433 = vpop.f32.mrb[0].mxu0
      %v3434 = vadd.f32 0.0, %v3433
      %v3435 = vpop.f32.mrb[0].mxu0
      %v3436 = vadd.f32 0.0, %v3435
      %v3437 = vpop.f32.mrb[0].mxu0
      %v3438 = vadd.f32 0.0, %v3437
      %v3439 = vpop.f32.mrb[0].mxu0
      %v3440 = vadd.f32 0.0, %v3439
      %3441 = vdwg.mxu0
      %3442 = vmatprep.subr.bf16.mxu0 %v3192
      %3443 = vmatpush1.bf16.msra.mxu0 %v3191
      %3444 = vmatprep.subr.bf16.mxu0 %v3200
      %3445 = vmatpush1.bf16.msra.mxu0 %v3199
      %3446 = vmatprep.subr.bf16.mxu0 %v3208
      %3447 = vmatpush1.bf16.msra.mxu0 %v3207
      %3448 = vmatprep.subr.bf16.mxu0 %v3216
      %3449 = vmatpush1.bf16.msra.mxu0 %v3215
      %3450 = vmatprep.subr.bf16.mxu0 %v3224
      %3451 = vmatpush1.bf16.msra.mxu0 %v3223
      %3452 = vmatprep.subr.bf16.mxu0 %v3232
      %3453 = vmatpush1.bf16.msra.mxu0 %v3231
      %3454 = vmatprep.subr.bf16.mxu0 %v3240
      %3455 = vmatpush1.bf16.msra.mxu0 %v3239
      %3456 = vmatprep.subr.bf16.mxu0 %v3248
      %3457 = vmatpush1.bf16.msra.mxu0 %v3247
      %3458 = vmatprep.subr.bf16.mxu0 0
      %3459 = vmatpush1.bf16.msra.mxu0 0
      %3460 = vmatprep.subr.bf16.mxu0 0
      %3461 = vmatpush1.bf16.msra.mxu0 0
      %3462 = vmatprep.subr.bf16.mxu0 0
      %3463 = vmatpush1.bf16.msra.mxu0 0
      %3464 = vmatprep.subr.bf16.mxu0 0
      %3465 = vmatpush1.bf16.msra.mxu0 0
      %3466 = vmatprep.subr.bf16.mxu0 0
      %3467 = vmatpush1.bf16.msra.mxu0 0
      %3468 = vmatprep.subr.bf16.mxu0 0
      %3469 = vmatpush1.bf16.msra.mxu0 0
      %3470 = vmatprep.subr.bf16.mxu0 0
      %3471 = vmatpush1.bf16.msra.mxu0 0
      %3472 = vmatprep.subr.bf16.mxu0 0
      %3473 = vmatpush1.bf16.msra.mxu0 0
      %3474 = vmatprep.mubr.bf16.mxu0 0
      %3475 = vmatmul.mubr.bf16.gmra.mrb[0].mxu0 %v2746
      %v3476 = vpop.f32.mrb[0].mxu0
      %v3477 = vadd.f32 0.0, %v3476
      %v3478 = vpop.f32.mrb[0].mxu0
      %v3479 = vadd.f32 0.0, %v3478
      %v3480 = vpop.f32.mrb[0].mxu0
      %v3481 = vadd.f32 0.0, %v3480
      %v3482 = vpop.f32.mrb[0].mxu0
      %v3483 = vadd.f32 0.0, %v3482
      %3484 = vdwg.mxu0
      %v3485 = vmul.f32 %v2942, 0.125
      %v3486 = vmul.f32 %v2944, 0.125
      %v3487 = vmul.f32 %v2985, 0.125
      %v3488 = vmul.f32 %v2987, 0.125
      %v3489 = vmul.f32 %v2946, 0.125
      %v3490 = vmul.f32 %v2948, 0.125
      %v3491 = vmul.f32 %v2989, 0.125
      %v3492 = vmul.f32 %v2991, 0.125
      %v3493 = vpack.c.bf16 %v3489, %v3485
      %v3494 = vpack.c.bf16 %v3490, %v3486
      %v3495 = vpack.c.bf16 %v3491, %v3487
      %v3496 = vpack.c.bf16 %v3492, %v3488
      %v3497 = vpack.c.bf16 %v3352, %v3348
      %v3498 = vpack.c.bf16 %v3354, %v3350
      %v3499 = vpack.c.bf16 %v3395, %v3391
      %v3500 = vpack.c.bf16 %v3397, %v3393
      %v3501 = vpack.c.bf16 %v3438, %v3434
      %v3502 = vpack.c.bf16 %v3440, %v3436
      %v3503 = vpack.c.bf16 %v3481, %v3477
      %v3504 = vpack.c.bf16 %v3483, %v3479
      %v3506 = vsel %vm1151, %v3493, 0
      %v3509 = vsel %vm1151, %v3497, 0
      %3511 = vmatprep.subr.bf16.mxu0 0
      %3512 = vmatpush1.bf16.xpose.msra.mxu0 %v3509
      %3513 = vmatprep.subr.bf16.mxu0 0
      %3514 = vmatpush1.bf16.xpose.msra.mxu0 0
      %3515 = vmatprep.subr.bf16.mxu0 0
      %3516 = vmatpush1.bf16.xpose.msra.mxu0 0
      %3517 = vmatprep.subr.bf16.mxu0 0
      %3518 = vmatpush1.bf16.xpose.msra.mxu0 0
      %3519 = vmatprep.subr.bf16.mxu0 0
      %3520 = vmatpush1.bf16.xpose.msra.mxu0 0
      %3521 = vmatprep.subr.bf16.mxu0 0
      %3522 = vmatpush1.bf16.xpose.msra.mxu0 0
      %3523 = vmatprep.subr.bf16.mxu0 0
      %3524 = vmatpush1.bf16.xpose.msra.mxu0 0
      %3525 = vmatprep.subr.bf16.mxu0 0
      %3526 = vmatpush1.bf16.xpose.msra.mxu0 0
      %3527 = vmatprep.subr.bf16.mxu0 0
      %3528 = vmatpush1.bf16.xpose.msra.mxu0 0
      %3529 = vmatprep.subr.bf16.mxu0 0
      %3530 = vmatpush1.bf16.xpose.msra.mxu0 0
      %3531 = vmatprep.subr.bf16.mxu0 0
      %3532 = vmatpush1.bf16.xpose.msra.mxu0 0
      %3533 = vmatprep.subr.bf16.mxu0 0
      %3534 = vmatpush1.bf16.xpose.msra.mxu0 0
      %3535 = vmatprep.subr.bf16.mxu0 0
      %3536 = vmatpush1.bf16.xpose.msra.mxu0 0
      %3537 = vmatprep.subr.bf16.mxu0 0
      %3538 = vmatpush1.bf16.xpose.msra.mxu0 0
      %3539 = vmatprep.subr.bf16.mxu0 0
      %3540 = vmatpush1.bf16.xpose.msra.mxu0 0
      %3541 = vmatprep.subr.bf16.mxu0 0
      %3542 = vmatpush1.bf16.xpose.msra.mxu0 0
      %3543 = vmatprep.mubr.bf16.mxu0 0
      %3544 = vmatmul.mubr.bf16.gmra.mrb[0].mxu0 %v3506
      %v3545 = vpop.f32.mrb[0].mxu0
      %v3546 = vadd.f32 0.0, %v3545
      %v3547 = vpop.f32.mrb[0].mxu0
      %v3548 = vpop.f32.mrb[0].mxu0
      %v3549 = vadd.f32 0.0, %v3548
      %v3550 = vpop.f32.mrb[0].mxu0
      %3551 = vdwg.mxu0
      %vm3552 = vcmask 130048
      %v3553 = vsel %vm3552, %v3546, -inf
      %3554 = vmax.xlane.f32.xlu0 %v3553
      %v3555 = vpop.xlane.xlu0 %3554
      %v3556 = vsel %vm3552, %v3549, -inf
      %3557 = vmax.xlane.f32.xlu0 %v3556
      %v3558 = vpop.xlane.xlu0 %3557
      %v3559 = vsub.f32 %v3546, %v3555
      %v3560 = vsub.f32 %v3549, %v3558
      %v3561 = vmul.f32 %v3559, 1.442695
      %v3562 = vpow.pop %v3561
      %v3563 = vmul.f32 %v3560, 1.442695
      %v3564 = vpow.pop %v3563
      %v3565 = vsel %vm3552, %v3562, 0.0
      %3566 = vadd.xlane.f32.xlu0 %v3565
      %v3567 = vpop.xlane.xlu0 %3566
      %v3568 = vsel %vm3552, %v3564, 0.0
      %3569 = vadd.xlane.f32.xlu0 %v3568
      %v3570 = vpop.xlane.xlu0 %3569
      %v3571 = vrcp.pop %v3567
      %v3572 = vrcp.pop %v3570
      %v3573 = vmul.f32 %v3562, %v3571
      %v3574 = vmul.f32 %v3564, %v3572
      %v3575 = vpack.c.bf16 %v3574, %v3573
      %v3577 = vsel %vm3552, %v3575, 0
      %3579 = vmatprep.subr.bf16.mxu0 0
      %3580 = vmatpush1.bf16.msra.mxu0 %v3501
      %3581 = vmatprep.subr.bf16.mxu0 0
      %3582 = vmatpush1.bf16.msra.mxu0 0
      %3583 = vmatprep.subr.bf16.mxu0 0
      %3584 = vmatpush1.bf16.msra.mxu0 0
      %3585 = vmatprep.subr.bf16.mxu0 0
      %3586 = vmatpush1.bf16.msra.mxu0 0
      %3587 = vmatprep.subr.bf16.mxu0 0
      %3588 = vmatpush1.bf16.msra.mxu0 0
      %3589 = vmatprep.subr.bf16.mxu0 0
      %3590 = vmatpush1.bf16.msra.mxu0 0
      %3591 = vmatprep.subr.bf16.mxu0 0
      %3592 = vmatpush1.bf16.msra.mxu0 0
      %3593 = vmatprep.subr.bf16.mxu0 0
      %3594 = vmatpush1.bf16.msra.mxu0 0
      %3595 = vmatprep.subr.bf16.mxu0 0
      %3596 = vmatpush1.bf16.msra.mxu0 0
      %3597 = vmatprep.subr.bf16.mxu0 0
      %3598 = vmatpush1.bf16.msra.mxu0 0
      %3599 = vmatprep.subr.bf16.mxu0 0
      %3600 = vmatpush1.bf16.msra.mxu0 0
      %3601 = vmatprep.subr.bf16.mxu0 0
      %3602 = vmatpush1.bf16.msra.mxu0 0
      %3603 = vmatprep.subr.bf16.mxu0 0
      %3604 = vmatpush1.bf16.msra.mxu0 0
      %3605 = vmatprep.subr.bf16.mxu0 0
      %3606 = vmatpush1.bf16.msra.mxu0 0
      %3607 = vmatprep.subr.bf16.mxu0 0
      %3608 = vmatpush1.bf16.msra.mxu0 0
      %3609 = vmatprep.subr.bf16.mxu0 0
      %3610 = vmatpush1.bf16.msra.mxu0 0
      %3611 = vmatprep.mubr.bf16.mxu0 0
      %3612 = vmatmul.mubr.bf16.gmra.mrb[0].mxu0 %v3577
      %v3613 = vpop.f32.mrb[0].mxu0
      %v3614 = vadd.f32 0.0, %v3613
      %v3615 = vpop.f32.mrb[0].mxu0
      %v3616 = vpop.f32.mrb[0].mxu0
      %v3617 = vadd.f32 0.0, %v3616
      %v3618 = vpop.f32.mrb[0].mxu0
      %3619 = vdwg.mxu0
      %3621 = vrot.lane.b32.xlu0 %v3493, 64
      %v3622 = vpop.permute.xlu0 %3621
      %3624 = vrot.lane.b32.xlu0 %v3497, 64
      %v3625 = vpop.permute.xlu0 %3624
      %v3627 = vsel %vm1151, %v3622, 0
      %v3630 = vsel %vm1151, %v3625, 0
      %3632 = vmatprep.subr.bf16.mxu0 0
      %3633 = vmatpush1.bf16.xpose.msra.mxu0 %v3630
      %3634 = vmatprep.subr.bf16.mxu0 0
      %3635 = vmatpush1.bf16.xpose.msra.mxu0 0
      %3636 = vmatprep.subr.bf16.mxu0 0
      %3637 = vmatpush1.bf16.xpose.msra.mxu0 0
      %3638 = vmatprep.subr.bf16.mxu0 0
      %3639 = vmatpush1.bf16.xpose.msra.mxu0 0
      %3640 = vmatprep.subr.bf16.mxu0 0
      %3641 = vmatpush1.bf16.xpose.msra.mxu0 0
      %3642 = vmatprep.subr.bf16.mxu0 0
      %3643 = vmatpush1.bf16.xpose.msra.mxu0 0
      %3644 = vmatprep.subr.bf16.mxu0 0
      %3645 = vmatpush1.bf16.xpose.msra.mxu0 0
      %3646 = vmatprep.subr.bf16.mxu0 0
      %3647 = vmatpush1.bf16.xpose.msra.mxu0 0
      %3648 = vmatprep.subr.bf16.mxu0 0
      %3649 = vmatpush1.bf16.xpose.msra.mxu0 0
      %3650 = vmatprep.subr.bf16.mxu0 0
      %3651 = vmatpush1.bf16.xpose.msra.mxu0 0
      %3652 = vmatprep.subr.bf16.mxu0 0
      %3653 = vmatpush1.bf16.xpose.msra.mxu0 0
      %3654 = vmatprep.subr.bf16.mxu0 0
      %3655 = vmatpush1.bf16.xpose.msra.mxu0 0
      %3656 = vmatprep.subr.bf16.mxu0 0
      %3657 = vmatpush1.bf16.xpose.msra.mxu0 0
      %3658 = vmatprep.subr.bf16.mxu0 0
      %3659 = vmatpush1.bf16.xpose.msra.mxu0 0
      %3660 = vmatprep.subr.bf16.mxu0 0
      %3661 = vmatpush1.bf16.xpose.msra.mxu0 0
      %3662 = vmatprep.subr.bf16.mxu0 0
      %3663 = vmatpush1.bf16.xpose.msra.mxu0 0
      %3664 = vmatprep.mubr.bf16.mxu0 0
      %3665 = vmatmul.mubr.bf16.gmra.mrb[0].mxu0 %v3627
      %v3666 = vpop.f32.mrb[0].mxu0
      %v3667 = vadd.f32 0.0, %v3666
      %v3668 = vpop.f32.mrb[0].mxu0
      %v3669 = vpop.f32.mrb[0].mxu0
      %v3670 = vadd.f32 0.0, %v3669
      %v3671 = vpop.f32.mrb[0].mxu0
      %3672 = vdwg.mxu0
      %v3673 = vsel %vm3552, %v3667, -inf
      %3674 = vmax.xlane.f32.xlu0 %v3673
      %v3675 = vpop.xlane.xlu0 %3674
      %v3676 = vsel %vm3552, %v3670, -inf
      %3677 = vmax.xlane.f32.xlu0 %v3676
      %v3678 = vpop.xlane.xlu0 %3677
      %v3679 = vsub.f32 %v3667, %v3675
      %v3680 = vsub.f32 %v3670, %v3678
      %v3681 = vmul.f32 %v3679, 1.442695
      %v3682 = vpow.pop %v3681
      %v3683 = vmul.f32 %v3680, 1.442695
      %v3684 = vpow.pop %v3683
      %v3685 = vsel %vm3552, %v3682, 0.0
      %3686 = vadd.xlane.f32.xlu0 %v3685
      %v3687 = vpop.xlane.xlu0 %3686
      %v3688 = vsel %vm3552, %v3684, 0.0
      %3689 = vadd.xlane.f32.xlu0 %v3688
      %v3690 = vpop.xlane.xlu0 %3689
      %v3691 = vrcp.pop %v3687
      %v3692 = vrcp.pop %v3690
      %v3693 = vmul.f32 %v3682, %v3691
      %v3694 = vmul.f32 %v3684, %v3692
      %v3695 = vpack.c.bf16 %v3694, %v3693
      %3697 = vrot.lane.b32.xlu0 %v3501, 64
      %v3698 = vpop.permute.xlu0 %3697
      %v3701 = vsel %vm3552, %v3695, 0
      %3703 = vmatprep.subr.bf16.mxu0 0
      %3704 = vmatpush1.bf16.msra.mxu0 %v3698
      %3705 = vmatprep.subr.bf16.mxu0 0
      %3706 = vmatpush1.bf16.msra.mxu0 0
      %3707 = vmatprep.subr.bf16.mxu0 0
      %3708 = vmatpush1.bf16.msra.mxu0 0
      %3709 = vmatprep.subr.bf16.mxu0 0
      %3710 = vmatpush1.bf16.msra.mxu0 0
      %3711 = vmatprep.subr.bf16.mxu0 0
      %3712 = vmatpush1.bf16.msra.mxu0 0
      %3713 = vmatprep.subr.bf16.mxu0 0
      %3714 = vmatpush1.bf16.msra.mxu0 0
      %3715 = vmatprep.subr.bf16.mxu0 0
      %3716 = vmatpush1.bf16.msra.mxu0 0
      %3717 = vmatprep.subr.bf16.mxu0 0
      %3718 = vmatpush1.bf16.msra.mxu0 0
      %3719 = vmatprep.subr.bf16.mxu0 0
      %3720 = vmatpush1.bf16.msra.mxu0 0
      %3721 = vmatprep.subr.bf16.mxu0 0
      %3722 = vmatpush1.bf16.msra.mxu0 0
      %3723 = vmatprep.subr.bf16.mxu0 0
      %3724 = vmatpush1.bf16.msra.mxu0 0
      %3725 = vmatprep.subr.bf16.mxu0 0
      %3726 = vmatpush1.bf16.msra.mxu0 0
      %3727 = vmatprep.subr.bf16.mxu0 0
      %3728 = vmatpush1.bf16.msra.mxu0 0
      %3729 = vmatprep.subr.bf16.mxu0 0
      %3730 = vmatpush1.bf16.msra.mxu0 0
      %3731 = vmatprep.subr.bf16.mxu0 0
      %3732 = vmatpush1.bf16.msra.mxu0 0
      %3733 = vmatprep.subr.bf16.mxu0 0
      %3734 = vmatpush1.bf16.msra.mxu0 0
      %3735 = vmatprep.mubr.bf16.mxu0 0
      %3736 = vmatmul.mubr.bf16.gmra.mrb[0].mxu0 %v3701
      %v3737 = vpop.f32.mrb[0].mxu0
      %v3738 = vadd.f32 0.0, %v3737
      %v3739 = vpop.f32.mrb[0].mxu0
      %v3740 = vpop.f32.mrb[0].mxu0
      %v3741 = vadd.f32 0.0, %v3740
      %v3742 = vpop.f32.mrb[0].mxu0
      %3743 = vdwg.mxu0
      %v3745 = vsel %vm1151, %v3494, 0
      %v3748 = vsel %vm1151, %v3498, 0
      %3750 = vmatprep.subr.bf16.mxu0 0
      %3751 = vmatpush1.bf16.xpose.msra.mxu0 %v3748
      %3752 = vmatprep.subr.bf16.mxu0 0
      %3753 = vmatpush1.bf16.xpose.msra.mxu0 0
      %3754 = vmatprep.subr.bf16.mxu0 0
      %3755 = vmatpush1.bf16.xpose.msra.mxu0 0
      %3756 = vmatprep.subr.bf16.mxu0 0
      %3757 = vmatpush1.bf16.xpose.msra.mxu0 0
      %3758 = vmatprep.subr.bf16.mxu0 0
      %3759 = vmatpush1.bf16.xpose.msra.mxu0 0
      %3760 = vmatprep.subr.bf16.mxu0 0
      %3761 = vmatpush1.bf16.xpose.msra.mxu0 0
      %3762 = vmatprep.subr.bf16.mxu0 0
      %3763 = vmatpush1.bf16.xpose.msra.mxu0 0
      %3764 = vmatprep.subr.bf16.mxu0 0
      %3765 = vmatpush1.bf16.xpose.msra.mxu0 0
      %3766 = vmatprep.subr.bf16.mxu0 0
      %3767 = vmatpush1.bf16.xpose.msra.mxu0 0
      %3768 = vmatprep.subr.bf16.mxu0 0
      %3769 = vmatpush1.bf16.xpose.msra.mxu0 0
      %3770 = vmatprep.subr.bf16.mxu0 0
      %3771 = vmatpush1.bf16.xpose.msra.mxu0 0
      %3772 = vmatprep.subr.bf16.mxu0 0
      %3773 = vmatpush1.bf16.xpose.msra.mxu0 0
      %3774 = vmatprep.subr.bf16.mxu0 0
      %3775 = vmatpush1.bf16.xpose.msra.mxu0 0
      %3776 = vmatprep.subr.bf16.mxu0 0
      %3777 = vmatpush1.bf16.xpose.msra.mxu0 0
      %3778 = vmatprep.subr.bf16.mxu0 0
      %3779 = vmatpush1.bf16.xpose.msra.mxu0 0
      %3780 = vmatprep.subr.bf16.mxu0 0
      %3781 = vmatpush1.bf16.xpose.msra.mxu0 0
      %3782 = vmatprep.mubr.bf16.mxu0 0
      %3783 = vmatmul.mubr.bf16.gmra.mrb[0].mxu0 %v3745
      %v3784 = vpop.f32.mrb[0].mxu0
      %v3785 = vadd.f32 0.0, %v3784
      %v3786 = vpop.f32.mrb[0].mxu0
      %v3787 = vpop.f32.mrb[0].mxu0
      %v3788 = vadd.f32 0.0, %v3787
      %v3789 = vpop.f32.mrb[0].mxu0
      %3790 = vdwg.mxu0
      %v3791 = vsel %vm3552, %v3785, -inf
      %3792 = vmax.xlane.f32.xlu0 %v3791
      %v3793 = vpop.xlane.xlu0 %3792
      %v3794 = vsel %vm3552, %v3788, -inf
      %3795 = vmax.xlane.f32.xlu0 %v3794
      %v3796 = vpop.xlane.xlu0 %3795
      %v3797 = vsub.f32 %v3785, %v3793
      %v3798 = vsub.f32 %v3788, %v3796
      %v3799 = vmul.f32 %v3797, 1.442695
      %v3800 = vpow.pop %v3799
      %v3801 = vmul.f32 %v3798, 1.442695
      %v3802 = vpow.pop %v3801
      %v3803 = vsel %vm3552, %v3800, 0.0
      %3804 = vadd.xlane.f32.xlu0 %v3803
      %v3805 = vpop.xlane.xlu0 %3804
      %v3806 = vsel %vm3552, %v3802, 0.0
      %3807 = vadd.xlane.f32.xlu0 %v3806
      %v3808 = vpop.xlane.xlu0 %3807
      %v3809 = vrcp.pop %v3805
      %v3810 = vrcp.pop %v3808
      %v3811 = vmul.f32 %v3800, %v3809
      %v3812 = vmul.f32 %v3802, %v3810
      %v3813 = vpack.c.bf16 %v3812, %v3811
      %v3815 = vsel %vm3552, %v3813, 0
      %3817 = vmatprep.subr.bf16.mxu0 0
      %3818 = vmatpush1.bf16.msra.mxu0 %v3502
      %3819 = vmatprep.subr.bf16.mxu0 0
      %3820 = vmatpush1.bf16.msra.mxu0 0
      %3821 = vmatprep.subr.bf16.mxu0 0
      %3822 = vmatpush1.bf16.msra.mxu0 0
      %3823 = vmatprep.subr.bf16.mxu0 0
      %3824 = vmatpush1.bf16.msra.mxu0 0
      %3825 = vmatprep.subr.bf16.mxu0 0
      %3826 = vmatpush1.bf16.msra.mxu0 0
      %3827 = vmatprep.subr.bf16.mxu0 0
      %3828 = vmatpush1.bf16.msra.mxu0 0
      %3829 = vmatprep.subr.bf16.mxu0 0
      %3830 = vmatpush1.bf16.msra.mxu0 0
      %3831 = vmatprep.subr.bf16.mxu0 0
      %3832 = vmatpush1.bf16.msra.mxu0 0
      %3833 = vmatprep.subr.bf16.mxu0 0
      %3834 = vmatpush1.bf16.msra.mxu0 0
      %3835 = vmatprep.subr.bf16.mxu0 0
      %3836 = vmatpush1.bf16.msra.mxu0 0
      %3837 = vmatprep.subr.bf16.mxu0 0
      %3838 = vmatpush1.bf16.msra.mxu0 0
      %3839 = vmatprep.subr.bf16.mxu0 0
      %3840 = vmatpush1.bf16.msra.mxu0 0
      %3841 = vmatprep.subr.bf16.mxu0 0
      %3842 = vmatpush1.bf16.msra.mxu0 0
      %3843 = vmatprep.subr.bf16.mxu0 0
      %3844 = vmatpush1.bf16.msra.mxu0 0
      %3845 = vmatprep.subr.bf16.mxu0 0
      %3846 = vmatpush1.bf16.msra.mxu0 0
      %3847 = vmatprep.subr.bf16.mxu0 0
      %3848 = vmatpush1.bf16.msra.mxu0 0
      %3849 = vmatprep.mubr.bf16.mxu0 0
      %3850 = vmatmul.mubr.bf16.gmra.mrb[0].mxu0 %v3815
      %v3851 = vpop.f32.mrb[0].mxu0
      %v3852 = vadd.f32 0.0, %v3851
      %v3853 = vpop.f32.mrb[0].mxu0
      %v3854 = vpop.f32.mrb[0].mxu0
      %v3855 = vadd.f32 0.0, %v3854
      %v3856 = vpop.f32.mrb[0].mxu0
      %3857 = vdwg.mxu0
      %3859 = vrot.lane.b32.xlu0 %v3494, 64
      %v3860 = vpop.permute.xlu0 %3859
      %3862 = vrot.lane.b32.xlu0 %v3498, 64
      %v3863 = vpop.permute.xlu0 %3862
      %v3865 = vsel %vm1151, %v3860, 0
      %v3868 = vsel %vm1151, %v3863, 0
      %3870 = vmatprep.subr.bf16.mxu0 0
      %3871 = vmatpush1.bf16.xpose.msra.mxu0 %v3868
      %3872 = vmatprep.subr.bf16.mxu0 0
      %3873 = vmatpush1.bf16.xpose.msra.mxu0 0
      %3874 = vmatprep.subr.bf16.mxu0 0
      %3875 = vmatpush1.bf16.xpose.msra.mxu0 0
      %3876 = vmatprep.subr.bf16.mxu0 0
      %3877 = vmatpush1.bf16.xpose.msra.mxu0 0
      %3878 = vmatprep.subr.bf16.mxu0 0
      %3879 = vmatpush1.bf16.xpose.msra.mxu0 0
      %3880 = vmatprep.subr.bf16.mxu0 0
      %3881 = vmatpush1.bf16.xpose.msra.mxu0 0
      %3882 = vmatprep.subr.bf16.mxu0 0
      %3883 = vmatpush1.bf16.xpose.msra.mxu0 0
      %3884 = vmatprep.subr.bf16.mxu0 0
      %3885 = vmatpush1.bf16.xpose.msra.mxu0 0
      %3886 = vmatprep.subr.bf16.mxu0 0
      %3887 = vmatpush1.bf16.xpose.msra.mxu0 0
      %3888 = vmatprep.subr.bf16.mxu0 0
      %3889 = vmatpush1.bf16.xpose.msra.mxu0 0
      %3890 = vmatprep.subr.bf16.mxu0 0
      %3891 = vmatpush1.bf16.xpose.msra.mxu0 0
      %3892 = vmatprep.subr.bf16.mxu0 0
      %3893 = vmatpush1.bf16.xpose.msra.mxu0 0
      %3894 = vmatprep.subr.bf16.mxu0 0
      %3895 = vmatpush1.bf16.xpose.msra.mxu0 0
      %3896 = vmatprep.subr.bf16.mxu0 0
      %3897 = vmatpush1.bf16.xpose.msra.mxu0 0
      %3898 = vmatprep.subr.bf16.mxu0 0
      %3899 = vmatpush1.bf16.xpose.msra.mxu0 0
      %3900 = vmatprep.subr.bf16.mxu0 0
      %3901 = vmatpush1.bf16.xpose.msra.mxu0 0
      %3902 = vmatprep.mubr.bf16.mxu0 0
      %3903 = vmatmul.mubr.bf16.gmra.mrb[0].mxu0 %v3865
      %v3904 = vpop.f32.mrb[0].mxu0
      %v3905 = vadd.f32 0.0, %v3904
      %v3906 = vpop.f32.mrb[0].mxu0
      %v3907 = vpop.f32.mrb[0].mxu0
      %v3908 = vadd.f32 0.0, %v3907
      %v3909 = vpop.f32.mrb[0].mxu0
      %3910 = vdwg.mxu0
      %v3911 = vsel %vm3552, %v3905, -inf
      %3912 = vmax.xlane.f32.xlu0 %v3911
      %v3913 = vpop.xlane.xlu0 %3912
      %v3914 = vsel %vm3552, %v3908, -inf
      %3915 = vmax.xlane.f32.xlu0 %v3914
      %v3916 = vpop.xlane.xlu0 %3915
      %v3917 = vsub.f32 %v3905, %v3913
      %v3918 = vsub.f32 %v3908, %v3916
      %v3919 = vmul.f32 %v3917, 1.442695
      %v3920 = vpow.pop %v3919
      %v3921 = vmul.f32 %v3918, 1.442695
      %v3922 = vpow.pop %v3921
      %v3923 = vsel %vm3552, %v3920, 0.0
      %3924 = vadd.xlane.f32.xlu0 %v3923
      %v3925 = vpop.xlane.xlu0 %3924
      %v3926 = vsel %vm3552, %v3922, 0.0
      %3927 = vadd.xlane.f32.xlu0 %v3926
      %v3928 = vpop.xlane.xlu0 %3927
      %v3929 = vrcp.pop %v3925
      %v3930 = vrcp.pop %v3928
      %v3931 = vmul.f32 %v3920, %v3929
      %v3932 = vmul.f32 %v3922, %v3930
      %v3933 = vpack.c.bf16 %v3932, %v3931
      %3935 = vrot.lane.b32.xlu0 %v3502, 64
      %v3936 = vpop.permute.xlu0 %3935
      %v3939 = vsel %vm3552, %v3933, 0
      %3941 = vmatprep.subr.bf16.mxu0 0
      %3942 = vmatpush1.bf16.msra.mxu0 %v3936
      %3943 = vmatprep.subr.bf16.mxu0 0
      %3944 = vmatpush1.bf16.msra.mxu0 0
      %3945 = vmatprep.subr.bf16.mxu0 0
      %3946 = vmatpush1.bf16.msra.mxu0 0
      %3947 = vmatprep.subr.bf16.mxu0 0
      %3948 = vmatpush1.bf16.msra.mxu0 0
      %3949 = vmatprep.subr.bf16.mxu0 0
      %3950 = vmatpush1.bf16.msra.mxu0 0
      %3951 = vmatprep.subr.bf16.mxu0 0
      %3952 = vmatpush1.bf16.msra.mxu0 0
      %3953 = vmatprep.subr.bf16.mxu0 0
      %3954 = vmatpush1.bf16.msra.mxu0 0
      %3955 = vmatprep.subr.bf16.mxu0 0
      %3956 = vmatpush1.bf16.msra.mxu0 0
      %3957 = vmatprep.subr.bf16.mxu0 0
      %3958 = vmatpush1.bf16.msra.mxu0 0
      %3959 = vmatprep.subr.bf16.mxu0 0
      %3960 = vmatpush1.bf16.msra.mxu0 0
      %3961 = vmatprep.subr.bf16.mxu0 0
      %3962 = vmatpush1.bf16.msra.mxu0 0
      %3963 = vmatprep.subr.bf16.mxu0 0
      %3964 = vmatpush1.bf16.msra.mxu0 0
      %3965 = vmatprep.subr.bf16.mxu0 0
      %3966 = vmatpush1.bf16.msra.mxu0 0
      %3967 = vmatprep.subr.bf16.mxu0 0
      %3968 = vmatpush1.bf16.msra.mxu0 0
      %3969 = vmatprep.subr.bf16.mxu0 0
      %3970 = vmatpush1.bf16.msra.mxu0 0
      %3971 = vmatprep.subr.bf16.mxu0 0
      %3972 = vmatpush1.bf16.msra.mxu0 0
      %3973 = vmatprep.mubr.bf16.mxu0 0
      %3974 = vmatmul.mubr.bf16.gmra.mrb[0].mxu0 %v3939
      %v3975 = vpop.f32.mrb[0].mxu0
      %v3976 = vadd.f32 0.0, %v3975
      %v3977 = vpop.f32.mrb[0].mxu0
      %v3978 = vpop.f32.mrb[0].mxu0
      %v3979 = vadd.f32 0.0, %v3978
      %v3980 = vpop.f32.mrb[0].mxu0
      %3981 = vdwg.mxu0
      %v3983 = vsel %vm1151, %v3495, 0
      %v3986 = vsel %vm1151, %v3499, 0
      %3988 = vmatprep.subr.bf16.mxu0 0
      %3989 = vmatpush1.bf16.xpose.msra.mxu0 %v3986
      %3990 = vmatprep.subr.bf16.mxu0 0
      %3991 = vmatpush1.bf16.xpose.msra.mxu0 0
      %3992 = vmatprep.subr.bf16.mxu0 0
      %3993 = vmatpush1.bf16.xpose.msra.mxu0 0
      %3994 = vmatprep.subr.bf16.mxu0 0
      %3995 = vmatpush1.bf16.xpose.msra.mxu0 0
      %3996 = vmatprep.subr.bf16.mxu0 0
      %3997 = vmatpush1.bf16.xpose.msra.mxu0 0
      %3998 = vmatprep.subr.bf16.mxu0 0
      %3999 = vmatpush1.bf16.xpose.msra.mxu0 0
      %4000 = vmatprep.subr.bf16.mxu0 0
      %4001 = vmatpush1.bf16.xpose.msra.mxu0 0
      %4002 = vmatprep.subr.bf16.mxu0 0
      %4003 = vmatpush1.bf16.xpose.msra.mxu0 0
      %4004 = vmatprep.subr.bf16.mxu0 0
      %4005 = vmatpush1.bf16.xpose.msra.mxu0 0
      %4006 = vmatprep.subr.bf16.mxu0 0
      %4007 = vmatpush1.bf16.xpose.msra.mxu0 0
      %4008 = vmatprep.subr.bf16.mxu0 0
      %4009 = vmatpush1.bf16.xpose.msra.mxu0 0
      %4010 = vmatprep.subr.bf16.mxu0 0
      %4011 = vmatpush1.bf16.xpose.msra.mxu0 0
      %4012 = vmatprep.subr.bf16.mxu0 0
      %4013 = vmatpush1.bf16.xpose.msra.mxu0 0
      %4014 = vmatprep.subr.bf16.mxu0 0
      %4015 = vmatpush1.bf16.xpose.msra.mxu0 0
      %4016 = vmatprep.subr.bf16.mxu0 0
      %4017 = vmatpush1.bf16.xpose.msra.mxu0 0
      %4018 = vmatprep.subr.bf16.mxu0 0
      %4019 = vmatpush1.bf16.xpose.msra.mxu0 0
      %4020 = vmatprep.mubr.bf16.mxu0 0
      %4021 = vmatmul.mubr.bf16.gmra.mrb[0].mxu0 %v3983
      %v4022 = vpop.f32.mrb[0].mxu0
      %v4023 = vadd.f32 0.0, %v4022
      %v4024 = vpop.f32.mrb[0].mxu0
      %v4025 = vpop.f32.mrb[0].mxu0
      %v4026 = vadd.f32 0.0, %v4025
      %v4027 = vpop.f32.mrb[0].mxu0
      %4028 = vdwg.mxu0
      %v4029 = vsel %vm3552, %v4023, -inf
      %4030 = vmax.xlane.f32.xlu0 %v4029
      %v4031 = vpop.xlane.xlu0 %4030
      %v4032 = vsel %vm3552, %v4026, -inf
      %4033 = vmax.xlane.f32.xlu0 %v4032
      %v4034 = vpop.xlane.xlu0 %4033
      %v4035 = vsub.f32 %v4023, %v4031
      %v4036 = vsub.f32 %v4026, %v4034
      %v4037 = vmul.f32 %v4035, 1.442695
      %v4038 = vpow.pop %v4037
      %v4039 = vmul.f32 %v4036, 1.442695
      %v4040 = vpow.pop %v4039
      %v4041 = vsel %vm3552, %v4038, 0.0
      %4042 = vadd.xlane.f32.xlu0 %v4041
      %v4043 = vpop.xlane.xlu0 %4042
      %v4044 = vsel %vm3552, %v4040, 0.0
      %4045 = vadd.xlane.f32.xlu0 %v4044
      %v4046 = vpop.xlane.xlu0 %4045
      %v4047 = vrcp.pop %v4043
      %v4048 = vrcp.pop %v4046
      %v4049 = vmul.f32 %v4038, %v4047
      %v4050 = vmul.f32 %v4040, %v4048
      %v4051 = vpack.c.bf16 %v4050, %v4049
      %v4053 = vsel %vm3552, %v4051, 0
      %4055 = vmatprep.subr.bf16.mxu0 0
      %4056 = vmatpush1.bf16.msra.mxu0 %v3503
      %4057 = vmatprep.subr.bf16.mxu0 0
      %4058 = vmatpush1.bf16.msra.mxu0 0
      %4059 = vmatprep.subr.bf16.mxu0 0
      %4060 = vmatpush1.bf16.msra.mxu0 0
      %4061 = vmatprep.subr.bf16.mxu0 0
      %4062 = vmatpush1.bf16.msra.mxu0 0
      %4063 = vmatprep.subr.bf16.mxu0 0
      %4064 = vmatpush1.bf16.msra.mxu0 0
      %4065 = vmatprep.subr.bf16.mxu0 0
      %4066 = vmatpush1.bf16.msra.mxu0 0
      %4067 = vmatprep.subr.bf16.mxu0 0
      %4068 = vmatpush1.bf16.msra.mxu0 0
      %4069 = vmatprep.subr.bf16.mxu0 0
      %4070 = vmatpush1.bf16.msra.mxu0 0
      %4071 = vmatprep.subr.bf16.mxu0 0
      %4072 = vmatpush1.bf16.msra.mxu0 0
      %4073 = vmatprep.subr.bf16.mxu0 0
      %4074 = vmatpush1.bf16.msra.mxu0 0
      %4075 = vmatprep.subr.bf16.mxu0 0
      %4076 = vmatpush1.bf16.msra.mxu0 0
      %4077 = vmatprep.subr.bf16.mxu0 0
      %4078 = vmatpush1.bf16.msra.mxu0 0
      %4079 = vmatprep.subr.bf16.mxu0 0
      %4080 = vmatpush1.bf16.msra.mxu0 0
      %4081 = vmatprep.subr.bf16.mxu0 0
      %4082 = vmatpush1.bf16.msra.mxu0 0
      %4083 = vmatprep.subr.bf16.mxu0 0
      %4084 = vmatpush1.bf16.msra.mxu0 0
      %4085 = vmatprep.subr.bf16.mxu0 0
      %4086 = vmatpush1.bf16.msra.mxu0 0
      %4087 = vmatprep.mubr.bf16.mxu0 0
      %4088 = vmatmul.mubr.bf16.gmra.mrb[0].mxu0 %v4053
      %v4089 = vpop.f32.mrb[0].mxu0
      %v4090 = vadd.f32 0.0, %v4089
      %v4091 = vpop.f32.mrb[0].mxu0
      %v4092 = vpop.f32.mrb[0].mxu0
      %v4093 = vadd.f32 0.0, %v4092
      %v4094 = vpop.f32.mrb[0].mxu0
      %4095 = vdwg.mxu0
      %4097 = vrot.lane.b32.xlu0 %v3495, 64
      %v4098 = vpop.permute.xlu0 %4097
      %4100 = vrot.lane.b32.xlu0 %v3499, 64
      %v4101 = vpop.permute.xlu0 %4100
      %v4103 = vsel %vm1151, %v4098, 0
      %v4106 = vsel %vm1151, %v4101, 0
      %4108 = vmatprep.subr.bf16.mxu0 0
      %4109 = vmatpush1.bf16.xpose.msra.mxu0 %v4106
      %4110 = vmatprep.subr.bf16.mxu0 0
      %4111 = vmatpush1.bf16.xpose.msra.mxu0 0
      %4112 = vmatprep.subr.bf16.mxu0 0
      %4113 = vmatpush1.bf16.xpose.msra.mxu0 0
      %4114 = vmatprep.subr.bf16.mxu0 0
      %4115 = vmatpush1.bf16.xpose.msra.mxu0 0
      %4116 = vmatprep.subr.bf16.mxu0 0
      %4117 = vmatpush1.bf16.xpose.msra.mxu0 0
      %4118 = vmatprep.subr.bf16.mxu0 0
      %4119 = vmatpush1.bf16.xpose.msra.mxu0 0
      %4120 = vmatprep.subr.bf16.mxu0 0
      %4121 = vmatpush1.bf16.xpose.msra.mxu0 0
      %4122 = vmatprep.subr.bf16.mxu0 0
      %4123 = vmatpush1.bf16.xpose.msra.mxu0 0
      %4124 = vmatprep.subr.bf16.mxu0 0
      %4125 = vmatpush1.bf16.xpose.msra.mxu0 0
      %4126 = vmatprep.subr.bf16.mxu0 0
      %4127 = vmatpush1.bf16.xpose.msra.mxu0 0
      %4128 = vmatprep.subr.bf16.mxu0 0
      %4129 = vmatpush1.bf16.xpose.msra.mxu0 0
      %4130 = vmatprep.subr.bf16.mxu0 0
      %4131 = vmatpush1.bf16.xpose.msra.mxu0 0
      %4132 = vmatprep.subr.bf16.mxu0 0
      %4133 = vmatpush1.bf16.xpose.msra.mxu0 0
      %4134 = vmatprep.subr.bf16.mxu0 0
      %4135 = vmatpush1.bf16.xpose.msra.mxu0 0
      %4136 = vmatprep.subr.bf16.mxu0 0
      %4137 = vmatpush1.bf16.xpose.msra.mxu0 0
      %4138 = vmatprep.subr.bf16.mxu0 0
      %4139 = vmatpush1.bf16.xpose.msra.mxu0 0
      %4140 = vmatprep.mubr.bf16.mxu0 0
      %4141 = vmatmul.mubr.bf16.gmra.mrb[0].mxu0 %v4103
      %v4142 = vpop.f32.mrb[0].mxu0
      %v4143 = vadd.f32 0.0, %v4142
      %v4144 = vpop.f32.mrb[0].mxu0
      %v4145 = vpop.f32.mrb[0].mxu0
      %v4146 = vadd.f32 0.0, %v4145
      %v4147 = vpop.f32.mrb[0].mxu0
      %4148 = vdwg.mxu0
      %v4149 = vsel %vm3552, %v4143, -inf
      %4150 = vmax.xlane.f32.xlu0 %v4149
      %v4151 = vpop.xlane.xlu0 %4150
      %v4152 = vsel %vm3552, %v4146, -inf
      %4153 = vmax.xlane.f32.xlu0 %v4152
      %v4154 = vpop.xlane.xlu0 %4153
      %v4155 = vsub.f32 %v4143, %v4151
      %v4156 = vsub.f32 %v4146, %v4154
      %v4157 = vmul.f32 %v4155, 1.442695
      %v4158 = vpow.pop %v4157
      %v4159 = vmul.f32 %v4156, 1.442695
      %v4160 = vpow.pop %v4159
      %v4161 = vsel %vm3552, %v4158, 0.0
      %4162 = vadd.xlane.f32.xlu0 %v4161
      %v4163 = vpop.xlane.xlu0 %4162
      %v4164 = vsel %vm3552, %v4160, 0.0
      %4165 = vadd.xlane.f32.xlu0 %v4164
      %v4166 = vpop.xlane.xlu0 %4165
      %v4167 = vrcp.pop %v4163
      %v4168 = vrcp.pop %v4166
      %v4169 = vmul.f32 %v4158, %v4167
      %v4170 = vmul.f32 %v4160, %v4168
      %v4171 = vpack.c.bf16 %v4170, %v4169
      %4173 = vrot.lane.b32.xlu0 %v3503, 64
      %v4174 = vpop.permute.xlu0 %4173
      %v4177 = vsel %vm3552, %v4171, 0
      %4179 = vmatprep.subr.bf16.mxu0 0
      %4180 = vmatpush1.bf16.msra.mxu0 %v4174
      %4181 = vmatprep.subr.bf16.mxu0 0
      %4182 = vmatpush1.bf16.msra.mxu0 0
      %4183 = vmatprep.subr.bf16.mxu0 0
      %4184 = vmatpush1.bf16.msra.mxu0 0
      %4185 = vmatprep.subr.bf16.mxu0 0
      %4186 = vmatpush1.bf16.msra.mxu0 0
      %4187 = vmatprep.subr.bf16.mxu0 0
      %4188 = vmatpush1.bf16.msra.mxu0 0
      %4189 = vmatprep.subr.bf16.mxu0 0
      %4190 = vmatpush1.bf16.msra.mxu0 0
      %4191 = vmatprep.subr.bf16.mxu0 0
      %4192 = vmatpush1.bf16.msra.mxu0 0
      %4193 = vmatprep.subr.bf16.mxu0 0
      %4194 = vmatpush1.bf16.msra.mxu0 0
      %4195 = vmatprep.subr.bf16.mxu0 0
      %4196 = vmatpush1.bf16.msra.mxu0 0
      %4197 = vmatprep.subr.bf16.mxu0 0
      %4198 = vmatpush1.bf16.msra.mxu0 0
      %4199 = vmatprep.subr.bf16.mxu0 0
      %4200 = vmatpush1.bf16.msra.mxu0 0
      %4201 = vmatprep.subr.bf16.mxu0 0
      %4202 = vmatpush1.bf16.msra.mxu0 0
      %4203 = vmatprep.subr.bf16.mxu0 0
      %4204 = vmatpush1.bf16.msra.mxu0 0
      %4205 = vmatprep.subr.bf16.mxu0 0
      %4206 = vmatpush1.bf16.msra.mxu0 0
      %4207 = vmatprep.subr.bf16.mxu0 0
      %4208 = vmatpush1.bf16.msra.mxu0 0
      %4209 = vmatprep.subr.bf16.mxu0 0
      %4210 = vmatpush1.bf16.msra.mxu0 0
      %4211 = vmatprep.mubr.bf16.mxu0 0
      %4212 = vmatmul.mubr.bf16.gmra.mrb[0].mxu0 %v4177
      %v4213 = vpop.f32.mrb[0].mxu0
      %v4214 = vadd.f32 0.0, %v4213
      %v4215 = vpop.f32.mrb[0].mxu0
      %v4216 = vpop.f32.mrb[0].mxu0
      %v4217 = vadd.f32 0.0, %v4216
      %v4218 = vpop.f32.mrb[0].mxu0
      %4219 = vdwg.mxu0
      %v4221 = vsel %vm1151, %v3496, 0
      %v4224 = vsel %vm1151, %v3500, 0
      %4226 = vmatprep.subr.bf16.mxu0 0
      %4227 = vmatpush1.bf16.xpose.msra.mxu0 %v4224
      %4228 = vmatprep.subr.bf16.mxu0 0
      %4229 = vmatpush1.bf16.xpose.msra.mxu0 0
      %4230 = vmatprep.subr.bf16.mxu0 0
      %4231 = vmatpush1.bf16.xpose.msra.mxu0 0
      %4232 = vmatprep.subr.bf16.mxu0 0
      %4233 = vmatpush1.bf16.xpose.msra.mxu0 0
      %4234 = vmatprep.subr.bf16.mxu0 0
      %4235 = vmatpush1.bf16.xpose.msra.mxu0 0
      %4236 = vmatprep.subr.bf16.mxu0 0
      %4237 = vmatpush1.bf16.xpose.msra.mxu0 0
      %4238 = vmatprep.subr.bf16.mxu0 0
      %4239 = vmatpush1.bf16.xpose.msra.mxu0 0
      %4240 = vmatprep.subr.bf16.mxu0 0
      %4241 = vmatpush1.bf16.xpose.msra.mxu0 0
      %4242 = vmatprep.subr.bf16.mxu0 0
      %4243 = vmatpush1.bf16.xpose.msra.mxu0 0
      %4244 = vmatprep.subr.bf16.mxu0 0
      %4245 = vmatpush1.bf16.xpose.msra.mxu0 0
      %4246 = vmatprep.subr.bf16.mxu0 0
      %4247 = vmatpush1.bf16.xpose.msra.mxu0 0
      %4248 = vmatprep.subr.bf16.mxu0 0
      %4249 = vmatpush1.bf16.xpose.msra.mxu0 0
      %4250 = vmatprep.subr.bf16.mxu0 0
      %4251 = vmatpush1.bf16.xpose.msra.mxu0 0
      %4252 = vmatprep.subr.bf16.mxu0 0
      %4253 = vmatpush1.bf16.xpose.msra.mxu0 0
      %4254 = vmatprep.subr.bf16.mxu0 0
      %4255 = vmatpush1.bf16.xpose.msra.mxu0 0
      %4256 = vmatprep.subr.bf16.mxu0 0
      %4257 = vmatpush1.bf16.xpose.msra.mxu0 0
      %4258 = vmatprep.mubr.bf16.mxu0 0
      %4259 = vmatmul.mubr.bf16.gmra.mrb[0].mxu0 %v4221
      %v4260 = vpop.f32.mrb[0].mxu0
      %v4261 = vadd.f32 0.0, %v4260
      %v4262 = vpop.f32.mrb[0].mxu0
      %v4263 = vpop.f32.mrb[0].mxu0
      %v4264 = vadd.f32 0.0, %v4263
      %v4265 = vpop.f32.mrb[0].mxu0
      %4266 = vdwg.mxu0
      %v4267 = vsel %vm3552, %v4261, -inf
      %4268 = vmax.xlane.f32.xlu0 %v4267
      %v4269 = vpop.xlane.xlu0 %4268
      %v4270 = vsel %vm3552, %v4264, -inf
      %4271 = vmax.xlane.f32.xlu0 %v4270
      %v4272 = vpop.xlane.xlu0 %4271
      %v4273 = vsub.f32 %v4261, %v4269
      %v4274 = vsub.f32 %v4264, %v4272
      %v4275 = vmul.f32 %v4273, 1.442695
      %v4276 = vpow.pop %v4275
      %v4277 = vmul.f32 %v4274, 1.442695
      %v4278 = vpow.pop %v4277
      %v4279 = vsel %vm3552, %v4276, 0.0
      %4280 = vadd.xlane.f32.xlu0 %v4279
      %v4281 = vpop.xlane.xlu0 %4280
      %v4282 = vsel %vm3552, %v4278, 0.0
      %4283 = vadd.xlane.f32.xlu0 %v4282
      %v4284 = vpop.xlane.xlu0 %4283
      %v4285 = vrcp.pop %v4281
      %v4286 = vrcp.pop %v4284
      %v4287 = vmul.f32 %v4276, %v4285
      %v4288 = vmul.f32 %v4278, %v4286
      %v4289 = vpack.c.bf16 %v4288, %v4287
      %v4291 = vsel %vm3552, %v4289, 0
      %4293 = vmatprep.subr.bf16.mxu0 0
      %4294 = vmatpush1.bf16.msra.mxu0 %v3504
      %4295 = vmatprep.subr.bf16.mxu0 0
      %4296 = vmatpush1.bf16.msra.mxu0 0
      %4297 = vmatprep.subr.bf16.mxu0 0
      %4298 = vmatpush1.bf16.msra.mxu0 0
      %4299 = vmatprep.subr.bf16.mxu0 0
      %4300 = vmatpush1.bf16.msra.mxu0 0
      %4301 = vmatprep.subr.bf16.mxu0 0
      %4302 = vmatpush1.bf16.msra.mxu0 0
      %4303 = vmatprep.subr.bf16.mxu0 0
      %4304 = vmatpush1.bf16.msra.mxu0 0
      %4305 = vmatprep.subr.bf16.mxu0 0
      %4306 = vmatpush1.bf16.msra.mxu0 0
      %4307 = vmatprep.subr.bf16.mxu0 0
      %4308 = vmatpush1.bf16.msra.mxu0 0
      %4309 = vmatprep.subr.bf16.mxu0 0
      %4310 = vmatpush1.bf16.msra.mxu0 0
      %4311 = vmatprep.subr.bf16.mxu0 0
      %4312 = vmatpush1.bf16.msra.mxu0 0
      %4313 = vmatprep.subr.bf16.mxu0 0
      %4314 = vmatpush1.bf16.msra.mxu0 0
      %4315 = vmatprep.subr.bf16.mxu0 0
      %4316 = vmatpush1.bf16.msra.mxu0 0
      %4317 = vmatprep.subr.bf16.mxu0 0
      %4318 = vmatpush1.bf16.msra.mxu0 0
      %4319 = vmatprep.subr.bf16.mxu0 0
      %4320 = vmatpush1.bf16.msra.mxu0 0
      %4321 = vmatprep.subr.bf16.mxu0 0
      %4322 = vmatpush1.bf16.msra.mxu0 0
      %4323 = vmatprep.subr.bf16.mxu0 0
      %4324 = vmatpush1.bf16.msra.mxu0 0
      %4325 = vmatprep.mubr.bf16.mxu0 0
      %4326 = vmatmul.mubr.bf16.gmra.mrb[0].mxu0 %v4291
      %v4327 = vpop.f32.mrb[0].mxu0
      %v4328 = vadd.f32 0.0, %v4327
      %v4329 = vpop.f32.mrb[0].mxu0
      %v4330 = vpop.f32.mrb[0].mxu0
      %v4331 = vadd.f32 0.0, %v4330
      %v4332 = vpop.f32.mrb[0].mxu0
      %4333 = vdwg.mxu0
      %4335 = vrot.lane.b32.xlu0 %v3496, 64
      %v4336 = vpop.permute.xlu0 %4335
      %4338 = vrot.lane.b32.xlu0 %v3500, 64
      %v4339 = vpop.permute.xlu0 %4338
      %v4341 = vsel %vm1151, %v4336, 0
      %v4344 = vsel %vm1151, %v4339, 0
      %4346 = vmatprep.subr.bf16.mxu0 0
      %4347 = vmatpush1.bf16.xpose.msra.mxu0 %v4344
      %4348 = vmatprep.subr.bf16.mxu0 0
      %4349 = vmatpush1.bf16.xpose.msra.mxu0 0
      %4350 = vmatprep.subr.bf16.mxu0 0
      %4351 = vmatpush1.bf16.xpose.msra.mxu0 0
      %4352 = vmatprep.subr.bf16.mxu0 0
      %4353 = vmatpush1.bf16.xpose.msra.mxu0 0
      %4354 = vmatprep.subr.bf16.mxu0 0
      %4355 = vmatpush1.bf16.xpose.msra.mxu0 0
      %4356 = vmatprep.subr.bf16.mxu0 0
      %4357 = vmatpush1.bf16.xpose.msra.mxu0 0
      %4358 = vmatprep.subr.bf16.mxu0 0
      %4359 = vmatpush1.bf16.xpose.msra.mxu0 0
      %4360 = vmatprep.subr.bf16.mxu0 0
      %4361 = vmatpush1.bf16.xpose.msra.mxu0 0
      %4362 = vmatprep.subr.bf16.mxu0 0
      %4363 = vmatpush1.bf16.xpose.msra.mxu0 0
      %4364 = vmatprep.subr.bf16.mxu0 0
      %4365 = vmatpush1.bf16.xpose.msra.mxu0 0
      %4366 = vmatprep.subr.bf16.mxu0 0
      %4367 = vmatpush1.bf16.xpose.msra.mxu0 0
      %4368 = vmatprep.subr.bf16.mxu0 0
      %4369 = vmatpush1.bf16.xpose.msra.mxu0 0
      %4370 = vmatprep.subr.bf16.mxu0 0
      %4371 = vmatpush1.bf16.xpose.msra.mxu0 0
      %4372 = vmatprep.subr.bf16.mxu0 0
      %4373 = vmatpush1.bf16.xpose.msra.mxu0 0
      %4374 = vmatprep.subr.bf16.mxu0 0
      %4375 = vmatpush1.bf16.xpose.msra.mxu0 0
      %4376 = vmatprep.subr.bf16.mxu0 0
      %4377 = vmatpush1.bf16.xpose.msra.mxu0 0
      %4378 = vmatprep.mubr.bf16.mxu0 0
      %4379 = vmatmul.mubr.bf16.gmra.mrb[0].mxu0 %v4341
      %v4380 = vpop.f32.mrb[0].mxu0
      %v4381 = vadd.f32 0.0, %v4380
      %v4382 = vpop.f32.mrb[0].mxu0
      %v4383 = vpop.f32.mrb[0].mxu0
      %v4384 = vadd.f32 0.0, %v4383
      %v4385 = vpop.f32.mrb[0].mxu0
      %4386 = vdwg.mxu0
      %v4387 = vsel %vm3552, %v4381, -inf
      %4388 = vmax.xlane.f32.xlu0 %v4387
      %v4389 = vpop.xlane.xlu0 %4388
      %v4390 = vsel %vm3552, %v4384, -inf
      %4391 = vmax.xlane.f32.xlu0 %v4390
      %v4392 = vpop.xlane.xlu0 %4391
      %v4393 = vsub.f32 %v4381, %v4389
      %v4394 = vsub.f32 %v4384, %v4392
      %v4395 = vmul.f32 %v4393, 1.442695
      %v4396 = vpow.pop %v4395
      %v4397 = vmul.f32 %v4394, 1.442695
      %v4398 = vpow.pop %v4397
      %v4399 = vsel %vm3552, %v4396, 0.0
      %4400 = vadd.xlane.f32.xlu0 %v4399
      %v4401 = vpop.xlane.xlu0 %4400
      %v4402 = vsel %vm3552, %v4398, 0.0
      %4403 = vadd.xlane.f32.xlu0 %v4402
      %v4404 = vpop.xlane.xlu0 %4403
      %v4405 = vrcp.pop %v4401
      %v4406 = vrcp.pop %v4404
      %v4407 = vmul.f32 %v4396, %v4405
      %v4408 = vmul.f32 %v4398, %v4406
      %v4409 = vpack.c.bf16 %v4408, %v4407
      %4411 = vrot.lane.b32.xlu0 %v3504, 64
      %v4412 = vpop.permute.xlu0 %4411
      %v4415 = vsel %vm3552, %v4409, 0
      %4417 = vmatprep.subr.bf16.mxu0 0
      %4418 = vmatpush1.bf16.msra.mxu0 %v4412
      %4419 = vmatprep.subr.bf16.mxu0 0
      %4420 = vmatpush1.bf16.msra.mxu0 0
      %4421 = vmatprep.subr.bf16.mxu0 0
      %4422 = vmatpush1.bf16.msra.mxu0 0
      %4423 = vmatprep.subr.bf16.mxu0 0
      %4424 = vmatpush1.bf16.msra.mxu0 0
      %4425 = vmatprep.subr.bf16.mxu0 0
      %4426 = vmatpush1.bf16.msra.mxu0 0
      %4427 = vmatprep.subr.bf16.mxu0 0
      %4428 = vmatpush1.bf16.msra.mxu0 0
      %4429 = vmatprep.subr.bf16.mxu0 0
      %4430 = vmatpush1.bf16.msra.mxu0 0
      %4431 = vmatprep.subr.bf16.mxu0 0
      %4432 = vmatpush1.bf16.msra.mxu0 0
      %4433 = vmatprep.subr.bf16.mxu0 0
      %4434 = vmatpush1.bf16.msra.mxu0 0
      %4435 = vmatprep.subr.bf16.mxu0 0
      %4436 = vmatpush1.bf16.msra.mxu0 0
      %4437 = vmatprep.subr.bf16.mxu0 0
      %4438 = vmatpush1.bf16.msra.mxu0 0
      %4439 = vmatprep.subr.bf16.mxu0 0
      %4440 = vmatpush1.bf16.msra.mxu0 0
      %4441 = vmatprep.subr.bf16.mxu0 0
      %4442 = vmatpush1.bf16.msra.mxu0 0
      %4443 = vmatprep.subr.bf16.mxu0 0
      %4444 = vmatpush1.bf16.msra.mxu0 0
      %4445 = vmatprep.subr.bf16.mxu0 0
      %4446 = vmatpush1.bf16.msra.mxu0 0
      %4447 = vmatprep.subr.bf16.mxu0 0
      %4448 = vmatpush1.bf16.msra.mxu0 0
      %4449 = vmatprep.mubr.bf16.mxu0 0
      %4450 = vmatmul.mubr.bf16.gmra.mrb[0].mxu0 %v4415
      %v4451 = vpop.f32.mrb[0].mxu0
      %v4452 = vadd.f32 0.0, %v4451
      %v4453 = vpop.f32.mrb[0].mxu0
      %v4454 = vpop.f32.mrb[0].mxu0
      %v4455 = vadd.f32 0.0, %v4454
      %v4456 = vpop.f32.mrb[0].mxu0
      %4457 = vdwg.mxu0
      %4460 = vrot.lane.b32.xlu0 %v3738, 64
      %v4461 = vpop.permute.xlu0 %4460
      %4462 = vrot.lane.b32.xlu0 %v3741, 64
      %v4463 = vpop.permute.xlu0 %4462
      %4468 = vrot.lane.b32.xlu0 %v3976, 64
      %v4469 = vpop.permute.xlu0 %4468
      %4470 = vrot.lane.b32.xlu0 %v3979, 64
      %v4471 = vpop.permute.xlu0 %4470
      %4476 = vrot.lane.b32.xlu0 %v4214, 64
      %v4477 = vpop.permute.xlu0 %4476
      %4478 = vrot.lane.b32.xlu0 %v4217, 64
      %v4479 = vpop.permute.xlu0 %4478
      %4484 = vrot.lane.b32.xlu0 %v4452, 64
      %v4485 = vpop.permute.xlu0 %4484
      %4486 = vrot.lane.b32.xlu0 %v4455, 64
      %v4487 = vpop.permute.xlu0 %4486
      %v4490 = vsel %vm1151, %v3614, %v4461
      %v4491 = vsel %vm1151, %v3617, %v4463
      %v4492 = vsel %vm1151, %v3852, %v4469
      %v4493 = vsel %vm1151, %v3855, %v4471
      %v4494 = vsel %vm1151, %v4090, %v4477
      %v4495 = vsel %vm1151, %v4093, %v4479
      %v4496 = vsel %vm1151, %v4328, %v4485
      %v4497 = vsel %vm1151, %v4331, %v4487
      %v4498 = vpack.c.bf16 %v4491, %v4490
      %v4499 = vpack.c.bf16 %v4493, %v4492
      %v4500 = vpack.c.bf16 %v4495, %v4494
      %v4501 = vpack.c.bf16 %v4497, %v4496
      %v4502 = vlaneseq
      %v4503 = vshrl.u32 %v4502, 7
      %v4504 = vsub.s32 2, %v4503
      %v4505 = vrot.slane %v2711, %v4504
      %v4570 = vunpack.c.l.b16 %v2647
      %v4571 = vunpack.c.l.b16 %v2648
      %v4572 = vunpack.c.l.b16 %v2649
      %v4573 = vunpack.c.l.b16 %v2650
      %v4574 = vunpack.c.l.b16 %v2651
      %v4575 = vunpack.c.l.b16 %v2652
      %v4576 = vunpack.c.l.b16 %v2653
      %v4577 = vunpack.c.l.b16 %v2654
      %v4578 = vunpack.c.l.b16 %v2655
      %v4579 = vunpack.c.l.b16 %v2656
      %v4580 = vunpack.c.l.b16 %v2657
      %v4581 = vunpack.c.l.b16 %v2658
      %v4582 = vunpack.c.l.b16 %v2659
      %v4583 = vunpack.c.l.b16 %v2660
      %v4584 = vunpack.c.l.b16 %v2661
      %v4585 = vunpack.c.l.b16 %v2662
      %v4586 = vunpack.c.l.b16 %v2663
      %v4587 = vunpack.c.l.b16 %v2664
      %v4588 = vunpack.c.l.b16 %v2665
      %v4589 = vunpack.c.l.b16 %v2666
      %v4590 = vunpack.c.l.b16 %v2667
      %v4591 = vunpack.c.l.b16 %v2668
      %v4592 = vunpack.c.l.b16 %v2669
      %v4593 = vunpack.c.l.b16 %v2670
      %v4594 = vunpack.c.l.b16 %v2671
      %v4595 = vunpack.c.l.b16 %v2672
      %v4596 = vunpack.c.l.b16 %v2673
      %v4597 = vunpack.c.l.b16 %v2674
      %v4598 = vunpack.c.l.b16 %v2675
      %v4599 = vunpack.c.l.b16 %v2676
      %v4600 = vunpack.c.l.b16 %v2677
      %v4601 = vunpack.c.l.b16 %v2678
      %v4602 = vunpack.c.l.b16 %v2679
      %v4603 = vunpack.c.l.b16 %v2680
      %v4604 = vunpack.c.l.b16 %v2681
      %v4605 = vunpack.c.l.b16 %v2682
      %v4606 = vunpack.c.l.b16 %v2683
      %v4607 = vunpack.c.l.b16 %v2684
      %v4608 = vunpack.c.l.b16 %v2685
      %v4609 = vunpack.c.l.b16 %v2686
      %v4610 = vunpack.c.l.b16 %v2687
      %v4611 = vunpack.c.l.b16 %v2688
      %v4612 = vunpack.c.l.b16 %v2689
      %v4613 = vunpack.c.l.b16 %v2690
      %v4614 = vunpack.c.l.b16 %v2691
      %v4615 = vunpack.c.l.b16 %v2692
      %v4616 = vunpack.c.l.b16 %v2693
      %v4617 = vunpack.c.l.b16 %v2694
      %v4618 = vunpack.c.l.b16 %v2695
      %v4619 = vunpack.c.l.b16 %v2696
      %v4620 = vunpack.c.l.b16 %v2697
      %v4621 = vunpack.c.l.b16 %v2698
      %v4622 = vunpack.c.l.b16 %v2699
      %v4623 = vunpack.c.l.b16 %v2700
      %v4624 = vunpack.c.l.b16 %v2701
      %v4625 = vunpack.c.l.b16 %v2702
      %v4626 = vunpack.c.l.b16 %v2703
      %v4627 = vunpack.c.l.b16 %v2704
      %v4628 = vunpack.c.l.b16 %v2705
      %v4629 = vunpack.c.l.b16 %v2706
      %v4630 = vunpack.c.l.b16 %v2707
      %v4631 = vunpack.c.l.b16 %v2708
      %v4632 = vunpack.c.l.b16 %v2709
      %v4633 = vunpack.c.l.b16 %v2710
      %v4634 = vpack.c.b16 %v4571, %v4570
      %v4635 = vpack.c.b16 %v4573, %v4572
      %v4636 = vpack.c.b16 %v4575, %v4574
      %v4637 = vpack.c.b16 %v4577, %v4576
      %v4638 = vpack.c.b16 %v4579, %v4578
      %v4639 = vpack.c.b16 %v4581, %v4580
      %v4640 = vpack.c.b16 %v4583, %v4582
      %v4641 = vpack.c.b16 %v4585, %v4584
      %v4642 = vpack.c.b16 %v4587, %v4586
      %v4643 = vpack.c.b16 %v4589, %v4588
      %v4644 = vpack.c.b16 %v4591, %v4590
      %v4645 = vpack.c.b16 %v4593, %v4592
      %v4646 = vpack.c.b16 %v4595, %v4594
      %v4647 = vpack.c.b16 %v4597, %v4596
      %v4648 = vpack.c.b16 %v4599, %v4598
      %v4649 = vpack.c.b16 %v4601, %v4600
      %v4650 = vpack.c.b16 %v4603, %v4602
      %v4651 = vpack.c.b16 %v4605, %v4604
      %v4652 = vpack.c.b16 %v4607, %v4606
      %v4653 = vpack.c.b16 %v4609, %v4608
      %v4654 = vpack.c.b16 %v4611, %v4610
      %v4655 = vpack.c.b16 %v4613, %v4612
      %v4656 = vpack.c.b16 %v4615, %v4614
      %v4657 = vpack.c.b16 %v4617, %v4616
      %v4658 = vpack.c.b16 %v4619, %v4618
      %v4659 = vpack.c.b16 %v4621, %v4620
      %v4660 = vpack.c.b16 %v4623, %v4622
      %v4661 = vpack.c.b16 %v4625, %v4624
      %v4662 = vpack.c.b16 %v4627, %v4626
      %v4663 = vpack.c.b16 %v4629, %v4628
      %v4664 = vpack.c.b16 %v4631, %v4630
      %v4665 = vpack.c.b16 %v4633, %v4632
      %4698 = vmatprep.subr.bf16.mxu0 0
      %4699 = vmatpush1.bf16.msra.mxu0 %v4634
      %4700 = vmatprep.subr.bf16.mxu0 0
      %4701 = vmatpush1.bf16.msra.mxu0 %v4635
      %4702 = vmatprep.subr.bf16.mxu0 0
      %4703 = vmatpush1.bf16.msra.mxu0 %v4636
      %4704 = vmatprep.subr.bf16.mxu0 0
      %4705 = vmatpush1.bf16.msra.mxu0 %v4637
      %4706 = vmatprep.subr.bf16.mxu0 0
      %4707 = vmatpush1.bf16.msra.mxu0 %v4638
      %4708 = vmatprep.subr.bf16.mxu0 0
      %4709 = vmatpush1.bf16.msra.mxu0 %v4639
      %4710 = vmatprep.subr.bf16.mxu0 0
      %4711 = vmatpush1.bf16.msra.mxu0 %v4640
      %4712 = vmatprep.subr.bf16.mxu0 0
      %4713 = vmatpush1.bf16.msra.mxu0 %v4641
      %4714 = vmatprep.subr.bf16.mxu0 0
      %4715 = vmatpush1.bf16.msra.mxu0 %v4642
      %4716 = vmatprep.subr.bf16.mxu0 0
      %4717 = vmatpush1.bf16.msra.mxu0 %v4643
      %4718 = vmatprep.subr.bf16.mxu0 0
      %4719 = vmatpush1.bf16.msra.mxu0 %v4644
      %4720 = vmatprep.subr.bf16.mxu0 0
      %4721 = vmatpush1.bf16.msra.mxu0 %v4645
      %4722 = vmatprep.subr.bf16.mxu0 0
      %4723 = vmatpush1.bf16.msra.mxu0 %v4646
      %4724 = vmatprep.subr.bf16.mxu0 0
      %4725 = vmatpush1.bf16.msra.mxu0 %v4647
      %4726 = vmatprep.subr.bf16.mxu0 0
      %4727 = vmatpush1.bf16.msra.mxu0 %v4648
      %4728 = vmatprep.subr.bf16.mxu0 0
      %4729 = vmatpush1.bf16.msra.mxu0 %v4649
      %4730 = vmatprep.mubr.bf16.mxu0 %v4499
      %4731 = vmatmul.mubr.bf16.gmra.mrb[0].mxu0 %v4498
      %v4732 = vpop.f32.mrb[0].mxu0
      %v4733 = vadd.f32 %v4505, %v4732
      %v4734 = vpop.f32.mrb[0].mxu0
      %v4735 = vpop.f32.mrb[0].mxu0
      %v4736 = vadd.f32 %v4505, %v4735
      %v4737 = vpop.f32.mrb[0].mxu0
      %4738 = vdwg.mxu0
      %4739 = vmatprep.subr.bf16.mxu0 0
      %4740 = vmatpush1.bf16.msra.mxu0 %v4650
      %4741 = vmatprep.subr.bf16.mxu0 0
      %4742 = vmatpush1.bf16.msra.mxu0 %v4651
      %4743 = vmatprep.subr.bf16.mxu0 0
      %4744 = vmatpush1.bf16.msra.mxu0 %v4652
      %4745 = vmatprep.subr.bf16.mxu0 0
      %4746 = vmatpush1.bf16.msra.mxu0 %v4653
      %4747 = vmatprep.subr.bf16.mxu0 0
      %4748 = vmatpush1.bf16.msra.mxu0 %v4654
      %4749 = vmatprep.subr.bf16.mxu0 0
      %4750 = vmatpush1.bf16.msra.mxu0 %v4655
      %4751 = vmatprep.subr.bf16.mxu0 0
      %4752 = vmatpush1.bf16.msra.mxu0 %v4656
      %4753 = vmatprep.subr.bf16.mxu0 0
      %4754 = vmatpush1.bf16.msra.mxu0 %v4657
      %4755 = vmatprep.subr.bf16.mxu0 0
      %4756 = vmatpush1.bf16.msra.mxu0 %v4658
      %4757 = vmatprep.subr.bf16.mxu0 0
      %4758 = vmatpush1.bf16.msra.mxu0 %v4659
      %4759 = vmatprep.subr.bf16.mxu0 0
      %4760 = vmatpush1.bf16.msra.mxu0 %v4660
      %4761 = vmatprep.subr.bf16.mxu0 0
      %4762 = vmatpush1.bf16.msra.mxu0 %v4661
      %4763 = vmatprep.subr.bf16.mxu0 0
      %4764 = vmatpush1.bf16.msra.mxu0 %v4662
      %4765 = vmatprep.subr.bf16.mxu0 0
      %4766 = vmatpush1.bf16.msra.mxu0 %v4663
      %4767 = vmatprep.subr.bf16.mxu0 0
      %4768 = vmatpush1.bf16.msra.mxu0 %v4664
      %4769 = vmatprep.subr.bf16.mxu0 0
      %4770 = vmatpush1.bf16.msra.mxu0 %v4665
      %4771 = vmatprep.mubr.bf16.mxu0 %v4501
      %4772 = vmatmul.mubr.bf16.gmra.mrb[0].mxu0 %v4500
      %v4773 = vpop.f32.mrb[0].mxu0
      %v4774 = vadd.f32 %v4733, %v4773
      %v4775 = vpop.f32.mrb[0].mxu0
      %v4776 = vpop.f32.mrb[0].mxu0
      %v4777 = vadd.f32 %v4736, %v4776
      %v4778 = vpop.f32.mrb[0].mxu0
      %4779 = vdwg.mxu0
      %v4780 = vadd.f32 %v4774, %v2549
      %v4781 = vadd.f32 %v4777, %v2550
      %v4782 = vld [vmem:[%s17] sm:$0xff]
      %v4783 = vld [vmem:[%s17 + $0x8] sm:$0xff]
      %v4784 = vld [vmem:[%s17 + $0x10] sm:$0xff]
      %v4785 = vld [vmem:[%s17 + $0x18] sm:$0xff]
      %v4786 = vld [vmem:[%s17 + $0x20] sm:$0xff]
      %v4787 = vld [vmem:[%s17 + $0x28] sm:$0xff]
      %v4788 = vld [vmem:[%s17 + $0x30] sm:$0xff]
      %v4789 = vld [vmem:[%s17 + $0x38] sm:$0xff]
      %v4790 = vld [vmem:[%s17 + $0x40] sm:$0xff]
      %v4791 = vld [vmem:[%s17 + $0x48] sm:$0xff]
      %v4792 = vld [vmem:[%s17 + $0x50] sm:$0xff]
      %v4793 = vld [vmem:[%s17 + $0x58] sm:$0xff]
      %v4794 = vld [vmem:[%s17 + $0x60] sm:$0xff]
      %v4795 = vld [vmem:[%s17 + $0x68] sm:$0xff]
      %v4796 = vld [vmem:[%s17 + $0x70] sm:$0xff]
      %v4797 = vld [vmem:[%s17 + $0x78] sm:$0xff]
      %v4798 = vld [vmem:[%s17 + $0x80] sm:$0xff]
      %v4799 = vld [vmem:[%s17 + $0x88] sm:$0xff]
      %v4800 = vld [vmem:[%s17 + $0x90] sm:$0xff]
      %v4801 = vld [vmem:[%s17 + $0x98] sm:$0xff]
      %v4802 = vld [vmem:[%s17 + $0xa0] sm:$0xff]
      %v4803 = vld [vmem:[%s17 + $0xa8] sm:$0xff]
      %v4804 = vld [vmem:[%s17 + $0xb0] sm:$0xff]
      %v4805 = vld [vmem:[%s17 + $0xb8] sm:$0xff]
      %v4806 = vld [vmem:[%s17 + $0xc0] sm:$0xff]
      %v4807 = vld [vmem:[%s17 + $0xc8] sm:$0xff]
      %v4808 = vld [vmem:[%s17 + $0xd0] sm:$0xff]
      %v4809 = vld [vmem:[%s17 + $0xd8] sm:$0xff]
      %v4810 = vld [vmem:[%s17 + $0xe0] sm:$0xff]
      %v4811 = vld [vmem:[%s17 + $0xe8] sm:$0xff]
      %v4812 = vld [vmem:[%s17 + $0xf0] sm:$0xff]
      %v4813 = vld [vmem:[%s17 + $0xf8] sm:$0xff]
      %v4814 = vld [vmem:[%s17 + $0x100] sm:$0xff]
      %v4815 = vld [vmem:[%s17 + $0x108] sm:$0xff]
      %v4816 = vld [vmem:[%s17 + $0x110] sm:$0xff]
      %v4817 = vld [vmem:[%s17 + $0x118] sm:$0xff]
      %v4818 = vld [vmem:[%s17 + $0x120] sm:$0xff]
      %v4819 = vld [vmem:[%s17 + $0x128] sm:$0xff]
      %v4820 = vld [vmem:[%s17 + $0x130] sm:$0xff]
      %v4821 = vld [vmem:[%s17 + $0x138] sm:$0xff]
      %v4822 = vld [vmem:[%s17 + $0x140] sm:$0xff]
      %v4823 = vld [vmem:[%s17 + $0x148] sm:$0xff]
      %v4824 = vld [vmem:[%s17 + $0x150] sm:$0xff]
      %v4825 = vld [vmem:[%s17 + $0x158] sm:$0xff]
      %v4826 = vld [vmem:[%s17 + $0x160] sm:$0xff]
      %v4827 = vld [vmem:[%s17 + $0x168] sm:$0xff]
      %v4828 = vld [vmem:[%s17 + $0x170] sm:$0xff]
      %v4829 = vld [vmem:[%s17 + $0x178] sm:$0xff]
      %v4830 = vld [vmem:[%s17 + $0x180] sm:$0xff]
      %v4831 = vld [vmem:[%s17 + $0x188] sm:$0xff]
      %v4832 = vld [vmem:[%s17 + $0x190] sm:$0xff]
      %v4833 = vld [vmem:[%s17 + $0x198] sm:$0xff]
      %v4834 = vld [vmem:[%s17 + $0x1a0] sm:$0xff]
      %v4835 = vld [vmem:[%s17 + $0x1a8] sm:$0xff]
      %v4836 = vld [vmem:[%s17 + $0x1b0] sm:$0xff]
      %v4837 = vld [vmem:[%s17 + $0x1b8] sm:$0xff]
      %v4838 = vld [vmem:[%s17 + $0x1c0] sm:$0xff]
      %v4839 = vld [vmem:[%s17 + $0x1c8] sm:$0xff]
      %v4840 = vld [vmem:[%s17 + $0x1d0] sm:$0xff]
      %v4841 = vld [vmem:[%s17 + $0x1d8] sm:$0xff]
      %v4842 = vld [vmem:[%s17 + $0x1e0] sm:$0xff]
      %v4843 = vld [vmem:[%s17 + $0x1e8] sm:$0xff]
      %v4844 = vld [vmem:[%s17 + $0x1f0] sm:$0xff]
      %v4845 = vld [vmem:[%s17 + $0x1f8] sm:$0xff]
      %v4846 = vld [vmem:[%s18] sm:$0xff]
      %v4847 = vld [vmem:[%s19] sm:$0xf]
      %v4848 = vld [vmem:[%s19 + $0x4] sm:$0xf]
      %v4849 = vld [vmem:[%s19 + $0x8] sm:$0xf]
      %v4850 = vld [vmem:[%s19 + $0xc] sm:$0xf]
      %v4851 = vld [vmem:[%s19 + $0x10] sm:$0xf]
      %v4852 = vld [vmem:[%s19 + $0x14] sm:$0xf]
      %v4853 = vld [vmem:[%s19 + $0x18] sm:$0xf]
      %v4854 = vld [vmem:[%s19 + $0x1c] sm:$0xf]
      %v4855 = vld [vmem:[%s19 + $0x20] sm:$0xf]
      %v4856 = vld [vmem:[%s19 + $0x24] sm:$0xf]
      %v4857 = vld [vmem:[%s19 + $0x28] sm:$0xf]
      %v4858 = vld [vmem:[%s19 + $0x2c] sm:$0xf]
      %v4859 = vld [vmem:[%s19 + $0x30] sm:$0xf]
      %v4860 = vld [vmem:[%s19 + $0x34] sm:$0xf]
      %v4861 = vld [vmem:[%s19 + $0x38] sm:$0xf]
      %v4862 = vld [vmem:[%s19 + $0x3c] sm:$0xf]
      %v4863 = vld [vmem:[%s19 + $0x40] sm:$0xf]
      %v4864 = vld [vmem:[%s19 + $0x44] sm:$0xf]
      %v4865 = vld [vmem:[%s19 + $0x48] sm:$0xf]
      %v4866 = vld [vmem:[%s19 + $0x4c] sm:$0xf]
      %v4867 = vld [vmem:[%s19 + $0x50] sm:$0xf]
      %v4868 = vld [vmem:[%s19 + $0x54] sm:$0xf]
      %v4869 = vld [vmem:[%s19 + $0x58] sm:$0xf]
      %v4870 = vld [vmem:[%s19 + $0x5c] sm:$0xf]
      %v4871 = vld [vmem:[%s19 + $0x60] sm:$0xf]
      %v4872 = vld [vmem:[%s19 + $0x64] sm:$0xf]
      %v4873 = vld [vmem:[%s19 + $0x68] sm:$0xf]
      %v4874 = vld [vmem:[%s19 + $0x6c] sm:$0xf]
      %v4875 = vld [vmem:[%s19 + $0x70] sm:$0xf]
      %v4876 = vld [vmem:[%s19 + $0x74] sm:$0xf]
      %v4877 = vld [vmem:[%s19 + $0x78] sm:$0xf]
      %v4878 = vld [vmem:[%s19 + $0x7c] sm:$0xf]
      %v4879 = vld [vmem:[%s19 + $0x80] sm:$0xf]
      %v4880 = vld [vmem:[%s19 + $0x84] sm:$0xf]
      %v4881 = vld [vmem:[%s19 + $0x88] sm:$0xf]
      %v4882 = vld [vmem:[%s19 + $0x8c] sm:$0xf]
      %v4883 = vld [vmem:[%s19 + $0x90] sm:$0xf]
      %v4884 = vld [vmem:[%s19 + $0x94] sm:$0xf]
      %v4885 = vld [vmem:[%s19 + $0x98] sm:$0xf]
      %v4886 = vld [vmem:[%s19 + $0x9c] sm:$0xf]
      %v4887 = vld [vmem:[%s19 + $0xa0] sm:$0xf]
      %v4888 = vld [vmem:[%s19 + $0xa4] sm:$0xf]
      %v4889 = vld [vmem:[%s19 + $0xa8] sm:$0xf]
      %v4890 = vld [vmem:[%s19 + $0xac] sm:$0xf]
      %v4891 = vld [vmem:[%s19 + $0xb0] sm:$0xf]
      %v4892 = vld [vmem:[%s19 + $0xb4] sm:$0xf]
      %v4893 = vld [vmem:[%s19 + $0xb8] sm:$0xf]
      %v4894 = vld [vmem:[%s19 + $0xbc] sm:$0xf]
      %v4895 = vld [vmem:[%s19 + $0xc0] sm:$0xf]
      %v4896 = vld [vmem:[%s19 + $0xc4] sm:$0xf]
      %v4897 = vld [vmem:[%s19 + $0xc8] sm:$0xf]
      %v4898 = vld [vmem:[%s19 + $0xcc] sm:$0xf]
      %v4899 = vld [vmem:[%s19 + $0xd0] sm:$0xf]
      %v4900 = vld [vmem:[%s19 + $0xd4] sm:$0xf]
      %v4901 = vld [vmem:[%s19 + $0xd8] sm:$0xf]
      %v4902 = vld [vmem:[%s19 + $0xdc] sm:$0xf]
      %v4903 = vld [vmem:[%s19 + $0xe0] sm:$0xf]
      %v4904 = vld [vmem:[%s19 + $0xe4] sm:$0xf]
      %v4905 = vld [vmem:[%s19 + $0xe8] sm:$0xf]
      %v4906 = vld [vmem:[%s19 + $0xec] sm:$0xf]
      %v4907 = vld [vmem:[%s19 + $0xf0] sm:$0xf]
      %v4908 = vld [vmem:[%s19 + $0xf4] sm:$0xf]
      %v4909 = vld [vmem:[%s19 + $0xf8] sm:$0xf]
      %v4910 = vld [vmem:[%s19 + $0xfc] sm:$0xf]
      %v4911 = vld [vmem:[%s20] sm:$0x7]
      %4912 = vadd.xlane.f32.xlu0 %v4780
      %v4913 = vpop.xlane.xlu0 %4912
      %4914 = vadd.xlane.f32.xlu0 %v4781
      %v4915 = vpop.xlane.xlu0 %4914
      %v4916 = vmul.f32 %v4913, %v860
      %v4917 = vmul.f32 %v4915, %v860
      %v4918 = vsub.f32 %v4780, %v4916
      %v4919 = vsub.f32 %v4781, %v4917
      %v4920 = vmul.f32 %v4918, %v4918
      %v4921 = vmul.f32 %v4919, %v4919
      %4922 = vadd.xlane.f32.xlu0 %v4920
      %v4923 = vpop.xlane.xlu0 %4922
      %4924 = vadd.xlane.f32.xlu0 %v4921
      %v4925 = vpop.xlane.xlu0 %4924
      %v4926 = vmul.f32 %v4923, %v860
      %v4927 = vmul.f32 %v4925, %v860
      %v4928 = vadd.f32 %v4926, 1e-05
      %v4929 = vadd.f32 %v4927, 1e-05
      %v4930 = vrsqrt.pop %v4928
      %v4931 = vrsqrt.pop %v4929
      %v4932 = vmul.f32 %v4918, %v4930
      %v4933 = vmul.f32 %v4919, %v4931
      %v4934 = vlaneseq
      %v4935 = vshrl.u32 %v4934, 7
      %v4936 = vsub.s32 0, %v4935
      %v4937 = vrot.slane %v4911, %v4936
      %v4938 = vmul.f32 %v4932, %v4937
      %v4939 = vmul.f32 %v4933, %v4937
      %v4940 = vlaneseq
      %v4941 = vshrl.u32 %v4940, 7
      %v4942 = vsub.s32 1, %v4941
      %v4943 = vrot.slane %v4911, %v4942
      %v4944 = vadd.f32 %v4938, %v4943
      %v4945 = vadd.f32 %v4939, %v4943
      %v4946 = vpack.c.bf16 %v4945, %v4944
      %v4948 = vlaneseq
      %v4949 = vshrl.u32 %v4948, 7
      %v4950 = vsub.s32 0, %v4949
      %v4951 = vrot.slane %v4846, %v4950
      %v4952 = vlaneseq
      %v4953 = vshrl.u32 %v4952, 7
      %v4954 = vsub.s32 1, %v4953
      %v4955 = vrot.slane %v4846, %v4954
      %v4956 = vlaneseq
      %v4957 = vshrl.u32 %v4956, 7
      %v4958 = vsub.s32 2, %v4957
      %v4959 = vrot.slane %v4846, %v4958
      %v4960 = vlaneseq
      %v4961 = vshrl.u32 %v4960, 7
      %v4962 = vsub.s32 3, %v4961
      %v4963 = vrot.slane %v4846, %v4962
      %v4964 = vlaneseq
      %v4965 = vshrl.u32 %v4964, 7
      %v4966 = vsub.s32 4, %v4965
      %v4967 = vrot.slane %v4846, %v4966
      %v4968 = vlaneseq
      %v4969 = vshrl.u32 %v4968, 7
      %v4970 = vsub.s32 5, %v4969
      %v4971 = vrot.slane %v4846, %v4970
      %v4972 = vlaneseq
      %v4973 = vshrl.u32 %v4972, 7
      %v4974 = vsub.s32 6, %v4973
      %v4975 = vrot.slane %v4846, %v4974
      %v4976 = vlaneseq
      %v4977 = vshrl.u32 %v4976, 7
      %v4978 = vsub.s32 7, %v4977
      %v4979 = vrot.slane %v4846, %v4978
      %v5052 = vunpack.c.l.b16 %v4782
      %v5053 = vunpack.c.h.b16 %v4782
      %v5054 = vunpack.c.l.b16 %v4783
      %v5055 = vunpack.c.h.b16 %v4783
      %v5056 = vunpack.c.l.b16 %v4784
      %v5057 = vunpack.c.h.b16 %v4784
      %v5058 = vunpack.c.l.b16 %v4785
      %v5059 = vunpack.c.h.b16 %v4785
      %v5060 = vunpack.c.l.b16 %v4786
      %v5061 = vunpack.c.h.b16 %v4786
      %v5062 = vunpack.c.l.b16 %v4787
      %v5063 = vunpack.c.h.b16 %v4787
      %v5064 = vunpack.c.l.b16 %v4788
      %v5065 = vunpack.c.h.b16 %v4788
      %v5066 = vunpack.c.l.b16 %v4789
      %v5067 = vunpack.c.h.b16 %v4789
      %v5068 = vunpack.c.l.b16 %v4790
      %v5069 = vunpack.c.h.b16 %v4790
      %v5070 = vunpack.c.l.b16 %v4791
      %v5071 = vunpack.c.h.b16 %v4791
      %v5072 = vunpack.c.l.b16 %v4792
      %v5073 = vunpack.c.h.b16 %v4792
      %v5074 = vunpack.c.l.b16 %v4793
      %v5075 = vunpack.c.h.b16 %v4793
      %v5076 = vunpack.c.l.b16 %v4794
      %v5077 = vunpack.c.h.b16 %v4794
      %v5078 = vunpack.c.l.b16 %v4795
      %v5079 = vunpack.c.h.b16 %v4795
      %v5080 = vunpack.c.l.b16 %v4796
      %v5081 = vunpack.c.h.b16 %v4796
      %v5082 = vunpack.c.l.b16 %v4797
      %v5083 = vunpack.c.h.b16 %v4797
      %v5084 = vunpack.c.l.b16 %v4798
      %v5085 = vunpack.c.h.b16 %v4798
      %v5086 = vunpack.c.l.b16 %v4799
      %v5087 = vunpack.c.h.b16 %v4799
      %v5088 = vunpack.c.l.b16 %v4800
      %v5089 = vunpack.c.h.b16 %v4800
      %v5090 = vunpack.c.l.b16 %v4801
      %v5091 = vunpack.c.h.b16 %v4801
      %v5092 = vunpack.c.l.b16 %v4802
      %v5093 = vunpack.c.h.b16 %v4802
      %v5094 = vunpack.c.l.b16 %v4803
      %v5095 = vunpack.c.h.b16 %v4803
      %v5096 = vunpack.c.l.b16 %v4804
      %v5097 = vunpack.c.h.b16 %v4804
      %v5098 = vunpack.c.l.b16 %v4805
      %v5099 = vunpack.c.h.b16 %v4805
      %v5100 = vunpack.c.l.b16 %v4806
      %v5101 = vunpack.c.h.b16 %v4806
      %v5102 = vunpack.c.l.b16 %v4807
      %v5103 = vunpack.c.h.b16 %v4807
      %v5104 = vunpack.c.l.b16 %v4808
      %v5105 = vunpack.c.h.b16 %v4808
      %v5106 = vunpack.c.l.b16 %v4809
      %v5107 = vunpack.c.h.b16 %v4809
      %v5108 = vunpack.c.l.b16 %v4810
      %v5109 = vunpack.c.h.b16 %v4810
      %v5110 = vunpack.c.l.b16 %v4811
      %v5111 = vunpack.c.h.b16 %v4811
      %v5112 = vunpack.c.l.b16 %v4812
      %v5113 = vunpack.c.h.b16 %v4812
      %v5114 = vunpack.c.l.b16 %v4813
      %v5115 = vunpack.c.h.b16 %v4813
      %v5116 = vunpack.c.l.b16 %v4814
      %v5117 = vunpack.c.h.b16 %v4814
      %v5118 = vunpack.c.l.b16 %v4815
      %v5119 = vunpack.c.h.b16 %v4815
      %v5120 = vunpack.c.l.b16 %v4816
      %v5121 = vunpack.c.h.b16 %v4816
      %v5122 = vunpack.c.l.b16 %v4817
      %v5123 = vunpack.c.h.b16 %v4817
      %v5124 = vunpack.c.l.b16 %v4818
      %v5125 = vunpack.c.h.b16 %v4818
      %v5126 = vunpack.c.l.b16 %v4819
      %v5127 = vunpack.c.h.b16 %v4819
      %v5128 = vunpack.c.l.b16 %v4820
      %v5129 = vunpack.c.h.b16 %v4820
      %v5130 = vunpack.c.l.b16 %v4821
      %v5131 = vunpack.c.h.b16 %v4821
      %v5132 = vunpack.c.l.b16 %v4822
      %v5133 = vunpack.c.h.b16 %v4822
      %v5134 = vunpack.c.l.b16 %v4823
      %v5135 = vunpack.c.h.b16 %v4823
      %v5136 = vunpack.c.l.b16 %v4824
      %v5137 = vunpack.c.h.b16 %v4824
      %v5138 = vunpack.c.l.b16 %v4825
      %v5139 = vunpack.c.h.b16 %v4825
      %v5140 = vunpack.c.l.b16 %v4826
      %v5141 = vunpack.c.h.b16 %v4826
      %v5142 = vunpack.c.l.b16 %v4827
      %v5143 = vunpack.c.h.b16 %v4827
      %v5144 = vunpack.c.l.b16 %v4828
      %v5145 = vunpack.c.h.b16 %v4828
      %v5146 = vunpack.c.l.b16 %v4829
      %v5147 = vunpack.c.h.b16 %v4829
      %v5148 = vunpack.c.l.b16 %v4830
      %v5149 = vunpack.c.h.b16 %v4830
      %v5150 = vunpack.c.l.b16 %v4831
      %v5151 = vunpack.c.h.b16 %v4831
      %v5152 = vunpack.c.l.b16 %v4832
      %v5153 = vunpack.c.h.b16 %v4832
      %v5154 = vunpack.c.l.b16 %v4833
      %v5155 = vunpack.c.h.b16 %v4833
      %v5156 = vunpack.c.l.b16 %v4834
      %v5157 = vunpack.c.h.b16 %v4834
      %v5158 = vunpack.c.l.b16 %v4835
      %v5159 = vunpack.c.h.b16 %v4835
      %v5160 = vunpack.c.l.b16 %v4836
      %v5161 = vunpack.c.h.b16 %v4836
      %v5162 = vunpack.c.l.b16 %v4837
      %v5163 = vunpack.c.h.b16 %v4837
      %v5164 = vunpack.c.l.b16 %v4838
      %v5165 = vunpack.c.h.b16 %v4838
      %v5166 = vunpack.c.l.b16 %v4839
      %v5167 = vunpack.c.h.b16 %v4839
      %v5168 = vunpack.c.l.b16 %v4840
      %v5169 = vunpack.c.h.b16 %v4840
      %v5170 = vunpack.c.l.b16 %v4841
      %v5171 = vunpack.c.h.b16 %v4841
      %v5172 = vunpack.c.l.b16 %v4842
      %v5173 = vunpack.c.h.b16 %v4842
      %v5174 = vunpack.c.l.b16 %v4843
      %v5175 = vunpack.c.h.b16 %v4843
      %v5176 = vunpack.c.l.b16 %v4844
      %v5177 = vunpack.c.h.b16 %v4844
      %v5178 = vunpack.c.l.b16 %v4845
      %v5179 = vunpack.c.h.b16 %v4845
      %v5180 = vpack.c.b16 %v5060, %v5052
      %v5181 = vpack.c.b16 %v5061, %v5053
      %v5182 = vpack.c.b16 %v5062, %v5054
      %v5183 = vpack.c.b16 %v5063, %v5055
      %v5184 = vpack.c.b16 %v5064, %v5056
      %v5185 = vpack.c.b16 %v5065, %v5057
      %v5186 = vpack.c.b16 %v5066, %v5058
      %v5187 = vpack.c.b16 %v5067, %v5059
      %v5188 = vpack.c.b16 %v5076, %v5068
      %v5189 = vpack.c.b16 %v5077, %v5069
      %v5190 = vpack.c.b16 %v5078, %v5070
      %v5191 = vpack.c.b16 %v5079, %v5071
      %v5192 = vpack.c.b16 %v5080, %v5072
      %v5193 = vpack.c.b16 %v5081, %v5073
      %v5194 = vpack.c.b16 %v5082, %v5074
      %v5195 = vpack.c.b16 %v5083, %v5075
      %v5196 = vpack.c.b16 %v5092, %v5084
      %v5197 = vpack.c.b16 %v5093, %v5085
      %v5198 = vpack.c.b16 %v5094, %v5086
      %v5199 = vpack.c.b16 %v5095, %v5087
      %v5200 = vpack.c.b16 %v5096, %v5088
      %v5201 = vpack.c.b16 %v5097, %v5089
      %v5202 = vpack.c.b16 %v5098, %v5090
      %v5203 = vpack.c.b16 %v5099, %v5091
      %v5204 = vpack.c.b16 %v5108, %v5100
      %v5205 = vpack.c.b16 %v5109, %v5101
      %v5206 = vpack.c.b16 %v5110, %v5102
      %v5207 = vpack.c.b16 %v5111, %v5103
      %v5208 = vpack.c.b16 %v5112, %v5104
      %v5209 = vpack.c.b16 %v5113, %v5105
      %v5210 = vpack.c.b16 %v5114, %v5106
      %v5211 = vpack.c.b16 %v5115, %v5107
      %v5212 = vpack.c.b16 %v5124, %v5116
      %v5213 = vpack.c.b16 %v5125, %v5117
      %v5214 = vpack.c.b16 %v5126, %v5118
      %v5215 = vpack.c.b16 %v5127, %v5119
      %v5216 = vpack.c.b16 %v5128, %v5120
      %v5217 = vpack.c.b16 %v5129, %v5121
      %v5218 = vpack.c.b16 %v5130, %v5122
      %v5219 = vpack.c.b16 %v5131, %v5123
      %v5220 = vpack.c.b16 %v5140, %v5132
      %v5221 = vpack.c.b16 %v5141, %v5133
      %v5222 = vpack.c.b16 %v5142, %v5134
      %v5223 = vpack.c.b16 %v5143, %v5135
      %v5224 = vpack.c.b16 %v5144, %v5136
      %v5225 = vpack.c.b16 %v5145, %v5137
      %v5226 = vpack.c.b16 %v5146, %v5138
      %v5227 = vpack.c.b16 %v5147, %v5139
      %v5228 = vpack.c.b16 %v5156, %v5148
      %v5229 = vpack.c.b16 %v5157, %v5149
      %v5230 = vpack.c.b16 %v5158, %v5150
      %v5231 = vpack.c.b16 %v5159, %v5151
      %v5232 = vpack.c.b16 %v5160, %v5152
      %v5233 = vpack.c.b16 %v5161, %v5153
      %v5234 = vpack.c.b16 %v5162, %v5154
      %v5235 = vpack.c.b16 %v5163, %v5155
      %v5236 = vpack.c.b16 %v5172, %v5164
      %v5237 = vpack.c.b16 %v5173, %v5165
      %v5238 = vpack.c.b16 %v5174, %v5166
      %v5239 = vpack.c.b16 %v5175, %v5167
      %v5240 = vpack.c.b16 %v5176, %v5168
      %v5241 = vpack.c.b16 %v5177, %v5169
      %v5242 = vpack.c.b16 %v5178, %v5170
      %v5243 = vpack.c.b16 %v5179, %v5171
      %5308 = vmatprep.subr.bf16.mxu0 %v5181
      %5309 = vmatpush1.bf16.msra.mxu0 %v5180
      %5310 = vmatprep.subr.bf16.mxu0 %v5189
      %5311 = vmatpush1.bf16.msra.mxu0 %v5188
      %5312 = vmatprep.subr.bf16.mxu0 %v5197
      %5313 = vmatpush1.bf16.msra.mxu0 %v5196
      %5314 = vmatprep.subr.bf16.mxu0 %v5205
      %5315 = vmatpush1.bf16.msra.mxu0 %v5204
      %5316 = vmatprep.subr.bf16.mxu0 %v5213
      %5317 = vmatpush1.bf16.msra.mxu0 %v5212
      %5318 = vmatprep.subr.bf16.mxu0 %v5221
      %5319 = vmatpush1.bf16.msra.mxu0 %v5220
      %5320 = vmatprep.subr.bf16.mxu0 %v5229
      %5321 = vmatpush1.bf16.msra.mxu0 %v5228
      %5322 = vmatprep.subr.bf16.mxu0 %v5237
      %5323 = vmatpush1.bf16.msra.mxu0 %v5236
      %5324 = vmatprep.subr.bf16.mxu0 0
      %5325 = vmatpush1.bf16.msra.mxu0 0
      %5326 = vmatprep.subr.bf16.mxu0 0
      %5327 = vmatpush1.bf16.msra.mxu0 0
      %5328 = vmatprep.subr.bf16.mxu0 0
      %5329 = vmatpush1.bf16.msra.mxu0 0
      %5330 = vmatprep.subr.bf16.mxu0 0
      %5331 = vmatpush1.bf16.msra.mxu0 0
      %5332 = vmatprep.subr.bf16.mxu0 0
      %5333 = vmatpush1.bf16.msra.mxu0 0
      %5334 = vmatprep.subr.bf16.mxu0 0
      %5335 = vmatpush1.bf16.msra.mxu0 0
      %5336 = vmatprep.subr.bf16.mxu0 0
      %5337 = vmatpush1.bf16.msra.mxu0 0
      %5338 = vmatprep.subr.bf16.mxu0 0
      %5339 = vmatpush1.bf16.msra.mxu0 0
      %5340 = vmatprep.mubr.bf16.mxu0 0
      %5341 = vmatmul.mubr.bf16.gmra.mrb[0].mxu0 %v4946
      %v5342 = vpop.f32.mrb[0].mxu0
      %v5343 = vadd.f32 %v4951, %v5342
      %v5344 = vpop.f32.mrb[0].mxu0
      %v5345 = vadd.f32 %v4955, %v5344
      %v5346 = vpop.f32.mrb[0].mxu0
      %v5347 = vadd.f32 %v4951, %v5346
      %v5348 = vpop.f32.mrb[0].mxu0
      %v5349 = vadd.f32 %v4955, %v5348
      %5350 = vdwg.mxu0
      %5351 = vmatprep.subr.bf16.mxu0 %v5183
      %5352 = vmatpush1.bf16.msra.mxu0 %v5182
      %5353 = vmatprep.subr.bf16.mxu0 %v5191
      %5354 = vmatpush1.bf16.msra.mxu0 %v5190
      %5355 = vmatprep.subr.bf16.mxu0 %v5199
      %5356 = vmatpush1.bf16.msra.mxu0 %v5198
      %5357 = vmatprep.subr.bf16.mxu0 %v5207
      %5358 = vmatpush1.bf16.msra.mxu0 %v5206
      %5359 = vmatprep.subr.bf16.mxu0 %v5215
      %5360 = vmatpush1.bf16.msra.mxu0 %v5214
      %5361 = vmatprep.subr.bf16.mxu0 %v5223
      %5362 = vmatpush1.bf16.msra.mxu0 %v5222
      %5363 = vmatprep.subr.bf16.mxu0 %v5231
      %5364 = vmatpush1.bf16.msra.mxu0 %v5230
      %5365 = vmatprep.subr.bf16.mxu0 %v5239
      %5366 = vmatpush1.bf16.msra.mxu0 %v5238
      %5367 = vmatprep.subr.bf16.mxu0 0
      %5368 = vmatpush1.bf16.msra.mxu0 0
      %5369 = vmatprep.subr.bf16.mxu0 0
      %5370 = vmatpush1.bf16.msra.mxu0 0
      %5371 = vmatprep.subr.bf16.mxu0 0
      %5372 = vmatpush1.bf16.msra.mxu0 0
      %5373 = vmatprep.subr.bf16.mxu0 0
      %5374 = vmatpush1.bf16.msra.mxu0 0
      %5375 = vmatprep.subr.bf16.mxu0 0
      %5376 = vmatpush1.bf16.msra.mxu0 0
      %5377 = vmatprep.subr.bf16.mxu0 0
      %5378 = vmatpush1.bf16.msra.mxu0 0
      %5379 = vmatprep.subr.bf16.mxu0 0
      %5380 = vmatpush1.bf16.msra.mxu0 0
      %5381 = vmatprep.subr.bf16.mxu0 0
      %5382 = vmatpush1.bf16.msra.mxu0 0
      %5383 = vmatprep.mubr.bf16.mxu0 0
      %5384 = vmatmul.mubr.bf16.gmra.mrb[0].mxu0 %v4946
      %v5385 = vpop.f32.mrb[0].mxu0
      %v5386 = vadd.f32 %v4959, %v5385
      %v5387 = vpop.f32.mrb[0].mxu0
      %v5388 = vadd.f32 %v4963, %v5387
      %v5389 = vpop.f32.mrb[0].mxu0
      %v5390 = vadd.f32 %v4959, %v5389
      %v5391 = vpop.f32.mrb[0].mxu0
      %v5392 = vadd.f32 %v4963, %v5391
      %5393 = vdwg.mxu0
      %5394 = vmatprep.subr.bf16.mxu0 %v5185
      %5395 = vmatpush1.bf16.msra.mxu0 %v5184
      %5396 = vmatprep.subr.bf16.mxu0 %v5193
      %5397 = vmatpush1.bf16.msra.mxu0 %v5192
      %5398 = vmatprep.subr.bf16.mxu0 %v5201
      %5399 = vmatpush1.bf16.msra.mxu0 %v5200
      %5400 = vmatprep.subr.bf16.mxu0 %v5209
      %5401 = vmatpush1.bf16.msra.mxu0 %v5208
      %5402 = vmatprep.subr.bf16.mxu0 %v5217
      %5403 = vmatpush1.bf16.msra.mxu0 %v5216
      %5404 = vmatprep.subr.bf16.mxu0 %v5225
      %5405 = vmatpush1.bf16.msra.mxu0 %v5224
      %5406 = vmatprep.subr.bf16.mxu0 %v5233
      %5407 = vmatpush1.bf16.msra.mxu0 %v5232
      %5408 = vmatprep.subr.bf16.mxu0 %v5241
      %5409 = vmatpush1.bf16.msra.mxu0 %v5240
      %5410 = vmatprep.subr.bf16.mxu0 0
      %5411 = vmatpush1.bf16.msra.mxu0 0
      %5412 = vmatprep.subr.bf16.mxu0 0
      %5413 = vmatpush1.bf16.msra.mxu0 0
      %5414 = vmatprep.subr.bf16.mxu0 0
      %5415 = vmatpush1.bf16.msra.mxu0 0
      %5416 = vmatprep.subr.bf16.mxu0 0
      %5417 = vmatpush1.bf16.msra.mxu0 0
      %5418 = vmatprep.subr.bf16.mxu0 0
      %5419 = vmatpush1.bf16.msra.mxu0 0
      %5420 = vmatprep.subr.bf16.mxu0 0
      %5421 = vmatpush1.bf16.msra.mxu0 0
      %5422 = vmatprep.subr.bf16.mxu0 0
      %5423 = vmatpush1.bf16.msra.mxu0 0
      %5424 = vmatprep.subr.bf16.mxu0 0
      %5425 = vmatpush1.bf16.msra.mxu0 0
      %5426 = vmatprep.mubr.bf16.mxu0 0
      %5427 = vmatmul.mubr.bf16.gmra.mrb[0].mxu0 %v4946
      %v5428 = vpop.f32.mrb[0].mxu0
      %v5429 = vadd.f32 %v4967, %v5428
      %v5430 = vpop.f32.mrb[0].mxu0
      %v5431 = vadd.f32 %v4971, %v5430
      %v5432 = vpop.f32.mrb[0].mxu0
      %v5433 = vadd.f32 %v4967, %v5432
      %v5434 = vpop.f32.mrb[0].mxu0
      %v5435 = vadd.f32 %v4971, %v5434
      %5436 = vdwg.mxu0
      %5437 = vmatprep.subr.bf16.mxu0 %v5187
      %5438 = vmatpush1.bf16.msra.mxu0 %v5186
      %5439 = vmatprep.subr.bf16.mxu0 %v5195
      %5440 = vmatpush1.bf16.msra.mxu0 %v5194
      %5441 = vmatprep.subr.bf16.mxu0 %v5203
      %5442 = vmatpush1.bf16.msra.mxu0 %v5202
      %5443 = vmatprep.subr.bf16.mxu0 %v5211
      %5444 = vmatpush1.bf16.msra.mxu0 %v5210
      %5445 = vmatprep.subr.bf16.mxu0 %v5219
      %5446 = vmatpush1.bf16.msra.mxu0 %v5218
      %5447 = vmatprep.subr.bf16.mxu0 %v5227
      %5448 = vmatpush1.bf16.msra.mxu0 %v5226
      %5449 = vmatprep.subr.bf16.mxu0 %v5235
      %5450 = vmatpush1.bf16.msra.mxu0 %v5234
      %5451 = vmatprep.subr.bf16.mxu0 %v5243
      %5452 = vmatpush1.bf16.msra.mxu0 %v5242
      %5453 = vmatprep.subr.bf16.mxu0 0
      %5454 = vmatpush1.bf16.msra.mxu0 0
      %5455 = vmatprep.subr.bf16.mxu0 0
      %5456 = vmatpush1.bf16.msra.mxu0 0
      %5457 = vmatprep.subr.bf16.mxu0 0
      %5458 = vmatpush1.bf16.msra.mxu0 0
      %5459 = vmatprep.subr.bf16.mxu0 0
      %5460 = vmatpush1.bf16.msra.mxu0 0
      %5461 = vmatprep.subr.bf16.mxu0 0
      %5462 = vmatpush1.bf16.msra.mxu0 0
      %5463 = vmatprep.subr.bf16.mxu0 0
      %5464 = vmatpush1.bf16.msra.mxu0 0
      %5465 = vmatprep.subr.bf16.mxu0 0
      %5466 = vmatpush1.bf16.msra.mxu0 0
      %5467 = vmatprep.subr.bf16.mxu0 0
      %5468 = vmatpush1.bf16.msra.mxu0 0
      %5469 = vmatprep.mubr.bf16.mxu0 0
      %5470 = vmatmul.mubr.bf16.gmra.mrb[0].mxu0 %v4946
      %v5471 = vpop.f32.mrb[0].mxu0
      %v5472 = vadd.f32 %v4975, %v5471
      %v5473 = vpop.f32.mrb[0].mxu0
      %v5474 = vadd.f32 %v4979, %v5473
      %v5475 = vpop.f32.mrb[0].mxu0
      %v5476 = vadd.f32 %v4975, %v5475
      %v5477 = vpop.f32.mrb[0].mxu0
      %v5478 = vadd.f32 %v4979, %v5477
      %5479 = vdwg.mxu0
      %v5480 = vmul.f32 %v5429, 0.5
      %v5481 = vmul.f32 %v5431, 0.5
      %v5482 = vmul.f32 %v5472, 0.5
      %v5483 = vmul.f32 %v5474, 0.5
      %v5484 = vmul.f32 %v5433, 0.5
      %v5485 = vmul.f32 %v5435, 0.5
      %v5486 = vmul.f32 %v5476, 0.5
      %v5487 = vmul.f32 %v5478, 0.5
      %v5488 = vmul.f32 %v5429, 0.70710677
      %v5489 = vmul.f32 %v5431, 0.70710677
      %v5490 = vmul.f32 %v5472, 0.70710677
      %v5491 = vmul.f32 %v5474, 0.70710677
      %v5492 = vmul.f32 %v5433, 0.70710677
      %v5493 = vmul.f32 %v5435, 0.70710677
      %v5494 = vmul.f32 %v5476, 0.70710677
      %v5495 = vmul.f32 %v5478, 0.70710677
      %vm5496 = vcmp.ge.f32.partialorder %v5488, 0.0
      %vm5497 = vcmp.ge.f32.partialorder %v5489, 0.0
      %vm5498 = vcmp.ge.f32.partialorder %v5490, 0.0
      %vm5499 = vcmp.ge.f32.partialorder %v5491, 0.0
      %vm5500 = vcmp.ge.f32.partialorder %v5492, 0.0
      %vm5501 = vcmp.ge.f32.partialorder %v5493, 0.0
      %vm5502 = vcmp.ge.f32.partialorder %v5494, 0.0
      %vm5503 = vcmp.ge.f32.partialorder %v5495, 0.0
      %v5504 = vsel %vm5496, 1.0, -1.0
      %v5505 = vsel %vm5497, 1.0, -1.0
      %v5506 = vsel %vm5498, 1.0, -1.0
      %v5507 = vsel %vm5499, 1.0, -1.0
      %v5508 = vsel %vm5500, 1.0, -1.0
      %v5509 = vsel %vm5501, 1.0, -1.0
      %v5510 = vsel %vm5502, 1.0, -1.0
      %v5511 = vsel %vm5503, 1.0, -1.0
      %v5512 = vand.u32 2147483647, %v5488
      %v5513 = vand.u32 2147483647, %v5489
      %v5514 = vand.u32 2147483647, %v5490
      %v5515 = vand.u32 2147483647, %v5491
      %v5516 = vand.u32 2147483647, %v5492
      %v5517 = vand.u32 2147483647, %v5493
      %v5518 = vand.u32 2147483647, %v5494
      %v5519 = vand.u32 2147483647, %v5495
      %v5520 = vmul.f32 %v5512, 0.3275911
      %v5521 = vmul.f32 %v5513, 0.3275911
      %v5522 = vmul.f32 %v5514, 0.3275911
      %v5523 = vmul.f32 %v5515, 0.3275911
      %v5524 = vmul.f32 %v5516, 0.3275911
      %v5525 = vmul.f32 %v5517, 0.3275911
      %v5526 = vmul.f32 %v5518, 0.3275911
      %v5527 = vmul.f32 %v5519, 0.3275911
      %v5528 = vadd.f32 %v5520, 1.0
      %v5529 = vadd.f32 %v5521, 1.0
      %v5530 = vadd.f32 %v5522, 1.0
      %v5531 = vadd.f32 %v5523, 1.0
      %v5532 = vadd.f32 %v5524, 1.0
      %v5533 = vadd.f32 %v5525, 1.0
      %v5534 = vadd.f32 %v5526, 1.0
      %v5535 = vadd.f32 %v5527, 1.0
      %v5536 = vrcp.pop %v5528
      %v5537 = vrcp.pop %v5529
      %v5538 = vrcp.pop %v5530
      %v5539 = vrcp.pop %v5531
      %v5540 = vrcp.pop %v5532
      %v5541 = vrcp.pop %v5533
      %v5542 = vrcp.pop %v5534
      %v5543 = vrcp.pop %v5535
      %v5544 = vmul.f32 %v5536, 1.0614054
      %v5545 = vmul.f32 %v5537, 1.0614054
      %v5546 = vmul.f32 %v5538, 1.0614054
      %v5547 = vmul.f32 %v5539, 1.0614054
      %v5548 = vmul.f32 %v5540, 1.0614054
      %v5549 = vmul.f32 %v5541, 1.0614054
      %v5550 = vmul.f32 %v5542, 1.0614054
      %v5551 = vmul.f32 %v5543, 1.0614054
      %v5552 = vadd.f32 %v5544, -1.4531521
      %v5553 = vadd.f32 %v5545, -1.4531521
      %v5554 = vadd.f32 %v5546, -1.4531521
      %v5555 = vadd.f32 %v5547, -1.4531521
      %v5556 = vadd.f32 %v5548, -1.4531521
      %v5557 = vadd.f32 %v5549, -1.4531521
      %v5558 = vadd.f32 %v5550, -1.4531521
      %v5559 = vadd.f32 %v5551, -1.4531521
      %v5560 = vmul.f32 %v5552, %v5536
      %v5561 = vmul.f32 %v5553, %v5537
      %v5562 = vmul.f32 %v5554, %v5538
      %v5563 = vmul.f32 %v5555, %v5539
      %v5564 = vmul.f32 %v5556, %v5540
      %v5565 = vmul.f32 %v5557, %v5541
      %v5566 = vmul.f32 %v5558, %v5542
      %v5567 = vmul.f32 %v5559, %v5543
      %v5568 = vadd.f32 %v5560, 1.4214138
      %v5569 = vadd.f32 %v5561, 1.4214138
      %v5570 = vadd.f32 %v5562, 1.4214138
      %v5571 = vadd.f32 %v5563, 1.4214138
      %v5572 = vadd.f32 %v5564, 1.4214138
      %v5573 = vadd.f32 %v5565, 1.4214138
      %v5574 = vadd.f32 %v5566, 1.4214138
      %v5575 = vadd.f32 %v5567, 1.4214138
      %v5576 = vmul.f32 %v5568, %v5536
      %v5577 = vmul.f32 %v5569, %v5537
      %v5578 = vmul.f32 %v5570, %v5538
      %v5579 = vmul.f32 %v5571, %v5539
      %v5580 = vmul.f32 %v5572, %v5540
      %v5581 = vmul.f32 %v5573, %v5541
      %v5582 = vmul.f32 %v5574, %v5542
      %v5583 = vmul.f32 %v5575, %v5543
      %v5584 = vadd.f32 %v5576, -0.28449672
      %v5585 = vadd.f32 %v5577, -0.28449672
      %v5586 = vadd.f32 %v5578, -0.28449672
      %v5587 = vadd.f32 %v5579, -0.28449672
      %v5588 = vadd.f32 %v5580, -0.28449672
      %v5589 = vadd.f32 %v5581, -0.28449672
      %v5590 = vadd.f32 %v5582, -0.28449672
      %v5591 = vadd.f32 %v5583, -0.28449672
      %v5592 = vmul.f32 %v5584, %v5536
      %v5593 = vmul.f32 %v5585, %v5537
      %v5594 = vmul.f32 %v5586, %v5538
      %v5595 = vmul.f32 %v5587, %v5539
      %v5596 = vmul.f32 %v5588, %v5540
      %v5597 = vmul.f32 %v5589, %v5541
      %v5598 = vmul.f32 %v5590, %v5542
      %v5599 = vmul.f32 %v5591, %v5543
      %v5600 = vadd.f32 %v5592, 0.2548296
      %v5601 = vadd.f32 %v5593, 0.2548296
      %v5602 = vadd.f32 %v5594, 0.2548296
      %v5603 = vadd.f32 %v5595, 0.2548296
      %v5604 = vadd.f32 %v5596, 0.2548296
      %v5605 = vadd.f32 %v5597, 0.2548296
      %v5606 = vadd.f32 %v5598, 0.2548296
      %v5607 = vadd.f32 %v5599, 0.2548296
      %v5608 = vmul.f32 %v5600, %v5536
      %v5609 = vmul.f32 %v5601, %v5537
      %v5610 = vmul.f32 %v5602, %v5538
      %v5611 = vmul.f32 %v5603, %v5539
      %v5612 = vmul.f32 %v5604, %v5540
      %v5613 = vmul.f32 %v5605, %v5541
      %v5614 = vmul.f32 %v5606, %v5542
      %v5615 = vmul.f32 %v5607, %v5543
      %v5616 = vsub.f32 0.0, %v5512
      %v5617 = vsub.f32 0.0, %v5513
      %v5618 = vsub.f32 0.0, %v5514
      %v5619 = vsub.f32 0.0, %v5515
      %v5620 = vsub.f32 0.0, %v5516
      %v5621 = vsub.f32 0.0, %v5517
      %v5622 = vsub.f32 0.0, %v5518
      %v5623 = vsub.f32 0.0, %v5519
      %v5624 = vmul.f32 %v5616, %v5512
      %v5625 = vmul.f32 %v5617, %v5513
      %v5626 = vmul.f32 %v5618, %v5514
      %v5627 = vmul.f32 %v5619, %v5515
      %v5628 = vmul.f32 %v5620, %v5516
      %v5629 = vmul.f32 %v5621, %v5517
      %v5630 = vmul.f32 %v5622, %v5518
      %v5631 = vmul.f32 %v5623, %v5519
      %v5632 = vmul.f32 %v5624, 1.442695
      %v5633 = vpow.pop %v5632
      %v5634 = vmul.f32 %v5625, 1.442695
      %v5635 = vpow.pop %v5634
      %v5636 = vmul.f32 %v5626, 1.442695
      %v5637 = vpow.pop %v5636
      %v5638 = vmul.f32 %v5627, 1.442695
      %v5639 = vpow.pop %v5638
      %v5640 = vmul.f32 %v5628, 1.442695
      %v5641 = vpow.pop %v5640
      %v5642 = vmul.f32 %v5629, 1.442695
      %v5643 = vpow.pop %v5642
      %v5644 = vmul.f32 %v5630, 1.442695
      %v5645 = vpow.pop %v5644
      %v5646 = vmul.f32 %v5631, 1.442695
      %v5647 = vpow.pop %v5646
      %v5648 = vmul.f32 %v5608, %v5633
      %v5649 = vmul.f32 %v5609, %v5635
      %v5650 = vmul.f32 %v5610, %v5637
      %v5651 = vmul.f32 %v5611, %v5639
      %v5652 = vmul.f32 %v5612, %v5641
      %v5653 = vmul.f32 %v5613, %v5643
      %v5654 = vmul.f32 %v5614, %v5645
      %v5655 = vmul.f32 %v5615, %v5647
      %v5656 = vsub.f32 1.0, %v5648
      %v5657 = vsub.f32 1.0, %v5649
      %v5658 = vsub.f32 1.0, %v5650
      %v5659 = vsub.f32 1.0, %v5651
      %v5660 = vsub.f32 1.0, %v5652
      %v5661 = vsub.f32 1.0, %v5653
      %v5662 = vsub.f32 1.0, %v5654
      %v5663 = vsub.f32 1.0, %v5655
      %v5664 = vmul.f32 %v5504, %v5656
      %v5665 = vmul.f32 %v5505, %v5657
      %v5666 = vmul.f32 %v5506, %v5658
      %v5667 = vmul.f32 %v5507, %v5659
      %v5668 = vmul.f32 %v5508, %v5660
      %v5669 = vmul.f32 %v5509, %v5661
      %v5670 = vmul.f32 %v5510, %v5662
      %v5671 = vmul.f32 %v5511, %v5663
      %v5672 = vadd.f32 %v5664, 1.0
      %v5673 = vadd.f32 %v5665, 1.0
      %v5674 = vadd.f32 %v5666, 1.0
      %v5675 = vadd.f32 %v5667, 1.0
      %v5676 = vadd.f32 %v5668, 1.0
      %v5677 = vadd.f32 %v5669, 1.0
      %v5678 = vadd.f32 %v5670, 1.0
      %v5679 = vadd.f32 %v5671, 1.0
      %v5680 = vmul.f32 %v5480, %v5672
      %v5681 = vmul.f32 %v5481, %v5673
      %v5682 = vmul.f32 %v5482, %v5674
      %v5683 = vmul.f32 %v5483, %v5675
      %v5684 = vmul.f32 %v5484, %v5676
      %v5685 = vmul.f32 %v5485, %v5677
      %v5686 = vmul.f32 %v5486, %v5678
      %v5687 = vmul.f32 %v5487, %v5679
      %v5688 = vmul.f32 %v5343, %v5680
      %v5689 = vmul.f32 %v5345, %v5681
      %v5690 = vmul.f32 %v5386, %v5682
      %v5691 = vmul.f32 %v5388, %v5683
      %v5692 = vmul.f32 %v5347, %v5684
      %v5693 = vmul.f32 %v5349, %v5685
      %v5694 = vmul.f32 %v5390, %v5686
      %v5695 = vmul.f32 %v5392, %v5687
      %v5696 = vpack.c.bf16 %v5692, %v5688
      %v5697 = vpack.c.bf16 %v5693, %v5689
      %v5698 = vpack.c.bf16 %v5694, %v5690
      %v5699 = vpack.c.bf16 %v5695, %v5691
      %v5700 = vlaneseq
      %v5701 = vshrl.u32 %v5700, 7
      %v5702 = vsub.s32 2, %v5701
      %v5703 = vrot.slane %v4911, %v5702
      %v5768 = vunpack.c.l.b16 %v4847
      %v5769 = vunpack.c.l.b16 %v4848
      %v5770 = vunpack.c.l.b16 %v4849
      %v5771 = vunpack.c.l.b16 %v4850
      %v5772 = vunpack.c.l.b16 %v4851
      %v5773 = vunpack.c.l.b16 %v4852
      %v5774 = vunpack.c.l.b16 %v4853
      %v5775 = vunpack.c.l.b16 %v4854
      %v5776 = vunpack.c.l.b16 %v4855
      %v5777 = vunpack.c.l.b16 %v4856
      %v5778 = vunpack.c.l.b16 %v4857
      %v5779 = vunpack.c.l.b16 %v4858
      %v5780 = vunpack.c.l.b16 %v4859
      %v5781 = vunpack.c.l.b16 %v4860
      %v5782 = vunpack.c.l.b16 %v4861
      %v5783 = vunpack.c.l.b16 %v4862
      %v5784 = vunpack.c.l.b16 %v4863
      %v5785 = vunpack.c.l.b16 %v4864
      %v5786 = vunpack.c.l.b16 %v4865
      %v5787 = vunpack.c.l.b16 %v4866
      %v5788 = vunpack.c.l.b16 %v4867
      %v5789 = vunpack.c.l.b16 %v4868
      %v5790 = vunpack.c.l.b16 %v4869
      %v5791 = vunpack.c.l.b16 %v4870
      %v5792 = vunpack.c.l.b16 %v4871
      %v5793 = vunpack.c.l.b16 %v4872
      %v5794 = vunpack.c.l.b16 %v4873
      %v5795 = vunpack.c.l.b16 %v4874
      %v5796 = vunpack.c.l.b16 %v4875
      %v5797 = vunpack.c.l.b16 %v4876
      %v5798 = vunpack.c.l.b16 %v4877
      %v5799 = vunpack.c.l.b16 %v4878
      %v5800 = vunpack.c.l.b16 %v4879
      %v5801 = vunpack.c.l.b16 %v4880
      %v5802 = vunpack.c.l.b16 %v4881
      %v5803 = vunpack.c.l.b16 %v4882
      %v5804 = vunpack.c.l.b16 %v4883
      %v5805 = vunpack.c.l.b16 %v4884
      %v5806 = vunpack.c.l.b16 %v4885
      %v5807 = vunpack.c.l.b16 %v4886
      %v5808 = vunpack.c.l.b16 %v4887
      %v5809 = vunpack.c.l.b16 %v4888
      %v5810 = vunpack.c.l.b16 %v4889
      %v5811 = vunpack.c.l.b16 %v4890
      %v5812 = vunpack.c.l.b16 %v4891
      %v5813 = vunpack.c.l.b16 %v4892
      %v5814 = vunpack.c.l.b16 %v4893
      %v5815 = vunpack.c.l.b16 %v4894
      %v5816 = vunpack.c.l.b16 %v4895
      %v5817 = vunpack.c.l.b16 %v4896
      %v5818 = vunpack.c.l.b16 %v4897
      %v5819 = vunpack.c.l.b16 %v4898
      %v5820 = vunpack.c.l.b16 %v4899
      %v5821 = vunpack.c.l.b16 %v4900
      %v5822 = vunpack.c.l.b16 %v4901
      %v5823 = vunpack.c.l.b16 %v4902
      %v5824 = vunpack.c.l.b16 %v4903
      %v5825 = vunpack.c.l.b16 %v4904
      %v5826 = vunpack.c.l.b16 %v4905
      %v5827 = vunpack.c.l.b16 %v4906
      %v5828 = vunpack.c.l.b16 %v4907
      %v5829 = vunpack.c.l.b16 %v4908
      %v5830 = vunpack.c.l.b16 %v4909
      %v5831 = vunpack.c.l.b16 %v4910
      %v5832 = vpack.c.b16 %v5769, %v5768
      %v5833 = vpack.c.b16 %v5771, %v5770
      %v5834 = vpack.c.b16 %v5773, %v5772
      %v5835 = vpack.c.b16 %v5775, %v5774
      %v5836 = vpack.c.b16 %v5777, %v5776
      %v5837 = vpack.c.b16 %v5779, %v5778
      %v5838 = vpack.c.b16 %v5781, %v5780
      %v5839 = vpack.c.b16 %v5783, %v5782
      %v5840 = vpack.c.b16 %v5785, %v5784
      %v5841 = vpack.c.b16 %v5787, %v5786
      %v5842 = vpack.c.b16 %v5789, %v5788
      %v5843 = vpack.c.b16 %v5791, %v5790
      %v5844 = vpack.c.b16 %v5793, %v5792
      %v5845 = vpack.c.b16 %v5795, %v5794
      %v5846 = vpack.c.b16 %v5797, %v5796
      %v5847 = vpack.c.b16 %v5799, %v5798
      %v5848 = vpack.c.b16 %v5801, %v5800
      %v5849 = vpack.c.b16 %v5803, %v5802
      %v5850 = vpack.c.b16 %v5805, %v5804
      %v5851 = vpack.c.b16 %v5807, %v5806
      %v5852 = vpack.c.b16 %v5809, %v5808
      %v5853 = vpack.c.b16 %v5811, %v5810
      %v5854 = vpack.c.b16 %v5813, %v5812
      %v5855 = vpack.c.b16 %v5815, %v5814
      %v5856 = vpack.c.b16 %v5817, %v5816
      %v5857 = vpack.c.b16 %v5819, %v5818
      %v5858 = vpack.c.b16 %v5821, %v5820
      %v5859 = vpack.c.b16 %v5823, %v5822
      %v5860 = vpack.c.b16 %v5825, %v5824
      %v5861 = vpack.c.b16 %v5827, %v5826
      %v5862 = vpack.c.b16 %v5829, %v5828
      %v5863 = vpack.c.b16 %v5831, %v5830
      %5896 = vmatprep.subr.bf16.mxu0 0
      %5897 = vmatpush1.bf16.msra.mxu0 %v5832
      %5898 = vmatprep.subr.bf16.mxu0 0
      %5899 = vmatpush1.bf16.msra.mxu0 %v5833
      %5900 = vmatprep.subr.bf16.mxu0 0
      %5901 = vmatpush1.bf16.msra.mxu0 %v5834
      %5902 = vmatprep.subr.bf16.mxu0 0
      %5903 = vmatpush1.bf16.msra.mxu0 %v5835
      %5904 = vmatprep.subr.bf16.mxu0 0
      %5905 = vmatpush1.bf16.msra.mxu0 %v5836
      %5906 = vmatprep.subr.bf16.mxu0 0
      %5907 = vmatpush1.bf16.msra.mxu0 %v5837
      %5908 = vmatprep.subr.bf16.mxu0 0
      %5909 = vmatpush1.bf16.msra.mxu0 %v5838
      %5910 = vmatprep.subr.bf16.mxu0 0
      %5911 = vmatpush1.bf16.msra.mxu0 %v5839
      %5912 = vmatprep.subr.bf16.mxu0 0
      %5913 = vmatpush1.bf16.msra.mxu0 %v5840
      %5914 = vmatprep.subr.bf16.mxu0 0
      %5915 = vmatpush1.bf16.msra.mxu0 %v5841
      %5916 = vmatprep.subr.bf16.mxu0 0
      %5917 = vmatpush1.bf16.msra.mxu0 %v5842
      %5918 = vmatprep.subr.bf16.mxu0 0
      %5919 = vmatpush1.bf16.msra.mxu0 %v5843
      %5920 = vmatprep.subr.bf16.mxu0 0
      %5921 = vmatpush1.bf16.msra.mxu0 %v5844
      %5922 = vmatprep.subr.bf16.mxu0 0
      %5923 = vmatpush1.bf16.msra.mxu0 %v5845
      %5924 = vmatprep.subr.bf16.mxu0 0
      %5925 = vmatpush1.bf16.msra.mxu0 %v5846
      %5926 = vmatprep.subr.bf16.mxu0 0
      %5927 = vmatpush1.bf16.msra.mxu0 %v5847
      %5928 = vmatprep.mubr.bf16.mxu0 %v5697
      %5929 = vmatmul.mubr.bf16.gmra.mrb[0].mxu0 %v5696
      %v5930 = vpop.f32.mrb[0].mxu0
      %v5931 = vadd.f32 %v5703, %v5930
      %v5932 = vpop.f32.mrb[0].mxu0
      %v5933 = vpop.f32.mrb[0].mxu0
      %v5934 = vadd.f32 %v5703, %v5933
      %v5935 = vpop.f32.mrb[0].mxu0
      %5936 = vdwg.mxu0
      %5937 = vmatprep.subr.bf16.mxu0 0
      %5938 = vmatpush1.bf16.msra.mxu0 %v5848
      %5939 = vmatprep.subr.bf16.mxu0 0
      %5940 = vmatpush1.bf16.msra.mxu0 %v5849
      %5941 = vmatprep.subr.bf16.mxu0 0
      %5942 = vmatpush1.bf16.msra.mxu0 %v5850
      %5943 = vmatprep.subr.bf16.mxu0 0
      %5944 = vmatpush1.bf16.msra.mxu0 %v5851
      %5945 = vmatprep.subr.bf16.mxu0 0
      %5946 = vmatpush1.bf16.msra.mxu0 %v5852
      %5947 = vmatprep.subr.bf16.mxu0 0
      %5948 = vmatpush1.bf16.msra.mxu0 %v5853
      %5949 = vmatprep.subr.bf16.mxu0 0
      %5950 = vmatpush1.bf16.msra.mxu0 %v5854
      %5951 = vmatprep.subr.bf16.mxu0 0
      %5952 = vmatpush1.bf16.msra.mxu0 %v5855
      %5953 = vmatprep.subr.bf16.mxu0 0
      %5954 = vmatpush1.bf16.msra.mxu0 %v5856
      %5955 = vmatprep.subr.bf16.mxu0 0
      %5956 = vmatpush1.bf16.msra.mxu0 %v5857
      %5957 = vmatprep.subr.bf16.mxu0 0
      %5958 = vmatpush1.bf16.msra.mxu0 %v5858
      %5959 = vmatprep.subr.bf16.mxu0 0
      %5960 = vmatpush1.bf16.msra.mxu0 %v5859
      %5961 = vmatprep.subr.bf16.mxu0 0
      %5962 = vmatpush1.bf16.msra.mxu0 %v5860
      %5963 = vmatprep.subr.bf16.mxu0 0
      %5964 = vmatpush1.bf16.msra.mxu0 %v5861
      %5965 = vmatprep.subr.bf16.mxu0 0
      %5966 = vmatpush1.bf16.msra.mxu0 %v5862
      %5967 = vmatprep.subr.bf16.mxu0 0
      %5968 = vmatpush1.bf16.msra.mxu0 %v5863
      %5969 = vmatprep.mubr.bf16.mxu0 %v5699
      %5970 = vmatmul.mubr.bf16.gmra.mrb[0].mxu0 %v5698
      %v5971 = vpop.f32.mrb[0].mxu0
      %v5972 = vadd.f32 %v5931, %v5971
      %v5973 = vpop.f32.mrb[0].mxu0
      %v5974 = vpop.f32.mrb[0].mxu0
      %v5975 = vadd.f32 %v5934, %v5974
      %v5976 = vpop.f32.mrb[0].mxu0
      %5977 = vdwg.mxu0
      %v5978 = vadd.f32 %v5972, %v4780
      %v5979 = vadd.f32 %v5975, %v4781
      %v5980 = vld [vmem:[%s3] sm:$0xff]
      %v5981 = vld [vmem:[%s21] sm:$0xf]
      %v5982 = vld [vmem:[%s21 + $0x4] sm:$0xf]
      %v5983 = vld [vmem:[%s21 + $0x8] sm:$0xf]
      %v5984 = vld [vmem:[%s21 + $0xc] sm:$0xf]
      %v5985 = vld [vmem:[%s21 + $0x10] sm:$0xf]
      %v5986 = vld [vmem:[%s21 + $0x14] sm:$0xf]
      %v5987 = vld [vmem:[%s21 + $0x18] sm:$0xf]
      %v5988 = vld [vmem:[%s21 + $0x1c] sm:$0xf]
      %v5989 = vld [vmem:[%s22] sm:$0xf]
      %v5990 = vld [vmem:[%s22 + $0x4] sm:$0xf]
      %v5991 = vld [vmem:[%s22 + $0x8] sm:$0xf]
      %v5992 = vld [vmem:[%s22 + $0xc] sm:$0xf]
      %v5993 = vld [vmem:[%s22 + $0x10] sm:$0xf]
      %v5994 = vld [vmem:[%s22 + $0x14] sm:$0xf]
      %v5995 = vld [vmem:[%s22 + $0x18] sm:$0xf]
      %v5996 = vld [vmem:[%s22 + $0x1c] sm:$0xf]
      %v5997 = vld [vmem:[%s22 + $0x20] sm:$0xf]
      %v5998 = vld [vmem:[%s22 + $0x24] sm:$0xf]
      %v5999 = vld [vmem:[%s22 + $0x28] sm:$0xf]
      %v6000 = vld [vmem:[%s22 + $0x2c] sm:$0xf]
      %v6001 = vld [vmem:[%s22 + $0x30] sm:$0xf]
      %v6002 = vld [vmem:[%s22 + $0x34] sm:$0xf]
      %v6003 = vld [vmem:[%s22 + $0x38] sm:$0xf]
      %v6004 = vld [vmem:[%s22 + $0x3c] sm:$0xf]
      %v6005 = vld [vmem:[%s23] sm:$0xf]
      %v6006 = vld [vmem:[%s23 + $0x4] sm:$0xf]
      %v6007 = vld [vmem:[%s23 + $0x8] sm:$0xf]
      %v6008 = vld [vmem:[%s23 + $0xc] sm:$0xf]
      %v6009 = vld [vmem:[%s23 + $0x10] sm:$0xf]
      %v6010 = vld [vmem:[%s23 + $0x14] sm:$0xf]
      %v6011 = vld [vmem:[%s23 + $0x18] sm:$0xf]
      %v6012 = vld [vmem:[%s23 + $0x1c] sm:$0xf]
      %v6013 = vld [vmem:[%s24] sm:$0x7]
      %v6014 = vld [vmem:[%s25] sm:$0x3]
      %v6015 = vsel %vm1151, %v5980, 0.0
      %6016 = vadd.xlane.f32.xlu0 %v6015
      %v6017 = vpop.xlane.xlu0 %6016
      %v6018 = vrcp.pop 64.0
      %v6019 = vmul.f32 %v6017, %v6018
      %v6020 = vsub.f32 %v5980, %v6019
      %v6021 = vmul.f32 %v6020, %v6020
      %v6022 = vsel %vm1151, %v6021, 0.0
      %6023 = vadd.xlane.f32.xlu0 %v6022
      %v6024 = vpop.xlane.xlu0 %6023
      %v6025 = vmul.f32 %v6024, %v6018
      %v6026 = vadd.f32 %v6025, 1e-05
      %v6027 = vrsqrt.pop %v6026
      %v6028 = vmul.f32 %v6020, %v6027
      %v6029 = vlaneseq
      %v6030 = vshrl.u32 %v6029, 7
      %v6031 = vsub.s32 0, %v6030
      %v6032 = vrot.slane %v6013, %v6031
      %v6033 = vmul.f32 %v6028, %v6032
      %v6034 = vlaneseq
      %v6035 = vshrl.u32 %v6034, 7
      %v6036 = vsub.s32 1, %v6035
      %v6037 = vrot.slane %v6013, %v6036
      %v6038 = vadd.f32 %v6033, %v6037
      %6039 = vadd.xlane.f32.xlu0 %v5978
      %v6040 = vpop.xlane.xlu0 %6039
      %6041 = vadd.xlane.f32.xlu0 %v5979
      %v6042 = vpop.xlane.xlu0 %6041
      %v6043 = vmul.f32 %v6040, %v860
      %v6044 = vmul.f32 %v6042, %v860
      %v6045 = vsub.f32 %v5978, %v6043
      %v6046 = vsub.f32 %v5979, %v6044
      %v6047 = vmul.f32 %v6045, %v6045
      %v6048 = vmul.f32 %v6046, %v6046
      %6049 = vadd.xlane.f32.xlu0 %v6047
      %v6050 = vpop.xlane.xlu0 %6049
      %6051 = vadd.xlane.f32.xlu0 %v6048
      %v6052 = vpop.xlane.xlu0 %6051
      %v6053 = vmul.f32 %v6050, %v860
      %v6054 = vmul.f32 %v6052, %v860
      %v6055 = vadd.f32 %v6053, 1e-05
      %v6056 = vadd.f32 %v6054, 1e-05
      %v6057 = vrsqrt.pop %v6055
      %v6058 = vrsqrt.pop %v6056
      %v6059 = vmul.f32 %v6045, %v6057
      %v6060 = vmul.f32 %v6046, %v6058
      %v6061 = vlaneseq
      %v6062 = vshrl.u32 %v6061, 7
      %v6063 = vsub.s32 0, %v6062
      %v6064 = vrot.slane %v6014, %v6063
      %v6065 = vmul.f32 %v6059, %v6064
      %v6066 = vmul.f32 %v6060, %v6064
      %v6067 = vlaneseq
      %v6068 = vshrl.u32 %v6067, 7
      %v6069 = vsub.s32 1, %v6068
      %v6070 = vrot.slane %v6014, %v6069
      %v6071 = vadd.f32 %v6065, %v6070
      %v6072 = vadd.f32 %v6066, %v6070
      %v6073 = vpack.c.bf16 %v6038, %v6038
      %v6082 = vunpack.c.l.b16 %v5981
      %v6083 = vunpack.c.l.b16 %v5982
      %v6084 = vunpack.c.l.b16 %v5983
      %v6085 = vunpack.c.l.b16 %v5984
      %v6086 = vunpack.c.l.b16 %v5985
      %v6087 = vunpack.c.l.b16 %v5986
      %v6088 = vunpack.c.l.b16 %v5987
      %v6089 = vunpack.c.l.b16 %v5988
      %v6090 = vpack.c.b16 %v6083, %v6082
      %v6091 = vpack.c.b16 %v6085, %v6084
      %v6092 = vpack.c.b16 %v6087, %v6086
      %v6093 = vpack.c.b16 %v6089, %v6088
      %v6099 = vsel %vm1151, %v6073, 0
      %6101 = vmatprep.subr.bf16.mxu0 0
      %6102 = vmatpush1.bf16.msra.mxu0 %v6090
      %6103 = vmatprep.subr.bf16.mxu0 0
      %6104 = vmatpush1.bf16.msra.mxu0 %v6091
      %6105 = vmatprep.subr.bf16.mxu0 0
      %6106 = vmatpush1.bf16.msra.mxu0 %v6092
      %6107 = vmatprep.subr.bf16.mxu0 0
      %6108 = vmatpush1.bf16.msra.mxu0 %v6093
      %6109 = vmatprep.subr.bf16.mxu0 0
      %6110 = vmatpush1.bf16.msra.mxu0 0
      %6111 = vmatprep.subr.bf16.mxu0 0
      %6112 = vmatpush1.bf16.msra.mxu0 0
      %6113 = vmatprep.subr.bf16.mxu0 0
      %6114 = vmatpush1.bf16.msra.mxu0 0
      %6115 = vmatprep.subr.bf16.mxu0 0
      %6116 = vmatpush1.bf16.msra.mxu0 0
      %6117 = vmatprep.subr.bf16.mxu0 0
      %6118 = vmatpush1.bf16.msra.mxu0 0
      %6119 = vmatprep.subr.bf16.mxu0 0
      %6120 = vmatpush1.bf16.msra.mxu0 0
      %6121 = vmatprep.subr.bf16.mxu0 0
      %6122 = vmatpush1.bf16.msra.mxu0 0
      %6123 = vmatprep.subr.bf16.mxu0 0
      %6124 = vmatpush1.bf16.msra.mxu0 0
      %6125 = vmatprep.subr.bf16.mxu0 0
      %6126 = vmatpush1.bf16.msra.mxu0 0
      %6127 = vmatprep.subr.bf16.mxu0 0
      %6128 = vmatpush1.bf16.msra.mxu0 0
      %6129 = vmatprep.subr.bf16.mxu0 0
      %6130 = vmatpush1.bf16.msra.mxu0 0
      %6131 = vmatprep.subr.bf16.mxu0 0
      %6132 = vmatpush1.bf16.msra.mxu0 0
      %6133 = vmatprep.mubr.bf16.mxu0 0
      %6134 = vmatmul.mubr.bf16.gmra.mrb[0].mxu0 %v6099
      %v6135 = vpop.f32.mrb[0].mxu0
      %v6136 = vadd.f32 0.0, %v6135
      %v6137 = vpop.f32.mrb[0].mxu0
      %v6138 = vpop.f32.mrb[0].mxu0
      %v6139 = vpop.f32.mrb[0].mxu0
      %6140 = vdwg.mxu0
      %v6141 = vpack.c.bf16 %v6072, %v6071
      %v6158 = vunpack.c.l.b16 %v5989
      %v6159 = vunpack.c.l.b16 %v5990
      %v6160 = vunpack.c.l.b16 %v5991
      %v6161 = vunpack.c.l.b16 %v5992
      %v6162 = vunpack.c.l.b16 %v5993
      %v6163 = vunpack.c.l.b16 %v5994
      %v6164 = vunpack.c.l.b16 %v5995
      %v6165 = vunpack.c.l.b16 %v5996
      %v6166 = vunpack.c.l.b16 %v5997
      %v6167 = vunpack.c.l.b16 %v5998
      %v6168 = vunpack.c.l.b16 %v5999
      %v6169 = vunpack.c.l.b16 %v6000
      %v6170 = vunpack.c.l.b16 %v6001
      %v6171 = vunpack.c.l.b16 %v6002
      %v6172 = vunpack.c.l.b16 %v6003
      %v6173 = vunpack.c.l.b16 %v6004
      %v6174 = vpack.c.b16 %v6159, %v6158
      %v6175 = vpack.c.b16 %v6161, %v6160
      %v6176 = vpack.c.b16 %v6163, %v6162
      %v6177 = vpack.c.b16 %v6165, %v6164
      %v6178 = vpack.c.b16 %v6167, %v6166
      %v6179 = vpack.c.b16 %v6169, %v6168
      %v6180 = vpack.c.b16 %v6171, %v6170
      %v6181 = vpack.c.b16 %v6173, %v6172
      %6190 = vmatprep.subr.bf16.mxu0 0
      %6191 = vmatpush1.bf16.msra.mxu0 %v6174
      %6192 = vmatprep.subr.bf16.mxu0 0
      %6193 = vmatpush1.bf16.msra.mxu0 %v6175
      %6194 = vmatprep.subr.bf16.mxu0 0
      %6195 = vmatpush1.bf16.msra.mxu0 %v6176
      %6196 = vmatprep.subr.bf16.mxu0 0
      %6197 = vmatpush1.bf16.msra.mxu0 %v6177
      %6198 = vmatprep.subr.bf16.mxu0 0
      %6199 = vmatpush1.bf16.msra.mxu0 %v6178
      %6200 = vmatprep.subr.bf16.mxu0 0
      %6201 = vmatpush1.bf16.msra.mxu0 %v6179
      %6202 = vmatprep.subr.bf16.mxu0 0
      %6203 = vmatpush1.bf16.msra.mxu0 %v6180
      %6204 = vmatprep.subr.bf16.mxu0 0
      %6205 = vmatpush1.bf16.msra.mxu0 %v6181
      %6206 = vmatprep.subr.bf16.mxu0 0
      %6207 = vmatpush1.bf16.msra.mxu0 0
      %6208 = vmatprep.subr.bf16.mxu0 0
      %6209 = vmatpush1.bf16.msra.mxu0 0
      %6210 = vmatprep.subr.bf16.mxu0 0
      %6211 = vmatpush1.bf16.msra.mxu0 0
      %6212 = vmatprep.subr.bf16.mxu0 0
      %6213 = vmatpush1.bf16.msra.mxu0 0
      %6214 = vmatprep.subr.bf16.mxu0 0
      %6215 = vmatpush1.bf16.msra.mxu0 0
      %6216 = vmatprep.subr.bf16.mxu0 0
      %6217 = vmatpush1.bf16.msra.mxu0 0
      %6218 = vmatprep.subr.bf16.mxu0 0
      %6219 = vmatpush1.bf16.msra.mxu0 0
      %6220 = vmatprep.subr.bf16.mxu0 0
      %6221 = vmatpush1.bf16.msra.mxu0 0
      %6222 = vmatprep.mubr.bf16.mxu0 0
      %6223 = vmatmul.mubr.bf16.gmra.mrb[0].mxu0 %v6141
      %v6224 = vpop.f32.mrb[0].mxu0
      %v6225 = vadd.f32 0.0, %v6224
      %v6226 = vpop.f32.mrb[0].mxu0
      %v6227 = vpop.f32.mrb[0].mxu0
      %v6228 = vadd.f32 0.0, %v6227
      %v6229 = vpop.f32.mrb[0].mxu0
      %6230 = vdwg.mxu0
      %v6231 = vmul.f32 %v6136, 0.125
      %v6232 = vpack.c.bf16 %v6231, %v6231
      %v6233 = vpack.c.bf16 %v6228, %v6225
      %v6235 = vsel %vm1151, %v6232, 0
      %v6238 = vsel %vm1151, %v6233, 0
      %6240 = vmatprep.subr.bf16.mxu0 0
      %6241 = vmatpush1.bf16.xpose.msra.mxu0 %v6238
      %6242 = vmatprep.subr.bf16.mxu0 0
      %6243 = vmatpush1.bf16.xpose.msra.mxu0 0
      %6244 = vmatprep.subr.bf16.mxu0 0
      %6245 = vmatpush1.bf16.xpose.msra.mxu0 0
      %6246 = vmatprep.subr.bf16.mxu0 0
      %6247 = vmatpush1.bf16.xpose.msra.mxu0 0
      %6248 = vmatprep.subr.bf16.mxu0 0
      %6249 = vmatpush1.bf16.xpose.msra.mxu0 0
      %6250 = vmatprep.subr.bf16.mxu0 0
      %6251 = vmatpush1.bf16.xpose.msra.mxu0 0
      %6252 = vmatprep.subr.bf16.mxu0 0
      %6253 = vmatpush1.bf16.xpose.msra.mxu0 0
      %6254 = vmatprep.subr.bf16.mxu0 0
      %6255 = vmatpush1.bf16.xpose.msra.mxu0 0
      %6256 = vmatprep.subr.bf16.mxu0 0
      %6257 = vmatpush1.bf16.xpose.msra.mxu0 0
      %6258 = vmatprep.subr.bf16.mxu0 0
      %6259 = vmatpush1.bf16.xpose.msra.mxu0 0
      %6260 = vmatprep.subr.bf16.mxu0 0
      %6261 = vmatpush1.bf16.xpose.msra.mxu0 0
      %6262 = vmatprep.subr.bf16.mxu0 0
      %6263 = vmatpush1.bf16.xpose.msra.mxu0 0
      %6264 = vmatprep.subr.bf16.mxu0 0
      %6265 = vmatpush1.bf16.xpose.msra.mxu0 0
      %6266 = vmatprep.subr.bf16.mxu0 0
      %6267 = vmatpush1.bf16.xpose.msra.mxu0 0
      %6268 = vmatprep.subr.bf16.mxu0 0
      %6269 = vmatpush1.bf16.xpose.msra.mxu0 0
      %6270 = vmatprep.subr.bf16.mxu0 0
      %6271 = vmatpush1.bf16.xpose.msra.mxu0 0
      %6272 = vmatprep.mubr.bf16.mxu0 0
      %6273 = vmatmul.mubr.bf16.gmra.mrb[0].mxu0 %v6235
      %v6274 = vpop.f32.mrb[0].mxu0
      %v6275 = vadd.f32 0.0, %v6274
      %v6276 = vpop.f32.mrb[0].mxu0
      %v6277 = vpop.f32.mrb[0].mxu0
      %v6278 = vpop.f32.mrb[0].mxu0
      %6279 = vdwg.mxu0
      %v6280 = vsel %vm3552, %v6275, -inf
      %6281 = vmax.xlane.f32.xlu0 %v6280
      %v6282 = vpop.xlane.xlu0 %6281
      %v6283 = vsub.f32 %v6275, %v6282
      %v6284 = vmul.f32 %v6283, 1.442695
      %v6285 = vpow.pop %v6284
      %v6286 = vsel %vm3552, %v6285, 0.0
      %6287 = vadd.xlane.f32.xlu0 %v6286
      %v6288 = vpop.xlane.xlu0 %6287
      %v6289 = vrcp.pop %v6288
      %v6290 = vmul.f32 %v6285, %v6289
      %v6291 = vpack.c.bf16 %v6290, %v6290
      %6293 = vrot.lane.b32.xlu0 %v6233, 64
      %v6294 = vpop.permute.xlu0 %6293
      %v6297 = vsel %vm3552, %v6291, 0
      %6299 = vmatprep.subr.bf16.mxu0 0
      %6300 = vmatpush1.bf16.msra.mxu0 %v6294
      %6301 = vmatprep.subr.bf16.mxu0 0
      %6302 = vmatpush1.bf16.msra.mxu0 0
      %6303 = vmatprep.subr.bf16.mxu0 0
      %6304 = vmatpush1.bf16.msra.mxu0 0
      %6305 = vmatprep.subr.bf16.mxu0 0
      %6306 = vmatpush1.bf16.msra.mxu0 0
      %6307 = vmatprep.subr.bf16.mxu0 0
      %6308 = vmatpush1.bf16.msra.mxu0 0
      %6309 = vmatprep.subr.bf16.mxu0 0
      %6310 = vmatpush1.bf16.msra.mxu0 0
      %6311 = vmatprep.subr.bf16.mxu0 0
      %6312 = vmatpush1.bf16.msra.mxu0 0
      %6313 = vmatprep.subr.bf16.mxu0 0
      %6314 = vmatpush1.bf16.msra.mxu0 0
      %6315 = vmatprep.subr.bf16.mxu0 0
      %6316 = vmatpush1.bf16.msra.mxu0 0
      %6317 = vmatprep.subr.bf16.mxu0 0
      %6318 = vmatpush1.bf16.msra.mxu0 0
      %6319 = vmatprep.subr.bf16.mxu0 0
      %6320 = vmatpush1.bf16.msra.mxu0 0
      %6321 = vmatprep.subr.bf16.mxu0 0
      %6322 = vmatpush1.bf16.msra.mxu0 0
      %6323 = vmatprep.subr.bf16.mxu0 0
      %6324 = vmatpush1.bf16.msra.mxu0 0
      %6325 = vmatprep.subr.bf16.mxu0 0
      %6326 = vmatpush1.bf16.msra.mxu0 0
      %6327 = vmatprep.subr.bf16.mxu0 0
      %6328 = vmatpush1.bf16.msra.mxu0 0
      %6329 = vmatprep.subr.bf16.mxu0 0
      %6330 = vmatpush1.bf16.msra.mxu0 0
      %6331 = vmatprep.mubr.bf16.mxu0 0
      %6332 = vmatmul.mubr.bf16.gmra.mrb[0].mxu0 %v6297
      %v6333 = vpop.f32.mrb[0].mxu0
      %v6334 = vadd.f32 0.0, %v6333
      %v6335 = vpop.f32.mrb[0].mxu0
      %v6336 = vpop.f32.mrb[0].mxu0
      %v6337 = vpop.f32.mrb[0].mxu0
      %6338 = vdwg.mxu0
      %v6339 = vpack.c.bf16 %v6334, %v6334
      %v6340 = vlaneseq
      %v6341 = vshrl.u32 %v6340, 7
      %v6342 = vsub.s32 2, %v6341
      %v6343 = vrot.slane %v6013, %v6342
      %v6352 = vunpack.c.l.b16 %v6005
      %v6353 = vunpack.c.l.b16 %v6006
      %v6354 = vunpack.c.l.b16 %v6007
      %v6355 = vunpack.c.l.b16 %v6008
      %v6356 = vunpack.c.l.b16 %v6009
      %v6357 = vunpack.c.l.b16 %v6010
      %v6358 = vunpack.c.l.b16 %v6011
      %v6359 = vunpack.c.l.b16 %v6012
      %v6360 = vpack.c.b16 %v6353, %v6352
      %v6361 = vpack.c.b16 %v6355, %v6354
      %v6362 = vpack.c.b16 %v6357, %v6356
      %v6363 = vpack.c.b16 %v6359, %v6358
      %v6369 = vsel %vm1151, %v6339, 0
      %6371 = vmatprep.subr.bf16.mxu0 0
      %6372 = vmatpush1.bf16.msra.mxu0 %v6360
      %6373 = vmatprep.subr.bf16.mxu0 0
      %6374 = vmatpush1.bf16.msra.mxu0 %v6361
      %6375 = vmatprep.subr.bf16.mxu0 0
      %6376 = vmatpush1.bf16.msra.mxu0 %v6362
      %6377 = vmatprep.subr.bf16.mxu0 0
      %6378 = vmatpush1.bf16.msra.mxu0 %v6363
      %6379 = vmatprep.subr.bf16.mxu0 0
      %6380 = vmatpush1.bf16.msra.mxu0 0
      %6381 = vmatprep.subr.bf16.mxu0 0
      %6382 = vmatpush1.bf16.msra.mxu0 0
      %6383 = vmatprep.subr.bf16.mxu0 0
      %6384 = vmatpush1.bf16.msra.mxu0 0
      %6385 = vmatprep.subr.bf16.mxu0 0
      %6386 = vmatpush1.bf16.msra.mxu0 0
      %6387 = vmatprep.subr.bf16.mxu0 0
      %6388 = vmatpush1.bf16.msra.mxu0 0
      %6389 = vmatprep.subr.bf16.mxu0 0
      %6390 = vmatpush1.bf16.msra.mxu0 0
      %6391 = vmatprep.subr.bf16.mxu0 0
      %6392 = vmatpush1.bf16.msra.mxu0 0
      %6393 = vmatprep.subr.bf16.mxu0 0
      %6394 = vmatpush1.bf16.msra.mxu0 0
      %6395 = vmatprep.subr.bf16.mxu0 0
      %6396 = vmatpush1.bf16.msra.mxu0 0
      %6397 = vmatprep.subr.bf16.mxu0 0
      %6398 = vmatpush1.bf16.msra.mxu0 0
      %6399 = vmatprep.subr.bf16.mxu0 0
      %6400 = vmatpush1.bf16.msra.mxu0 0
      %6401 = vmatprep.subr.bf16.mxu0 0
      %6402 = vmatpush1.bf16.msra.mxu0 0
      %6403 = vmatprep.mubr.bf16.mxu0 0
      %6404 = vmatmul.mubr.bf16.gmra.mrb[0].mxu0 %v6369
      %v6405 = vpop.f32.mrb[0].mxu0
      %v6406 = vadd.f32 %v6343, %v6405
      %v6407 = vpop.f32.mrb[0].mxu0
      %v6408 = vpop.f32.mrb[0].mxu0
      %v6409 = vpop.f32.mrb[0].mxu0
      %6410 = vdwg.mxu0
      %6411 = vst.msk [vmem:[%s803] sm:$0xff] %vm1151, %v6406
      %p6412 = scmp.lt.s32.totalorder %s37, 1
      %s6413 = scalar_select %p6412, %s37, 1
      %s6414 = smul.addr %s6413, 8
      %s6415 = scalar_lea.vmem %s26, %s6414
      // Predicated region
      $region125: #{infer_func_forward.1} parent=123 // pred_check
        %p6416 = pneg %p611
      $region126: #{infer_func_forward.1} parent=123 // pred_check_branch
        %6418 = sbr.rel (%p6416) target = $region128
      $region127: #{infer_func_forward.1} parent=123 // pred_region
        _
      $region128: #{infer_func_forward.1} parent=123 // pred_fallthru
        _
    $region124: #{infer_func_forward.1} parent=5 // pred_fallthru
      _
    %p6419 = scmp.le.s32.totalorder 2, %s32
    // Predicated region
    $region129: #{infer_func_forward.1} parent=5 // pred_check
      %p6420 = pneg %p6419
    $region130: #{infer_func_forward.1} parent=5 // pred_check_branch
      %6422 = sbr.rel (%p6420) target = $region132
    $region131: #{infer_func_forward.1} parent=5 // pred_region
      %s6423 = ssub.s32 %s32, 2
      // Predicated region
      $region133: #{infer_func_forward.1} parent=131 // pred_check
        %p6424 = pneg %p617
      $region134: #{infer_func_forward.1} parent=131 // pred_check_branch
        %6426 = sbr.rel (%p6424) target = $region136
      $region135: #{infer_func_forward.1} parent=131 // pred_region
        %p6427 = scmp.lt.s32.totalorder %s38, 1
        %s6428 = scalar_select %p6427, %s38, 1
        %s6429 = smul.addr %s6428, 8
        %s6430 = scalar_lea.vmem %s26, %s6429
      $region136: #{infer_func_forward.1} parent=131 // pred_fallthru
        _
    $region132: #{infer_func_forward.1} parent=5 // pred_fallthru
      _
  $region6: #{infer_func_forward.1} parent=0 // loop_footer
    %s36 = sadd.s32 1, %s32
  $region7: #{infer_func_forward.1} parent=0 // loop_footer_branch
    %31 = sbr.rel target = $region3
  $region8: #{infer_func_forward.1} parent=0 // loop_exit
    _

</llo_original>
